<compile_context>
chip_gen: v5e
topology: v5e:2x2
jax: 0.10.0
libtpu: 0.0.40
codegen_flags: <defaults>
</compile_context>

<pallas_src>
import functools
import math

import jax
import jax.numpy as jnp
from jax.experimental import pallas as pl
from jax.experimental.pallas import tpu as pltpu

VMEM_LIMIT = 48 * 1024 * 1024  # safe on v7x (64 MiB physical) and v5e/v6e


def _tile(dim, target):
    """Largest clean tile: `target` if it divides `dim`, else the full dim."""
    if dim >= target and dim % target == 0:
        return target
    return dim


def _gelu_tanh(x):
    c = 0.7978845608028654  # sqrt(2/pi)
    return 0.5 * x * (1.0 + jnp.tanh(c * (x + 0.044715 * x * x * x)))


# --------------------------- tiled matmul + bias ---------------------------

def _matmul_bias_kernel(x_ref, w_ref, b_ref, o_ref, acc_ref):
    @pl.when(pl.program_id(2) == 0)
    def _():
        acc_ref[...] = jnp.zeros_like(acc_ref)

    acc_ref[...] += jnp.dot(x_ref[...], w_ref[...],
                            preferred_element_type=jnp.float32)

    @pl.when(pl.program_id(2) == pl.num_programs(2) - 1)
    def _():
        acc = acc_ref[...] + b_ref[...].astype(jnp.float32)
        o_ref[...] = acc.astype(o_ref.dtype)


def matmul_bias(x, w, b, tm=256, tn=256, tk=512):
    """y = x @ w + b.  x:(M,K) bf16, w:(K,N) bf16, b:(N,)."""
    M, K = x.shape
    N = w.shape[1]
    tm, tn, tk = _tile(M, tm), _tile(N, tn), _tile(K, tk)
    b2 = b.reshape(1, N)
    return pl.pallas_call(
        _matmul_bias_kernel,
        out_shape=jax.ShapeDtypeStruct((M, N), x.dtype),
        grid=(M // tm, N // tn, K // tk),
        in_specs=[
            pl.BlockSpec((tm, tk), lambda i, j, k: (i, k)),
            pl.BlockSpec((tk, tn), lambda i, j, k: (k, j)),
            pl.BlockSpec((1, tn), lambda i, j, k: (0, j)),
        ],
        out_specs=pl.BlockSpec((tm, tn), lambda i, j, k: (i, j)),
        scratch_shapes=[pltpu.VMEM((tm, tn), jnp.float32)],
        compiler_params=pltpu.CompilerParams(
            dimension_semantics=("parallel", "parallel", "arbitrary"),
            vmem_limit_bytes=VMEM_LIMIT),
    )(x, w, b2)


def linear3d(x, w, b):
    B, S, _ = x.shape
    return matmul_bias(x.reshape(B * S, x.shape[-1]), w, b).reshape(B, S, -1)


# -------------------- fused MLP: ff1 + GELU-tanh + ff2 ---------------------

def _mlp_kernel(x_ref, w1_ref, b1_ref, w2_ref, b2_ref, o_ref, acc_ref):
    j = pl.program_id(1)

    @pl.when(j == 0)
    def _():
        acc_ref[...] = jnp.zeros_like(acc_ref)

    h = jnp.dot(x_ref[...], w1_ref[...], preferred_element_type=jnp.float32)
    h = _gelu_tanh(h + b1_ref[...].astype(jnp.float32))
    acc_ref[...] += jnp.dot(h.astype(x_ref.dtype), w2_ref[...],
                            preferred_element_type=jnp.float32)

    @pl.when(j == pl.num_programs(1) - 1)
    def _():
        o_ref[...] = (acc_ref[...] + b2_ref[...].astype(jnp.float32)
                      ).astype(o_ref.dtype)


def mlp_fused(x2d, w1, b1, w2, b2, tm=256, th=512):
    """GELU-tanh MLP; the (M, mlp_dim) intermediate stays in VMEM."""
    M, D = x2d.shape
    Dm = w1.shape[1]
    tm, th = _tile(M, tm), _tile(Dm, th)
    return pl.pallas_call(
        _mlp_kernel,
        out_shape=jax.ShapeDtypeStruct((M, D), x2d.dtype),
        grid=(M // tm, Dm // th),
        in_specs=[
            pl.BlockSpec((tm, D), lambda i, j: (i, 0)),
            pl.BlockSpec((D, th), lambda i, j: (0, j)),
            pl.BlockSpec((1, th), lambda i, j: (0, j)),
            pl.BlockSpec((th, D), lambda i, j: (j, 0)),
            pl.BlockSpec((1, D), lambda i, j: (0, 0)),
        ],
        out_specs=pl.BlockSpec((tm, D), lambda i, j: (i, 0)),
        scratch_shapes=[pltpu.VMEM((tm, D), jnp.float32)],
        compiler_params=pltpu.CompilerParams(
            dimension_semantics=("parallel", "arbitrary"),
            vmem_limit_bytes=VMEM_LIMIT),
    )(x2d, w1, b1.reshape(1, -1), w2, b2.reshape(1, -1))


def mlp(x, w1, b1, w2, b2):
    B, S, D = x.shape
    return mlp_fused(x.reshape(B * S, D), w1, b1, w2, b2).reshape(B, S, D)


# ----------------------- flash attention (packed heads) --------------------

def _flash_attn_kernel(q_ref, k_ref, v_ref, o_ref, m_sc, l_sc, acc_sc, *, scale):
    kv = pl.program_id(3)

    @pl.when(kv == 0)
    def _():
        m_sc[...] = jnp.full_like(m_sc, -jnp.inf)
        l_sc[...] = jnp.zeros_like(l_sc)
        acc_sc[...] = jnp.zeros_like(acc_sc)

    q = q_ref[...]                                   # (tq, Dh)  bf16
    k = k_ref[...]                                   # (tkv, Dh) bf16
    s = jax.lax.dot_general(q, k, (((1,), (1,)), ((), ())),
                            preferred_element_type=jnp.float32) * scale
    m_prev = m_sc[...]
    m_new = jnp.maximum(m_prev, s.max(-1, keepdims=True))
    alpha = jnp.exp(m_prev - m_new)
    p = jnp.exp(s - m_new)
    l_sc[...] = alpha * l_sc[...] + p.sum(-1, keepdims=True)
    acc_sc[...] = alpha * acc_sc[...] + jnp.dot(
        p.astype(v_ref.dtype), v_ref[...], preferred_element_type=jnp.float32)
    m_sc[...] = m_new

    @pl.when(kv == pl.num_programs(3) - 1)
    def _():
        o_ref[...] = (acc_sc[...] *
                      pl.reciprocal(l_sc[...], approx=True)).astype(o_ref.dtype)


def attention(q, k, v, num_heads, tq=128, tkv=256):
    """q,k,v: (B, S, H*Dh) bf16; heads sliced via the BlockSpec (no transposes)."""
    B, S, D = q.shape
    Dh = D // num_heads
    scale = 1.0 / math.sqrt(Dh)
    tq, tkv = _tile(S, tq), _tile(S, tkv)
    qspec = pl.BlockSpec((None, tq, Dh), lambda b, h, qi, ki: (b, qi, h))
    kvspec = pl.BlockSpec((None, tkv, Dh), lambda b, h, qi, ki: (b, ki, h))
    return pl.pallas_call(
        functools.partial(_flash_attn_kernel, scale=scale),
        out_shape=jax.ShapeDtypeStruct((B, S, D), q.dtype),
        grid=(B, num_heads, S // tq, S // tkv),
        in_specs=[qspec, kvspec, kvspec],
        out_specs=pl.BlockSpec((None, tq, Dh), lambda b, h, qi, ki: (b, qi, h)),
        scratch_shapes=[pltpu.VMEM((tq, 1), jnp.float32),
                        pltpu.VMEM((tq, 1), jnp.float32),
                        pltpu.VMEM((tq, Dh), jnp.float32)],
        compiler_params=pltpu.CompilerParams(
            dimension_semantics=("parallel", "parallel", "parallel", "arbitrary"),
            vmem_limit_bytes=VMEM_LIMIT),
    )(q, k, v)


# ---------------------- LayerNorm + adaLN modulation -----------------------

def _ln_mod_kernel(x_ref, shift_ref, scale_ref, o_ref, *, eps):
    x = x_ref[...].astype(jnp.float32)               # (tS, D)
    mean = jnp.mean(x, axis=-1, keepdims=True)
    var = jnp.mean(jnp.square(x - mean), axis=-1, keepdims=True)
    xn = (x - mean) * jax.lax.rsqrt(var + eps)
    out = xn * (1.0 + scale_ref[...].astype(jnp.float32)) \
        + shift_ref[...].astype(jnp.float32)
    o_ref[...] = out.astype(o_ref.dtype)


def layernorm_modulate(x, shift, scale, eps=1e-6, ts=256):
    """LayerNorm(no affine, eps) * (1 + scale[:,None]) + shift[:,None]."""
    B, S, D = x.shape
    ts = _tile(S, ts)
    shift3 = shift.reshape(B, 1, D)
    scale3 = scale.reshape(B, 1, D)
    return pl.pallas_call(
        functools.partial(_ln_mod_kernel, eps=eps),
        out_shape=jax.ShapeDtypeStruct((B, S, D), x.dtype),
        grid=(B, S // ts),
        in_specs=[
            pl.BlockSpec((None, ts, D), lambda b, s: (b, s, 0)),
            pl.BlockSpec((None, 1, D), lambda b, s: (b, 0, 0)),
            pl.BlockSpec((None, 1, D), lambda b, s: (b, 0, 0)),
        ],
        out_specs=pl.BlockSpec((None, ts, D), lambda b, s: (b, s, 0)),
        compiler_params=pltpu.CompilerParams(
            dimension_semantics=("parallel", "parallel"),
            vmem_limit_bytes=VMEM_LIMIT),
    )(x, shift3, scale3)


# ------------------------------- JAX glue ----------------------------------

def rms_norm(x, weight, eps=1e-6):
    xf = x.astype(jnp.float32)
    var = jnp.mean(xf * xf, axis=-1, keepdims=True)
    return (xf * jax.lax.rsqrt(var + eps) * weight.astype(jnp.float32)
            ).astype(x.dtype)


def apply_rope(x, cos, sin):
    # x: (B, S, H, Dh); cos/sin: (S, Dh) with each frequency repeated twice.
    xf = x.astype(jnp.float32)
    xr = xf.reshape(*x.shape[:-1], -1, 2)
    x1, x2 = xr[..., 0], xr[..., 1]
    x_rot = jnp.stack([-x2, x1], axis=-1).reshape(x.shape)
    out = xf * cos[None, :, None, :] + x_rot * sin[None, :, None, :]
    return out.astype(x.dtype)


def flux_transformer_block(p, hidden_states, encoder_hidden_states, temb,
                           image_rotary_emb, num_heads):
    B, S_img, D = hidden_states.shape
    S_txt = encoder_hidden_states.shape[1]
    Dh = D // num_heads
    cos, sin = image_rotary_emb
    dtype = hidden_states.dtype

    # AdaLayerNormZero modulations from temb: tiny GEMMs, keep in plain XLA.
    silu_t = jax.nn.silu(temb.astype(jnp.float32))
    mod = silu_t @ p["norm1_lin_w"].astype(jnp.float32) \
        + p["norm1_lin_b"].astype(jnp.float32)
    (shift_msa, scale_msa, gate_msa,
     shift_mlp, scale_mlp, gate_mlp) = jnp.split(mod, 6, axis=-1)
    mod_c = silu_t @ p["norm1c_lin_w"].astype(jnp.float32) \
        + p["norm1c_lin_b"].astype(jnp.float32)
    (c_shift_msa, c_scale_msa, c_gate_msa,
     c_shift_mlp, c_scale_mlp, c_gate_mlp) = jnp.split(mod_c, 6, axis=-1)

    norm_h = layernorm_modulate(hidden_states, shift_msa, scale_msa)
    norm_c = layernorm_modulate(encoder_hidden_states, c_shift_msa, c_scale_msa)

    # Fused QKV projections (single GEMM per stream).
    qkv = linear3d(norm_h, p["to_qkv_w"], p["to_qkv_b"])        # (B,S_img,3D)
    q, k, v = jnp.split(qkv, 3, axis=-1)
    qkv_c = linear3d(norm_c, p["add_qkv_w"], p["add_qkv_b"])    # (B,S_txt,3D)
    cq, ck, cv = jnp.split(qkv_c, 3, axis=-1)

    def heads(x):  # (B,S,D) -> (B,S,H,Dh) : free reshape, no transpose
        return x.reshape(x.shape[0], x.shape[1], num_heads, Dh)

    q = rms_norm(heads(q), p["norm_q_w"])
    k = rms_norm(heads(k), p["norm_k_w"])
    cq = rms_norm(heads(cq), p["norm_added_q_w"])
    ck = rms_norm(heads(ck), p["norm_added_k_w"])

    # Joint attention over [text ; image] with RoPE on Q and K.
    # TODO(synk): RoPE/RMSNorm could be fused into the attention kernel to
    # save the extra q/k HBM passes (per-position norm-weight switch needed).
    S_tot = S_txt + S_img
    q_all = apply_rope(jnp.concatenate([cq, q], axis=1), cos, sin
                       ).reshape(B, S_tot, D)
    k_all = apply_rope(jnp.concatenate([ck, k], axis=1), cos, sin
                       ).reshape(B, S_tot, D)
    v_all = jnp.concatenate([cv, v], axis=1).reshape(B, S_tot, D)

    attn = attention(q_all, k_all, v_all, num_heads)            # (B,S_tot,D)
    context_attn, img_attn = attn[:, :S_txt], attn[:, S_txt:]

    img_attn = linear3d(img_attn, p["to_out_w"], p["to_out_b"])
    context_attn = linear3d(context_attn, p["to_add_out_w"], p["to_add_out_b"])

    # TODO(synk): residual + gate adds left to XLA fusion; could be folded into
    # the preceding matmul epilogues via input_output_aliases.
    hidden_states = hidden_states + gate_msa[:, None, :].astype(dtype) * img_attn
    norm_h2 = layernorm_modulate(hidden_states, shift_mlp, scale_mlp)
    ff = mlp(norm_h2, p["ff1_w"], p["ff1_b"], p["ff2_w"], p["ff2_b"])
    hidden_states = hidden_states + gate_mlp[:, None, :].astype(dtype) * ff

    encoder_hidden_states = (encoder_hidden_states
                             + c_gate_msa[:, None, :].astype(dtype) * context_attn)
    norm_c2 = layernorm_modulate(encoder_hidden_states, c_shift_mlp, c_scale_mlp)
    ffc = mlp(norm_c2, p["ffc1_w"], p["ffc1_b"], p["ffc2_w"], p["ffc2_b"])
    encoder_hidden_states = (encoder_hidden_states
                             + c_gate_mlp[:, None, :].astype(dtype) * ffc)
    # TODO(synk): fp16 clip(-65504, 65504) from the torch block skipped (bf16 run).

    return encoder_hidden_states, hidden_states


def tracing_transformer_block_wrapper(block_params, hidden_states,
                                      encoder_hidden_states, temb,
                                      image_rotary_emb, num_heads):
    """Mirrors TracingTransformerBlockWrapper.forward: loop over blocks."""
    for p in block_params:
        encoder_hidden_states, hidden_states = flux_transformer_block(
            p, hidden_states, encoder_hidden_states, temb, image_rotary_emb,
            num_heads)
    return encoder_hidden_states, hidden_states


# --------------------------- parameter creation -----------------------------

def init_block_params(key, dim, head_dim, mlp_dim, dtype=jnp.bfloat16):
    specs = {
        "norm1_lin": (dim, 6 * dim),
        "norm1c_lin": (dim, 6 * dim),
        "to_qkv": (dim, 3 * dim),        # fused to_q/to_k/to_v
        "add_qkv": (dim, 3 * dim),       # fused add_q/add_k/add_v
        "to_out": (dim, dim), "to_add_out": (dim, dim),
        "ff1": (dim, mlp_dim), "ff2": (mlp_dim, dim),
        "ffc1": (dim, mlp_dim), "ffc2": (mlp_dim, dim),
    }
    p = {}
    keys = jax.random.split(key, len(specs))
    for (name, (din, dout)), k in zip(sorted(specs.items()), keys):
        w = 0.02 * jax.random.normal(k, (din, dout), jnp.float32)
        p[name + "_w"] = w.astype(dtype)
        p[name + "_b"] = jnp.zeros((dout,), dtype)
    for name in ("norm_q", "norm_k", "norm_added_q", "norm_added_k"):
        p[name + "_w"] = jnp.ones((head_dim,), dtype)
    return p


# --------------------------------- main -------------------------------------

if __name__ == "__main__":
    # Small but Flux-shaped: head_dim=128 (lane-aligned), 2 heads -> D=256.
    B, S_img, S_txt, H, Dh = 2, 24, 8, 2, 128
    D = H * Dh
    mlp_dim = 4 * D
    n_blocks = 2
    dtype = jnp.bfloat16

    key = jax.random.PRNGKey(0)
    k_hs, k_ehs, k_temb, k_params = jax.random.split(key, 4)
    hidden_states = jax.random.normal(k_hs, (B, S_img, D), jnp.float32).astype(dtype)
    encoder_hidden_states = jax.random.normal(
        k_ehs, (B, S_txt, D), jnp.float32).astype(dtype)
    temb = jax.random.normal(k_temb, (B, D), jnp.float32).astype(dtype)

    # Rotary embeddings over the concatenated [text ; image] sequence.
    S_tot = S_txt + S_img
    pos = jnp.arange(S_tot, dtype=jnp.float32)
    inv_freq = 1.0 / (10000.0 ** (jnp.arange(0, Dh, 2, dtype=jnp.float32) / Dh))
    angles = pos[:, None] * inv_freq[None, :]
    cos = jnp.repeat(jnp.cos(angles), 2, axis=-1)    # (S_tot, Dh)
    sin = jnp.repeat(jnp.sin(angles), 2, axis=-1)    # (S_tot, Dh)
    image_rotary_emb = (cos, sin)

    block_params = [init_block_params(k, D, Dh, mlp_dim, dtype)
                    for k in jax.random.split(k_params, n_blocks)]

    fwd = jax.jit(functools.partial(tracing_transformer_block_wrapper,
                                    num_heads=H))
    enc_out, hid_out = fwd(block_params, hidden_states, encoder_hidden_states,
                           temb, image_rotary_emb)
    jax.block_until_ready((enc_out, hid_out))

    assert enc_out.shape == (B, S_txt, D) and hid_out.shape == (B, S_img, D)
    assert bool(jnp.all(jnp.isfinite(enc_out.astype(jnp.float32))))
    assert bool(jnp.all(jnp.isfinite(hid_out.astype(jnp.float32))))
    print("KERNEL_OK")
</pallas_src>

<mosaic_0001>
module attributes {stable_mosaic.version = 11 : i64} {
  func.func @_ln_mod_kernel(%arg0: i32, %arg1: i32, %arg2: memref<1x24x256xbf16, #tpu.memory_space<vmem>>, %arg3: memref<1x1x256xf32, #tpu.memory_space<vmem>>, %arg4: memref<1x1x256xf32, #tpu.memory_space<vmem>>, %arg5: memref<1x24x256xbf16, #tpu.memory_space<vmem>>) attributes {dimension_semantics = [#tpu.dimension_semantics<parallel>, #tpu.dimension_semantics<parallel>], iteration_bounds = array<i64: 2, 1>, scalar_prefetch = 0 : i64, scratch_operands = 0 : i64, tpu.core_type = #tpu.core_type<tc>, window_params = [{transform_indices = @transform_0, window_bounds = array<i64: 1, 24, 256>}, {transform_indices = @transform_1, window_bounds = array<i64: 1, 1, 256>}, {transform_indices = @transform_2, window_bounds = array<i64: 1, 1, 256>}, {transform_indices = @transform_3, window_bounds = array<i64: 1, 24, 256>}]} {
    %c0 = arith.constant 0 : index
    %c0_0 = arith.constant 0 : index
    %c0_1 = arith.constant 0 : index
    %0 = vector.load %arg2[%c0, %c0_0, %c0_1] : memref<1x24x256xbf16, #tpu.memory_space<vmem>>, vector<1x24x256xbf16>
    %1 = vector.shape_cast %0 : vector<1x24x256xbf16> to vector<24x256xbf16>
    %2 = arith.extf %1 : vector<24x256xbf16> to vector<24x256xf32>
    %cst = arith.constant dense<0.000000e+00> : vector<24xf32>
    %3 = vector.multi_reduction <add>, %2, %cst [1] : vector<24x256xf32> to vector<24xf32>
    %4 = vector.shape_cast %3 : vector<24xf32> to vector<24x1xf32>
    %cst_2 = arith.constant 2.560000e+02 : f32
    %5 = vector.broadcast %cst_2 : f32 to vector<24x1xf32>
    %6 = arith.divf %4, %5 : vector<24x1xf32>
    %7 = vector.broadcast %6 : vector<24x1xf32> to vector<24x256xf32>
    %8 = arith.subf %2, %7 : vector<24x256xf32>
    %9 = arith.mulf %8, %8 : vector<24x256xf32>
    %cst_3 = arith.constant dense<0.000000e+00> : vector<24xf32>
    %10 = vector.multi_reduction <add>, %9, %cst_3 [1] : vector<24x256xf32> to vector<24xf32>
    %11 = vector.shape_cast %10 : vector<24xf32> to vector<24x1xf32>
    %cst_4 = arith.constant 2.560000e+02 : f32
    %12 = vector.broadcast %cst_4 : f32 to vector<24x1xf32>
    %13 = arith.divf %11, %12 : vector<24x1xf32>
    %14 = vector.broadcast %6 : vector<24x1xf32> to vector<24x256xf32>
    %15 = arith.subf %2, %14 : vector<24x256xf32>
    %cst_5 = arith.constant 9.99999997E-7 : f32
    %16 = vector.broadcast %cst_5 : f32 to vector<24x1xf32>
    %17 = arith.addf %13, %16 : vector<24x1xf32>
    %18 = math.rsqrt %17 : vector<24x1xf32>
    %19 = vector.broadcast %18 : vector<24x1xf32> to vector<24x256xf32>
    %20 = arith.mulf %15, %19 : vector<24x256xf32>
    %c0_6 = arith.constant 0 : index
    %c0_7 = arith.constant 0 : index
    %c0_8 = arith.constant 0 : index
    %21 = vector.load %arg4[%c0_6, %c0_7, %c0_8] : memref<1x1x256xf32, #tpu.memory_space<vmem>>, vector<1x1x256xf32>
    %22 = vector.shape_cast %21 : vector<1x1x256xf32> to vector<1x256xf32>
    %cst_9 = arith.constant 1.000000e+00 : f32
    %23 = vector.broadcast %cst_9 : f32 to vector<1x256xf32>
    %24 = arith.addf %23, %22 : vector<1x256xf32>
    %25 = vector.broadcast %24 : vector<1x256xf32> to vector<24x256xf32>
    %26 = arith.mulf %20, %25 : vector<24x256xf32>
    %c0_10 = arith.constant 0 : index
    %c0_11 = arith.constant 0 : index
    %c0_12 = arith.constant 0 : index
    %27 = vector.load %arg3[%c0_10, %c0_11, %c0_12] : memref<1x1x256xf32, #tpu.memory_space<vmem>>, vector<1x1x256xf32>
    %28 = vector.shape_cast %27 : vector<1x1x256xf32> to vector<1x256xf32>
    %29 = vector.broadcast %28 : vector<1x256xf32> to vector<24x256xf32>
    %30 = arith.addf %26, %29 : vector<24x256xf32>
    %31 = arith.truncf %30 : vector<24x256xf32> to vector<24x256xbf16>
    %c0_13 = arith.constant 0 : index
    %c0_14 = arith.constant 0 : index
    %c0_15 = arith.constant 0 : index
    %32 = vector.load %arg5[%c0_13, %c0_14, %c0_15] : memref<1x24x256xbf16, #tpu.memory_space<vmem>>, vector<1x24x256xbf16>
    %33 = vector.shape_cast %32 : vector<1x24x256xbf16> to vector<24x256xbf16>
    %34 = vector.shape_cast %31 : vector<24x256xbf16> to vector<1x24x256xbf16>
    tpu.vector_store %arg5[%c0_13, %c0_14, %c0_15], %34 {strides = array<i32>} : memref<1x24x256xbf16, #tpu.memory_space<vmem>>, vector<1x24x256xbf16>,
    return
  }
  func.func @transform_0(%arg0: i32, %arg1: i32) -> (i32, i32, i32) {
    %c0_i32 = arith.constant 0 : i32
    %c0_i32_0 = arith.constant 0 : i32
    return %arg0, %arg1, %c0_i32 : i32, i32, i32
  }
  func.func @transform_1(%arg0: i32, %arg1: i32) -> (i32, i32, i32) {
    %c0_i32 = arith.constant 0 : i32
    %c0_i32_0 = arith.constant 0 : i32
    %c0_i32_1 = arith.constant 0 : i32
    return %arg0, %c0_i32, %c0_i32_0 : i32, i32, i32
  }
  func.func @transform_2(%arg0: i32, %arg1: i32) -> (i32, i32, i32) {
    %c0_i32 = arith.constant 0 : i32
    %c0_i32_0 = arith.constant 0 : i32
    %c0_i32_1 = arith.constant 0 : i32
    return %arg0, %c0_i32, %c0_i32_0 : i32, i32, i32
  }
  func.func @transform_3(%arg0: i32, %arg1: i32) -> (i32, i32, i32) {
    %c0_i32 = arith.constant 0 : i32
    %c0_i32_0 = arith.constant 0 : i32
    return %arg0, %arg1, %c0_i32 : i32, i32, i32
  }
}

module attributes {stable_mosaic.version = 11 : i64} {
  func.func @_matmul_bias_kernel(%arg0: i32, %arg1: i32, %arg2: i32, %arg3: memref<48x256xbf16, #tpu.memory_space<vmem>>, %arg4: memref<256x256xbf16, #tpu.memory_space<vmem>>, %arg5: memref<1x256xbf16, #tpu.memory_space<vmem>>, %arg6: memref<48x256xbf16, #tpu.memory_space<vmem>>, %arg7: memref<48x256xf32, #tpu.memory_space<vmem>>) attributes {dimension_semantics = [#tpu.dimension_semantics<parallel>, #tpu.dimension_semantics<parallel>, #tpu.dimension_semantics<arbitrary>], iteration_bounds = array<i64: 1, 3, 1>, scalar_prefetch = 0 : i64, scratch_operands = 1 : i64, tpu.core_type = #tpu.core_type<tc>, window_params = [{transform_indices = @transform_0, window_bounds = array<i64: 48, 256>}, {transform_indices = @transform_1, window_bounds = array<i64: 256, 256>}, {transform_indices = @transform_2, window_bounds = array<i64: 1, 256>}, {transform_indices = @transform_3, window_bounds = array<i64: 48, 256>}]} {
    %c0_i32 = arith.constant 0 : i32
    %0 = arith.cmpi eq, %arg2, %c0_i32 : i32
    %1 = arith.extui %0 : i1 to i32
    %c0_i32_0 = arith.constant 0 : i32
    %2 = arith.cmpi ne, %1, %c0_i32_0 : i32
    scf.if %2 {
      %cst_10 = arith.constant 0.000000e+00 : f32
      %12 = vector.broadcast %cst_10 : f32 to vector<48x256xf32>
      %c0_11 = arith.constant 0 : index
      %c0_12 = arith.constant 0 : index
      %13 = vector.load %arg7[%c0_11, %c0_12] : memref<48x256xf32, #tpu.memory_space<vmem>>, vector<48x256xf32>
      tpu.vector_store %arg7[%c0_11, %c0_12], %12 {strides = array<i32>} : memref<48x256xf32, #tpu.memory_space<vmem>>, vector<48x256xf32>,
    } else {
    }
    %c0 = arith.constant 0 : index
    %c0_1 = arith.constant 0 : index
    %3 = vector.load %arg7[%c0, %c0_1] : memref<48x256xf32, #tpu.memory_space<vmem>>, vector<48x256xf32>
    %c0_2 = arith.constant 0 : index
    %c0_3 = arith.constant 0 : index
    %4 = vector.load %arg3[%c0_2, %c0_3] : memref<48x256xbf16, #tpu.memory_space<vmem>>, vector<48x256xbf16>
    %c0_4 = arith.constant 0 : index
    %c0_5 = arith.constant 0 : index
    %5 = vector.load %arg4[%c0_4, %c0_5] : memref<256x256xbf16, #tpu.memory_space<vmem>>, vector<256x256xbf16>
    %cst = arith.constant dense<0.000000e+00> : vector<48x256xf32>
    %6 = tpu.matmul %4, %5, %cst {dimension_numbers = #tpu.dot_dimension_numbers<[1], [0], [0], [1], [0, 0, 1, 1], [], []>} : vector<48x256xbf16>, vector<256x256xbf16>, vector<48x256xf32> -> vector<48x256xf32>
    %7 = arith.addf %3, %6 : vector<48x256xf32>
    %c0_6 = arith.constant 0 : index
    %c0_7 = arith.constant 0 : index
    %8 = vector.load %arg7[%c0_6, %c0_7] : memref<48x256xf32, #tpu.memory_space<vmem>>, vector<48x256xf32>
    tpu.vector_store %arg7[%c0_6, %c0_7], %7 {strides = array<i32>} : memref<48x256xf32, #tpu.memory_space<vmem>>, vector<48x256xf32>,
    %c0_i32_8 = arith.constant 0 : i32
    %9 = arith.cmpi eq, %arg2, %c0_i32_8 : i32
    %10 = arith.extui %9 : i1 to i32
    %c0_i32_9 = arith.constant 0 : i32
    %11 = arith.cmpi ne, %10, %c0_i32_9 : i32
    scf.if %11 {
      %c0_10 = arith.constant 0 : index
      %c0_11 = arith.constant 0 : index
      %12 = vector.load %arg7[%c0_10, %c0_11] : memref<48x256xf32, #tpu.memory_space<vmem>>, vector<48x256xf32>
      %c0_12 = arith.constant 0 : index
      %c0_13 = arith.constant 0 : index
      %13 = vector.load %arg5[%c0_12, %c0_13] : memref<1x256xbf16, #tpu.memory_space<vmem>>, vector<1x256xbf16>
      %14 = arith.extf %13 : vector<1x256xbf16> to vector<1x256xf32>
      %15 = vector.broadcast %14 : vector<1x256xf32> to vector<48x256xf32>
      %16 = arith.addf %12, %15 : vector<48x256xf32>
      %17 = arith.truncf %16 : vector<48x256xf32> to vector<48x256xbf16>
      %c0_14 = arith.constant 0 : index
      %c0_15 = arith.constant 0 : index
      %18 = vector.load %arg6[%c0_14, %c0_15] : memref<48x256xbf16, #tpu.memory_space<vmem>>, vector<48x256xbf16>
      tpu.vector_store %arg6[%c0_14, %c0_15], %17 {strides = array<i32>} : memref<48x256xbf16, #tpu.memory_space<vmem>>, vector<48x256xbf16>,
    } else {
    }
    return
  }
  func.func @transform_0(%arg0: i32, %arg1: i32, %arg2: i32) -> (i32, i32) {
    %c0_i32 = arith.constant 0 : i32
    return %arg0, %arg2 : i32, i32
  }
  func.func @transform_1(%arg0: i32, %arg1: i32, %arg2: i32) -> (i32, i32) {
    %c0_i32 = arith.constant 0 : i32
    return %arg2, %arg1 : i32, i32
  }
  func.func @transform_2(%arg0: i32, %arg1: i32, %arg2: i32) -> (i32, i32) {
    %c0_i32 = arith.constant 0 : i32
    %c0_i32_0 = arith.constant 0 : i32
    return %c0_i32, %arg1 : i32, i32
  }
  func.func @transform_3(%arg0: i32, %arg1: i32, %arg2: i32) -> (i32, i32) {
    %c0_i32 = arith.constant 0 : i32
    return %arg0, %arg1 : i32, i32
  }
}

module attributes {stable_mosaic.version = 11 : i64} {
  func.func @_ln_mod_kernel(%arg0: i32, %arg1: i32, %arg2: memref<1x8x256xbf16, #tpu.memory_space<vmem>>, %arg3: memref<1x1x256xf32, #tpu.memory_space<vmem>>, %arg4: memref<1x1x256xf32, #tpu.memory_space<vmem>>, %arg5: memref<1x8x256xbf16, #tpu.memory_space<vmem>>) attributes {dimension_semantics = [#tpu.dimension_semantics<parallel>, #tpu.dimension_semantics<parallel>], iteration_bounds = array<i64: 2, 1>, scalar_prefetch = 0 : i64, scratch_operands = 0 : i64, tpu.core_type = #tpu.core_type<tc>, window_params = [{transform_indices = @transform_0, window_bounds = array<i64: 1, 8, 256>}, {transform_indices = @transform_1, window_bounds = array<i64: 1, 1, 256>}, {transform_indices = @transform_2, window_bounds = array<i64: 1, 1, 256>}, {transform_indices = @transform_3, window_bounds = array<i64: 1, 8, 256>}]} {
    %c0 = arith.constant 0 : index
    %c0_0 = arith.constant 0 : index
    %c0_1 = arith.constant 0 : index
    %0 = vector.load %arg2[%c0, %c0_0, %c0_1] : memref<1x8x256xbf16, #tpu.memory_space<vmem>>, vector<1x8x256xbf16>
    %1 = vector.shape_cast %0 : vector<1x8x256xbf16> to vector<8x256xbf16>
    %2 = arith.extf %1 : vector<8x256xbf16> to vector<8x256xf32>
    %cst = arith.constant dense<0.000000e+00> : vector<8xf32>
    %3 = vector.multi_reduction <add>, %2, %cst [1] : vector<8x256xf32> to vector<8xf32>
    %4 = vector.shape_cast %3 : vector<8xf32> to vector<8x1xf32>
    %cst_2 = arith.constant 2.560000e+02 : f32
    %5 = vector.broadcast %cst_2 : f32 to vector<8x1xf32>
    %6 = arith.divf %4, %5 : vector<8x1xf32>
    %7 = vector.broadcast %6 : vector<8x1xf32> to vector<8x256xf32>
    %8 = arith.subf %2, %7 : vector<8x256xf32>
    %9 = arith.mulf %8, %8 : vector<8x256xf32>
    %cst_3 = arith.constant dense<0.000000e+00> : vector<8xf32>
    %10 = vector.multi_reduction <add>, %9, %cst_3 [1] : vector<8x256xf32> to vector<8xf32>
    %11 = vector.shape_cast %10 : vector<8xf32> to vector<8x1xf32>
    %cst_4 = arith.constant 2.560000e+02 : f32
    %12 = vector.broadcast %cst_4 : f32 to vector<8x1xf32>
    %13 = arith.divf %11, %12 : vector<8x1xf32>
    %14 = vector.broadcast %6 : vector<8x1xf32> to vector<8x256xf32>
    %15 = arith.subf %2, %14 : vector<8x256xf32>
    %cst_5 = arith.constant 9.99999997E-7 : f32
    %16 = vector.broadcast %cst_5 : f32 to vector<8x1xf32>
    %17 = arith.addf %13, %16 : vector<8x1xf32>
    %18 = math.rsqrt %17 : vector<8x1xf32>
    %19 = vector.broadcast %18 : vector<8x1xf32> to vector<8x256xf32>
    %20 = arith.mulf %15, %19 : vector<8x256xf32>
    %c0_6 = arith.constant 0 : index
    %c0_7 = arith.constant 0 : index
    %c0_8 = arith.constant 0 : index
    %21 = vector.load %arg4[%c0_6, %c0_7, %c0_8] : memref<1x1x256xf32, #tpu.memory_space<vmem>>, vector<1x1x256xf32>
    %22 = vector.shape_cast %21 : vector<1x1x256xf32> to vector<1x256xf32>
    %cst_9 = arith.constant 1.000000e+00 : f32
    %23 = vector.broadcast %cst_9 : f32 to vector<1x256xf32>
    %24 = arith.addf %23, %22 : vector<1x256xf32>
    %25 = vector.broadcast %24 : vector<1x256xf32> to vector<8x256xf32>
    %26 = arith.mulf %20, %25 : vector<8x256xf32>
    %c0_10 = arith.constant 0 : index
    %c0_11 = arith.constant 0 : index
    %c0_12 = arith.constant 0 : index
    %27 = vector.load %arg3[%c0_10, %c0_11, %c0_12] : memref<1x1x256xf32, #tpu.memory_space<vmem>>, vector<1x1x256xf32>
    %28 = vector.shape_cast %27 : vector<1x1x256xf32> to vector<1x256xf32>
    %29 = vector.broadcast %28 : vector<1x256xf32> to vector<8x256xf32>
    %30 = arith.addf %26, %29 : vector<8x256xf32>
    %31 = arith.truncf %30 : vector<8x256xf32> to vector<8x256xbf16>
    %c0_13 = arith.constant 0 : index
    %c0_14 = arith.constant 0 : index
    %c0_15 = arith.constant 0 : index
    %32 = vector.load %arg5[%c0_13, %c0_14, %c0_15] : memref<1x8x256xbf16, #tpu.memory_space<vmem>>, vector<1x8x256xbf16>
    %33 = vector.shape_cast %32 : vector<1x8x256xbf16> to vector<8x256xbf16>
    %34 = vector.shape_cast %31 : vector<8x256xbf16> to vector<1x8x256xbf16>
    tpu.vector_store %arg5[%c0_13, %c0_14, %c0_15], %34 {strides = array<i32>} : memref<1x8x256xbf16, #tpu.memory_space<vmem>>, vector<1x8x256xbf16>,
    return
  }
  func.func @transform_0(%arg0: i32, %arg1: i32) -> (i32, i32, i32) {
    %c0_i32 = arith.constant 0 : i32
    %c0_i32_0 = arith.constant 0 : i32
    return %arg0, %arg1, %c0_i32 : i32, i32, i32
  }
  func.func @transform_1(%arg0: i32, %arg1: i32) -> (i32, i32, i32) {
    %c0_i32 = arith.constant 0 : i32
    %c0_i32_0 = arith.constant 0 : i32
    %c0_i32_1 = arith.constant 0 : i32
    return %arg0, %c0_i32, %c0_i32_0 : i32, i32, i32
  }
  func.func @transform_2(%arg0: i32, %arg1: i32) -> (i32, i32, i32) {
    %c0_i32 = arith.constant 0 : i32
    %c0_i32_0 = arith.constant 0 : i32
    %c0_i32_1 = arith.constant 0 : i32
    return %arg0, %c0_i32, %c0_i32_0 : i32, i32, i32
  }
  func.func @transform_3(%arg0: i32, %arg1: i32) -> (i32, i32, i32) {
    %c0_i32 = arith.constant 0 : i32
    %c0_i32_0 = arith.constant 0 : i32
    return %arg0, %arg1, %c0_i32 : i32, i32, i32
  }
}

module attributes {stable_mosaic.version = 11 : i64} {
  func.func @_matmul_bias_kernel(%arg0: i32, %arg1: i32, %arg2: i32, %arg3: memref<16x256xbf16, #tpu.memory_space<vmem>>, %arg4: memref<256x256xbf16, #tpu.memory_space<vmem>>, %arg5: memref<1x256xbf16, #tpu.memory_space<vmem>>, %arg6: memref<16x256xbf16, #tpu.memory_space<vmem>>, %arg7: memref<16x256xf32, #tpu.memory_space<vmem>>) attributes {dimension_semantics = [#tpu.dimension_semantics<parallel>, #tpu.dimension_semantics<parallel>, #tpu.dimension_semantics<arbitrary>], iteration_bounds = array<i64: 1, 3, 1>, scalar_prefetch = 0 : i64, scratch_operands = 1 : i64, tpu.core_type = #tpu.core_type<tc>, window_params = [{transform_indices = @transform_0, window_bounds = array<i64: 16, 256>}, {transform_indices = @transform_1, window_bounds = array<i64: 256, 256>}, {transform_indices = @transform_2, window_bounds = array<i64: 1, 256>}, {transform_indices = @transform_3, window_bounds = array<i64: 16, 256>}]} {
    %c0_i32 = arith.constant 0 : i32
    %0 = arith.cmpi eq, %arg2, %c0_i32 : i32
    %1 = arith.extui %0 : i1 to i32
    %c0_i32_0 = arith.constant 0 : i32
    %2 = arith.cmpi ne, %1, %c0_i32_0 : i32
    scf.if %2 {
      %cst_10 = arith.constant 0.000000e+00 : f32
      %12 = vector.broadcast %cst_10 : f32 to vector<16x256xf32>
      %c0_11 = arith.constant 0 : index
      %c0_12 = arith.constant 0 : index
      %13 = vector.load %arg7[%c0_11, %c0_12] : memref<16x256xf32, #tpu.memory_space<vmem>>, vector<16x256xf32>
      tpu.vector_store %arg7[%c0_11, %c0_12], %12 {strides = array<i32>} : memref<16x256xf32, #tpu.memory_space<vmem>>, vector<16x256xf32>,
    } else {
    }
    %c0 = arith.constant 0 : index
    %c0_1 = arith.constant 0 : index
    %3 = vector.load %arg7[%c0, %c0_1] : memref<16x256xf32, #tpu.memory_space<vmem>>, vector<16x256xf32>
    %c0_2 = arith.constant 0 : index
    %c0_3 = arith.constant 0 : index
    %4 = vector.load %arg3[%c0_2, %c0_3] : memref<16x256xbf16, #tpu.memory_space<vmem>>, vector<16x256xbf16>
    %c0_4 = arith.constant 0 : index
    %c0_5 = arith.constant 0 : index
    %5 = vector.load %arg4[%c0_4, %c0_5] : memref<256x256xbf16, #tpu.memory_space<vmem>>, vector<256x256xbf16>
    %cst = arith.constant dense<0.000000e+00> : vector<16x256xf32>
    %6 = tpu.matmul %4, %5, %cst {dimension_numbers = #tpu.dot_dimension_numbers<[1], [0], [0], [1], [0, 0, 1, 1], [], []>} : vector<16x256xbf16>, vector<256x256xbf16>, vector<16x256xf32> -> vector<16x256xf32>
    %7 = arith.addf %3, %6 : vector<16x256xf32>
    %c0_6 = arith.constant 0 : index
    %c0_7 = arith.constant 0 : index
    %8 = vector.load %arg7[%c0_6, %c0_7] : memref<16x256xf32, #tpu.memory_space<vmem>>, vector<16x256xf32>
    tpu.vector_store %arg7[%c0_6, %c0_7], %7 {strides = array<i32>} : memref<16x256xf32, #tpu.memory_space<vmem>>, vector<16x256xf32>,
    %c0_i32_8 = arith.constant 0 : i32
    %9 = arith.cmpi eq, %arg2, %c0_i32_8 : i32
    %10 = arith.extui %9 : i1 to i32
    %c0_i32_9 = arith.constant 0 : i32
    %11 = arith.cmpi ne, %10, %c0_i32_9 : i32
    scf.if %11 {
      %c0_10 = arith.constant 0 : index
      %c0_11 = arith.constant 0 : index
      %12 = vector.load %arg7[%c0_10, %c0_11] : memref<16x256xf32, #tpu.memory_space<vmem>>, vector<16x256xf32>
      %c0_12 = arith.constant 0 : index
      %c0_13 = arith.constant 0 : index
      %13 = vector.load %arg5[%c0_12, %c0_13] : memref<1x256xbf16, #tpu.memory_space<vmem>>, vector<1x256xbf16>
      %14 = arith.extf %13 : vector<1x256xbf16> to vector<1x256xf32>
      %15 = vector.broadcast %14 : vector<1x256xf32> to vector<16x256xf32>
      %16 = arith.addf %12, %15 : vector<16x256xf32>
      %17 = arith.truncf %16 : vector<16x256xf32> to vector<16x256xbf16>
      %c0_14 = arith.constant 0 : index
      %c0_15 = arith.constant 0 : index
      %18 = vector.load %arg6[%c0_14, %c0_15] : memref<16x256xbf16, #tpu.memory_space<vmem>>, vector<16x256xbf16>
      tpu.vector_store %arg6[%c0_14, %c0_15], %17 {strides = array<i32>} : memref<16x256xbf16, #tpu.memory_space<vmem>>, vector<16x256xbf16>,
    } else {
    }
    return
  }
  func.func @transform_0(%arg0: i32, %arg1: i32, %arg2: i32) -> (i32, i32) {
    %c0_i32 = arith.constant 0 : i32
    return %arg0, %arg2 : i32, i32
  }
  func.func @transform_1(%arg0: i32, %arg1: i32, %arg2: i32) -> (i32, i32) {
    %c0_i32 = arith.constant 0 : i32
    return %arg2, %arg1 : i32, i32
  }
  func.func @transform_2(%arg0: i32, %arg1: i32, %arg2: i32) -> (i32, i32) {
    %c0_i32 = arith.constant 0 : i32
    %c0_i32_0 = arith.constant 0 : i32
    return %c0_i32, %arg1 : i32, i32
  }
  func.func @transform_3(%arg0: i32, %arg1: i32, %arg2: i32) -> (i32, i32) {
    %c0_i32 = arith.constant 0 : i32
    return %arg0, %arg1 : i32, i32
  }
}

module attributes {stable_mosaic.version = 11 : i64} {
  func.func @_matmul_bias_kernel(%arg0: i32, %arg1: i32, %arg2: i32, %arg3: memref<16x256xbf16, #tpu.memory_space<vmem>>, %arg4: memref<256x256xbf16, #tpu.memory_space<vmem>>, %arg5: memref<1x256xbf16, #tpu.memory_space<vmem>>, %arg6: memref<16x256xbf16, #tpu.memory_space<vmem>>, %arg7: memref<16x256xf32, #tpu.memory_space<vmem>>) attributes {dimension_semantics = [#tpu.dimension_semantics<parallel>, #tpu.dimension_semantics<parallel>, #tpu.dimension_semantics<arbitrary>], iteration_bounds = array<i64: 1, 1, 1>, scalar_prefetch = 0 : i64, scratch_operands = 1 : i64, tpu.core_type = #tpu.core_type<tc>, window_params = [{transform_indices = @transform_0, window_bounds = array<i64: 16, 256>}, {transform_indices = @transform_1, window_bounds = array<i64: 256, 256>}, {transform_indices = @transform_2, window_bounds = array<i64: 1, 256>}, {transform_indices = @transform_3, window_bounds = array<i64: 16, 256>}]} {
    %c0_i32 = arith.constant 0 : i32
    %0 = arith.cmpi eq, %arg2, %c0_i32 : i32
    %1 = arith.extui %0 : i1 to i32
    %c0_i32_0 = arith.constant 0 : i32
    %2 = arith.cmpi ne, %1, %c0_i32_0 : i32
    scf.if %2 {
      %cst_10 = arith.constant 0.000000e+00 : f32
      %12 = vector.broadcast %cst_10 : f32 to vector<16x256xf32>
      %c0_11 = arith.constant 0 : index
      %c0_12 = arith.constant 0 : index
      %13 = vector.load %arg7[%c0_11, %c0_12] : memref<16x256xf32, #tpu.memory_space<vmem>>, vector<16x256xf32>
      tpu.vector_store %arg7[%c0_11, %c0_12], %12 {strides = array<i32>} : memref<16x256xf32, #tpu.memory_space<vmem>>, vector<16x256xf32>,
    } else {
    }
    %c0 = arith.constant 0 : index
    %c0_1 = arith.constant 0 : index
    %3 = vector.load %arg7[%c0, %c0_1] : memref<16x256xf32, #tpu.memory_space<vmem>>, vector<16x256xf32>
    %c0_2 = arith.constant 0 : index
    %c0_3 = arith.constant 0 : index
    %4 = vector.load %arg3[%c0_2, %c0_3] : memref<16x256xbf16, #tpu.memory_space<vmem>>, vector<16x256xbf16>
    %c0_4 = arith.constant 0 : index
    %c0_5 = arith.constant 0 : index
    %5 = vector.load %arg4[%c0_4, %c0_5] : memref<256x256xbf16, #tpu.memory_space<vmem>>, vector<256x256xbf16>
    %cst = arith.constant dense<0.000000e+00> : vector<16x256xf32>
    %6 = tpu.matmul %4, %5, %cst {dimension_numbers = #tpu.dot_dimension_numbers<[1], [0], [0], [1], [0, 0, 1, 1], [], []>} : vector<16x256xbf16>, vector<256x256xbf16>, vector<16x256xf32> -> vector<16x256xf32>
    %7 = arith.addf %3, %6 : vector<16x256xf32>
    %c0_6 = arith.constant 0 : index
    %c0_7 = arith.constant 0 : index
    %8 = vector.load %arg7[%c0_6, %c0_7] : memref<16x256xf32, #tpu.memory_space<vmem>>, vector<16x256xf32>
    tpu.vector_store %arg7[%c0_6, %c0_7], %7 {strides = array<i32>} : memref<16x256xf32, #tpu.memory_space<vmem>>, vector<16x256xf32>,
    %c0_i32_8 = arith.constant 0 : i32
    %9 = arith.cmpi eq, %arg2, %c0_i32_8 : i32
    %10 = arith.extui %9 : i1 to i32
    %c0_i32_9 = arith.constant 0 : i32
    %11 = arith.cmpi ne, %10, %c0_i32_9 : i32
    scf.if %11 {
      %c0_10 = arith.constant 0 : index
      %c0_11 = arith.constant 0 : index
      %12 = vector.load %arg7[%c0_10, %c0_11] : memref<16x256xf32, #tpu.memory_space<vmem>>, vector<16x256xf32>
      %c0_12 = arith.constant 0 : index
      %c0_13 = arith.constant 0 : index
      %13 = vector.load %arg5[%c0_12, %c0_13] : memref<1x256xbf16, #tpu.memory_space<vmem>>, vector<1x256xbf16>
      %14 = arith.extf %13 : vector<1x256xbf16> to vector<1x256xf32>
      %15 = vector.broadcast %14 : vector<1x256xf32> to vector<16x256xf32>
      %16 = arith.addf %12, %15 : vector<16x256xf32>
      %17 = arith.truncf %16 : vector<16x256xf32> to vector<16x256xbf16>
      %c0_14 = arith.constant 0 : index
      %c0_15 = arith.constant 0 : index
      %18 = vector.load %arg6[%c0_14, %c0_15] : memref<16x256xbf16, #tpu.memory_space<vmem>>, vector<16x256xbf16>
      tpu.vector_store %arg6[%c0_14, %c0_15], %17 {strides = array<i32>} : memref<16x256xbf16, #tpu.memory_space<vmem>>, vector<16x256xbf16>,
    } else {
    }
    return
  }
  func.func @transform_0(%arg0: i32, %arg1: i32, %arg2: i32) -> (i32, i32) {
    %c0_i32 = arith.constant 0 : i32
    return %arg0, %arg2 : i32, i32
  }
  func.func @transform_1(%arg0: i32, %arg1: i32, %arg2: i32) -> (i32, i32) {
    %c0_i32 = arith.constant 0 : i32
    return %arg2, %arg1 : i32, i32
  }
  func.func @transform_2(%arg0: i32, %arg1: i32, %arg2: i32) -> (i32, i32) {
    %c0_i32 = arith.constant 0 : i32
    %c0_i32_0 = arith.constant 0 : i32
    return %c0_i32, %arg1 : i32, i32
  }
  func.func @transform_3(%arg0: i32, %arg1: i32, %arg2: i32) -> (i32, i32) {
    %c0_i32 = arith.constant 0 : i32
    return %arg0, %arg1 : i32, i32
  }
}

module attributes {stable_mosaic.version = 11 : i64} {
  func.func @_flash_attn_kernel(%arg0: i32, %arg1: i32, %arg2: i32, %arg3: i32, %arg4: memref<1x32x128xbf16, #tpu.memory_space<vmem>>, %arg5: memref<1x32x128xbf16, #tpu.memory_space<vmem>>, %arg6: memref<1x32x128xbf16, #tpu.memory_space<vmem>>, %arg7: memref<1x32x128xbf16, #tpu.memory_space<vmem>>, %arg8: memref<32x1xf32, #tpu.memory_space<vmem>>, %arg9: memref<32x1xf32, #tpu.memory_space<vmem>>, %arg10: memref<32x128xf32, #tpu.memory_space<vmem>>) attributes {dimension_semantics = [#tpu.dimension_semantics<parallel>, #tpu.dimension_semantics<parallel>, #tpu.dimension_semantics<parallel>, #tpu.dimension_semantics<arbitrary>], iteration_bounds = array<i64: 2, 2, 1, 1>, scalar_prefetch = 0 : i64, scratch_operands = 3 : i64, tpu.core_type = #tpu.core_type<tc>, window_params = [{transform_indices = @transform_0, window_bounds = array<i64: 1, 32, 128>}, {transform_indices = @transform_1, window_bounds = array<i64: 1, 32, 128>}, {transform_indices = @transform_2, window_bounds = array<i64: 1, 32, 128>}, {transform_indices = @transform_3, window_bounds = array<i64: 1, 32, 128>}]} {
    %c0_i32 = arith.constant 0 : i32
    %0 = arith.cmpi eq, %arg3, %c0_i32 : i32
    %1 = arith.extui %0 : i1 to i32
    %c0_i32_0 = arith.constant 0 : i32
    %2 = arith.cmpi ne, %1, %c0_i32_0 : i32
    scf.if %2 {
      %cst_27 = arith.constant 0xFF800000 : f32
      %38 = vector.broadcast %cst_27 : f32 to vector<32x1xf32>
      %c0_28 = arith.constant 0 : index
      %c0_29 = arith.constant 0 : index
      %39 = vector.load %arg8[%c0_28, %c0_29] : memref<32x1xf32, #tpu.memory_space<vmem>>, vector<32x1xf32>
      tpu.vector_store %arg8[%c0_28, %c0_29], %38 {strides = array<i32>} : memref<32x1xf32, #tpu.memory_space<vmem>>, vector<32x1xf32>,
      %cst_30 = arith.constant 0.000000e+00 : f32
      %40 = vector.broadcast %cst_30 : f32 to vector<32x1xf32>
      %c0_31 = arith.constant 0 : index
      %c0_32 = arith.constant 0 : index
      %41 = vector.load %arg9[%c0_31, %c0_32] : memref<32x1xf32, #tpu.memory_space<vmem>>, vector<32x1xf32>
      tpu.vector_store %arg9[%c0_31, %c0_32], %40 {strides = array<i32>} : memref<32x1xf32, #tpu.memory_space<vmem>>, vector<32x1xf32>,
      %cst_33 = arith.constant 0.000000e+00 : f32
      %42 = vector.broadcast %cst_33 : f32 to vector<32x128xf32>
      %c0_34 = arith.constant 0 : index
      %c0_35 = arith.constant 0 : index
      %43 = vector.load %arg10[%c0_34, %c0_35] : memref<32x128xf32, #tpu.memory_space<vmem>>, vector<32x128xf32>
      tpu.vector_store %arg10[%c0_34, %c0_35], %42 {strides = array<i32>} : memref<32x128xf32, #tpu.memory_space<vmem>>, vector<32x128xf32>,
    } else {
    }
    %c0 = arith.constant 0 : index
    %c0_1 = arith.constant 0 : index
    %c0_2 = arith.constant 0 : index
    %3 = vector.load %arg4[%c0, %c0_1, %c0_2] : memref<1x32x128xbf16, #tpu.memory_space<vmem>>, vector<1x32x128xbf16>
    %4 = vector.shape_cast %3 : vector<1x32x128xbf16> to vector<32x128xbf16>
    %c0_3 = arith.constant 0 : index
    %c0_4 = arith.constant 0 : index
    %c0_5 = arith.constant 0 : index
    %5 = vector.load %arg5[%c0_3, %c0_4, %c0_5] : memref<1x32x128xbf16, #tpu.memory_space<vmem>>, vector<1x32x128xbf16>
    %6 = vector.shape_cast %5 : vector<1x32x128xbf16> to vector<32x128xbf16>
    %cst = arith.constant dense<0.000000e+00> : vector<32x32xf32>
    %7 = tpu.matmul %4, %6, %cst {dimension_numbers = #tpu.dot_dimension_numbers<[1], [1], [0], [0], [0, 0, 1, 0], [], []>} : vector<32x128xbf16>, vector<32x128xbf16>, vector<32x32xf32> -> vector<32x32xf32>
    %cst_6 = arith.constant 0.0883883461 : f32
    %8 = vector.broadcast %cst_6 : f32 to vector<32x32xf32>
    %9 = arith.mulf %7, %8 : vector<32x32xf32>
    %c0_7 = arith.constant 0 : index
    %c0_8 = arith.constant 0 : index
    %10 = vector.load %arg8[%c0_7, %c0_8] : memref<32x1xf32, #tpu.memory_space<vmem>>, vector<32x1xf32>
    %cst_9 = arith.constant dense<0xFF800000> : vector<32xf32>
    %11 = vector.multi_reduction <maximumf>, %9, %cst_9 [1] : vector<32x32xf32> to vector<32xf32>
    %12 = vector.shape_cast %11 : vector<32xf32> to vector<32x1xf32>
    %13 = arith.maximumf %10, %12 : vector<32x1xf32>
    %14 = arith.subf %10, %13 : vector<32x1xf32>
    %15 = math.exp %14 : vector<32x1xf32>
    %16 = vector.broadcast %13 : vector<32x1xf32> to vector<32x32xf32>
    %17 = arith.subf %9, %16 : vector<32x32xf32>
    %18 = math.exp %17 : vector<32x32xf32>
    %c0_10 = arith.constant 0 : index
    %c0_11 = arith.constant 0 : index
    %19 = vector.load %arg9[%c0_10, %c0_11] : memref<32x1xf32, #tpu.memory_space<vmem>>, vector<32x1xf32>
    %20 = arith.mulf %15, %19 : vector<32x1xf32>
    %cst_12 = arith.constant dense<0.000000e+00> : vector<32xf32>
    %21 = vector.multi_reduction <add>, %18, %cst_12 [1] : vector<32x32xf32> to vector<32xf32>
    %22 = vector.shape_cast %21 : vector<32xf32> to vector<32x1xf32>
    %23 = arith.addf %20, %22 : vector<32x1xf32>
    %c0_13 = arith.constant 0 : index
    %c0_14 = arith.constant 0 : index
    %24 = vector.load %arg9[%c0_13, %c0_14] : memref<32x1xf32, #tpu.memory_space<vmem>>, vector<32x1xf32>
    tpu.vector_store %arg9[%c0_13, %c0_14], %23 {strides = array<i32>} : memref<32x1xf32, #tpu.memory_space<vmem>>, vector<32x1xf32>,
    %c0_15 = arith.constant 0 : index
    %c0_16 = arith.constant 0 : index
    %25 = vector.load %arg10[%c0_15, %c0_16] : memref<32x128xf32, #tpu.memory_space<vmem>>, vector<32x128xf32>
    %26 = vector.broadcast %15 : vector<32x1xf32> to vector<32x128xf32>
    %27 = arith.mulf %26, %25 : vector<32x128xf32>
    %28 = arith.truncf %18 : vector<32x32xf32> to vector<32x32xbf16>
    %c0_17 = arith.constant 0 : index
    %c0_18 = arith.constant 0 : index
    %c0_19 = arith.constant 0 : index
    %29 = vector.load %arg6[%c0_17, %c0_18, %c0_19] : memref<1x32x128xbf16, #tpu.memory_space<vmem>>, vector<1x32x128xbf16>
    %30 = vector.shape_cast %29 : vector<1x32x128xbf16> to vector<32x128xbf16>
    %cst_20 = arith.constant dense<0.000000e+00> : vector<32x128xf32>
    %31 = tpu.matmul %28, %30, %cst_20 {dimension_numbers = #tpu.dot_dimension_numbers<[1], [0], [0], [1], [0, 0, 1, 1], [], []>} : vector<32x32xbf16>, vector<32x128xbf16>, vector<32x128xf32> -> vector<32x128xf32>
    %32 = arith.addf %27, %31 : vector<32x128xf32>
    %c0_21 = arith.constant 0 : index
    %c0_22 = arith.constant 0 : index
    %33 = vector.load %arg10[%c0_21, %c0_22] : memref<32x128xf32, #tpu.memory_space<vmem>>, vector<32x128xf32>
    tpu.vector_store %arg10[%c0_21, %c0_22], %32 {strides = array<i32>} : memref<32x128xf32, #tpu.memory_space<vmem>>, vector<32x128xf32>,
    %c0_23 = arith.constant 0 : index
    %c0_24 = arith.constant 0 : index
    %34 = vector.load %arg8[%c0_23, %c0_24] : memref<32x1xf32, #tpu.memory_space<vmem>>, vector<32x1xf32>
    tpu.vector_store %arg8[%c0_23, %c0_24], %13 {strides = array<i32>} : memref<32x1xf32, #tpu.memory_space<vmem>>, vector<32x1xf32>,
    %c0_i32_25 = arith.constant 0 : i32
    %35 = arith.cmpi eq, %arg3, %c0_i32_25 : i32
    %36 = arith.extui %35 : i1 to i32
    %c0_i32_26 = arith.constant 0 : i32
    %37 = arith.cmpi ne, %36, %c0_i32_26 : i32
    scf.if %37 {
      %c0_27 = arith.constant 0 : index
      %c0_28 = arith.constant 0 : index
      %38 = vector.load %arg10[%c0_27, %c0_28] : memref<32x128xf32, #tpu.memory_space<vmem>>, vector<32x128xf32>
      %c0_29 = arith.constant 0 : index
      %c0_30 = arith.constant 0 : index
      %39 = vector.load %arg9[%c0_29, %c0_30] : memref<32x1xf32, #tpu.memory_space<vmem>>, vector<32x1xf32>
      %40 = tpu.reciprocal %39 {approx = true} : vector<32x1xf32> -> vector<32x1xf32>
      %41 = vector.broadcast %40 : vector<32x1xf32> to vector<32x128xf32>
      %42 = arith.mulf %38, %41 : vector<32x128xf32>
      %43 = arith.truncf %42 : vector<32x128xf32> to vector<32x128xbf16>
      %c0_31 = arith.constant 0 : index
      %c0_32 = arith.constant 0 : index
      %c0_33 = arith.constant 0 : index
      %44 = vector.load %arg7[%c0_31, %c0_32, %c0_33] : memref<1x32x128xbf16, #tpu.memory_space<vmem>>, vector<1x32x128xbf16>
      %45 = vector.shape_cast %44 : vector<1x32x128xbf16> to vector<32x128xbf16>
      %46 = vector.shape_cast %43 : vector<32x128xbf16> to vector<1x32x128xbf16>
      tpu.vector_store %arg7[%c0_31, %c0_32, %c0_33], %46 {strides = array<i32>} : memref<1x32x128xbf16, #tpu.memory_space<vmem>>, vector<1x32x128xbf16>,
    } else {
    }
    return
  }
  func.func @transform_0(%arg0: i32, %arg1: i32, %arg2: i32, %arg3: i32) -> (i32, i32, i32) {
    %c0_i32 = arith.constant 0 : i32
    return %arg0, %arg2, %arg1 : i32, i32, i32
  }
  func.func @transform_1(%arg0: i32, %arg1: i32, %arg2: i32, %arg3: i32) -> (i32, i32, i32) {
    %c0_i32 = arith.constant 0 : i32
    return %arg0, %arg3, %arg1 : i32, i32, i32
  }
  func.func @transform_2(%arg0: i32, %arg1: i32, %arg2: i32, %arg3: i32) -> (i32, i32, i32) {
    %c0_i32 = arith.constant 0 : i32
    return %arg0, %arg3, %arg1 : i32, i32, i32
  }
  func.func @transform_3(%arg0: i32, %arg1: i32, %arg2: i32, %arg3: i32) -> (i32, i32, i32) {
    %c0_i32 = arith.constant 0 : i32
    return %arg0, %arg2, %arg1 : i32, i32, i32
  }
}

module attributes {stable_mosaic.version = 11 : i64} {
  func.func @_mlp_kernel(%arg0: i32, %arg1: i32, %arg2: memref<16x256xbf16, #tpu.memory_space<vmem>>, %arg3: memref<256x512xbf16, #tpu.memory_space<vmem>>, %arg4: memref<1x512xbf16, #tpu.memory_space<vmem>>, %arg5: memref<512x256xbf16, #tpu.memory_space<vmem>>, %arg6: memref<1x256xbf16, #tpu.memory_space<vmem>>, %arg7: memref<16x256xbf16, #tpu.memory_space<vmem>>, %arg8: memref<16x256xf32, #tpu.memory_space<vmem>>) attributes {dimension_semantics = [#tpu.dimension_semantics<parallel>, #tpu.dimension_semantics<arbitrary>], iteration_bounds = array<i64: 1, 2>, scalar_prefetch = 0 : i64, scratch_operands = 1 : i64, tpu.core_type = #tpu.core_type<tc>, window_params = [{transform_indices = @transform_0, window_bounds = array<i64: 16, 256>}, {transform_indices = @transform_1, window_bounds = array<i64: 256, 512>}, {transform_indices = @transform_2, window_bounds = array<i64: 1, 512>}, {transform_indices = @transform_3, window_bounds = array<i64: 512, 256>}, {pipeline_mode = #tpu.pipeline_mode<synchronous>, transform_indices = @transform_4, window_bounds = array<i64: 1, 256>}, {transform_indices = @transform_5, window_bounds = array<i64: 16, 256>}]} {
    %c0_i32 = arith.constant 0 : i32
    %0 = arith.cmpi eq, %arg1, %c0_i32 : i32
    %1 = arith.extui %0 : i1 to i32
    %c0_i32_0 = arith.constant 0 : i32
    %2 = arith.cmpi ne, %1, %c0_i32_0 : i32
    scf.if %2 {
      %cst_18 = arith.constant 0.000000e+00 : f32
      %32 = vector.broadcast %cst_18 : f32 to vector<16x256xf32>
      %c0_19 = arith.constant 0 : index
      %c0_20 = arith.constant 0 : index
      %33 = vector.load %arg8[%c0_19, %c0_20] : memref<16x256xf32, #tpu.memory_space<vmem>>, vector<16x256xf32>
      tpu.vector_store %arg8[%c0_19, %c0_20], %32 {strides = array<i32>} : memref<16x256xf32, #tpu.memory_space<vmem>>, vector<16x256xf32>,
    } else {
    }
    %c0 = arith.constant 0 : index
    %c0_1 = arith.constant 0 : index
    %3 = vector.load %arg2[%c0, %c0_1] : memref<16x256xbf16, #tpu.memory_space<vmem>>, vector<16x256xbf16>
    %c0_2 = arith.constant 0 : index
    %c0_3 = arith.constant 0 : index
    %4 = vector.load %arg3[%c0_2, %c0_3] : memref<256x512xbf16, #tpu.memory_space<vmem>>, vector<256x512xbf16>
    %cst = arith.constant dense<0.000000e+00> : vector<16x512xf32>
    %5 = tpu.matmul %3, %4, %cst {dimension_numbers = #tpu.dot_dimension_numbers<[1], [0], [0], [1], [0, 0, 1, 1], [], []>} : vector<16x256xbf16>, vector<256x512xbf16>, vector<16x512xf32> -> vector<16x512xf32>
    %c0_4 = arith.constant 0 : index
    %c0_5 = arith.constant 0 : index
    %6 = vector.load %arg4[%c0_4, %c0_5] : memref<1x512xbf16, #tpu.memory_space<vmem>>, vector<1x512xbf16>
    %7 = arith.extf %6 : vector<1x512xbf16> to vector<1x512xf32>
    %8 = vector.broadcast %7 : vector<1x512xf32> to vector<16x512xf32>
    %9 = arith.addf %5, %8 : vector<16x512xf32>
    %cst_6 = arith.constant 5.000000e-01 : f32
    %10 = vector.broadcast %cst_6 : f32 to vector<16x512xf32>
    %11 = arith.mulf %10, %9 : vector<16x512xf32>
    %cst_7 = arith.constant 4.471500e-02 : f32
    %12 = vector.broadcast %cst_7 : f32 to vector<16x512xf32>
    %13 = arith.mulf %12, %9 : vector<16x512xf32>
    %14 = arith.mulf %13, %9 : vector<16x512xf32>
    %15 = arith.mulf %14, %9 : vector<16x512xf32>
    %16 = arith.addf %9, %15 : vector<16x512xf32>
    %cst_8 = arith.constant 0.797884583 : f32
    %17 = vector.broadcast %cst_8 : f32 to vector<16x512xf32>
    %18 = arith.mulf %17, %16 : vector<16x512xf32>
    %19 = math.tanh %18 : vector<16x512xf32>
    %cst_9 = arith.constant 1.000000e+00 : f32
    %20 = vector.broadcast %cst_9 : f32 to vector<16x512xf32>
    %21 = arith.addf %20, %19 : vector<16x512xf32>
    %22 = arith.mulf %11, %21 : vector<16x512xf32>
    %c0_10 = arith.constant 0 : index
    %c0_11 = arith.constant 0 : index
    %23 = vector.load %arg8[%c0_10, %c0_11] : memref<16x256xf32, #tpu.memory_space<vmem>>, vector<16x256xf32>
    %24 = arith.truncf %22 : vector<16x512xf32> to vector<16x512xbf16>
    %c0_12 = arith.constant 0 : index
    %c0_13 = arith.constant 0 : index
    %25 = vector.load %arg5[%c0_12, %c0_13] : memref<512x256xbf16, #tpu.memory_space<vmem>>, vector<512x256xbf16>
    %cst_14 = arith.constant dense<0.000000e+00> : vector<16x256xf32>
    %26 = tpu.matmul %24, %25, %cst_14 {dimension_numbers = #tpu.dot_dimension_numbers<[1], [0], [0], [1], [0, 0, 1, 1], [], []>} : vector<16x512xbf16>, vector<512x256xbf16>, vector<16x256xf32> -> vector<16x256xf32>
    %27 = arith.addf %23, %26 : vector<16x256xf32>
    %c0_15 = arith.constant 0 : index
    %c0_16 = arith.constant 0 : index
    %28 = vector.load %arg8[%c0_15, %c0_16] : memref<16x256xf32, #tpu.memory_space<vmem>>, vector<16x256xf32>
    tpu.vector_store %arg8[%c0_15, %c0_16], %27 {strides = array<i32>} : memref<16x256xf32, #tpu.memory_space<vmem>>, vector<16x256xf32>,
    %c1_i32 = arith.constant 1 : i32
    %29 = arith.cmpi eq, %arg1, %c1_i32 : i32
    %30 = arith.extui %29 : i1 to i32
    %c0_i32_17 = arith.constant 0 : i32
    %31 = arith.cmpi ne, %30, %c0_i32_17 : i32
    scf.if %31 {
      %c0_18 = arith.constant 0 : index
      %c0_19 = arith.constant 0 : index
      %32 = vector.load %arg8[%c0_18, %c0_19] : memref<16x256xf32, #tpu.memory_space<vmem>>, vector<16x256xf32>
      %c0_20 = arith.constant 0 : index
      %c0_21 = arith.constant 0 : index
      %33 = vector.load %arg6[%c0_20, %c0_21] : memref<1x256xbf16, #tpu.memory_space<vmem>>, vector<1x256xbf16>
      %34 = arith.extf %33 : vector<1x256xbf16> to vector<1x256xf32>
      %35 = vector.broadcast %34 : vector<1x256xf32> to vector<16x256xf32>
      %36 = arith.addf %32, %35 : vector<16x256xf32>
      %37 = arith.truncf %36 : vector<16x256xf32> to vector<16x256xbf16>
      %c0_22 = arith.constant 0 : index
      %c0_23 = arith.constant 0 : index
      %38 = vector.load %arg7[%c0_22, %c0_23] : memref<16x256xbf16, #tpu.memory_space<vmem>>, vector<16x256xbf16>
      tpu.vector_store %arg7[%c0_22, %c0_23], %37 {strides = array<i32>} : memref<16x256xbf16, #tpu.memory_space<vmem>>, vector<16x256xbf16>,
    } else {
    }
    return
  }
  func.func @transform_0(%arg0: i32, %arg1: i32) -> (i32, i32) {
    %c0_i32 = arith.constant 0 : i32
    %c0_i32_0 = arith.constant 0 : i32
    return %arg0, %c0_i32 : i32, i32
  }
  func.func @transform_1(%arg0: i32, %arg1: i32) -> (i32, i32) {
    %c0_i32 = arith.constant 0 : i32
    %c0_i32_0 = arith.constant 0 : i32
    return %c0_i32, %arg1 : i32, i32
  }
  func.func @transform_2(%arg0: i32, %arg1: i32) -> (i32, i32) {
    %c0_i32 = arith.constant 0 : i32
    %c0_i32_0 = arith.constant 0 : i32
    return %c0_i32, %arg1 : i32, i32
  }
  func.func @transform_3(%arg0: i32, %arg1: i32) -> (i32, i32) {
    %c0_i32 = arith.constant 0 : i32
    %c0_i32_0 = arith.constant 0 : i32
    return %arg1, %c0_i32 : i32, i32
  }
  func.func @transform_4(%arg0: i32, %arg1: i32) -> (i32, i32) {
    %c0_i32 = arith.constant 0 : i32
    %c0_i32_0 = arith.constant 0 : i32
    %c0_i32_1 = arith.constant 0 : i32
    return %c0_i32, %c0_i32_0 : i32, i32
  }
  func.func @transform_5(%arg0: i32, %arg1: i32) -> (i32, i32) {
    %c0_i32 = arith.constant 0 : i32
    %c0_i32_0 = arith.constant 0 : i32
    return %arg0, %c0_i32 : i32, i32
  }
}

module attributes {stable_mosaic.version = 11 : i64} {
  func.func @_mlp_kernel(%arg0: i32, %arg1: i32, %arg2: memref<48x256xbf16, #tpu.memory_space<vmem>>, %arg3: memref<256x512xbf16, #tpu.memory_space<vmem>>, %arg4: memref<1x512xbf16, #tpu.memory_space<vmem>>, %arg5: memref<512x256xbf16, #tpu.memory_space<vmem>>, %arg6: memref<1x256xbf16, #tpu.memory_space<vmem>>, %arg7: memref<48x256xbf16, #tpu.memory_space<vmem>>, %arg8: memref<48x256xf32, #tpu.memory_space<vmem>>) attributes {dimension_semantics = [#tpu.dimension_semantics<parallel>, #tpu.dimension_semantics<arbitrary>], iteration_bounds = array<i64: 1, 2>, scalar_prefetch = 0 : i64, scratch_operands = 1 : i64, tpu.core_type = #tpu.core_type<tc>, window_params = [{transform_indices = @transform_0, window_bounds = array<i64: 48, 256>}, {transform_indices = @transform_1, window_bounds = array<i64: 256, 512>}, {transform_indices = @transform_2, window_bounds = array<i64: 1, 512>}, {transform_indices = @transform_3, window_bounds = array<i64: 512, 256>}, {pipeline_mode = #tpu.pipeline_mode<synchronous>, transform_indices = @transform_4, window_bounds = array<i64: 1, 256>}, {transform_indices = @transform_5, window_bounds = array<i64: 48, 256>}]} {
    %c0_i32 = arith.constant 0 : i32
    %0 = arith.cmpi eq, %arg1, %c0_i32 : i32
    %1 = arith.extui %0 : i1 to i32
    %c0_i32_0 = arith.constant 0 : i32
    %2 = arith.cmpi ne, %1, %c0_i32_0 : i32
    scf.if %2 {
      %cst_18 = arith.constant 0.000000e+00 : f32
      %32 = vector.broadcast %cst_18 : f32 to vector<48x256xf32>
      %c0_19 = arith.constant 0 : index
      %c0_20 = arith.constant 0 : index
      %33 = vector.load %arg8[%c0_19, %c0_20] : memref<48x256xf32, #tpu.memory_space<vmem>>, vector<48x256xf32>
      tpu.vector_store %arg8[%c0_19, %c0_20], %32 {strides = array<i32>} : memref<48x256xf32, #tpu.memory_space<vmem>>, vector<48x256xf32>,
    } else {
    }
    %c0 = arith.constant 0 : index
    %c0_1 = arith.constant 0 : index
    %3 = vector.load %arg2[%c0, %c0_1] : memref<48x256xbf16, #tpu.memory_space<vmem>>, vector<48x256xbf16>
    %c0_2 = arith.constant 0 : index
    %c0_3 = arith.constant 0 : index
    %4 = vector.load %arg3[%c0_2, %c0_3] : memref<256x512xbf16, #tpu.memory_space<vmem>>, vector<256x512xbf16>
    %cst = arith.constant dense<0.000000e+00> : vector<48x512xf32>
    %5 = tpu.matmul %3, %4, %cst {dimension_numbers = #tpu.dot_dimension_numbers<[1], [0], [0], [1], [0, 0, 1, 1], [], []>} : vector<48x256xbf16>, vector<256x512xbf16>, vector<48x512xf32> -> vector<48x512xf32>
    %c0_4 = arith.constant 0 : index
    %c0_5 = arith.constant 0 : index
    %6 = vector.load %arg4[%c0_4, %c0_5] : memref<1x512xbf16, #tpu.memory_space<vmem>>, vector<1x512xbf16>
    %7 = arith.extf %6 : vector<1x512xbf16> to vector<1x512xf32>
    %8 = vector.broadcast %7 : vector<1x512xf32> to vector<48x512xf32>
    %9 = arith.addf %5, %8 : vector<48x512xf32>
    %cst_6 = arith.constant 5.000000e-01 : f32
    %10 = vector.broadcast %cst_6 : f32 to vector<48x512xf32>
    %11 = arith.mulf %10, %9 : vector<48x512xf32>
    %cst_7 = arith.constant 4.471500e-02 : f32
    %12 = vector.broadcast %cst_7 : f32 to vector<48x512xf32>
    %13 = arith.mulf %12, %9 : vector<48x512xf32>
    %14 = arith.mulf %13, %9 : vector<48x512xf32>
    %15 = arith.mulf %14, %9 : vector<48x512xf32>
    %16 = arith.addf %9, %15 : vector<48x512xf32>
    %cst_8 = arith.constant 0.797884583 : f32
    %17 = vector.broadcast %cst_8 : f32 to vector<48x512xf32>
    %18 = arith.mulf %17, %16 : vector<48x512xf32>
    %19 = math.tanh %18 : vector<48x512xf32>
    %cst_9 = arith.constant 1.000000e+00 : f32
    %20 = vector.broadcast %cst_9 : f32 to vector<48x512xf32>
    %21 = arith.addf %20, %19 : vector<48x512xf32>
    %22 = arith.mulf %11, %21 : vector<48x512xf32>
    %c0_10 = arith.constant 0 : index
    %c0_11 = arith.constant 0 : index
    %23 = vector.load %arg8[%c0_10, %c0_11] : memref<48x256xf32, #tpu.memory_space<vmem>>, vector<48x256xf32>
    %24 = arith.truncf %22 : vector<48x512xf32> to vector<48x512xbf16>
    %c0_12 = arith.constant 0 : index
    %c0_13 = arith.constant 0 : index
    %25 = vector.load %arg5[%c0_12, %c0_13] : memref<512x256xbf16, #tpu.memory_space<vmem>>, vector<512x256xbf16>
    %cst_14 = arith.constant dense<0.000000e+00> : vector<48x256xf32>
    %26 = tpu.matmul %24, %25, %cst_14 {dimension_numbers = #tpu.dot_dimension_numbers<[1], [0], [0], [1], [0, 0, 1, 1], [], []>} : vector<48x512xbf16>, vector<512x256xbf16>, vector<48x256xf32> -> vector<48x256xf32>
    %27 = arith.addf %23, %26 : vector<48x256xf32>
    %c0_15 = arith.constant 0 : index
    %c0_16 = arith.constant 0 : index
    %28 = vector.load %arg8[%c0_15, %c0_16] : memref<48x256xf32, #tpu.memory_space<vmem>>, vector<48x256xf32>
    tpu.vector_store %arg8[%c0_15, %c0_16], %27 {strides = array<i32>} : memref<48x256xf32, #tpu.memory_space<vmem>>, vector<48x256xf32>,
    %c1_i32 = arith.constant 1 : i32
    %29 = arith.cmpi eq, %arg1, %c1_i32 : i32
    %30 = arith.extui %29 : i1 to i32
    %c0_i32_17 = arith.constant 0 : i32
    %31 = arith.cmpi ne, %30, %c0_i32_17 : i32
    scf.if %31 {
      %c0_18 = arith.constant 0 : index
      %c0_19 = arith.constant 0 : index
      %32 = vector.load %arg8[%c0_18, %c0_19] : memref<48x256xf32, #tpu.memory_space<vmem>>, vector<48x256xf32>
      %c0_20 = arith.constant 0 : index
      %c0_21 = arith.constant 0 : index
      %33 = vector.load %arg6[%c0_20, %c0_21] : memref<1x256xbf16, #tpu.memory_space<vmem>>, vector<1x256xbf16>
      %34 = arith.extf %33 : vector<1x256xbf16> to vector<1x256xf32>
      %35 = vector.broadcast %34 : vector<1x256xf32> to vector<48x256xf32>
      %36 = arith.addf %32, %35 : vector<48x256xf32>
      %37 = arith.truncf %36 : vector<48x256xf32> to vector<48x256xbf16>
      %c0_22 = arith.constant 0 : index
      %c0_23 = arith.constant 0 : index
      %38 = vector.load %arg7[%c0_22, %c0_23] : memref<48x256xbf16, #tpu.memory_space<vmem>>, vector<48x256xbf16>
      tpu.vector_store %arg7[%c0_22, %c0_23], %37 {strides = array<i32>} : memref<48x256xbf16, #tpu.memory_space<vmem>>, vector<48x256xbf16>,
    } else {
    }
    return
  }
  func.func @transform_0(%arg0: i32, %arg1: i32) -> (i32, i32) {
    %c0_i32 = arith.constant 0 : i32
    %c0_i32_0 = arith.constant 0 : i32
    return %arg0, %c0_i32 : i32, i32
  }
  func.func @transform_1(%arg0: i32, %arg1: i32) -> (i32, i32) {
    %c0_i32 = arith.constant 0 : i32
    %c0_i32_0 = arith.constant 0 : i32
    return %c0_i32, %arg1 : i32, i32
  }
  func.func @transform_2(%arg0: i32, %arg1: i32) -> (i32, i32) {
    %c0_i32 = arith.constant 0 : i32
    %c0_i32_0 = arith.constant 0 : i32
    return %c0_i32, %arg1 : i32, i32
  }
  func.func @transform_3(%arg0: i32, %arg1: i32) -> (i32, i32) {
    %c0_i32 = arith.constant 0 : i32
    %c0_i32_0 = arith.constant 0 : i32
    return %arg1, %c0_i32 : i32, i32
  }
  func.func @transform_4(%arg0: i32, %arg1: i32) -> (i32, i32) {
    %c0_i32 = arith.constant 0 : i32
    %c0_i32_0 = arith.constant 0 : i32
    %c0_i32_1 = arith.constant 0 : i32
    return %c0_i32, %c0_i32_0 : i32, i32
  }
  func.func @transform_5(%arg0: i32, %arg1: i32) -> (i32, i32) {
    %c0_i32 = arith.constant 0 : i32
    %c0_i32_0 = arith.constant 0 : i32
    return %arg0, %c0_i32 : i32, i32
  }
}

module attributes {stable_mosaic.version = 11 : i64} {
  func.func @_matmul_bias_kernel(%arg0: i32, %arg1: i32, %arg2: i32, %arg3: memref<48x256xbf16, #tpu.memory_space<vmem>>, %arg4: memref<256x256xbf16, #tpu.memory_space<vmem>>, %arg5: memref<1x256xbf16, #tpu.memory_space<vmem>>, %arg6: memref<48x256xbf16, #tpu.memory_space<vmem>>, %arg7: memref<48x256xf32, #tpu.memory_space<vmem>>) attributes {dimension_semantics = [#tpu.dimension_semantics<parallel>, #tpu.dimension_semantics<parallel>, #tpu.dimension_semantics<arbitrary>], iteration_bounds = array<i64: 1, 1, 1>, scalar_prefetch = 0 : i64, scratch_operands = 1 : i64, tpu.core_type = #tpu.core_type<tc>, window_params = [{transform_indices = @transform_0, window_bounds = array<i64: 48, 256>}, {transform_indices = @transform_1, window_bounds = array<i64: 256, 256>}, {transform_indices = @transform_2, window_bounds = array<i64: 1, 256>}, {transform_indices = @transform_3, window_bounds = array<i64: 48, 256>}]} {
    %c0_i32 = arith.constant 0 : i32
    %0 = arith.cmpi eq, %arg2, %c0_i32 : i32
    %1 = arith.extui %0 : i1 to i32
    %c0_i32_0 = arith.constant 0 : i32
    %2 = arith.cmpi ne, %1, %c0_i32_0 : i32
    scf.if %2 {
      %cst_10 = arith.constant 0.000000e+00 : f32
      %12 = vector.broadcast %cst_10 : f32 to vector<48x256xf32>
      %c0_11 = arith.constant 0 : index
      %c0_12 = arith.constant 0 : index
      %13 = vector.load %arg7[%c0_11, %c0_12] : memref<48x256xf32, #tpu.memory_space<vmem>>, vector<48x256xf32>
      tpu.vector_store %arg7[%c0_11, %c0_12], %12 {strides = array<i32>} : memref<48x256xf32, #tpu.memory_space<vmem>>, vector<48x256xf32>,
    } else {
    }
    %c0 = arith.constant 0 : index
    %c0_1 = arith.constant 0 : index
    %3 = vector.load %arg7[%c0, %c0_1] : memref<48x256xf32, #tpu.memory_space<vmem>>, vector<48x256xf32>
    %c0_2 = arith.constant 0 : index
    %c0_3 = arith.constant 0 : index
    %4 = vector.load %arg3[%c0_2, %c0_3] : memref<48x256xbf16, #tpu.memory_space<vmem>>, vector<48x256xbf16>
    %c0_4 = arith.constant 0 : index
    %c0_5 = arith.constant 0 : index
    %5 = vector.load %arg4[%c0_4, %c0_5] : memref<256x256xbf16, #tpu.memory_space<vmem>>, vector<256x256xbf16>
    %cst = arith.constant dense<0.000000e+00> : vector<48x256xf32>
    %6 = tpu.matmul %4, %5, %cst {dimension_numbers = #tpu.dot_dimension_numbers<[1], [0], [0], [1], [0, 0, 1, 1], [], []>} : vector<48x256xbf16>, vector<256x256xbf16>, vector<48x256xf32> -> vector<48x256xf32>
    %7 = arith.addf %3, %6 : vector<48x256xf32>
    %c0_6 = arith.constant 0 : index
    %c0_7 = arith.constant 0 : index
    %8 = vector.load %arg7[%c0_6, %c0_7] : memref<48x256xf32, #tpu.memory_space<vmem>>, vector<48x256xf32>
    tpu.vector_store %arg7[%c0_6, %c0_7], %7 {strides = array<i32>} : memref<48x256xf32, #tpu.memory_space<vmem>>, vector<48x256xf32>,
    %c0_i32_8 = arith.constant 0 : i32
    %9 = arith.cmpi eq, %arg2, %c0_i32_8 : i32
    %10 = arith.extui %9 : i1 to i32
    %c0_i32_9 = arith.constant 0 : i32
    %11 = arith.cmpi ne, %10, %c0_i32_9 : i32
    scf.if %11 {
      %c0_10 = arith.constant 0 : index
      %c0_11 = arith.constant 0 : index
      %12 = vector.load %arg7[%c0_10, %c0_11] : memref<48x256xf32, #tpu.memory_space<vmem>>, vector<48x256xf32>
      %c0_12 = arith.constant 0 : index
      %c0_13 = arith.constant 0 : index
      %13 = vector.load %arg5[%c0_12, %c0_13] : memref<1x256xbf16, #tpu.memory_space<vmem>>, vector<1x256xbf16>
      %14 = arith.extf %13 : vector<1x256xbf16> to vector<1x256xf32>
      %15 = vector.broadcast %14 : vector<1x256xf32> to vector<48x256xf32>
      %16 = arith.addf %12, %15 : vector<48x256xf32>
      %17 = arith.truncf %16 : vector<48x256xf32> to vector<48x256xbf16>
      %c0_14 = arith.constant 0 : index
      %c0_15 = arith.constant 0 : index
      %18 = vector.load %arg6[%c0_14, %c0_15] : memref<48x256xbf16, #tpu.memory_space<vmem>>, vector<48x256xbf16>
      tpu.vector_store %arg6[%c0_14, %c0_15], %17 {strides = array<i32>} : memref<48x256xbf16, #tpu.memory_space<vmem>>, vector<48x256xbf16>,
    } else {
    }
    return
  }
  func.func @transform_0(%arg0: i32, %arg1: i32, %arg2: i32) -> (i32, i32) {
    %c0_i32 = arith.constant 0 : i32
    return %arg0, %arg2 : i32, i32
  }
  func.func @transform_1(%arg0: i32, %arg1: i32, %arg2: i32) -> (i32, i32) {
    %c0_i32 = arith.constant 0 : i32
    return %arg2, %arg1 : i32, i32
  }
  func.func @transform_2(%arg0: i32, %arg1: i32, %arg2: i32) -> (i32, i32) {
    %c0_i32 = arith.constant 0 : i32
    %c0_i32_0 = arith.constant 0 : i32
    return %c0_i32, %arg1 : i32, i32
  }
  func.func @transform_3(%arg0: i32, %arg1: i32, %arg2: i32) -> (i32, i32) {
    %c0_i32 = arith.constant 0 : i32
    return %arg0, %arg1 : i32, i32
  }
}

</mosaic_0001>

<llo_original>
// kernel: tracing_transformer_block_wrapper.22
$region0: #{tracing_transformer_block_wrapper.22}
  #allocation0 [shape = 'u32[]', space=smem, size = 0x4, offset = 0x4, fixed_abs, tag = 'smem constant byte address 0x4 - core index']
  #allocation1 [shape = 'u32[72,128]{1,0:T(1,128)}', space=vmem, size = 0x9000, scoped, tag = 'internal scratch']
  %s0 = inlined_call_operand.vmem [shape: bf16[2,24,256], index: 0, kind: input, shape index: {}]
  %s1 = inlined_call_operand.vmem [shape: f32[2,1,256], index: 1, kind: input, shape index: {}]
  %s2 = inlined_call_operand.vmem [shape: f32[2,1,256], index: 2, kind: input, shape index: {}]
  %s3 = inlined_call_operand.vmem [shape: bf16[2,24,256], index: 3, kind: output, shape index: {}]
  %s4 = sld [smem:[#allocation0]]
  $region45: #{tracing_transformer_block_wrapper.22} parent=0
    _
  %s6 = ssub.s32 1, %s4
  %s7 = scalar_select 0, %s6, %s4
  loop: start=0, step=1, limit=4
  $region2: #{tracing_transformer_block_wrapper.22} parent=0 // loop_pre_header
    _
  $region3: #{tracing_transformer_block_wrapper.22} parent=0 // loop_header
    %s9 = sphi 0, %s13
    %p10 = scmp.ge.s32.totalorder %s9, 4
    %s16 = sphi 0, %s28
    %s17 = sphi 0, %s24
    %s18 = sphi 0, %s16
    %s19 = sphi 0, %s17
    %s20 = sphi 0, %s18
    %s21 = sphi 0, %s19
    %s33 = sphi 0, %s35
    %s36 = sphi 0, %s33
    %s37 = sphi 0, %s36
    %s53 = sphi 0, %s37
    %s59 = sphi 0, %s61
    %s62 = sphi 0, %s59
    %s63 = sphi 0, %s62
    %s79 = sphi 0, %s63
    %s85 = sphi 0, %s87
    %s88 = sphi 0, %s85
    %s89 = sphi 0, %s88
    %s105 = sphi 0, %s89
    %s113 = sphi 0, %s115
    %s116 = sphi 0, %s113
    %s117 = sphi 0, %s116
    %s133 = sphi 0, %s117
  $region4: #{tracing_transformer_block_wrapper.22} parent=0 // loop_header_branch
    %12 = sbr.rel (%p10) target = $region8
  $region5: #{tracing_transformer_block_wrapper.22} parent=0 // loop_body
    %s14 = ssub.s32 %s9, 1
    %s15 = ssub.s32 %s9, 2
    %s22 = sadd.s32 1, %s17
    %p23 = scmp.ge.s32.totalorder %s22, 1
    %s24 = scalar_select %p23, 0, %s22
    %s25 = sadd.s32 1, %s16
    %s26 = scalar_select %p23, %s25, %s16
    %p27 = scmp.ge.s32.totalorder %s26, 2
    %s28 = scalar_select %p27, 0, %s26
    %s29 = ssub.s32 %s16, %s28
    %s30 = ssub.s32 %s17, %s24
    %s31 = sor.u32 %s29, %s30
    %p32 = scmp.eq.s32.totalorder %s31, 0
    %s34 = sadd.s32 %s33, 1
    %s35 = scalar_select %p32, %s33, %s34
    %p38 = pneg %p32
    %p39 = scmp.eq.s32.totalorder %s9, 1
    %p40 = por %p38, %p39
    %p41 = scmp.ne.s32.totalorder %s33, %s36
    %p42 = scmp.eq.s32.totalorder %s9, 0
    %p43 = por %p41, %p42
    %p44 = scmp.ne.s32.totalorder %s33, %s36
    %p45 = scmp.eq.s32.totalorder %s14, 1
    %p46 = por %p44, %p45
    %p47 = scmp.ne.s32.totalorder %s36, %s37
    %p48 = scmp.eq.s32.totalorder %s14, 0
    %p49 = por %p47, %p48
    %p50 = scmp.ne.s32.totalorder %s36, %s37
    %p51 = scmp.eq.s32.totalorder %s15, 1
    %p52 = por %p50, %p51
    %p54 = scmp.ne.s32.totalorder %s37, %s53
    %p55 = scmp.eq.s32.totalorder %s15, 0
    %p56 = por %p54, %p55
    %s57 = ssub.s32 %s16, %s28
    %p58 = scmp.eq.s32.totalorder %s57, 0
    %s60 = sadd.s32 %s59, 1
    %s61 = scalar_select %p58, %s59, %s60
    %p64 = pneg %p58
    %p65 = scmp.eq.s32.totalorder %s9, 1
    %p66 = por %p64, %p65
    %p67 = scmp.ne.s32.totalorder %s59, %s62
    %p68 = scmp.eq.s32.totalorder %s9, 0
    %p69 = por %p67, %p68
    %p70 = scmp.ne.s32.totalorder %s59, %s62
    %p71 = scmp.eq.s32.totalorder %s14, 1
    %p72 = por %p70, %p71
    %p73 = scmp.ne.s32.totalorder %s62, %s63
    %p74 = scmp.eq.s32.totalorder %s14, 0
    %p75 = por %p73, %p74
    %p76 = scmp.ne.s32.totalorder %s62, %s63
    %p77 = scmp.eq.s32.totalorder %s15, 1
    %p78 = por %p76, %p77
    %p80 = scmp.ne.s32.totalorder %s63, %s79
    %p81 = scmp.eq.s32.totalorder %s15, 0
    %p82 = por %p80, %p81
    %s83 = ssub.s32 %s16, %s28
    %p84 = scmp.eq.s32.totalorder %s83, 0
    %s86 = sadd.s32 %s85, 1
    %s87 = scalar_select %p84, %s85, %s86
    %p90 = pneg %p84
    %p91 = scmp.eq.s32.totalorder %s9, 1
    %p92 = por %p90, %p91
    %p93 = scmp.ne.s32.totalorder %s85, %s88
    %p94 = scmp.eq.s32.totalorder %s9, 0
    %p95 = por %p93, %p94
    %p96 = scmp.ne.s32.totalorder %s85, %s88
    %p97 = scmp.eq.s32.totalorder %s14, 1
    %p98 = por %p96, %p97
    %p99 = scmp.ne.s32.totalorder %s88, %s89
    %p100 = scmp.eq.s32.totalorder %s14, 0
    %p101 = por %p99, %p100
    %p102 = scmp.ne.s32.totalorder %s88, %s89
    %p103 = scmp.eq.s32.totalorder %s15, 1
    %p104 = por %p102, %p103
    %p106 = scmp.ne.s32.totalorder %s89, %s105
    %p107 = scmp.eq.s32.totalorder %s15, 0
    %p108 = por %p106, %p107
    %s109 = ssub.s32 %s16, %s28
    %s110 = ssub.s32 %s17, %s24
    %s111 = sor.u32 %s109, %s110
    %p112 = scmp.eq.s32.totalorder %s111, 0
    %s114 = sadd.s32 %s113, 1
    %s115 = scalar_select %p112, %s113, %s114
    %p118 = pneg %p112
    %p119 = scmp.eq.s32.totalorder %s9, 1
    %p120 = por %p118, %p119
    %p121 = scmp.ne.s32.totalorder %s113, %s116
    %p122 = scmp.eq.s32.totalorder %s9, 0
    %p123 = por %p121, %p122
    %p124 = scmp.ne.s32.totalorder %s113, %s116
    %p125 = scmp.eq.s32.totalorder %s14, 1
    %p126 = por %p124, %p125
    %p127 = scmp.ne.s32.totalorder %s116, %s117
    %p128 = scmp.eq.s32.totalorder %s14, 0
    %p129 = por %p127, %p128
    %p130 = scmp.ne.s32.totalorder %s116, %s117
    %p131 = scmp.eq.s32.totalorder %s15, 1
    %p132 = por %p130, %p131
    %p134 = scmp.ne.s32.totalorder %s117, %s133
    %p135 = scmp.eq.s32.totalorder %s15, 0
    %p136 = por %p134, %p135
    %p137 = scmp.le.s32.totalorder 1, %s9
    %p138 = scmp.lt.s32.totalorder %s9, 3
    %p139 = pnand %p137, %p138
    %p140 = pneg %p139
    // Predicated region
    $region9: #{tracing_transformer_block_wrapper.22} parent=5 // pred_check
      _
    $region10: #{tracing_transformer_block_wrapper.22} parent=5 // pred_check_branch
      %142 = sbr.rel (%p139) target = $region12
    $region11: #{tracing_transformer_block_wrapper.22} parent=5 // pred_region
      %s143 = ssub.s32 %s9, 1
    $region12: #{tracing_transformer_block_wrapper.22} parent=5 // pred_fallthru
      _
    %p144 = scmp.lt.s32.totalorder %s9, 2
    // Predicated region
    $region13: #{tracing_transformer_block_wrapper.22} parent=5 // pred_check
      %p145 = pneg %p144
    $region14: #{tracing_transformer_block_wrapper.22} parent=5 // pred_check_branch
      %147 = sbr.rel (%p145) target = $region16
    $region15: #{tracing_transformer_block_wrapper.22} parent=5 // pred_region
      // Predicated region
      $region17: #{tracing_transformer_block_wrapper.22} parent=15 // pred_check
        %p148 = pneg %p43
      $region18: #{tracing_transformer_block_wrapper.22} parent=15 // pred_check_branch
        %150 = sbr.rel (%p148) target = $region20
      $region19: #{tracing_transformer_block_wrapper.22} parent=15 // pred_region
        %s151 = smul.u32 3, %s17
        %p152 = scmp.lt.s32.totalorder %s16, 1
        %s153 = scalar_select %p152, %s16, 1
        %p154 = scmp.lt.s32.totalorder %s151, 2
        %s155 = scalar_select %p154, %s151, 2
        %s156 = smul.addr %s155, 2
        %s157 = smul.addr %s153, 6
        %s158 = sadd.s32 %s156, %s157
        %s159 = smul.addr %s158, 4
        %s160 = scalar_lea.vmem %s0, %s159
        %s161 = smul.u32 3, %s17
      $region20: #{tracing_transformer_block_wrapper.22} parent=15 // pred_fallthru
        _
      // Predicated region
      $region21: #{tracing_transformer_block_wrapper.22} parent=15 // pred_check
        %p162 = pneg %p69
      $region22: #{tracing_transformer_block_wrapper.22} parent=15 // pred_check_branch
        %164 = sbr.rel (%p162) target = $region24
      $region23: #{tracing_transformer_block_wrapper.22} parent=15 // pred_region
        %p165 = scmp.lt.s32.totalorder %s16, 1
        %s166 = scalar_select %p165, %s16, 1
        %s167 = smul.addr %s166, 2
        %s168 = scalar_lea.vmem %s1, %s167
      $region24: #{tracing_transformer_block_wrapper.22} parent=15 // pred_fallthru
        _
      // Predicated region
      $region25: #{tracing_transformer_block_wrapper.22} parent=15 // pred_check
        %p169 = pneg %p95
      $region26: #{tracing_transformer_block_wrapper.22} parent=15 // pred_check_branch
        %171 = sbr.rel (%p169) target = $region28
      $region27: #{tracing_transformer_block_wrapper.22} parent=15 // pred_region
        %p172 = scmp.lt.s32.totalorder %s16, 1
        %s173 = scalar_select %p172, %s16, 1
        %s174 = smul.addr %s173, 2
        %s175 = scalar_lea.vmem %s2, %s174
      $region28: #{tracing_transformer_block_wrapper.22} parent=15 // pred_fallthru
        _
    $region16: #{tracing_transformer_block_wrapper.22} parent=5 // pred_fallthru
      _
    %p176 = scmp.le.s32.totalorder 1, %s9
    %p177 = scmp.lt.s32.totalorder %s9, 3
    %p178 = pnand %p176, %p177
    %p179 = pneg %p178
    // Predicated region
    $region29: #{tracing_transformer_block_wrapper.22} parent=5 // pred_check
      _
    $region30: #{tracing_transformer_block_wrapper.22} parent=5 // pred_check_branch
      %181 = sbr.rel (%p178) target = $region32
    $region31: #{tracing_transformer_block_wrapper.22} parent=5 // pred_region
      %s182 = ssub.s32 %s9, 1
      %s183 = smul.u32 3, %s19
      %p184 = scmp.lt.s32.totalorder %s18, 1
      %s185 = scalar_select %p184, %s18, 1
      %p186 = scmp.lt.s32.totalorder %s183, 2
      %s187 = scalar_select %p186, %s183, 2
      %s188 = smul.addr %s187, 2
      %s189 = smul.addr %s185, 6
      %s190 = sadd.s32 %s188, %s189
      %s191 = smul.addr %s190, 4
      %s192 = scalar_lea.vmem %s0, %s191
      %p193 = pneg %p49
      %p194 = pneg %p46
      %p195 = scmp.lt.s32.totalorder %s18, 1
      %s196 = scalar_select %p195, %s18, 1
      %s197 = smul.addr %s196, 2
      %s198 = scalar_lea.vmem %s1, %s197
      %p199 = pneg %p75
      %p200 = pneg %p72
      %p201 = scmp.lt.s32.totalorder %s18, 1
      %s202 = scalar_select %p201, %s18, 1
      %s203 = smul.addr %s202, 2
      %s204 = scalar_lea.vmem %s2, %s203
      %p205 = pneg %p101
      %p206 = pneg %p98
      %p207 = pneg %p129
      %p208 = pneg %p126
      %s209 = smul.u32 3, %s19
      %p210 = scmp.lt.s32.totalorder %s18, 1
      %s211 = scalar_select %p210, %s18, 1
      %p212 = scmp.lt.s32.totalorder %s209, 2
      %s213 = scalar_select %p212, %s209, 2
      %s214 = smul.addr %s213, 2
      %s215 = smul.addr %s211, 6
      %s216 = sadd.s32 %s214, %s215
      %s217 = smul.addr %s216, 4
      %s218 = scalar_lea.vmem %s3, %s217
      %s219 = smul.u32 3, %s19
      %p220 = scmp.lt.s32.totalorder %s18, 1
      %s221 = scalar_select %p220, %s18, 1
      %p222 = scmp.lt.s32.totalorder %s219, 2
      %s223 = scalar_select %p222, %s219, 2
      %s224 = smul.addr %s223, 2
      %s225 = smul.addr %s221, 6
      %s226 = sadd.s32 %s224, %s225
      %s227 = smul.addr %s226, 4
      %s228 = scalar_lea.vmem %s0, %s227
      %s229 = smul.u32 3, %s19
      %p230 = scmp.lt.s32.totalorder %s18, 1
      %s231 = scalar_select %p230, %s18, 1
      %s232 = smul.addr %s231, 2
      %s233 = scalar_lea.vmem %s1, %s232
      %p234 = scmp.lt.s32.totalorder %s18, 1
      %s235 = scalar_select %p234, %s18, 1
      %s236 = smul.addr %s235, 2
      %s237 = scalar_lea.vmem %s2, %s236
      %s238 = smul.u32 3, %s19
      %p239 = scmp.lt.s32.totalorder %s18, 1
      %s240 = scalar_select %p239, %s18, 1
      %p241 = scmp.lt.s32.totalorder %s238, 2
      %s242 = scalar_select %p241, %s238, 2
      %s243 = smul.addr %s242, 2
      %s244 = smul.addr %s240, 6
      %s245 = sadd.s32 %s243, %s244
      %s246 = smul.addr %s245, 4
      %s247 = scalar_lea.vmem %s3, %s246
      %s248 = smul.u32 3, %s19
      %v249 = vld [vmem:[%s228] sm:$0xff]
      %v250 = vld [vmem:[%s228 + $0x8] sm:$0xff]
      %v251 = vld [vmem:[%s228 + $0x10] sm:$0xff]
      %v252 = vunpack.c.l.bf16 %v249
      %v253 = vunpack.c.h.bf16 %v249
      %v254 = vunpack.c.l.bf16 %v250
      %v255 = vunpack.c.h.bf16 %v250
      %v256 = vunpack.c.l.bf16 %v251
      %v257 = vunpack.c.h.bf16 %v251
      %v258 = vadd.f32 %v252, %v253
      %259 = vadd.xlane.f32.xlu0 %v258
      %v260 = vpop.xlane.xlu0 %259
      %v261 = vadd.f32 %v254, %v255
      %262 = vadd.xlane.f32.xlu0 %v261
      %v263 = vpop.xlane.xlu0 %262
      %v264 = vadd.f32 %v256, %v257
      %265 = vadd.xlane.f32.xlu0 %v264
      %v266 = vpop.xlane.xlu0 %265
      %v267 = vrcp.pop 256.0
      %v268 = vmul.f32 256.0, %v267
      %v269 = vsub.f32 1.0, %v268
      %v270 = vmul.f32 %v267, %v269
      %v271 = vadd.f32 %v267, %v270
      %vm272 = vweird.f32 %v267
      %v273 = vsel %vm272, %v267, %v271
      %v274 = vmul.f32 %v260, %v273
      %v275 = vmul.f32 %v263, %v273
      %v276 = vmul.f32 %v266, %v273
      %v277 = vsub.f32 %v252, %v274
      %v278 = vsub.f32 %v253, %v274
      %v279 = vsub.f32 %v254, %v275
      %v280 = vsub.f32 %v255, %v275
      %v281 = vsub.f32 %v256, %v276
      %v282 = vsub.f32 %v257, %v276
      %v283 = vmul.f32 %v277, %v277
      %v284 = vmul.f32 %v278, %v278
      %v285 = vmul.f32 %v279, %v279
      %v286 = vmul.f32 %v280, %v280
      %v287 = vmul.f32 %v281, %v281
      %v288 = vmul.f32 %v282, %v282
      %v289 = vadd.f32 %v283, %v284
      %290 = vadd.xlane.f32.xlu0 %v289
      %v291 = vpop.xlane.xlu0 %290
      %v292 = vadd.f32 %v285, %v286
      %293 = vadd.xlane.f32.xlu0 %v292
      %v294 = vpop.xlane.xlu0 %293
      %v295 = vadd.f32 %v287, %v288
      %296 = vadd.xlane.f32.xlu0 %v295
      %v297 = vpop.xlane.xlu0 %296
      %v298 = vmul.f32 %v291, %v273
      %v299 = vmul.f32 %v294, %v273
      %v300 = vmul.f32 %v297, %v273
      %v301 = vadd.f32 %v298, 1e-06
      %v302 = vadd.f32 %v299, 1e-06
      %v303 = vadd.f32 %v300, 1e-06
      %v304 = vrsqrt.pop %v301
      %v305 = vmul.f32 %v304, %v301
      %v306 = vmul.f32 %v305, %v304
      %v307 = vmul.f32 0.5, %v306
      %v308 = vsub.f32 1.5, %v307
      %v309 = vmul.f32 %v304, %v308
      %vm310 = vweird.f32 %v301
      %vm311 = vweird.f32 %v304
      %vm312 = vmor %vm310, %vm311
      %v313 = vsel %vm312, %v304, %v309
      %v314 = vrsqrt.pop %v302
      %v315 = vmul.f32 %v314, %v302
      %v316 = vmul.f32 %v315, %v314
      %v317 = vmul.f32 0.5, %v316
      %v318 = vsub.f32 1.5, %v317
      %v319 = vmul.f32 %v314, %v318
      %vm320 = vweird.f32 %v302
      %vm321 = vweird.f32 %v314
      %vm322 = vmor %vm320, %vm321
      %v323 = vsel %vm322, %v314, %v319
      %v324 = vrsqrt.pop %v303
      %v325 = vmul.f32 %v324, %v303
      %v326 = vmul.f32 %v325, %v324
      %v327 = vmul.f32 0.5, %v326
      %v328 = vsub.f32 1.5, %v327
      %v329 = vmul.f32 %v324, %v328
      %vm330 = vweird.f32 %v303
      %vm331 = vweird.f32 %v324
      %vm332 = vmor %vm330, %vm331
      %v333 = vsel %vm332, %v324, %v329
      %v334 = vmul.f32 %v277, %v313
      %v335 = vmul.f32 %v278, %v313
      %v336 = vmul.f32 %v279, %v323
      %v337 = vmul.f32 %v280, %v323
      %v338 = vmul.f32 %v281, %v333
      %v339 = vmul.f32 %v282, %v333
      %v340 = vld [vmem:[%s237] sm:$0x3]
      %v341 = vadd.f32 %v340, 1.0
      %v343 = vperm.slane %v341, 0
      %v344 = vperm.slane %v341, 1
      %v347 = vmul.f32 %v334, %v343
      %v348 = vmul.f32 %v335, %v344
      %v349 = vmul.f32 %v336, %v343
      %v350 = vmul.f32 %v337, %v344
      %v351 = vmul.f32 %v338, %v343
      %v352 = vmul.f32 %v339, %v344
      %v353 = vld [vmem:[%s233] sm:$0x3]
      %v355 = vperm.slane %v353, 0
      %v356 = vperm.slane %v353, 1
      %v359 = vadd.f32 %v347, %v355
      %v360 = vadd.f32 %v348, %v356
      %v361 = vadd.f32 %v349, %v355
      %v362 = vadd.f32 %v350, %v356
      %v363 = vadd.f32 %v351, %v355
      %v364 = vadd.f32 %v352, %v356
      %v365 = vpack.c.bf16 %v360, %v359
      %v366 = vpack.c.bf16 %v362, %v361
      %v367 = vpack.c.bf16 %v364, %v363
      %368 = vst [vmem:[%s247] sm:$0xff] %v365
      %369 = vst [vmem:[%s247 + $0x8] sm:$0xff] %v366
      %370 = vst [vmem:[%s247 + $0x10] sm:$0xff] %v367
      %s371 = smul.u32 3, %s19
      %p372 = scmp.lt.s32.totalorder %s18, 1
      %s373 = scalar_select %p372, %s18, 1
      %p374 = scmp.lt.s32.totalorder %s371, 2
      %s375 = scalar_select %p374, %s371, 2
      %s376 = smul.addr %s375, 2
      %s377 = smul.addr %s373, 6
      %s378 = sadd.s32 %s376, %s377
      %s379 = smul.addr %s378, 4
      %s380 = scalar_lea.vmem %s3, %s379
      // Predicated region
      $region33: #{tracing_transformer_block_wrapper.22} parent=31 // pred_check
        %p381 = pneg %p126
      $region34: #{tracing_transformer_block_wrapper.22} parent=31 // pred_check_branch
        %383 = sbr.rel (%p381) target = $region36
      $region35: #{tracing_transformer_block_wrapper.22} parent=31 // pred_region
        %s384 = smul.u32 3, %s19
      $region36: #{tracing_transformer_block_wrapper.22} parent=31 // pred_fallthru
        _
    $region32: #{tracing_transformer_block_wrapper.22} parent=5 // pred_fallthru
      _
    %p385 = scmp.le.s32.totalorder 2, %s9
    // Predicated region
    $region37: #{tracing_transformer_block_wrapper.22} parent=5 // pred_check
      %p386 = pneg %p385
    $region38: #{tracing_transformer_block_wrapper.22} parent=5 // pred_check_branch
      %388 = sbr.rel (%p386) target = $region40
    $region39: #{tracing_transformer_block_wrapper.22} parent=5 // pred_region
      %s389 = ssub.s32 %s9, 2
      // Predicated region
      $region41: #{tracing_transformer_block_wrapper.22} parent=39 // pred_check
        %p390 = pneg %p132
      $region42: #{tracing_transformer_block_wrapper.22} parent=39 // pred_check_branch
        %392 = sbr.rel (%p390) target = $region44
      $region43: #{tracing_transformer_block_wrapper.22} parent=39 // pred_region
        %s393 = smul.u32 3, %s21
        %p394 = scmp.lt.s32.totalorder %s20, 1
        %s395 = scalar_select %p394, %s20, 1
        %p396 = scmp.lt.s32.totalorder %s393, 2
        %s397 = scalar_select %p396, %s393, 2
        %s398 = smul.addr %s397, 2
        %s399 = smul.addr %s395, 6
        %s400 = sadd.s32 %s398, %s399
        %s401 = smul.addr %s400, 4
        %s402 = scalar_lea.vmem %s3, %s401
      $region44: #{tracing_transformer_block_wrapper.22} parent=39 // pred_fallthru
        _
    $region40: #{tracing_transformer_block_wrapper.22} parent=5 // pred_fallthru
      _
  $region6: #{tracing_transformer_block_wrapper.22} parent=0 // loop_footer
    %s13 = sadd.s32 1, %s9
  $region7: #{tracing_transformer_block_wrapper.22} parent=0 // loop_footer_branch
    %8 = sbr.rel target = $region3
  $region8: #{tracing_transformer_block_wrapper.22} parent=0 // loop_exit
    _

// kernel: tracing_transformer_block_wrapper.24
$region0: #{tracing_transformer_block_wrapper.24}
  #allocation0 [shape = 'u32[]', space=smem, size = 0x4, offset = 0x4, fixed_abs, tag = 'smem constant byte address 0x4 - core index']
  #allocation1 [shape = 'u32[72,128]{1,0:T(1,128)}', space=vmem, size = 0x9000, scoped, tag = 'internal scratch']
  #allocation2 [shape = 'f32[48,256]{1,0:T(8,128)}', space=vmem, size = 0xc000, scoped, tag = 'scratch operand']
  %s0 = inlined_call_operand.vmem [shape: bf16[48,256], index: 0, kind: input, shape index: {}]
  %s1 = inlined_call_operand.vmem [shape: bf16[256,768], index: 1, kind: input, shape index: {}]
  %s2 = inlined_call_operand.vmem [shape: bf16[1,768], index: 2, kind: input, shape index: {}]
  %s3 = inlined_call_operand.vmem [shape: bf16[48,768], index: 3, kind: output, shape index: {}]
  %s4 = sld [smem:[#allocation0]]
  $region125: #{tracing_transformer_block_wrapper.24} parent=0
    _
  %s6 = ssub.s32 1, %s4
  %s7 = scalar_select 0, %s6, %s4
  $region1: #{tracing_transformer_block_wrapper.24} parent=0
    #allocation3 [shape = 'u8[262144]{0}', space=vmem, size = 0x40000, scoped, tag = 'input window, operand 1']
    #allocation4 [shape = 'u8[49152]{0}', space=vmem, size = 0xc000, scoped, tag = 'output window, operand 0']
    loop: start=0, step=1, limit=5
    $region2: #{tracing_transformer_block_wrapper.24} parent=1 // loop_pre_header
      _
    $region3: #{tracing_transformer_block_wrapper.24} parent=1 // loop_header
      %s9 = sphi 0, %s13
      %p10 = scmp.ge.s32.totalorder %s9, 5
      %s16 = sphi 0, %s35
      %s17 = sphi 0, %s31
      %s18 = sphi 0, %s27
      %s19 = sphi 0, %s16
      %s20 = sphi 0, %s17
      %s21 = sphi 0, %s18
      %s22 = sphi 0, %s19
      %s23 = sphi 0, %s20
      %s24 = sphi 0, %s21
      %s40 = sphi 0, %s42
      %s43 = sphi 0, %s40
      %s44 = sphi 0, %s43
      %s60 = sphi 0, %s44
      %s68 = sphi 0, %s70
      %s71 = sphi 0, %s68
      %s72 = sphi 0, %s71
      %s88 = sphi 0, %s72
      %s94 = sphi 0, %s96
      %s97 = sphi 0, %s94
      %s98 = sphi 0, %s97
      %s114 = sphi 0, %s98
      %s122 = sphi 0, %s124
      %s125 = sphi 0, %s122
      %s126 = sphi 0, %s125
      %s142 = sphi 0, %s126
    $region4: #{tracing_transformer_block_wrapper.24} parent=1 // loop_header_branch
      %12 = sbr.rel (%p10) target = $region8
    $region5: #{tracing_transformer_block_wrapper.24} parent=1 // loop_body
      %s14 = ssub.s32 %s9, 1
      %s15 = ssub.s32 %s9, 2
      %s25 = sadd.s32 1, %s18
      %p26 = scmp.ge.s32.totalorder %s25, 1
      %s27 = scalar_select %p26, 0, %s25
      %s28 = sadd.s32 1, %s17
      %s29 = scalar_select %p26, %s28, %s17
      %p30 = scmp.ge.s32.totalorder %s29, 3
      %s31 = scalar_select %p30, 0, %s29
      %s32 = sadd.s32 1, %s16
      %s33 = scalar_select %p30, %s32, %s16
      %p34 = scmp.ge.s32.totalorder %s33, 1
      %s35 = scalar_select %p34, 0, %s33
      %s36 = ssub.s32 %s16, %s35
      %s37 = ssub.s32 %s18, %s27
      %s38 = sor.u32 %s36, %s37
      %p39 = scmp.eq.s32.totalorder %s38, 0
      %s41 = sadd.s32 %s40, 1
      %s42 = scalar_select %p39, %s40, %s41
      %p45 = pneg %p39
      %p46 = scmp.eq.s32.totalorder %s9, 2
      %p47 = por %p45, %p46
      %p48 = scmp.ne.s32.totalorder %s40, %s43
      %p49 = scmp.eq.s32.totalorder %s9, 0
      %p50 = por %p48, %p49
      %p51 = scmp.ne.s32.totalorder %s40, %s43
      %p52 = scmp.eq.s32.totalorder %s14, 2
      %p53 = por %p51, %p52
      %p54 = scmp.ne.s32.totalorder %s43, %s44
      %p55 = scmp.eq.s32.totalorder %s14, 0
      %p56 = por %p54, %p55
      %p57 = scmp.ne.s32.totalorder %s43, %s44
      %p58 = scmp.eq.s32.totalorder %s15, 2
      %p59 = por %p57, %p58
      %p61 = scmp.ne.s32.totalorder %s44, %s60
      %p62 = scmp.eq.s32.totalorder %s15, 0
      %p63 = por %p61, %p62
      %s64 = ssub.s32 %s18, %s27
      %s65 = ssub.s32 %s17, %s31
      %s66 = sor.u32 %s64, %s65
      %p67 = scmp.eq.s32.totalorder %s66, 0
      %s69 = sadd.s32 %s68, 1
      %s70 = scalar_select %p67, %s68, %s69
      %p73 = pneg %p67
      %p74 = scmp.eq.s32.totalorder %s9, 2
      %p75 = por %p73, %p74
      %p76 = scmp.ne.s32.totalorder %s68, %s71
      %p77 = scmp.eq.s32.totalorder %s9, 0
      %p78 = por %p76, %p77
      %p79 = scmp.ne.s32.totalorder %s68, %s71
      %p80 = scmp.eq.s32.totalorder %s14, 2
      %p81 = por %p79, %p80
      %p82 = scmp.ne.s32.totalorder %s71, %s72
      %p83 = scmp.eq.s32.totalorder %s14, 0
      %p84 = por %p82, %p83
      %p85 = scmp.ne.s32.totalorder %s71, %s72
      %p86 = scmp.eq.s32.totalorder %s15, 2
      %p87 = por %p85, %p86
      %p89 = scmp.ne.s32.totalorder %s72, %s88
      %p90 = scmp.eq.s32.totalorder %s15, 0
      %p91 = por %p89, %p90
      %s92 = ssub.s32 %s17, %s31
      %p93 = scmp.eq.s32.totalorder %s92, 0
      %s95 = sadd.s32 %s94, 1
      %s96 = scalar_select %p93, %s94, %s95
      %p99 = pneg %p93
      %p100 = scmp.eq.s32.totalorder %s9, 2
      %p101 = por %p99, %p100
      %p102 = scmp.ne.s32.totalorder %s94, %s97
      %p103 = scmp.eq.s32.totalorder %s9, 0
      %p104 = por %p102, %p103
      %p105 = scmp.ne.s32.totalorder %s94, %s97
      %p106 = scmp.eq.s32.totalorder %s14, 2
      %p107 = por %p105, %p106
      %p108 = scmp.ne.s32.totalorder %s97, %s98
      %p109 = scmp.eq.s32.totalorder %s14, 0
      %p110 = por %p108, %p109
      %p111 = scmp.ne.s32.totalorder %s97, %s98
      %p112 = scmp.eq.s32.totalorder %s15, 2
      %p113 = por %p111, %p112
      %p115 = scmp.ne.s32.totalorder %s98, %s114
      %p116 = scmp.eq.s32.totalorder %s15, 0
      %p117 = por %p115, %p116
      %s118 = ssub.s32 %s16, %s35
      %s119 = ssub.s32 %s17, %s31
      %s120 = sor.u32 %s118, %s119
      %p121 = scmp.eq.s32.totalorder %s120, 0
      %s123 = sadd.s32 %s122, 1
      %s124 = scalar_select %p121, %s122, %s123
      %p127 = pneg %p121
      %p128 = scmp.eq.s32.totalorder %s9, 2
      %p129 = por %p127, %p128
      %p130 = scmp.ne.s32.totalorder %s122, %s125
      %p131 = scmp.eq.s32.totalorder %s9, 0
      %p132 = por %p130, %p131
      %p133 = scmp.ne.s32.totalorder %s122, %s125
      %p134 = scmp.eq.s32.totalorder %s14, 2
      %p135 = por %p133, %p134
      %p136 = scmp.ne.s32.totalorder %s125, %s126
      %p137 = scmp.eq.s32.totalorder %s14, 0
      %p138 = por %p136, %p137
      %p139 = scmp.ne.s32.totalorder %s125, %s126
      %p140 = scmp.eq.s32.totalorder %s15, 2
      %p141 = por %p139, %p140
      %p143 = scmp.ne.s32.totalorder %s126, %s142
      %p144 = scmp.eq.s32.totalorder %s15, 0
      %p145 = por %p143, %p144
      %p146 = scmp.le.s32.totalorder 1, %s9
      %p147 = scmp.lt.s32.totalorder %s9, 4
      %p148 = pnand %p146, %p147
      %p149 = pneg %p148
      // Predicated region
      $region9: #{tracing_transformer_block_wrapper.24} parent=5 // pred_check
        _
      $region10: #{tracing_transformer_block_wrapper.24} parent=5 // pred_check_branch
        %151 = sbr.rel (%p148) target = $region12
      $region11: #{tracing_transformer_block_wrapper.24} parent=5 // pred_region
        %s152 = ssub.s32 %s9, 1
        // Predicated region
        $region13: #{tracing_transformer_block_wrapper.24} parent=11 // pred_check
          %p153 = pneg %p56
        $region14: #{tracing_transformer_block_wrapper.24} parent=11 // pred_check_branch
          %155 = sbr.rel (%p153) target = $region16
        $region15: #{tracing_transformer_block_wrapper.24} parent=11 // pred_region
          %s156 = smul.u32 6, %s19
          %s157 = smul.u32 2, %s21
          %p158 = scmp.lt.s32.totalorder %s156, 5
          %s159 = scalar_select %p158, %s156, 5
          %p160 = scmp.lt.s32.totalorder %s157, 1
          %s161 = scalar_select %p160, %s157, 1
          %s162 = smul.addr %s159, 2
          %s163 = sadd.s32 %s161, %s162
          %s164 = smul.addr %s163, 4
          %s165 = scalar_lea.vmem %s0, %s164
          %s166 = smul.u32 6, %s19
          %s167 = smul.u32 2, %s21
        $region16: #{tracing_transformer_block_wrapper.24} parent=11 // pred_fallthru
          _
      $region12: #{tracing_transformer_block_wrapper.24} parent=5 // pred_fallthru
        _
      %p168 = scmp.lt.s32.totalorder %s9, 3
      // Predicated region
      $region17: #{tracing_transformer_block_wrapper.24} parent=5 // pred_check
        %p169 = pneg %p168
      $region18: #{tracing_transformer_block_wrapper.24} parent=5 // pred_check_branch
        %171 = sbr.rel (%p169) target = $region20
      $region19: #{tracing_transformer_block_wrapper.24} parent=5 // pred_region
        // Predicated region
        $region21: #{tracing_transformer_block_wrapper.24} parent=19 // pred_check
          %p172 = pneg %p78
        $region22: #{tracing_transformer_block_wrapper.24} parent=19 // pred_check_branch
          %174 = sbr.rel (%p172) target = $region24
        $region23: #{tracing_transformer_block_wrapper.24} parent=19 // pred_region
          %s175 = sand.u32 %s68, 1
          %s176 = sand.u32 %s68, 1
          %s177 = smul.addr %s176, 256
          %s178 = scalar_lea.vmem [#allocation3], %s177
          %s179 = smul.u32 32, %s18
          %s180 = smul.u32 2, %s17
          %s181 = smul.addr %s179, 6
          %s182 = sadd.s32 %s180, %s181
          %s183 = smul.addr %s182, 4
          %s184 = scalar_lea.vmem %s1, %s183
          // Predicated region
          $region25: #{tracing_transformer_block_wrapper.24} parent=23 // pred_check
            _
          $region26: #{tracing_transformer_block_wrapper.24} parent=23 // pred_check_branch
            %186 = sbr.rel (0) target = $region28
          $region27: #{tracing_transformer_block_wrapper.24} parent=23 // pred_region
            // Predicated region
            $region29: #{tracing_transformer_block_wrapper.24} parent=27 // pred_check
              _
            $region30: #{tracing_transformer_block_wrapper.24} parent=27 // pred_check_branch
              %188 = sbr.rel (0) target = $region32
            $region31: #{tracing_transformer_block_wrapper.24} parent=27 // pred_region
              // Predicated region
              $region44: #{tracing_transformer_block_wrapper.24} parent=31 // pred_check
                _
              $region45: #{tracing_transformer_block_wrapper.24} parent=31 // pred_check_branch
                %266 = sbr.rel (0) target = $region47
              $region46: #{tracing_transformer_block_wrapper.24} parent=31 // pred_region
                loop: start=0, step=1, limit=1
                $region48: #{tracing_transformer_block_wrapper.24} parent=46 // loop_pre_header
                  _
                $region49: #{tracing_transformer_block_wrapper.24} parent=46 // loop_header
                  %s268 = sphi 0, %s272
                  %p269 = scmp.ge.s32.totalorder %s268, 1
                  %s273 = sphi %s184, %s184
                  %s274 = sphi %s178, %s178
                $region50: #{tracing_transformer_block_wrapper.24} parent=46 // loop_header_branch
                  %271 = sbr.rel (%p269) target = $region54
                $region51: #{tracing_transformer_block_wrapper.24} parent=46 // loop_body
                  %v275 = vld [vmem:[%s273] sm:$0xff]
                  %276 = vst [vmem:[%s274] sm:$0xff] %v275
                  %v277 = vld [vmem:[%s273 + $0x18] sm:$0xff]
                  %278 = vst [vmem:[%s274 + $0x8] sm:$0xff] %v277
                  %v279 = vld [vmem:[%s273 + $0x30] sm:$0xff]
                  %280 = vst [vmem:[%s274 + $0x10] sm:$0xff] %v279
                  %v281 = vld [vmem:[%s273 + $0x48] sm:$0xff]
                  %282 = vst [vmem:[%s274 + $0x18] sm:$0xff] %v281
                  %v283 = vld [vmem:[%s273 + $0x60] sm:$0xff]
                  %284 = vst [vmem:[%s274 + $0x20] sm:$0xff] %v283
                  %v285 = vld [vmem:[%s273 + $0x78] sm:$0xff]
                  %286 = vst [vmem:[%s274 + $0x28] sm:$0xff] %v285
                  %v287 = vld [vmem:[%s273 + $0x90] sm:$0xff]
                  %288 = vst [vmem:[%s274 + $0x30] sm:$0xff] %v287
                  %v289 = vld [vmem:[%s273 + $0xa8] sm:$0xff]
                  %290 = vst [vmem:[%s274 + $0x38] sm:$0xff] %v289
                  %v291 = vld [vmem:[%s273 + $0xc0] sm:$0xff]
                  %292 = vst [vmem:[%s274 + $0x40] sm:$0xff] %v291
                  %v293 = vld [vmem:[%s273 + $0xd8] sm:$0xff]
                  %294 = vst [vmem:[%s274 + $0x48] sm:$0xff] %v293
                  %v295 = vld [vmem:[%s273 + $0xf0] sm:$0xff]
                  %296 = vst [vmem:[%s274 + $0x50] sm:$0xff] %v295
                  %v297 = vld [vmem:[%s273 + $0x108] sm:$0xff]
                  %298 = vst [vmem:[%s274 + $0x58] sm:$0xff] %v297
                  %v299 = vld [vmem:[%s273 + $0x120] sm:$0xff]
                  %300 = vst [vmem:[%s274 + $0x60] sm:$0xff] %v299
                  %v301 = vld [vmem:[%s273 + $0x138] sm:$0xff]
                  %302 = vst [vmem:[%s274 + $0x68] sm:$0xff] %v301
                  %v303 = vld [vmem:[%s273 + $0x150] sm:$0xff]
                  %304 = vst [vmem:[%s274 + $0x70] sm:$0xff] %v303
                  %v305 = vld [vmem:[%s273 + $0x168] sm:$0xff]
                  %306 = vst [vmem:[%s274 + $0x78] sm:$0xff] %v305
                  %v307 = vld [vmem:[%s273 + $0x180] sm:$0xff]
                  %308 = vst [vmem:[%s274 + $0x80] sm:$0xff] %v307
                  %v309 = vld [vmem:[%s273 + $0x198] sm:$0xff]
                  %310 = vst [vmem:[%s274 + $0x88] sm:$0xff] %v309
                  %v311 = vld [vmem:[%s273 + $0x1b0] sm:$0xff]
                  %312 = vst [vmem:[%s274 + $0x90] sm:$0xff] %v311
                  %v313 = vld [vmem:[%s273 + $0x1c8] sm:$0xff]
                  %314 = vst [vmem:[%s274 + $0x98] sm:$0xff] %v313
                  %v315 = vld [vmem:[%s273 + $0x1e0] sm:$0xff]
                  %316 = vst [vmem:[%s274 + $0xa0] sm:$0xff] %v315
                  %v317 = vld [vmem:[%s273 + $0x1f8] sm:$0xff]
                  %318 = vst [vmem:[%s274 + $0xa8] sm:$0xff] %v317
                  %v319 = vld [vmem:[%s273 + $0x210] sm:$0xff]
                  %320 = vst [vmem:[%s274 + $0xb0] sm:$0xff] %v319
                  %v321 = vld [vmem:[%s273 + $0x228] sm:$0xff]
                  %322 = vst [vmem:[%s274 + $0xb8] sm:$0xff] %v321
                  %v323 = vld [vmem:[%s273 + $0x240] sm:$0xff]
                  %324 = vst [vmem:[%s274 + $0xc0] sm:$0xff] %v323
                  %v325 = vld [vmem:[%s273 + $0x258] sm:$0xff]
                  %326 = vst [vmem:[%s274 + $0xc8] sm:$0xff] %v325
                  %v327 = vld [vmem:[%s273 + $0x270] sm:$0xff]
                  %328 = vst [vmem:[%s274 + $0xd0] sm:$0xff] %v327
                  %v329 = vld [vmem:[%s273 + $0x288] sm:$0xff]
                  %330 = vst [vmem:[%s274 + $0xd8] sm:$0xff] %v329
                  %v331 = vld [vmem:[%s273 + $0x2a0] sm:$0xff]
                  %332 = vst [vmem:[%s274 + $0xe0] sm:$0xff] %v331
                  %v333 = vld [vmem:[%s273 + $0x2b8] sm:$0xff]
                  %334 = vst [vmem:[%s274 + $0xe8] sm:$0xff] %v333
                  %v335 = vld [vmem:[%s273 + $0x2d0] sm:$0xff]
                  %336 = vst [vmem:[%s274 + $0xf0] sm:$0xff] %v335
                  %v337 = vld [vmem:[%s273 + $0x2e8] sm:$0xff]
                  %338 = vst [vmem:[%s274 + $0xf8] sm:$0xff] %v337
                $region52: #{tracing_transformer_block_wrapper.24} parent=46 // loop_footer
                  %s272 = sadd.s32 1, %s268
                $region53: #{tracing_transformer_block_wrapper.24} parent=46 // loop_footer_branch
                  %267 = sbr.rel target = $region49
                $region54: #{tracing_transformer_block_wrapper.24} parent=46 // loop_exit
                  _
              $region47: #{tracing_transformer_block_wrapper.24} parent=31 // pred_fallthru
                _
              // Predicated region
              $region55: #{tracing_transformer_block_wrapper.24} parent=31 // pred_check
                _
              $region56: #{tracing_transformer_block_wrapper.24} parent=31 // pred_check_branch
                %340 = sbr.rel target = $region58
              $region57: #{tracing_transformer_block_wrapper.24} parent=31 // pred_region
                _
              $region58: #{tracing_transformer_block_wrapper.24} parent=31 // pred_fallthru
                _
            $region32: #{tracing_transformer_block_wrapper.24} parent=27 // pred_fallthru
              _
            // Predicated region
            $region33: #{tracing_transformer_block_wrapper.24} parent=27 // pred_check
              _
            $region34: #{tracing_transformer_block_wrapper.24} parent=27 // pred_check_branch
              %190 = sbr.rel target = $region36
            $region35: #{tracing_transformer_block_wrapper.24} parent=27 // pred_region
              %s192 = ssub.s32 256, 1
              loop: start=0, step=1, limit=1
              $region37: #{tracing_transformer_block_wrapper.24} parent=35 // loop_pre_header
                _
              $region38: #{tracing_transformer_block_wrapper.24} parent=35 // loop_header
                %s194 = sphi 0, %s198
                %p195 = scmp.ge.s32.totalorder %s194, 1
                %s199 = sphi %s184, %s184
                %s200 = sphi %s178, %s178
              $region39: #{tracing_transformer_block_wrapper.24} parent=35 // loop_header_branch
                %197 = sbr.rel (%p195) target = $region43
              $region40: #{tracing_transformer_block_wrapper.24} parent=35 // loop_body
                %v201 = vld [vmem:[%s199] sm:%s192]
                %202 = vst [vmem:[%s200] sm:%s192] %v201
                %v203 = vld [vmem:[%s199 + $0x18] sm:%s192]
                %204 = vst [vmem:[%s200 + $0x8] sm:%s192] %v203
                %v205 = vld [vmem:[%s199 + $0x30] sm:%s192]
                %206 = vst [vmem:[%s200 + $0x10] sm:%s192] %v205
                %v207 = vld [vmem:[%s199 + $0x48] sm:%s192]
                %208 = vst [vmem:[%s200 + $0x18] sm:%s192] %v207
                %v209 = vld [vmem:[%s199 + $0x60] sm:%s192]
                %210 = vst [vmem:[%s200 + $0x20] sm:%s192] %v209
                %v211 = vld [vmem:[%s199 + $0x78] sm:%s192]
                %212 = vst [vmem:[%s200 + $0x28] sm:%s192] %v211
                %v213 = vld [vmem:[%s199 + $0x90] sm:%s192]
                %214 = vst [vmem:[%s200 + $0x30] sm:%s192] %v213
                %v215 = vld [vmem:[%s199 + $0xa8] sm:%s192]
                %216 = vst [vmem:[%s200 + $0x38] sm:%s192] %v215
                %v217 = vld [vmem:[%s199 + $0xc0] sm:%s192]
                %218 = vst [vmem:[%s200 + $0x40] sm:%s192] %v217
                %v219 = vld [vmem:[%s199 + $0xd8] sm:%s192]
                %220 = vst [vmem:[%s200 + $0x48] sm:%s192] %v219
                %v221 = vld [vmem:[%s199 + $0xf0] sm:%s192]
                %222 = vst [vmem:[%s200 + $0x50] sm:%s192] %v221
                %v223 = vld [vmem:[%s199 + $0x108] sm:%s192]
                %224 = vst [vmem:[%s200 + $0x58] sm:%s192] %v223
                %v225 = vld [vmem:[%s199 + $0x120] sm:%s192]
                %226 = vst [vmem:[%s200 + $0x60] sm:%s192] %v225
                %v227 = vld [vmem:[%s199 + $0x138] sm:%s192]
                %228 = vst [vmem:[%s200 + $0x68] sm:%s192] %v227
                %v229 = vld [vmem:[%s199 + $0x150] sm:%s192]
                %230 = vst [vmem:[%s200 + $0x70] sm:%s192] %v229
                %v231 = vld [vmem:[%s199 + $0x168] sm:%s192]
                %232 = vst [vmem:[%s200 + $0x78] sm:%s192] %v231
                %v233 = vld [vmem:[%s199 + $0x180] sm:%s192]
                %234 = vst [vmem:[%s200 + $0x80] sm:%s192] %v233
                %v235 = vld [vmem:[%s199 + $0x198] sm:%s192]
                %236 = vst [vmem:[%s200 + $0x88] sm:%s192] %v235
                %v237 = vld [vmem:[%s199 + $0x1b0] sm:%s192]
                %238 = vst [vmem:[%s200 + $0x90] sm:%s192] %v237
                %v239 = vld [vmem:[%s199 + $0x1c8] sm:%s192]
                %240 = vst [vmem:[%s200 + $0x98] sm:%s192] %v239
                %v241 = vld [vmem:[%s199 + $0x1e0] sm:%s192]
                %242 = vst [vmem:[%s200 + $0xa0] sm:%s192] %v241
                %v243 = vld [vmem:[%s199 + $0x1f8] sm:%s192]
                %244 = vst [vmem:[%s200 + $0xa8] sm:%s192] %v243
                %v245 = vld [vmem:[%s199 + $0x210] sm:%s192]
                %246 = vst [vmem:[%s200 + $0xb0] sm:%s192] %v245
                %v247 = vld [vmem:[%s199 + $0x228] sm:%s192]
                %248 = vst [vmem:[%s200 + $0xb8] sm:%s192] %v247
                %v249 = vld [vmem:[%s199 + $0x240] sm:%s192]
                %250 = vst [vmem:[%s200 + $0xc0] sm:%s192] %v249
                %v251 = vld [vmem:[%s199 + $0x258] sm:%s192]
                %252 = vst [vmem:[%s200 + $0xc8] sm:%s192] %v251
                %v253 = vld [vmem:[%s199 + $0x270] sm:%s192]
                %254 = vst [vmem:[%s200 + $0xd0] sm:%s192] %v253
                %v255 = vld [vmem:[%s199 + $0x288] sm:%s192]
                %256 = vst [vmem:[%s200 + $0xd8] sm:%s192] %v255
                %v257 = vld [vmem:[%s199 + $0x2a0] sm:%s192]
                %258 = vst [vmem:[%s200 + $0xe0] sm:%s192] %v257
                %v259 = vld [vmem:[%s199 + $0x2b8] sm:%s192]
                %260 = vst [vmem:[%s200 + $0xe8] sm:%s192] %v259
                %v261 = vld [vmem:[%s199 + $0x2d0] sm:%s192]
                %262 = vst [vmem:[%s200 + $0xf0] sm:%s192] %v261
                %v263 = vld [vmem:[%s199 + $0x2e8] sm:%s192]
                %264 = vst [vmem:[%s200 + $0xf8] sm:%s192] %v263
              $region41: #{tracing_transformer_block_wrapper.24} parent=35 // loop_footer
                %s198 = sadd.s32 1, %s194
              $region42: #{tracing_transformer_block_wrapper.24} parent=35 // loop_footer_branch
                %193 = sbr.rel target = $region38
              $region43: #{tracing_transformer_block_wrapper.24} parent=35 // loop_exit
                _
            $region36: #{tracing_transformer_block_wrapper.24} parent=27 // pred_fallthru
              _
          $region28: #{tracing_transformer_block_wrapper.24} parent=23 // pred_fallthru
            _
          %341 = vnop
        $region24: #{tracing_transformer_block_wrapper.24} parent=19 // pred_fallthru
          _
        // Predicated region
        $region59: #{tracing_transformer_block_wrapper.24} parent=19 // pred_check
          %p342 = pneg %p104
        $region60: #{tracing_transformer_block_wrapper.24} parent=19 // pred_check_branch
          %344 = sbr.rel (%p342) target = $region62
        $region61: #{tracing_transformer_block_wrapper.24} parent=19 // pred_region
          %s345 = smul.u32 2, %s17
          %p346 = scmp.lt.s32.totalorder %s345, 5
          %s347 = scalar_select %p346, %s345, 5
          %s348 = scalar_lea.vmem %s2, %s347
          %s349 = smul.u32 2, %s17
        $region62: #{tracing_transformer_block_wrapper.24} parent=19 // pred_fallthru
          _
      $region20: #{tracing_transformer_block_wrapper.24} parent=5 // pred_fallthru
        _
      %p350 = scmp.le.s32.totalorder 1, %s9
      %p351 = scmp.lt.s32.totalorder %s9, 4
      %p352 = pnand %p350, %p351
      %p353 = pneg %p352
      // Predicated region
      $region63: #{tracing_transformer_block_wrapper.24} parent=5 // pred_check
        _
      $region64: #{tracing_transformer_block_wrapper.24} parent=5 // pred_check_branch
        %355 = sbr.rel (%p352) target = $region66
      $region65: #{tracing_transformer_block_wrapper.24} parent=5 // pred_region
        %s356 = ssub.s32 %s9, 1
        %s357 = sand.u32 %s71, 1
        %s358 = sand.u32 %s71, 1
        %s359 = smul.addr %s358, 256
        %s360 = scalar_lea.vmem [#allocation3], %s359
        // Predicated region
        $region67: #{tracing_transformer_block_wrapper.24} parent=65 // pred_check
          %p361 = pneg %p84
        $region68: #{tracing_transformer_block_wrapper.24} parent=65 // pred_check_branch
          %363 = sbr.rel (%p361) target = $region70
        $region69: #{tracing_transformer_block_wrapper.24} parent=65 // pred_region
          _
        $region70: #{tracing_transformer_block_wrapper.24} parent=65 // pred_fallthru
          _
        %s364 = smul.u32 6, %s19
        %s365 = smul.u32 2, %s21
        %p366 = scmp.lt.s32.totalorder %s364, 5
        %s367 = scalar_select %p366, %s364, 5
        %p368 = scmp.lt.s32.totalorder %s365, 1
        %s369 = scalar_select %p368, %s365, 1
        %s370 = smul.addr %s367, 2
        %s371 = sadd.s32 %s369, %s370
        %s372 = smul.addr %s371, 4
        %s373 = scalar_lea.vmem %s0, %s372
        %p374 = pneg %p56
        %p375 = pneg %p53
        %s376 = sand.u32 %s71, 1
        %s377 = sand.u32 %s71, 1
        %s378 = smul.addr %s377, 256
        %s379 = scalar_lea.vmem [#allocation3], %s378
        %p380 = pneg %p84
        %p381 = pneg %p81
        %s382 = smul.u32 2, %s20
        %p383 = scmp.lt.s32.totalorder %s382, 5
        %s384 = scalar_select %p383, %s382, 5
        %s385 = scalar_lea.vmem %s2, %s384
        %p386 = pneg %p110
        %p387 = pneg %p107
        %p388 = pneg %p138
        %p389 = pneg %p135
        %s390 = sand.u32 %s125, 1
        %s391 = sand.u32 %s125, 1
        %s392 = smul.addr %s391, 48
        %s393 = scalar_lea.vmem [#allocation4], %s392
        %s394 = smul.u32 6, %s19
        %s395 = smul.u32 2, %s21
        %p396 = scmp.lt.s32.totalorder %s394, 5
        %s397 = scalar_select %p396, %s394, 5
        %p398 = scmp.lt.s32.totalorder %s395, 1
        %s399 = scalar_select %p398, %s395, 1
        %s400 = smul.addr %s397, 2
        %s401 = sadd.s32 %s399, %s400
        %s402 = smul.addr %s401, 4
        %s403 = scalar_lea.vmem %s0, %s402
        %s404 = smul.u32 6, %s19
        %s405 = smul.u32 2, %s21
        %s406 = smul.u32 32, %s21
        %s407 = smul.u32 2, %s20
        %s408 = smul.u32 2, %s20
        %p409 = scmp.lt.s32.totalorder %s408, 5
        %s410 = scalar_select %p409, %s408, 5
        %s411 = scalar_lea.vmem %s2, %s410
        %s412 = smul.u32 2, %s20
        %s413 = smul.u32 6, %s19
        %s414 = smul.u32 2, %s20
        %p415 = scmp.eq.s32.totalorder %s21, 0
        // Predicated region
        $region71: #{tracing_transformer_block_wrapper.24} parent=65 // pred_check
          %p416 = pneg %p415
        $region72: #{tracing_transformer_block_wrapper.24} parent=65 // pred_check_branch
          %418 = sbr.rel (%p416) target = $region74
        $region73: #{tracing_transformer_block_wrapper.24} parent=65 // pred_region
          %419 = vst [vmem:[#allocation2] sm:$0xff] 0.0
          %420 = vst [vmem:[#allocation2 + $0x8] sm:$0xff] 0.0
          %421 = vst [vmem:[#allocation2 + $0x10] sm:$0xff] 0.0
          %422 = vst [vmem:[#allocation2 + $0x18] sm:$0xff] 0.0
          %423 = vst [vmem:[#allocation2 + $0x20] sm:$0xff] 0.0
          %424 = vst [vmem:[#allocation2 + $0x28] sm:$0xff] 0.0
          %425 = vst [vmem:[#allocation2 + $0x30] sm:$0xff] 0.0
          %426 = vst [vmem:[#allocation2 + $0x38] sm:$0xff] 0.0
          %427 = vst [vmem:[#allocation2 + $0x40] sm:$0xff] 0.0
          %428 = vst [vmem:[#allocation2 + $0x48] sm:$0xff] 0.0
          %429 = vst [vmem:[#allocation2 + $0x50] sm:$0xff] 0.0
          %430 = vst [vmem:[#allocation2 + $0x58] sm:$0xff] 0.0
        $region74: #{tracing_transformer_block_wrapper.24} parent=65 // pred_fallthru
          _
        %v431 = vld [vmem:[#allocation2] sm:$0xff]
        %v432 = vld [vmem:[#allocation2 + $0x8] sm:$0xff]
        %v433 = vld [vmem:[#allocation2 + $0x10] sm:$0xff]
        %v434 = vld [vmem:[#allocation2 + $0x18] sm:$0xff]
        %v435 = vld [vmem:[#allocation2 + $0x20] sm:$0xff]
        %v436 = vld [vmem:[#allocation2 + $0x28] sm:$0xff]
        %v437 = vld [vmem:[#allocation2 + $0x30] sm:$0xff]
        %v438 = vld [vmem:[#allocation2 + $0x38] sm:$0xff]
        %v439 = vld [vmem:[#allocation2 + $0x40] sm:$0xff]
        %v440 = vld [vmem:[#allocation2 + $0x48] sm:$0xff]
        %v441 = vld [vmem:[#allocation2 + $0x50] sm:$0xff]
        %v442 = vld [vmem:[#allocation2 + $0x58] sm:$0xff]
        %v443 = vld [vmem:[%s403] sm:$0xff]
        %v444 = vld [vmem:[%s403 + $0x8] sm:$0xff]
        %v445 = vld [vmem:[%s403 + $0x10] sm:$0xff]
        %v446 = vld [vmem:[%s403 + $0x18] sm:$0xff]
        %v447 = vld [vmem:[%s403 + $0x20] sm:$0xff]
        %v448 = vld [vmem:[%s403 + $0x28] sm:$0xff]
        %v449 = vld [vmem:[%s360] sm:$0xff]
        %v450 = vld [vmem:[%s360 + $0x8] sm:$0xff]
        %v451 = vld [vmem:[%s360 + $0x10] sm:$0xff]
        %v452 = vld [vmem:[%s360 + $0x18] sm:$0xff]
        %v453 = vld [vmem:[%s360 + $0x20] sm:$0xff]
        %v454 = vld [vmem:[%s360 + $0x28] sm:$0xff]
        %v455 = vld [vmem:[%s360 + $0x30] sm:$0xff]
        %v456 = vld [vmem:[%s360 + $0x38] sm:$0xff]
        %v457 = vld [vmem:[%s360 + $0x40] sm:$0xff]
        %v458 = vld [vmem:[%s360 + $0x48] sm:$0xff]
        %v459 = vld [vmem:[%s360 + $0x50] sm:$0xff]
        %v460 = vld [vmem:[%s360 + $0x58] sm:$0xff]
        %v461 = vld [vmem:[%s360 + $0x60] sm:$0xff]
        %v462 = vld [vmem:[%s360 + $0x68] sm:$0xff]
        %v463 = vld [vmem:[%s360 + $0x70] sm:$0xff]
        %v464 = vld [vmem:[%s360 + $0x78] sm:$0xff]
        %v465 = vld [vmem:[%s360 + $0x80] sm:$0xff]
        %v466 = vld [vmem:[%s360 + $0x88] sm:$0xff]
        %v467 = vld [vmem:[%s360 + $0x90] sm:$0xff]
        %v468 = vld [vmem:[%s360 + $0x98] sm:$0xff]
        %v469 = vld [vmem:[%s360 + $0xa0] sm:$0xff]
        %v470 = vld [vmem:[%s360 + $0xa8] sm:$0xff]
        %v471 = vld [vmem:[%s360 + $0xb0] sm:$0xff]
        %v472 = vld [vmem:[%s360 + $0xb8] sm:$0xff]
        %v473 = vld [vmem:[%s360 + $0xc0] sm:$0xff]
        %v474 = vld [vmem:[%s360 + $0xc8] sm:$0xff]
        %v475 = vld [vmem:[%s360 + $0xd0] sm:$0xff]
        %v476 = vld [vmem:[%s360 + $0xd8] sm:$0xff]
        %v477 = vld [vmem:[%s360 + $0xe0] sm:$0xff]
        %v478 = vld [vmem:[%s360 + $0xe8] sm:$0xff]
        %v479 = vld [vmem:[%s360 + $0xf0] sm:$0xff]
        %v480 = vld [vmem:[%s360 + $0xf8] sm:$0xff]
        %v487 = vunpack.c.l.b16 %v443
        %v488 = vunpack.c.h.b16 %v443
        %v489 = vunpack.c.l.b16 %v444
        %v490 = vunpack.c.h.b16 %v444
        %v491 = vunpack.c.l.b16 %v445
        %v492 = vunpack.c.h.b16 %v445
        %v493 = vunpack.c.l.b16 %v446
        %v494 = vunpack.c.h.b16 %v446
        %v495 = vunpack.c.l.b16 %v447
        %v496 = vunpack.c.h.b16 %v447
        %v497 = vunpack.c.l.b16 %v448
        %v498 = vunpack.c.h.b16 %v448
        %v499 = vpack.c.b16 %v489, %v487
        %v500 = vpack.c.b16 %v490, %v488
        %v501 = vpack.c.b16 %v493, %v491
        %v502 = vpack.c.b16 %v494, %v492
        %v503 = vpack.c.b16 %v497, %v495
        %v504 = vpack.c.b16 %v498, %v496
        %v543 = vunpack.c.l.b16 %v449
        %v544 = vunpack.c.h.b16 %v449
        %v545 = vunpack.c.l.b16 %v450
        %v546 = vunpack.c.h.b16 %v450
        %v547 = vunpack.c.l.b16 %v451
        %v548 = vunpack.c.h.b16 %v451
        %v549 = vunpack.c.l.b16 %v452
        %v550 = vunpack.c.h.b16 %v452
        %v551 = vunpack.c.l.b16 %v453
        %v552 = vunpack.c.h.b16 %v453
        %v553 = vunpack.c.l.b16 %v454
        %v554 = vunpack.c.h.b16 %v454
        %v555 = vunpack.c.l.b16 %v455
        %v556 = vunpack.c.h.b16 %v455
        %v557 = vunpack.c.l.b16 %v456
        %v558 = vunpack.c.h.b16 %v456
        %v559 = vunpack.c.l.b16 %v457
        %v560 = vunpack.c.h.b16 %v457
        %v561 = vunpack.c.l.b16 %v458
        %v562 = vunpack.c.h.b16 %v458
        %v563 = vunpack.c.l.b16 %v459
        %v564 = vunpack.c.h.b16 %v459
        %v565 = vunpack.c.l.b16 %v460
        %v566 = vunpack.c.h.b16 %v460
        %v567 = vunpack.c.l.b16 %v461
        %v568 = vunpack.c.h.b16 %v461
        %v569 = vunpack.c.l.b16 %v462
        %v570 = vunpack.c.h.b16 %v462
        %v571 = vunpack.c.l.b16 %v463
        %v572 = vunpack.c.h.b16 %v463
        %v573 = vunpack.c.l.b16 %v464
        %v574 = vunpack.c.h.b16 %v464
        %v575 = vunpack.c.l.b16 %v465
        %v576 = vunpack.c.h.b16 %v465
        %v577 = vunpack.c.l.b16 %v466
        %v578 = vunpack.c.h.b16 %v466
        %v579 = vunpack.c.l.b16 %v467
        %v580 = vunpack.c.h.b16 %v467
        %v581 = vunpack.c.l.b16 %v468
        %v582 = vunpack.c.h.b16 %v468
        %v583 = vunpack.c.l.b16 %v469
        %v584 = vunpack.c.h.b16 %v469
        %v585 = vunpack.c.l.b16 %v470
        %v586 = vunpack.c.h.b16 %v470
        %v587 = vunpack.c.l.b16 %v471
        %v588 = vunpack.c.h.b16 %v471
        %v589 = vunpack.c.l.b16 %v472
        %v590 = vunpack.c.h.b16 %v472
        %v591 = vunpack.c.l.b16 %v473
        %v592 = vunpack.c.h.b16 %v473
        %v593 = vunpack.c.l.b16 %v474
        %v594 = vunpack.c.h.b16 %v474
        %v595 = vunpack.c.l.b16 %v475
        %v596 = vunpack.c.h.b16 %v475
        %v597 = vunpack.c.l.b16 %v476
        %v598 = vunpack.c.h.b16 %v476
        %v599 = vunpack.c.l.b16 %v477
        %v600 = vunpack.c.h.b16 %v477
        %v601 = vunpack.c.l.b16 %v478
        %v602 = vunpack.c.h.b16 %v478
        %v603 = vunpack.c.l.b16 %v479
        %v604 = vunpack.c.h.b16 %v479
        %v605 = vunpack.c.l.b16 %v480
        %v606 = vunpack.c.h.b16 %v480
        %v607 = vpack.c.b16 %v545, %v543
        %v608 = vpack.c.b16 %v546, %v544
        %v609 = vpack.c.b16 %v549, %v547
        %v610 = vpack.c.b16 %v550, %v548
        %v611 = vpack.c.b16 %v553, %v551
        %v612 = vpack.c.b16 %v554, %v552
        %v613 = vpack.c.b16 %v557, %v555
        %v614 = vpack.c.b16 %v558, %v556
        %v615 = vpack.c.b16 %v561, %v559
        %v616 = vpack.c.b16 %v562, %v560
        %v617 = vpack.c.b16 %v565, %v563
        %v618 = vpack.c.b16 %v566, %v564
        %v619 = vpack.c.b16 %v569, %v567
        %v620 = vpack.c.b16 %v570, %v568
        %v621 = vpack.c.b16 %v573, %v571
        %v622 = vpack.c.b16 %v574, %v572
        %v623 = vpack.c.b16 %v577, %v575
        %v624 = vpack.c.b16 %v578, %v576
        %v625 = vpack.c.b16 %v581, %v579
        %v626 = vpack.c.b16 %v582, %v580
        %v627 = vpack.c.b16 %v585, %v583
        %v628 = vpack.c.b16 %v586, %v584
        %v629 = vpack.c.b16 %v589, %v587
        %v630 = vpack.c.b16 %v590, %v588
        %v631 = vpack.c.b16 %v593, %v591
        %v632 = vpack.c.b16 %v594, %v592
        %v633 = vpack.c.b16 %v597, %v595
        %v634 = vpack.c.b16 %v598, %v596
        %v635 = vpack.c.b16 %v601, %v599
        %v636 = vpack.c.b16 %v602, %v600
        %v637 = vpack.c.b16 %v605, %v603
        %v638 = vpack.c.b16 %v606, %v604
        %671 = vmatpush.bf16.msra.mxu0 %v621
        %672 = vmatpush.bf16.msra.mxu0 %v619
        %673 = vmatpush.bf16.msra.mxu0 %v617
        %674 = vmatpush.bf16.msra.mxu0 %v615
        %675 = vmatpush.bf16.msra.mxu0 %v613
        %676 = vmatpush.bf16.msra.mxu0 %v611
        %677 = vmatpush.bf16.msra.mxu0 %v609
        %678 = vmatpush.bf16.msra.mxu0 %v607
        %679 = vmatmul.bf16.gmra.mxu0 %v499
        %v680 = vpop.f32.mrf.mxu0
        %v681 = vadd.f32 0.0, %v680
        %v682 = vpop.f32.mrf.mxu0
        %v683 = vadd.f32 0.0, %v682
        %684 = vmatmul.bf16.gmra.mxu0 %v501
        %v685 = vpop.f32.mrf.mxu0
        %v686 = vadd.f32 0.0, %v685
        %v687 = vpop.f32.mrf.mxu0
        %v688 = vadd.f32 0.0, %v687
        %689 = vmatmul.bf16.gmra.mxu0 %v503
        %v690 = vpop.f32.mrf.mxu0
        %v691 = vadd.f32 0.0, %v690
        %v692 = vpop.f32.mrf.mxu0
        %v693 = vadd.f32 0.0, %v692
        %694 = vdwg.mxu0
        %695 = vmatpush.bf16.msra.mxu0 %v637
        %696 = vmatpush.bf16.msra.mxu0 %v635
        %697 = vmatpush.bf16.msra.mxu0 %v633
        %698 = vmatpush.bf16.msra.mxu0 %v631
        %699 = vmatpush.bf16.msra.mxu0 %v629
        %700 = vmatpush.bf16.msra.mxu0 %v627
        %701 = vmatpush.bf16.msra.mxu0 %v625
        %702 = vmatpush.bf16.msra.mxu0 %v623
        %703 = vmatmul.bf16.gmra.mxu0 %v500
        %v704 = vpop.f32.mrf.mxu0
        %v705 = vadd.f32 %v681, %v704
        %v706 = vpop.f32.mrf.mxu0
        %v707 = vadd.f32 %v683, %v706
        %708 = vmatmul.bf16.gmra.mxu0 %v502
        %v709 = vpop.f32.mrf.mxu0
        %v710 = vadd.f32 %v686, %v709
        %v711 = vpop.f32.mrf.mxu0
        %v712 = vadd.f32 %v688, %v711
        %713 = vmatmul.bf16.gmra.mxu0 %v504
        %v714 = vpop.f32.mrf.mxu0
        %v715 = vadd.f32 %v691, %v714
        %v716 = vpop.f32.mrf.mxu0
        %v717 = vadd.f32 %v693, %v716
        %718 = vdwg.mxu0
        %719 = vmatpush.bf16.msra.mxu0 %v622
        %720 = vmatpush.bf16.msra.mxu0 %v620
        %721 = vmatpush.bf16.msra.mxu0 %v618
        %722 = vmatpush.bf16.msra.mxu0 %v616
        %723 = vmatpush.bf16.msra.mxu0 %v614
        %724 = vmatpush.bf16.msra.mxu0 %v612
        %725 = vmatpush.bf16.msra.mxu0 %v610
        %726 = vmatpush.bf16.msra.mxu0 %v608
        %727 = vmatmul.bf16.gmra.mxu0 %v499
        %v728 = vpop.f32.mrf.mxu0
        %v729 = vadd.f32 0.0, %v728
        %v730 = vpop.f32.mrf.mxu0
        %v731 = vadd.f32 0.0, %v730
        %732 = vmatmul.bf16.gmra.mxu0 %v501
        %v733 = vpop.f32.mrf.mxu0
        %v734 = vadd.f32 0.0, %v733
        %v735 = vpop.f32.mrf.mxu0
        %v736 = vadd.f32 0.0, %v735
        %737 = vmatmul.bf16.gmra.mxu0 %v503
        %v738 = vpop.f32.mrf.mxu0
        %v739 = vadd.f32 0.0, %v738
        %v740 = vpop.f32.mrf.mxu0
        %v741 = vadd.f32 0.0, %v740
        %742 = vdwg.mxu0
        %743 = vmatpush.bf16.msra.mxu0 %v638
        %744 = vmatpush.bf16.msra.mxu0 %v636
        %745 = vmatpush.bf16.msra.mxu0 %v634
        %746 = vmatpush.bf16.msra.mxu0 %v632
        %747 = vmatpush.bf16.msra.mxu0 %v630
        %748 = vmatpush.bf16.msra.mxu0 %v628
        %749 = vmatpush.bf16.msra.mxu0 %v626
        %750 = vmatpush.bf16.msra.mxu0 %v624
        %751 = vmatmul.bf16.gmra.mxu0 %v500
        %v752 = vpop.f32.mrf.mxu0
        %v753 = vadd.f32 %v729, %v752
        %v754 = vpop.f32.mrf.mxu0
        %v755 = vadd.f32 %v731, %v754
        %756 = vmatmul.bf16.gmra.mxu0 %v502
        %v757 = vpop.f32.mrf.mxu0
        %v758 = vadd.f32 %v734, %v757
        %v759 = vpop.f32.mrf.mxu0
        %v760 = vadd.f32 %v736, %v759
        %761 = vmatmul.bf16.gmra.mxu0 %v504
        %v762 = vpop.f32.mrf.mxu0
        %v763 = vadd.f32 %v739, %v762
        %v764 = vpop.f32.mrf.mxu0
        %v765 = vadd.f32 %v741, %v764
        %766 = vdwg.mxu0
        %v767 = vadd.f32 %v431, %v705
        %v768 = vadd.f32 %v432, %v753
        %v769 = vadd.f32 %v433, %v707
        %v770 = vadd.f32 %v434, %v755
        %v771 = vadd.f32 %v435, %v710
        %v772 = vadd.f32 %v436, %v758
        %v773 = vadd.f32 %v437, %v712
        %v774 = vadd.f32 %v438, %v760
        %v775 = vadd.f32 %v439, %v715
        %v776 = vadd.f32 %v440, %v763
        %v777 = vadd.f32 %v441, %v717
        %v778 = vadd.f32 %v442, %v765
        %779 = vst [vmem:[#allocation2] sm:$0xff] %v767
        %780 = vst [vmem:[#allocation2 + $0x8] sm:$0xff] %v768
        %781 = vst [vmem:[#allocation2 + $0x10] sm:$0xff] %v769
        %782 = vst [vmem:[#allocation2 + $0x18] sm:$0xff] %v770
        %783 = vst [vmem:[#allocation2 + $0x20] sm:$0xff] %v771
        %784 = vst [vmem:[#allocation2 + $0x28] sm:$0xff] %v772
        %785 = vst [vmem:[#allocation2 + $0x30] sm:$0xff] %v773
        %786 = vst [vmem:[#allocation2 + $0x38] sm:$0xff] %v774
        %787 = vst [vmem:[#allocation2 + $0x40] sm:$0xff] %v775
        %788 = vst [vmem:[#allocation2 + $0x48] sm:$0xff] %v776
        %789 = vst [vmem:[#allocation2 + $0x50] sm:$0xff] %v777
        %790 = vst [vmem:[#allocation2 + $0x58] sm:$0xff] %v778
        // Predicated region
        $region75: #{tracing_transformer_block_wrapper.24} parent=65 // pred_check
          %p791 = pneg %p415
        $region76: #{tracing_transformer_block_wrapper.24} parent=65 // pred_check_branch
          %793 = sbr.rel (%p791) target = $region78
        $region77: #{tracing_transformer_block_wrapper.24} parent=65 // pred_region
          %v794 = vld [vmem:[#allocation2] sm:$0xff]
          %v795 = vld [vmem:[#allocation2 + $0x8] sm:$0xff]
          %v796 = vld [vmem:[#allocation2 + $0x10] sm:$0xff]
          %v797 = vld [vmem:[#allocation2 + $0x18] sm:$0xff]
          %v798 = vld [vmem:[#allocation2 + $0x20] sm:$0xff]
          %v799 = vld [vmem:[#allocation2 + $0x28] sm:$0xff]
          %v800 = vld [vmem:[#allocation2 + $0x30] sm:$0xff]
          %v801 = vld [vmem:[#allocation2 + $0x38] sm:$0xff]
          %v802 = vld [vmem:[#allocation2 + $0x40] sm:$0xff]
          %v803 = vld [vmem:[#allocation2 + $0x48] sm:$0xff]
          %v804 = vld [vmem:[#allocation2 + $0x50] sm:$0xff]
          %v805 = vld [vmem:[#allocation2 + $0x58] sm:$0xff]
          %v806 = vld [vmem:[%s411] sm:$0x3]
          %v807 = vunpack.c.l.bf16 %v806
          %v809 = vperm.slane %v807, 0
          %v810 = vperm.slane %v807, 2
          %v813 = vperm.slane %v809, 0
          %v814 = vperm.slane %v810, 0
          %v815 = vadd.f32 %v794, %v813
          %v816 = vadd.f32 %v795, %v814
          %v817 = vadd.f32 %v796, %v813
          %v818 = vadd.f32 %v797, %v814
          %v819 = vadd.f32 %v798, %v813
          %v820 = vadd.f32 %v799, %v814
          %v821 = vadd.f32 %v800, %v813
          %v822 = vadd.f32 %v801, %v814
          %v823 = vadd.f32 %v802, %v813
          %v824 = vadd.f32 %v803, %v814
          %v825 = vadd.f32 %v804, %v813
          %v826 = vadd.f32 %v805, %v814
          %v827 = vpack.c.bf16 %v816, %v815
          %v828 = vpack.c.bf16 %v818, %v817
          %v829 = vpack.c.bf16 %v820, %v819
          %v830 = vpack.c.bf16 %v822, %v821
          %v831 = vpack.c.bf16 %v824, %v823
          %v832 = vpack.c.bf16 %v826, %v825
          %833 = vst [vmem:[%s393] sm:$0xff] %v827
          %834 = vst [vmem:[%s393 + $0x8] sm:$0xff] %v828
          %835 = vst [vmem:[%s393 + $0x10] sm:$0xff] %v829
          %836 = vst [vmem:[%s393 + $0x18] sm:$0xff] %v830
          %837 = vst [vmem:[%s393 + $0x20] sm:$0xff] %v831
          %838 = vst [vmem:[%s393 + $0x28] sm:$0xff] %v832
        $region78: #{tracing_transformer_block_wrapper.24} parent=65 // pred_fallthru
          _
        %s839 = sand.u32 %s125, 1
        %s840 = sand.u32 %s125, 1
        %s841 = smul.addr %s840, 48
        %s842 = scalar_lea.vmem [#allocation4], %s841
        // Predicated region
        $region79: #{tracing_transformer_block_wrapper.24} parent=65 // pred_check
          %p843 = pneg %p135
        $region80: #{tracing_transformer_block_wrapper.24} parent=65 // pred_check_branch
          %845 = sbr.rel (%p843) target = $region82
        $region81: #{tracing_transformer_block_wrapper.24} parent=65 // pred_region
          %s846 = smul.u32 6, %s19
          %s847 = smul.u32 2, %s20
          %s848 = smul.addr %s846, 6
          %s849 = sadd.s32 %s847, %s848
          %s850 = smul.addr %s849, 4
          %s851 = scalar_lea.vmem %s3, %s850
          // Predicated region
          $region83: #{tracing_transformer_block_wrapper.24} parent=81 // pred_check
            _
          $region84: #{tracing_transformer_block_wrapper.24} parent=81 // pred_check_branch
            %853 = sbr.rel (0) target = $region86
          $region85: #{tracing_transformer_block_wrapper.24} parent=81 // pred_region
            // Predicated region
            $region87: #{tracing_transformer_block_wrapper.24} parent=85 // pred_check
              _
            $region88: #{tracing_transformer_block_wrapper.24} parent=85 // pred_check_branch
              %855 = sbr.rel (0) target = $region90
            $region89: #{tracing_transformer_block_wrapper.24} parent=85 // pred_region
              // Predicated region
              $region102: #{tracing_transformer_block_wrapper.24} parent=89 // pred_check
                _
              $region103: #{tracing_transformer_block_wrapper.24} parent=89 // pred_check_branch
                %881 = sbr.rel (0) target = $region105
              $region104: #{tracing_transformer_block_wrapper.24} parent=89 // pred_region
                loop: start=0, step=1, limit=1
                $region106: #{tracing_transformer_block_wrapper.24} parent=104 // loop_pre_header
                  _
                $region107: #{tracing_transformer_block_wrapper.24} parent=104 // loop_header
                  %s883 = sphi 0, %s887
                  %p884 = scmp.ge.s32.totalorder %s883, 1
                  %s888 = sphi %s842, %s842
                  %s889 = sphi %s851, %s851
                $region108: #{tracing_transformer_block_wrapper.24} parent=104 // loop_header_branch
                  %886 = sbr.rel (%p884) target = $region112
                $region109: #{tracing_transformer_block_wrapper.24} parent=104 // loop_body
                  %v890 = vld [vmem:[%s888] sm:$0xff]
                  %891 = vst [vmem:[%s889] sm:$0xff] %v890
                  %v892 = vld [vmem:[%s888 + $0x8] sm:$0xff]
                  %893 = vst [vmem:[%s889 + $0x18] sm:$0xff] %v892
                  %v894 = vld [vmem:[%s888 + $0x10] sm:$0xff]
                  %895 = vst [vmem:[%s889 + $0x30] sm:$0xff] %v894
                  %v896 = vld [vmem:[%s888 + $0x18] sm:$0xff]
                  %897 = vst [vmem:[%s889 + $0x48] sm:$0xff] %v896
                  %v898 = vld [vmem:[%s888 + $0x20] sm:$0xff]
                  %899 = vst [vmem:[%s889 + $0x60] sm:$0xff] %v898
                  %v900 = vld [vmem:[%s888 + $0x28] sm:$0xff]
                  %901 = vst [vmem:[%s889 + $0x78] sm:$0xff] %v900
                $region110: #{tracing_transformer_block_wrapper.24} parent=104 // loop_footer
                  %s887 = sadd.s32 1, %s883
                $region111: #{tracing_transformer_block_wrapper.24} parent=104 // loop_footer_branch
                  %882 = sbr.rel target = $region107
                $region112: #{tracing_transformer_block_wrapper.24} parent=104 // loop_exit
                  _
              $region105: #{tracing_transformer_block_wrapper.24} parent=89 // pred_fallthru
                _
              // Predicated region
              $region113: #{tracing_transformer_block_wrapper.24} parent=89 // pred_check
                _
              $region114: #{tracing_transformer_block_wrapper.24} parent=89 // pred_check_branch
                %903 = sbr.rel target = $region116
              $region115: #{tracing_transformer_block_wrapper.24} parent=89 // pred_region
                _
              $region116: #{tracing_transformer_block_wrapper.24} parent=89 // pred_fallthru
                _
            $region90: #{tracing_transformer_block_wrapper.24} parent=85 // pred_fallthru
              _
            // Predicated region
            $region91: #{tracing_transformer_block_wrapper.24} parent=85 // pred_check
              _
            $region92: #{tracing_transformer_block_wrapper.24} parent=85 // pred_check_branch
              %857 = sbr.rel target = $region94
            $region93: #{tracing_transformer_block_wrapper.24} parent=85 // pred_region
              %s859 = ssub.s32 256, 1
              loop: start=0, step=1, limit=1
              $region95: #{tracing_transformer_block_wrapper.24} parent=93 // loop_pre_header
                _
              $region96: #{tracing_transformer_block_wrapper.24} parent=93 // loop_header
                %s861 = sphi 0, %s865
                %p862 = scmp.ge.s32.totalorder %s861, 1
                %s866 = sphi %s842, %s842
                %s867 = sphi %s851, %s851
              $region97: #{tracing_transformer_block_wrapper.24} parent=93 // loop_header_branch
                %864 = sbr.rel (%p862) target = $region101
              $region98: #{tracing_transformer_block_wrapper.24} parent=93 // loop_body
                %v868 = vld [vmem:[%s866] sm:%s859]
                %869 = vst [vmem:[%s867] sm:%s859] %v868
                %v870 = vld [vmem:[%s866 + $0x8] sm:%s859]
                %871 = vst [vmem:[%s867 + $0x18] sm:%s859] %v870
                %v872 = vld [vmem:[%s866 + $0x10] sm:%s859]
                %873 = vst [vmem:[%s867 + $0x30] sm:%s859] %v872
                %v874 = vld [vmem:[%s866 + $0x18] sm:%s859]
                %875 = vst [vmem:[%s867 + $0x48] sm:%s859] %v874
                %v876 = vld [vmem:[%s866 + $0x20] sm:%s859]
                %877 = vst [vmem:[%s867 + $0x60] sm:%s859] %v876
                %v878 = vld [vmem:[%s866 + $0x28] sm:%s859]
                %879 = vst [vmem:[%s867 + $0x78] sm:%s859] %v878
              $region99: #{tracing_transformer_block_wrapper.24} parent=93 // loop_footer
                %s865 = sadd.s32 1, %s861
              $region100: #{tracing_transformer_block_wrapper.24} parent=93 // loop_footer_branch
                %860 = sbr.rel target = $region96
              $region101: #{tracing_transformer_block_wrapper.24} parent=93 // loop_exit
                _
            $region94: #{tracing_transformer_block_wrapper.24} parent=85 // pred_fallthru
              _
          $region86: #{tracing_transformer_block_wrapper.24} parent=81 // pred_fallthru
            _
          %904 = vnop
        $region82: #{tracing_transformer_block_wrapper.24} parent=65 // pred_fallthru
          _
      $region66: #{tracing_transformer_block_wrapper.24} parent=5 // pred_fallthru
        _
      %p905 = scmp.le.s32.totalorder 2, %s9
      // Predicated region
      $region117: #{tracing_transformer_block_wrapper.24} parent=5 // pred_check
        %p906 = pneg %p905
      $region118: #{tracing_transformer_block_wrapper.24} parent=5 // pred_check_branch
        %908 = sbr.rel (%p906) target = $region120
      $region119: #{tracing_transformer_block_wrapper.24} parent=5 // pred_region
        %s909 = ssub.s32 %s9, 2
        // Predicated region
        $region121: #{tracing_transformer_block_wrapper.24} parent=119 // pred_check
          %p910 = pneg %p141
        $region122: #{tracing_transformer_block_wrapper.24} parent=119 // pred_check_branch
          %912 = sbr.rel (%p910) target = $region124
        $region123: #{tracing_transformer_block_wrapper.24} parent=119 // pred_region
          %s913 = sand.u32 %s126, 1
          %s914 = sand.u32 %s126, 1
          %s915 = smul.addr %s914, 48
          %s916 = scalar_lea.vmem [#allocation4], %s915
        $region124: #{tracing_transformer_block_wrapper.24} parent=119 // pred_fallthru
          _
      $region120: #{tracing_transformer_block_wrapper.24} parent=5 // pred_fallthru
        _
    $region6: #{tracing_transformer_block_wrapper.24} parent=1 // loop_footer
      %s13 = sadd.s32 1, %s9
    $region7: #{tracing_transformer_block_wrapper.24} parent=1 // loop_footer_branch
      %8 = sbr.rel target = $region3
    $region8: #{tracing_transformer_block_wrapper.24} parent=1 // loop_exit
      _

// kernel: tracing_transformer_block_wrapper.23
$region0: #{tracing_transformer_block_wrapper.23}
  #allocation0 [shape = 'u32[]', space=smem, size = 0x4, offset = 0x4, fixed_abs, tag = 'smem constant byte address 0x4 - core index']
  #allocation1 [shape = 'u32[72,128]{1,0:T(1,128)}', space=vmem, size = 0x9000, scoped, tag = 'internal scratch']
  %s0 = inlined_call_operand.vmem [shape: bf16[2,8,256], index: 0, kind: input, shape index: {}]
  %s1 = inlined_call_operand.vmem [shape: f32[2,1,256], index: 1, kind: input, shape index: {}]
  %s2 = inlined_call_operand.vmem [shape: f32[2,1,256], index: 2, kind: input, shape index: {}]
  %s3 = inlined_call_operand.vmem [shape: bf16[2,8,256], index: 3, kind: output, shape index: {}]
  %s4 = sld [smem:[#allocation0]]
  $region45: #{tracing_transformer_block_wrapper.23} parent=0
    _
  %s6 = ssub.s32 1, %s4
  %s7 = scalar_select 0, %s6, %s4
  loop: start=0, step=1, limit=4
  $region2: #{tracing_transformer_block_wrapper.23} parent=0 // loop_pre_header
    _
  $region3: #{tracing_transformer_block_wrapper.23} parent=0 // loop_header
    %s9 = sphi 0, %s13
    %p10 = scmp.ge.s32.totalorder %s9, 4
    %s16 = sphi 0, %s28
    %s17 = sphi 0, %s24
    %s18 = sphi 0, %s16
    %s19 = sphi 0, %s17
    %s20 = sphi 0, %s18
    %s21 = sphi 0, %s19
    %s33 = sphi 0, %s35
    %s36 = sphi 0, %s33
    %s37 = sphi 0, %s36
    %s53 = sphi 0, %s37
    %s59 = sphi 0, %s61
    %s62 = sphi 0, %s59
    %s63 = sphi 0, %s62
    %s79 = sphi 0, %s63
    %s85 = sphi 0, %s87
    %s88 = sphi 0, %s85
    %s89 = sphi 0, %s88
    %s105 = sphi 0, %s89
    %s113 = sphi 0, %s115
    %s116 = sphi 0, %s113
    %s117 = sphi 0, %s116
    %s133 = sphi 0, %s117
  $region4: #{tracing_transformer_block_wrapper.23} parent=0 // loop_header_branch
    %12 = sbr.rel (%p10) target = $region8
  $region5: #{tracing_transformer_block_wrapper.23} parent=0 // loop_body
    %s14 = ssub.s32 %s9, 1
    %s15 = ssub.s32 %s9, 2
    %s22 = sadd.s32 1, %s17
    %p23 = scmp.ge.s32.totalorder %s22, 1
    %s24 = scalar_select %p23, 0, %s22
    %s25 = sadd.s32 1, %s16
    %s26 = scalar_select %p23, %s25, %s16
    %p27 = scmp.ge.s32.totalorder %s26, 2
    %s28 = scalar_select %p27, 0, %s26
    %s29 = ssub.s32 %s16, %s28
    %s30 = ssub.s32 %s17, %s24
    %s31 = sor.u32 %s29, %s30
    %p32 = scmp.eq.s32.totalorder %s31, 0
    %s34 = sadd.s32 %s33, 1
    %s35 = scalar_select %p32, %s33, %s34
    %p38 = pneg %p32
    %p39 = scmp.eq.s32.totalorder %s9, 1
    %p40 = por %p38, %p39
    %p41 = scmp.ne.s32.totalorder %s33, %s36
    %p42 = scmp.eq.s32.totalorder %s9, 0
    %p43 = por %p41, %p42
    %p44 = scmp.ne.s32.totalorder %s33, %s36
    %p45 = scmp.eq.s32.totalorder %s14, 1
    %p46 = por %p44, %p45
    %p47 = scmp.ne.s32.totalorder %s36, %s37
    %p48 = scmp.eq.s32.totalorder %s14, 0
    %p49 = por %p47, %p48
    %p50 = scmp.ne.s32.totalorder %s36, %s37
    %p51 = scmp.eq.s32.totalorder %s15, 1
    %p52 = por %p50, %p51
    %p54 = scmp.ne.s32.totalorder %s37, %s53
    %p55 = scmp.eq.s32.totalorder %s15, 0
    %p56 = por %p54, %p55
    %s57 = ssub.s32 %s16, %s28
    %p58 = scmp.eq.s32.totalorder %s57, 0
    %s60 = sadd.s32 %s59, 1
    %s61 = scalar_select %p58, %s59, %s60
    %p64 = pneg %p58
    %p65 = scmp.eq.s32.totalorder %s9, 1
    %p66 = por %p64, %p65
    %p67 = scmp.ne.s32.totalorder %s59, %s62
    %p68 = scmp.eq.s32.totalorder %s9, 0
    %p69 = por %p67, %p68
    %p70 = scmp.ne.s32.totalorder %s59, %s62
    %p71 = scmp.eq.s32.totalorder %s14, 1
    %p72 = por %p70, %p71
    %p73 = scmp.ne.s32.totalorder %s62, %s63
    %p74 = scmp.eq.s32.totalorder %s14, 0
    %p75 = por %p73, %p74
    %p76 = scmp.ne.s32.totalorder %s62, %s63
    %p77 = scmp.eq.s32.totalorder %s15, 1
    %p78 = por %p76, %p77
    %p80 = scmp.ne.s32.totalorder %s63, %s79
    %p81 = scmp.eq.s32.totalorder %s15, 0
    %p82 = por %p80, %p81
    %s83 = ssub.s32 %s16, %s28
    %p84 = scmp.eq.s32.totalorder %s83, 0
    %s86 = sadd.s32 %s85, 1
    %s87 = scalar_select %p84, %s85, %s86
    %p90 = pneg %p84
    %p91 = scmp.eq.s32.totalorder %s9, 1
    %p92 = por %p90, %p91
    %p93 = scmp.ne.s32.totalorder %s85, %s88
    %p94 = scmp.eq.s32.totalorder %s9, 0
    %p95 = por %p93, %p94
    %p96 = scmp.ne.s32.totalorder %s85, %s88
    %p97 = scmp.eq.s32.totalorder %s14, 1
    %p98 = por %p96, %p97
    %p99 = scmp.ne.s32.totalorder %s88, %s89
    %p100 = scmp.eq.s32.totalorder %s14, 0
    %p101 = por %p99, %p100
    %p102 = scmp.ne.s32.totalorder %s88, %s89
    %p103 = scmp.eq.s32.totalorder %s15, 1
    %p104 = por %p102, %p103
    %p106 = scmp.ne.s32.totalorder %s89, %s105
    %p107 = scmp.eq.s32.totalorder %s15, 0
    %p108 = por %p106, %p107
    %s109 = ssub.s32 %s16, %s28
    %s110 = ssub.s32 %s17, %s24
    %s111 = sor.u32 %s109, %s110
    %p112 = scmp.eq.s32.totalorder %s111, 0
    %s114 = sadd.s32 %s113, 1
    %s115 = scalar_select %p112, %s113, %s114
    %p118 = pneg %p112
    %p119 = scmp.eq.s32.totalorder %s9, 1
    %p120 = por %p118, %p119
    %p121 = scmp.ne.s32.totalorder %s113, %s116
    %p122 = scmp.eq.s32.totalorder %s9, 0
    %p123 = por %p121, %p122
    %p124 = scmp.ne.s32.totalorder %s113, %s116
    %p125 = scmp.eq.s32.totalorder %s14, 1
    %p126 = por %p124, %p125
    %p127 = scmp.ne.s32.totalorder %s116, %s117
    %p128 = scmp.eq.s32.totalorder %s14, 0
    %p129 = por %p127, %p128
    %p130 = scmp.ne.s32.totalorder %s116, %s117
    %p131 = scmp.eq.s32.totalorder %s15, 1
    %p132 = por %p130, %p131
    %p134 = scmp.ne.s32.totalorder %s117, %s133
    %p135 = scmp.eq.s32.totalorder %s15, 0
    %p136 = por %p134, %p135
    %p137 = scmp.le.s32.totalorder 1, %s9
    %p138 = scmp.lt.s32.totalorder %s9, 3
    %p139 = pnand %p137, %p138
    %p140 = pneg %p139
    // Predicated region
    $region9: #{tracing_transformer_block_wrapper.23} parent=5 // pred_check
      _
    $region10: #{tracing_transformer_block_wrapper.23} parent=5 // pred_check_branch
      %142 = sbr.rel (%p139) target = $region12
    $region11: #{tracing_transformer_block_wrapper.23} parent=5 // pred_region
      %s143 = ssub.s32 %s9, 1
    $region12: #{tracing_transformer_block_wrapper.23} parent=5 // pred_fallthru
      _
    %p144 = scmp.lt.s32.totalorder %s9, 2
    // Predicated region
    $region13: #{tracing_transformer_block_wrapper.23} parent=5 // pred_check
      %p145 = pneg %p144
    $region14: #{tracing_transformer_block_wrapper.23} parent=5 // pred_check_branch
      %147 = sbr.rel (%p145) target = $region16
    $region15: #{tracing_transformer_block_wrapper.23} parent=5 // pred_region
      // Predicated region
      $region17: #{tracing_transformer_block_wrapper.23} parent=15 // pred_check
        %p148 = pneg %p43
      $region18: #{tracing_transformer_block_wrapper.23} parent=15 // pred_check_branch
        %150 = sbr.rel (%p148) target = $region20
      $region19: #{tracing_transformer_block_wrapper.23} parent=15 // pred_region
        %p151 = scmp.lt.s32.totalorder %s16, 1
        %s152 = scalar_select %p151, %s16, 1
        %p153 = scmp.lt.s32.totalorder %s17, 0
        %s154 = scalar_select %p153, %s17, 0
        %s155 = smul.addr %s154, 2
        %s156 = smul.addr %s152, 2
        %s157 = sadd.s32 %s155, %s156
        %s158 = smul.addr %s157, 4
        %s159 = scalar_lea.vmem %s0, %s158
      $region20: #{tracing_transformer_block_wrapper.23} parent=15 // pred_fallthru
        _
      // Predicated region
      $region21: #{tracing_transformer_block_wrapper.23} parent=15 // pred_check
        %p160 = pneg %p69
      $region22: #{tracing_transformer_block_wrapper.23} parent=15 // pred_check_branch
        %162 = sbr.rel (%p160) target = $region24
      $region23: #{tracing_transformer_block_wrapper.23} parent=15 // pred_region
        %p163 = scmp.lt.s32.totalorder %s16, 1
        %s164 = scalar_select %p163, %s16, 1
        %s165 = smul.addr %s164, 2
        %s166 = scalar_lea.vmem %s1, %s165
      $region24: #{tracing_transformer_block_wrapper.23} parent=15 // pred_fallthru
        _
      // Predicated region
      $region25: #{tracing_transformer_block_wrapper.23} parent=15 // pred_check
        %p167 = pneg %p95
      $region26: #{tracing_transformer_block_wrapper.23} parent=15 // pred_check_branch
        %169 = sbr.rel (%p167) target = $region28
      $region27: #{tracing_transformer_block_wrapper.23} parent=15 // pred_region
        %p170 = scmp.lt.s32.totalorder %s16, 1
        %s171 = scalar_select %p170, %s16, 1
        %s172 = smul.addr %s171, 2
        %s173 = scalar_lea.vmem %s2, %s172
      $region28: #{tracing_transformer_block_wrapper.23} parent=15 // pred_fallthru
        _
    $region16: #{tracing_transformer_block_wrapper.23} parent=5 // pred_fallthru
      _
    %p174 = scmp.le.s32.totalorder 1, %s9
    %p175 = scmp.lt.s32.totalorder %s9, 3
    %p176 = pnand %p174, %p175
    %p177 = pneg %p176
    // Predicated region
    $region29: #{tracing_transformer_block_wrapper.23} parent=5 // pred_check
      _
    $region30: #{tracing_transformer_block_wrapper.23} parent=5 // pred_check_branch
      %179 = sbr.rel (%p176) target = $region32
    $region31: #{tracing_transformer_block_wrapper.23} parent=5 // pred_region
      %s180 = ssub.s32 %s9, 1
      %p181 = scmp.lt.s32.totalorder %s18, 1
      %s182 = scalar_select %p181, %s18, 1
      %p183 = scmp.lt.s32.totalorder %s19, 0
      %s184 = scalar_select %p183, %s19, 0
      %s185 = smul.addr %s184, 2
      %s186 = smul.addr %s182, 2
      %s187 = sadd.s32 %s185, %s186
      %s188 = smul.addr %s187, 4
      %s189 = scalar_lea.vmem %s0, %s188
      %p190 = pneg %p49
      %p191 = pneg %p46
      %p192 = scmp.lt.s32.totalorder %s18, 1
      %s193 = scalar_select %p192, %s18, 1
      %s194 = smul.addr %s193, 2
      %s195 = scalar_lea.vmem %s1, %s194
      %p196 = pneg %p75
      %p197 = pneg %p72
      %p198 = scmp.lt.s32.totalorder %s18, 1
      %s199 = scalar_select %p198, %s18, 1
      %s200 = smul.addr %s199, 2
      %s201 = scalar_lea.vmem %s2, %s200
      %p202 = pneg %p101
      %p203 = pneg %p98
      %p204 = pneg %p129
      %p205 = pneg %p126
      %p206 = scmp.lt.s32.totalorder %s18, 1
      %s207 = scalar_select %p206, %s18, 1
      %p208 = scmp.lt.s32.totalorder %s19, 0
      %s209 = scalar_select %p208, %s19, 0
      %s210 = smul.addr %s209, 2
      %s211 = smul.addr %s207, 2
      %s212 = sadd.s32 %s210, %s211
      %s213 = smul.addr %s212, 4
      %s214 = scalar_lea.vmem %s3, %s213
      %p215 = scmp.lt.s32.totalorder %s18, 1
      %s216 = scalar_select %p215, %s18, 1
      %p217 = scmp.lt.s32.totalorder %s19, 0
      %s218 = scalar_select %p217, %s19, 0
      %s219 = smul.addr %s218, 2
      %s220 = smul.addr %s216, 2
      %s221 = sadd.s32 %s219, %s220
      %s222 = smul.addr %s221, 4
      %s223 = scalar_lea.vmem %s0, %s222
      %p224 = scmp.lt.s32.totalorder %s18, 1
      %s225 = scalar_select %p224, %s18, 1
      %s226 = smul.addr %s225, 2
      %s227 = scalar_lea.vmem %s1, %s226
      %p228 = scmp.lt.s32.totalorder %s18, 1
      %s229 = scalar_select %p228, %s18, 1
      %s230 = smul.addr %s229, 2
      %s231 = scalar_lea.vmem %s2, %s230
      %p232 = scmp.lt.s32.totalorder %s18, 1
      %s233 = scalar_select %p232, %s18, 1
      %p234 = scmp.lt.s32.totalorder %s19, 0
      %s235 = scalar_select %p234, %s19, 0
      %s236 = smul.addr %s235, 2
      %s237 = smul.addr %s233, 2
      %s238 = sadd.s32 %s236, %s237
      %s239 = smul.addr %s238, 4
      %s240 = scalar_lea.vmem %s3, %s239
      %v241 = vld [vmem:[%s223] sm:$0xff]
      %v242 = vunpack.c.l.bf16 %v241
      %v243 = vunpack.c.h.bf16 %v241
      %v244 = vadd.f32 %v242, %v243
      %245 = vadd.xlane.f32.xlu0 %v244
      %v246 = vpop.xlane.xlu0 %245
      %v247 = vrcp.pop 256.0
      %v248 = vmul.f32 256.0, %v247
      %v249 = vsub.f32 1.0, %v248
      %v250 = vmul.f32 %v247, %v249
      %v251 = vadd.f32 %v247, %v250
      %vm252 = vweird.f32 %v247
      %v253 = vsel %vm252, %v247, %v251
      %v254 = vmul.f32 %v246, %v253
      %v255 = vsub.f32 %v242, %v254
      %v256 = vsub.f32 %v243, %v254
      %v257 = vmul.f32 %v255, %v255
      %v258 = vmul.f32 %v256, %v256
      %v259 = vadd.f32 %v257, %v258
      %260 = vadd.xlane.f32.xlu0 %v259
      %v261 = vpop.xlane.xlu0 %260
      %v262 = vmul.f32 %v261, %v253
      %v263 = vadd.f32 %v262, 1e-06
      %v264 = vrsqrt.pop %v263
      %v265 = vmul.f32 %v264, %v263
      %v266 = vmul.f32 %v265, %v264
      %v267 = vmul.f32 0.5, %v266
      %v268 = vsub.f32 1.5, %v267
      %v269 = vmul.f32 %v264, %v268
      %vm270 = vweird.f32 %v263
      %vm271 = vweird.f32 %v264
      %vm272 = vmor %vm270, %vm271
      %v273 = vsel %vm272, %v264, %v269
      %v274 = vmul.f32 %v255, %v273
      %v275 = vmul.f32 %v256, %v273
      %v276 = vld [vmem:[%s231] sm:$0x3]
      %v277 = vadd.f32 %v276, 1.0
      %v279 = vperm.slane %v277, 0
      %v280 = vperm.slane %v277, 1
      %v283 = vmul.f32 %v274, %v279
      %v284 = vmul.f32 %v275, %v280
      %v285 = vld [vmem:[%s227] sm:$0x3]
      %v287 = vperm.slane %v285, 0
      %v288 = vperm.slane %v285, 1
      %v291 = vadd.f32 %v283, %v287
      %v292 = vadd.f32 %v284, %v288
      %v293 = vpack.c.bf16 %v292, %v291
      %294 = vst [vmem:[%s240] sm:$0xff] %v293
      %p295 = scmp.lt.s32.totalorder %s18, 1
      %s296 = scalar_select %p295, %s18, 1
      %p297 = scmp.lt.s32.totalorder %s19, 0
      %s298 = scalar_select %p297, %s19, 0
      %s299 = smul.addr %s298, 2
      %s300 = smul.addr %s296, 2
      %s301 = sadd.s32 %s299, %s300
      %s302 = smul.addr %s301, 4
      %s303 = scalar_lea.vmem %s3, %s302
      // Predicated region
      $region33: #{tracing_transformer_block_wrapper.23} parent=31 // pred_check
        %p304 = pneg %p126
      $region34: #{tracing_transformer_block_wrapper.23} parent=31 // pred_check_branch
        %306 = sbr.rel (%p304) target = $region36
      $region35: #{tracing_transformer_block_wrapper.23} parent=31 // pred_region
        _
      $region36: #{tracing_transformer_block_wrapper.23} parent=31 // pred_fallthru
        _
    $region32: #{tracing_transformer_block_wrapper.23} parent=5 // pred_fallthru
      _
    %p307 = scmp.le.s32.totalorder 2, %s9
    // Predicated region
    $region37: #{tracing_transformer_block_wrapper.23} parent=5 // pred_check
      %p308 = pneg %p307
    $region38: #{tracing_transformer_block_wrapper.23} parent=5 // pred_check_branch
      %310 = sbr.rel (%p308) target = $region40
    $region39: #{tracing_transformer_block_wrapper.23} parent=5 // pred_region
      %s311 = ssub.s32 %s9, 2
      // Predicated region
      $region41: #{tracing_transformer_block_wrapper.23} parent=39 // pred_check
        %p312 = pneg %p132
      $region42: #{tracing_transformer_block_wrapper.23} parent=39 // pred_check_branch
        %314 = sbr.rel (%p312) target = $region44
      $region43: #{tracing_transformer_block_wrapper.23} parent=39 // pred_region
        %p315 = scmp.lt.s32.totalorder %s20, 1
        %s316 = scalar_select %p315, %s20, 1
        %p317 = scmp.lt.s32.totalorder %s21, 0
        %s318 = scalar_select %p317, %s21, 0
        %s319 = smul.addr %s318, 2
        %s320 = smul.addr %s316, 2
        %s321 = sadd.s32 %s319, %s320
        %s322 = smul.addr %s321, 4
        %s323 = scalar_lea.vmem %s3, %s322
      $region44: #{tracing_transformer_block_wrapper.23} parent=39 // pred_fallthru
        _
    $region40: #{tracing_transformer_block_wrapper.23} parent=5 // pred_fallthru
      _
  $region6: #{tracing_transformer_block_wrapper.23} parent=0 // loop_footer
    %s13 = sadd.s32 1, %s9
  $region7: #{tracing_transformer_block_wrapper.23} parent=0 // loop_footer_branch
    %8 = sbr.rel target = $region3
  $region8: #{tracing_transformer_block_wrapper.23} parent=0 // loop_exit
    _

// kernel: tracing_transformer_block_wrapper.25
$region0: #{tracing_transformer_block_wrapper.25}
  #allocation0 [shape = 'u32[]', space=smem, size = 0x4, offset = 0x4, fixed_abs, tag = 'smem constant byte address 0x4 - core index']
  #allocation1 [shape = 'u32[72,128]{1,0:T(1,128)}', space=vmem, size = 0x9000, scoped, tag = 'internal scratch']
  #allocation2 [shape = 'f32[16,256]{1,0:T(8,128)}', space=vmem, size = 0x4000, scoped, tag = 'scratch operand']
  %s0 = inlined_call_operand.vmem [shape: bf16[16,256], index: 0, kind: input, shape index: {}]
  %s1 = inlined_call_operand.vmem [shape: bf16[256,768], index: 1, kind: input, shape index: {}]
  %s2 = inlined_call_operand.vmem [shape: bf16[1,768], index: 2, kind: input, shape index: {}]
  %s3 = inlined_call_operand.vmem [shape: bf16[16,768], index: 3, kind: output, shape index: {}]
  %s4 = sld [smem:[#allocation0]]
  $region125: #{tracing_transformer_block_wrapper.25} parent=0
    _
  %s6 = ssub.s32 1, %s4
  %s7 = scalar_select 0, %s6, %s4
  $region1: #{tracing_transformer_block_wrapper.25} parent=0
    #allocation3 [shape = 'u8[262144]{0}', space=vmem, size = 0x40000, scoped, tag = 'input window, operand 1']
    #allocation4 [shape = 'u8[16384]{0}', space=vmem, size = 0x4000, scoped, tag = 'output window, operand 0']
    loop: start=0, step=1, limit=5
    $region2: #{tracing_transformer_block_wrapper.25} parent=1 // loop_pre_header
      _
    $region3: #{tracing_transformer_block_wrapper.25} parent=1 // loop_header
      %s9 = sphi 0, %s13
      %p10 = scmp.ge.s32.totalorder %s9, 5
      %s16 = sphi 0, %s35
      %s17 = sphi 0, %s31
      %s18 = sphi 0, %s27
      %s19 = sphi 0, %s16
      %s20 = sphi 0, %s17
      %s21 = sphi 0, %s18
      %s22 = sphi 0, %s19
      %s23 = sphi 0, %s20
      %s24 = sphi 0, %s21
      %s40 = sphi 0, %s42
      %s43 = sphi 0, %s40
      %s44 = sphi 0, %s43
      %s60 = sphi 0, %s44
      %s68 = sphi 0, %s70
      %s71 = sphi 0, %s68
      %s72 = sphi 0, %s71
      %s88 = sphi 0, %s72
      %s94 = sphi 0, %s96
      %s97 = sphi 0, %s94
      %s98 = sphi 0, %s97
      %s114 = sphi 0, %s98
      %s122 = sphi 0, %s124
      %s125 = sphi 0, %s122
      %s126 = sphi 0, %s125
      %s142 = sphi 0, %s126
    $region4: #{tracing_transformer_block_wrapper.25} parent=1 // loop_header_branch
      %12 = sbr.rel (%p10) target = $region8
    $region5: #{tracing_transformer_block_wrapper.25} parent=1 // loop_body
      %s14 = ssub.s32 %s9, 1
      %s15 = ssub.s32 %s9, 2
      %s25 = sadd.s32 1, %s18
      %p26 = scmp.ge.s32.totalorder %s25, 1
      %s27 = scalar_select %p26, 0, %s25
      %s28 = sadd.s32 1, %s17
      %s29 = scalar_select %p26, %s28, %s17
      %p30 = scmp.ge.s32.totalorder %s29, 3
      %s31 = scalar_select %p30, 0, %s29
      %s32 = sadd.s32 1, %s16
      %s33 = scalar_select %p30, %s32, %s16
      %p34 = scmp.ge.s32.totalorder %s33, 1
      %s35 = scalar_select %p34, 0, %s33
      %s36 = ssub.s32 %s16, %s35
      %s37 = ssub.s32 %s18, %s27
      %s38 = sor.u32 %s36, %s37
      %p39 = scmp.eq.s32.totalorder %s38, 0
      %s41 = sadd.s32 %s40, 1
      %s42 = scalar_select %p39, %s40, %s41
      %p45 = pneg %p39
      %p46 = scmp.eq.s32.totalorder %s9, 2
      %p47 = por %p45, %p46
      %p48 = scmp.ne.s32.totalorder %s40, %s43
      %p49 = scmp.eq.s32.totalorder %s9, 0
      %p50 = por %p48, %p49
      %p51 = scmp.ne.s32.totalorder %s40, %s43
      %p52 = scmp.eq.s32.totalorder %s14, 2
      %p53 = por %p51, %p52
      %p54 = scmp.ne.s32.totalorder %s43, %s44
      %p55 = scmp.eq.s32.totalorder %s14, 0
      %p56 = por %p54, %p55
      %p57 = scmp.ne.s32.totalorder %s43, %s44
      %p58 = scmp.eq.s32.totalorder %s15, 2
      %p59 = por %p57, %p58
      %p61 = scmp.ne.s32.totalorder %s44, %s60
      %p62 = scmp.eq.s32.totalorder %s15, 0
      %p63 = por %p61, %p62
      %s64 = ssub.s32 %s18, %s27
      %s65 = ssub.s32 %s17, %s31
      %s66 = sor.u32 %s64, %s65
      %p67 = scmp.eq.s32.totalorder %s66, 0
      %s69 = sadd.s32 %s68, 1
      %s70 = scalar_select %p67, %s68, %s69
      %p73 = pneg %p67
      %p74 = scmp.eq.s32.totalorder %s9, 2
      %p75 = por %p73, %p74
      %p76 = scmp.ne.s32.totalorder %s68, %s71
      %p77 = scmp.eq.s32.totalorder %s9, 0
      %p78 = por %p76, %p77
      %p79 = scmp.ne.s32.totalorder %s68, %s71
      %p80 = scmp.eq.s32.totalorder %s14, 2
      %p81 = por %p79, %p80
      %p82 = scmp.ne.s32.totalorder %s71, %s72
      %p83 = scmp.eq.s32.totalorder %s14, 0
      %p84 = por %p82, %p83
      %p85 = scmp.ne.s32.totalorder %s71, %s72
      %p86 = scmp.eq.s32.totalorder %s15, 2
      %p87 = por %p85, %p86
      %p89 = scmp.ne.s32.totalorder %s72, %s88
      %p90 = scmp.eq.s32.totalorder %s15, 0
      %p91 = por %p89, %p90
      %s92 = ssub.s32 %s17, %s31
      %p93 = scmp.eq.s32.totalorder %s92, 0
      %s95 = sadd.s32 %s94, 1
      %s96 = scalar_select %p93, %s94, %s95
      %p99 = pneg %p93
      %p100 = scmp.eq.s32.totalorder %s9, 2
      %p101 = por %p99, %p100
      %p102 = scmp.ne.s32.totalorder %s94, %s97
      %p103 = scmp.eq.s32.totalorder %s9, 0
      %p104 = por %p102, %p103
      %p105 = scmp.ne.s32.totalorder %s94, %s97
      %p106 = scmp.eq.s32.totalorder %s14, 2
      %p107 = por %p105, %p106
      %p108 = scmp.ne.s32.totalorder %s97, %s98
      %p109 = scmp.eq.s32.totalorder %s14, 0
      %p110 = por %p108, %p109
      %p111 = scmp.ne.s32.totalorder %s97, %s98
      %p112 = scmp.eq.s32.totalorder %s15, 2
      %p113 = por %p111, %p112
      %p115 = scmp.ne.s32.totalorder %s98, %s114
      %p116 = scmp.eq.s32.totalorder %s15, 0
      %p117 = por %p115, %p116
      %s118 = ssub.s32 %s16, %s35
      %s119 = ssub.s32 %s17, %s31
      %s120 = sor.u32 %s118, %s119
      %p121 = scmp.eq.s32.totalorder %s120, 0
      %s123 = sadd.s32 %s122, 1
      %s124 = scalar_select %p121, %s122, %s123
      %p127 = pneg %p121
      %p128 = scmp.eq.s32.totalorder %s9, 2
      %p129 = por %p127, %p128
      %p130 = scmp.ne.s32.totalorder %s122, %s125
      %p131 = scmp.eq.s32.totalorder %s9, 0
      %p132 = por %p130, %p131
      %p133 = scmp.ne.s32.totalorder %s122, %s125
      %p134 = scmp.eq.s32.totalorder %s14, 2
      %p135 = por %p133, %p134
      %p136 = scmp.ne.s32.totalorder %s125, %s126
      %p137 = scmp.eq.s32.totalorder %s14, 0
      %p138 = por %p136, %p137
      %p139 = scmp.ne.s32.totalorder %s125, %s126
      %p140 = scmp.eq.s32.totalorder %s15, 2
      %p141 = por %p139, %p140
      %p143 = scmp.ne.s32.totalorder %s126, %s142
      %p144 = scmp.eq.s32.totalorder %s15, 0
      %p145 = por %p143, %p144
      %p146 = scmp.le.s32.totalorder 1, %s9
      %p147 = scmp.lt.s32.totalorder %s9, 4
      %p148 = pnand %p146, %p147
      %p149 = pneg %p148
      // Predicated region
      $region9: #{tracing_transformer_block_wrapper.25} parent=5 // pred_check
        _
      $region10: #{tracing_transformer_block_wrapper.25} parent=5 // pred_check_branch
        %151 = sbr.rel (%p148) target = $region12
      $region11: #{tracing_transformer_block_wrapper.25} parent=5 // pred_region
        %s152 = ssub.s32 %s9, 1
        // Predicated region
        $region13: #{tracing_transformer_block_wrapper.25} parent=11 // pred_check
          %p153 = pneg %p56
        $region14: #{tracing_transformer_block_wrapper.25} parent=11 // pred_check_branch
          %155 = sbr.rel (%p153) target = $region16
        $region15: #{tracing_transformer_block_wrapper.25} parent=11 // pred_region
          %s156 = smul.u32 2, %s19
          %s157 = smul.u32 2, %s21
          %p158 = scmp.lt.s32.totalorder %s156, 1
          %s159 = scalar_select %p158, %s156, 1
          %p160 = scmp.lt.s32.totalorder %s157, 1
          %s161 = scalar_select %p160, %s157, 1
          %s162 = smul.addr %s159, 2
          %s163 = sadd.s32 %s161, %s162
          %s164 = smul.addr %s163, 4
          %s165 = scalar_lea.vmem %s0, %s164
          %s166 = smul.u32 2, %s19
          %s167 = smul.u32 2, %s21
        $region16: #{tracing_transformer_block_wrapper.25} parent=11 // pred_fallthru
          _
      $region12: #{tracing_transformer_block_wrapper.25} parent=5 // pred_fallthru
        _
      %p168 = scmp.lt.s32.totalorder %s9, 3
      // Predicated region
      $region17: #{tracing_transformer_block_wrapper.25} parent=5 // pred_check
        %p169 = pneg %p168
      $region18: #{tracing_transformer_block_wrapper.25} parent=5 // pred_check_branch
        %171 = sbr.rel (%p169) target = $region20
      $region19: #{tracing_transformer_block_wrapper.25} parent=5 // pred_region
        // Predicated region
        $region21: #{tracing_transformer_block_wrapper.25} parent=19 // pred_check
          %p172 = pneg %p78
        $region22: #{tracing_transformer_block_wrapper.25} parent=19 // pred_check_branch
          %174 = sbr.rel (%p172) target = $region24
        $region23: #{tracing_transformer_block_wrapper.25} parent=19 // pred_region
          %s175 = sand.u32 %s68, 1
          %s176 = sand.u32 %s68, 1
          %s177 = smul.addr %s176, 256
          %s178 = scalar_lea.vmem [#allocation3], %s177
          %s179 = smul.u32 32, %s18
          %s180 = smul.u32 2, %s17
          %s181 = smul.addr %s179, 6
          %s182 = sadd.s32 %s180, %s181
          %s183 = smul.addr %s182, 4
          %s184 = scalar_lea.vmem %s1, %s183
          // Predicated region
          $region25: #{tracing_transformer_block_wrapper.25} parent=23 // pred_check
            _
          $region26: #{tracing_transformer_block_wrapper.25} parent=23 // pred_check_branch
            %186 = sbr.rel (0) target = $region28
          $region27: #{tracing_transformer_block_wrapper.25} parent=23 // pred_region
            // Predicated region
            $region29: #{tracing_transformer_block_wrapper.25} parent=27 // pred_check
              _
            $region30: #{tracing_transformer_block_wrapper.25} parent=27 // pred_check_branch
              %188 = sbr.rel (0) target = $region32
            $region31: #{tracing_transformer_block_wrapper.25} parent=27 // pred_region
              // Predicated region
              $region44: #{tracing_transformer_block_wrapper.25} parent=31 // pred_check
                _
              $region45: #{tracing_transformer_block_wrapper.25} parent=31 // pred_check_branch
                %266 = sbr.rel (0) target = $region47
              $region46: #{tracing_transformer_block_wrapper.25} parent=31 // pred_region
                loop: start=0, step=1, limit=1
                $region48: #{tracing_transformer_block_wrapper.25} parent=46 // loop_pre_header
                  _
                $region49: #{tracing_transformer_block_wrapper.25} parent=46 // loop_header
                  %s268 = sphi 0, %s272
                  %p269 = scmp.ge.s32.totalorder %s268, 1
                  %s273 = sphi %s184, %s184
                  %s274 = sphi %s178, %s178
                $region50: #{tracing_transformer_block_wrapper.25} parent=46 // loop_header_branch
                  %271 = sbr.rel (%p269) target = $region54
                $region51: #{tracing_transformer_block_wrapper.25} parent=46 // loop_body
                  %v275 = vld [vmem:[%s273] sm:$0xff]
                  %276 = vst [vmem:[%s274] sm:$0xff] %v275
                  %v277 = vld [vmem:[%s273 + $0x18] sm:$0xff]
                  %278 = vst [vmem:[%s274 + $0x8] sm:$0xff] %v277
                  %v279 = vld [vmem:[%s273 + $0x30] sm:$0xff]
                  %280 = vst [vmem:[%s274 + $0x10] sm:$0xff] %v279
                  %v281 = vld [vmem:[%s273 + $0x48] sm:$0xff]
                  %282 = vst [vmem:[%s274 + $0x18] sm:$0xff] %v281
                  %v283 = vld [vmem:[%s273 + $0x60] sm:$0xff]
                  %284 = vst [vmem:[%s274 + $0x20] sm:$0xff] %v283
                  %v285 = vld [vmem:[%s273 + $0x78] sm:$0xff]
                  %286 = vst [vmem:[%s274 + $0x28] sm:$0xff] %v285
                  %v287 = vld [vmem:[%s273 + $0x90] sm:$0xff]
                  %288 = vst [vmem:[%s274 + $0x30] sm:$0xff] %v287
                  %v289 = vld [vmem:[%s273 + $0xa8] sm:$0xff]
                  %290 = vst [vmem:[%s274 + $0x38] sm:$0xff] %v289
                  %v291 = vld [vmem:[%s273 + $0xc0] sm:$0xff]
                  %292 = vst [vmem:[%s274 + $0x40] sm:$0xff] %v291
                  %v293 = vld [vmem:[%s273 + $0xd8] sm:$0xff]
                  %294 = vst [vmem:[%s274 + $0x48] sm:$0xff] %v293
                  %v295 = vld [vmem:[%s273 + $0xf0] sm:$0xff]
                  %296 = vst [vmem:[%s274 + $0x50] sm:$0xff] %v295
                  %v297 = vld [vmem:[%s273 + $0x108] sm:$0xff]
                  %298 = vst [vmem:[%s274 + $0x58] sm:$0xff] %v297
                  %v299 = vld [vmem:[%s273 + $0x120] sm:$0xff]
                  %300 = vst [vmem:[%s274 + $0x60] sm:$0xff] %v299
                  %v301 = vld [vmem:[%s273 + $0x138] sm:$0xff]
                  %302 = vst [vmem:[%s274 + $0x68] sm:$0xff] %v301
                  %v303 = vld [vmem:[%s273 + $0x150] sm:$0xff]
                  %304 = vst [vmem:[%s274 + $0x70] sm:$0xff] %v303
                  %v305 = vld [vmem:[%s273 + $0x168] sm:$0xff]
                  %306 = vst [vmem:[%s274 + $0x78] sm:$0xff] %v305
                  %v307 = vld [vmem:[%s273 + $0x180] sm:$0xff]
                  %308 = vst [vmem:[%s274 + $0x80] sm:$0xff] %v307
                  %v309 = vld [vmem:[%s273 + $0x198] sm:$0xff]
                  %310 = vst [vmem:[%s274 + $0x88] sm:$0xff] %v309
                  %v311 = vld [vmem:[%s273 + $0x1b0] sm:$0xff]
                  %312 = vst [vmem:[%s274 + $0x90] sm:$0xff] %v311
                  %v313 = vld [vmem:[%s273 + $0x1c8] sm:$0xff]
                  %314 = vst [vmem:[%s274 + $0x98] sm:$0xff] %v313
                  %v315 = vld [vmem:[%s273 + $0x1e0] sm:$0xff]
                  %316 = vst [vmem:[%s274 + $0xa0] sm:$0xff] %v315
                  %v317 = vld [vmem:[%s273 + $0x1f8] sm:$0xff]
                  %318 = vst [vmem:[%s274 + $0xa8] sm:$0xff] %v317
                  %v319 = vld [vmem:[%s273 + $0x210] sm:$0xff]
                  %320 = vst [vmem:[%s274 + $0xb0] sm:$0xff] %v319
                  %v321 = vld [vmem:[%s273 + $0x228] sm:$0xff]
                  %322 = vst [vmem:[%s274 + $0xb8] sm:$0xff] %v321
                  %v323 = vld [vmem:[%s273 + $0x240] sm:$0xff]
                  %324 = vst [vmem:[%s274 + $0xc0] sm:$0xff] %v323
                  %v325 = vld [vmem:[%s273 + $0x258] sm:$0xff]
                  %326 = vst [vmem:[%s274 + $0xc8] sm:$0xff] %v325
                  %v327 = vld [vmem:[%s273 + $0x270] sm:$0xff]
                  %328 = vst [vmem:[%s274 + $0xd0] sm:$0xff] %v327
                  %v329 = vld [vmem:[%s273 + $0x288] sm:$0xff]
                  %330 = vst [vmem:[%s274 + $0xd8] sm:$0xff] %v329
                  %v331 = vld [vmem:[%s273 + $0x2a0] sm:$0xff]
                  %332 = vst [vmem:[%s274 + $0xe0] sm:$0xff] %v331
                  %v333 = vld [vmem:[%s273 + $0x2b8] sm:$0xff]
                  %334 = vst [vmem:[%s274 + $0xe8] sm:$0xff] %v333
                  %v335 = vld [vmem:[%s273 + $0x2d0] sm:$0xff]
                  %336 = vst [vmem:[%s274 + $0xf0] sm:$0xff] %v335
                  %v337 = vld [vmem:[%s273 + $0x2e8] sm:$0xff]
                  %338 = vst [vmem:[%s274 + $0xf8] sm:$0xff] %v337
                $region52: #{tracing_transformer_block_wrapper.25} parent=46 // loop_footer
                  %s272 = sadd.s32 1, %s268
                $region53: #{tracing_transformer_block_wrapper.25} parent=46 // loop_footer_branch
                  %267 = sbr.rel target = $region49
                $region54: #{tracing_transformer_block_wrapper.25} parent=46 // loop_exit
                  _
              $region47: #{tracing_transformer_block_wrapper.25} parent=31 // pred_fallthru
                _
              // Predicated region
              $region55: #{tracing_transformer_block_wrapper.25} parent=31 // pred_check
                _
              $region56: #{tracing_transformer_block_wrapper.25} parent=31 // pred_check_branch
                %340 = sbr.rel target = $region58
              $region57: #{tracing_transformer_block_wrapper.25} parent=31 // pred_region
                _
              $region58: #{tracing_transformer_block_wrapper.25} parent=31 // pred_fallthru
                _
            $region32: #{tracing_transformer_block_wrapper.25} parent=27 // pred_fallthru
              _
            // Predicated region
            $region33: #{tracing_transformer_block_wrapper.25} parent=27 // pred_check
              _
            $region34: #{tracing_transformer_block_wrapper.25} parent=27 // pred_check_branch
              %190 = sbr.rel target = $region36
            $region35: #{tracing_transformer_block_wrapper.25} parent=27 // pred_region
              %s192 = ssub.s32 256, 1
              loop: start=0, step=1, limit=1
              $region37: #{tracing_transformer_block_wrapper.25} parent=35 // loop_pre_header
                _
              $region38: #{tracing_transformer_block_wrapper.25} parent=35 // loop_header
                %s194 = sphi 0, %s198
                %p195 = scmp.ge.s32.totalorder %s194, 1
                %s199 = sphi %s184, %s184
                %s200 = sphi %s178, %s178
              $region39: #{tracing_transformer_block_wrapper.25} parent=35 // loop_header_branch
                %197 = sbr.rel (%p195) target = $region43
              $region40: #{tracing_transformer_block_wrapper.25} parent=35 // loop_body
                %v201 = vld [vmem:[%s199] sm:%s192]
                %202 = vst [vmem:[%s200] sm:%s192] %v201
                %v203 = vld [vmem:[%s199 + $0x18] sm:%s192]
                %204 = vst [vmem:[%s200 + $0x8] sm:%s192] %v203
                %v205 = vld [vmem:[%s199 + $0x30] sm:%s192]
                %206 = vst [vmem:[%s200 + $0x10] sm:%s192] %v205
                %v207 = vld [vmem:[%s199 + $0x48] sm:%s192]
                %208 = vst [vmem:[%s200 + $0x18] sm:%s192] %v207
                %v209 = vld [vmem:[%s199 + $0x60] sm:%s192]
                %210 = vst [vmem:[%s200 + $0x20] sm:%s192] %v209
                %v211 = vld [vmem:[%s199 + $0x78] sm:%s192]
                %212 = vst [vmem:[%s200 + $0x28] sm:%s192] %v211
                %v213 = vld [vmem:[%s199 + $0x90] sm:%s192]
                %214 = vst [vmem:[%s200 + $0x30] sm:%s192] %v213
                %v215 = vld [vmem:[%s199 + $0xa8] sm:%s192]
                %216 = vst [vmem:[%s200 + $0x38] sm:%s192] %v215
                %v217 = vld [vmem:[%s199 + $0xc0] sm:%s192]
                %218 = vst [vmem:[%s200 + $0x40] sm:%s192] %v217
                %v219 = vld [vmem:[%s199 + $0xd8] sm:%s192]
                %220 = vst [vmem:[%s200 + $0x48] sm:%s192] %v219
                %v221 = vld [vmem:[%s199 + $0xf0] sm:%s192]
                %222 = vst [vmem:[%s200 + $0x50] sm:%s192] %v221
                %v223 = vld [vmem:[%s199 + $0x108] sm:%s192]
                %224 = vst [vmem:[%s200 + $0x58] sm:%s192] %v223
                %v225 = vld [vmem:[%s199 + $0x120] sm:%s192]
                %226 = vst [vmem:[%s200 + $0x60] sm:%s192] %v225
                %v227 = vld [vmem:[%s199 + $0x138] sm:%s192]
                %228 = vst [vmem:[%s200 + $0x68] sm:%s192] %v227
                %v229 = vld [vmem:[%s199 + $0x150] sm:%s192]
                %230 = vst [vmem:[%s200 + $0x70] sm:%s192] %v229
                %v231 = vld [vmem:[%s199 + $0x168] sm:%s192]
                %232 = vst [vmem:[%s200 + $0x78] sm:%s192] %v231
                %v233 = vld [vmem:[%s199 + $0x180] sm:%s192]
                %234 = vst [vmem:[%s200 + $0x80] sm:%s192] %v233
                %v235 = vld [vmem:[%s199 + $0x198] sm:%s192]
                %236 = vst [vmem:[%s200 + $0x88] sm:%s192] %v235
                %v237 = vld [vmem:[%s199 + $0x1b0] sm:%s192]
                %238 = vst [vmem:[%s200 + $0x90] sm:%s192] %v237
                %v239 = vld [vmem:[%s199 + $0x1c8] sm:%s192]
                %240 = vst [vmem:[%s200 + $0x98] sm:%s192] %v239
                %v241 = vld [vmem:[%s199 + $0x1e0] sm:%s192]
                %242 = vst [vmem:[%s200 + $0xa0] sm:%s192] %v241
                %v243 = vld [vmem:[%s199 + $0x1f8] sm:%s192]
                %244 = vst [vmem:[%s200 + $0xa8] sm:%s192] %v243
                %v245 = vld [vmem:[%s199 + $0x210] sm:%s192]
                %246 = vst [vmem:[%s200 + $0xb0] sm:%s192] %v245
                %v247 = vld [vmem:[%s199 + $0x228] sm:%s192]
                %248 = vst [vmem:[%s200 + $0xb8] sm:%s192] %v247
                %v249 = vld [vmem:[%s199 + $0x240] sm:%s192]
                %250 = vst [vmem:[%s200 + $0xc0] sm:%s192] %v249
                %v251 = vld [vmem:[%s199 + $0x258] sm:%s192]
                %252 = vst [vmem:[%s200 + $0xc8] sm:%s192] %v251
                %v253 = vld [vmem:[%s199 + $0x270] sm:%s192]
                %254 = vst [vmem:[%s200 + $0xd0] sm:%s192] %v253
                %v255 = vld [vmem:[%s199 + $0x288] sm:%s192]
                %256 = vst [vmem:[%s200 + $0xd8] sm:%s192] %v255
                %v257 = vld [vmem:[%s199 + $0x2a0] sm:%s192]
                %258 = vst [vmem:[%s200 + $0xe0] sm:%s192] %v257
                %v259 = vld [vmem:[%s199 + $0x2b8] sm:%s192]
                %260 = vst [vmem:[%s200 + $0xe8] sm:%s192] %v259
                %v261 = vld [vmem:[%s199 + $0x2d0] sm:%s192]
                %262 = vst [vmem:[%s200 + $0xf0] sm:%s192] %v261
                %v263 = vld [vmem:[%s199 + $0x2e8] sm:%s192]
                %264 = vst [vmem:[%s200 + $0xf8] sm:%s192] %v263
              $region41: #{tracing_transformer_block_wrapper.25} parent=35 // loop_footer
                %s198 = sadd.s32 1, %s194
              $region42: #{tracing_transformer_block_wrapper.25} parent=35 // loop_footer_branch
                %193 = sbr.rel target = $region38
              $region43: #{tracing_transformer_block_wrapper.25} parent=35 // loop_exit
                _
            $region36: #{tracing_transformer_block_wrapper.25} parent=27 // pred_fallthru
              _
          $region28: #{tracing_transformer_block_wrapper.25} parent=23 // pred_fallthru
            _
          %341 = vnop
        $region24: #{tracing_transformer_block_wrapper.25} parent=19 // pred_fallthru
          _
        // Predicated region
        $region59: #{tracing_transformer_block_wrapper.25} parent=19 // pred_check
          %p342 = pneg %p104
        $region60: #{tracing_transformer_block_wrapper.25} parent=19 // pred_check_branch
          %344 = sbr.rel (%p342) target = $region62
        $region61: #{tracing_transformer_block_wrapper.25} parent=19 // pred_region
          %s345 = smul.u32 2, %s17
          %p346 = scmp.lt.s32.totalorder %s345, 5
          %s347 = scalar_select %p346, %s345, 5
          %s348 = scalar_lea.vmem %s2, %s347
          %s349 = smul.u32 2, %s17
        $region62: #{tracing_transformer_block_wrapper.25} parent=19 // pred_fallthru
          _
      $region20: #{tracing_transformer_block_wrapper.25} parent=5 // pred_fallthru
        _
      %p350 = scmp.le.s32.totalorder 1, %s9
      %p351 = scmp.lt.s32.totalorder %s9, 4
      %p352 = pnand %p350, %p351
      %p353 = pneg %p352
      // Predicated region
      $region63: #{tracing_transformer_block_wrapper.25} parent=5 // pred_check
        _
      $region64: #{tracing_transformer_block_wrapper.25} parent=5 // pred_check_branch
        %355 = sbr.rel (%p352) target = $region66
      $region65: #{tracing_transformer_block_wrapper.25} parent=5 // pred_region
        %s356 = ssub.s32 %s9, 1
        %s357 = sand.u32 %s71, 1
        %s358 = sand.u32 %s71, 1
        %s359 = smul.addr %s358, 256
        %s360 = scalar_lea.vmem [#allocation3], %s359
        // Predicated region
        $region67: #{tracing_transformer_block_wrapper.25} parent=65 // pred_check
          %p361 = pneg %p84
        $region68: #{tracing_transformer_block_wrapper.25} parent=65 // pred_check_branch
          %363 = sbr.rel (%p361) target = $region70
        $region69: #{tracing_transformer_block_wrapper.25} parent=65 // pred_region
          _
        $region70: #{tracing_transformer_block_wrapper.25} parent=65 // pred_fallthru
          _
        %s364 = smul.u32 2, %s19
        %s365 = smul.u32 2, %s21
        %p366 = scmp.lt.s32.totalorder %s364, 1
        %s367 = scalar_select %p366, %s364, 1
        %p368 = scmp.lt.s32.totalorder %s365, 1
        %s369 = scalar_select %p368, %s365, 1
        %s370 = smul.addr %s367, 2
        %s371 = sadd.s32 %s369, %s370
        %s372 = smul.addr %s371, 4
        %s373 = scalar_lea.vmem %s0, %s372
        %p374 = pneg %p56
        %p375 = pneg %p53
        %s376 = sand.u32 %s71, 1
        %s377 = sand.u32 %s71, 1
        %s378 = smul.addr %s377, 256
        %s379 = scalar_lea.vmem [#allocation3], %s378
        %p380 = pneg %p84
        %p381 = pneg %p81
        %s382 = smul.u32 2, %s20
        %p383 = scmp.lt.s32.totalorder %s382, 5
        %s384 = scalar_select %p383, %s382, 5
        %s385 = scalar_lea.vmem %s2, %s384
        %p386 = pneg %p110
        %p387 = pneg %p107
        %p388 = pneg %p138
        %p389 = pneg %p135
        %s390 = sand.u32 %s125, 1
        %s391 = sand.u32 %s125, 1
        %s392 = smul.addr %s391, 16
        %s393 = scalar_lea.vmem [#allocation4], %s392
        %s394 = smul.u32 2, %s19
        %s395 = smul.u32 2, %s21
        %p396 = scmp.lt.s32.totalorder %s394, 1
        %s397 = scalar_select %p396, %s394, 1
        %p398 = scmp.lt.s32.totalorder %s395, 1
        %s399 = scalar_select %p398, %s395, 1
        %s400 = smul.addr %s397, 2
        %s401 = sadd.s32 %s399, %s400
        %s402 = smul.addr %s401, 4
        %s403 = scalar_lea.vmem %s0, %s402
        %s404 = smul.u32 2, %s19
        %s405 = smul.u32 2, %s21
        %s406 = smul.u32 32, %s21
        %s407 = smul.u32 2, %s20
        %s408 = smul.u32 2, %s20
        %p409 = scmp.lt.s32.totalorder %s408, 5
        %s410 = scalar_select %p409, %s408, 5
        %s411 = scalar_lea.vmem %s2, %s410
        %s412 = smul.u32 2, %s20
        %s413 = smul.u32 2, %s19
        %s414 = smul.u32 2, %s20
        %p415 = scmp.eq.s32.totalorder %s21, 0
        // Predicated region
        $region71: #{tracing_transformer_block_wrapper.25} parent=65 // pred_check
          %p416 = pneg %p415
        $region72: #{tracing_transformer_block_wrapper.25} parent=65 // pred_check_branch
          %418 = sbr.rel (%p416) target = $region74
        $region73: #{tracing_transformer_block_wrapper.25} parent=65 // pred_region
          %419 = vst [vmem:[#allocation2] sm:$0xff] 0.0
          %420 = vst [vmem:[#allocation2 + $0x8] sm:$0xff] 0.0
          %421 = vst [vmem:[#allocation2 + $0x10] sm:$0xff] 0.0
          %422 = vst [vmem:[#allocation2 + $0x18] sm:$0xff] 0.0
        $region74: #{tracing_transformer_block_wrapper.25} parent=65 // pred_fallthru
          _
        %v423 = vld [vmem:[#allocation2] sm:$0xff]
        %v424 = vld [vmem:[#allocation2 + $0x8] sm:$0xff]
        %v425 = vld [vmem:[#allocation2 + $0x10] sm:$0xff]
        %v426 = vld [vmem:[#allocation2 + $0x18] sm:$0xff]
        %v427 = vld [vmem:[%s403] sm:$0xff]
        %v428 = vld [vmem:[%s403 + $0x8] sm:$0xff]
        %v429 = vld [vmem:[%s360] sm:$0xff]
        %v430 = vld [vmem:[%s360 + $0x8] sm:$0xff]
        %v431 = vld [vmem:[%s360 + $0x10] sm:$0xff]
        %v432 = vld [vmem:[%s360 + $0x18] sm:$0xff]
        %v433 = vld [vmem:[%s360 + $0x20] sm:$0xff]
        %v434 = vld [vmem:[%s360 + $0x28] sm:$0xff]
        %v435 = vld [vmem:[%s360 + $0x30] sm:$0xff]
        %v436 = vld [vmem:[%s360 + $0x38] sm:$0xff]
        %v437 = vld [vmem:[%s360 + $0x40] sm:$0xff]
        %v438 = vld [vmem:[%s360 + $0x48] sm:$0xff]
        %v439 = vld [vmem:[%s360 + $0x50] sm:$0xff]
        %v440 = vld [vmem:[%s360 + $0x58] sm:$0xff]
        %v441 = vld [vmem:[%s360 + $0x60] sm:$0xff]
        %v442 = vld [vmem:[%s360 + $0x68] sm:$0xff]
        %v443 = vld [vmem:[%s360 + $0x70] sm:$0xff]
        %v444 = vld [vmem:[%s360 + $0x78] sm:$0xff]
        %v445 = vld [vmem:[%s360 + $0x80] sm:$0xff]
        %v446 = vld [vmem:[%s360 + $0x88] sm:$0xff]
        %v447 = vld [vmem:[%s360 + $0x90] sm:$0xff]
        %v448 = vld [vmem:[%s360 + $0x98] sm:$0xff]
        %v449 = vld [vmem:[%s360 + $0xa0] sm:$0xff]
        %v450 = vld [vmem:[%s360 + $0xa8] sm:$0xff]
        %v451 = vld [vmem:[%s360 + $0xb0] sm:$0xff]
        %v452 = vld [vmem:[%s360 + $0xb8] sm:$0xff]
        %v453 = vld [vmem:[%s360 + $0xc0] sm:$0xff]
        %v454 = vld [vmem:[%s360 + $0xc8] sm:$0xff]
        %v455 = vld [vmem:[%s360 + $0xd0] sm:$0xff]
        %v456 = vld [vmem:[%s360 + $0xd8] sm:$0xff]
        %v457 = vld [vmem:[%s360 + $0xe0] sm:$0xff]
        %v458 = vld [vmem:[%s360 + $0xe8] sm:$0xff]
        %v459 = vld [vmem:[%s360 + $0xf0] sm:$0xff]
        %v460 = vld [vmem:[%s360 + $0xf8] sm:$0xff]
        %v463 = vunpack.c.l.b16 %v427
        %v464 = vunpack.c.h.b16 %v427
        %v465 = vunpack.c.l.b16 %v428
        %v466 = vunpack.c.h.b16 %v428
        %v467 = vpack.c.b16 %v465, %v463
        %v468 = vpack.c.b16 %v466, %v464
        %v503 = vunpack.c.l.b16 %v429
        %v504 = vunpack.c.h.b16 %v429
        %v505 = vunpack.c.l.b16 %v430
        %v506 = vunpack.c.h.b16 %v430
        %v507 = vunpack.c.l.b16 %v431
        %v508 = vunpack.c.h.b16 %v431
        %v509 = vunpack.c.l.b16 %v432
        %v510 = vunpack.c.h.b16 %v432
        %v511 = vunpack.c.l.b16 %v433
        %v512 = vunpack.c.h.b16 %v433
        %v513 = vunpack.c.l.b16 %v434
        %v514 = vunpack.c.h.b16 %v434
        %v515 = vunpack.c.l.b16 %v435
        %v516 = vunpack.c.h.b16 %v435
        %v517 = vunpack.c.l.b16 %v436
        %v518 = vunpack.c.h.b16 %v436
        %v519 = vunpack.c.l.b16 %v437
        %v520 = vunpack.c.h.b16 %v437
        %v521 = vunpack.c.l.b16 %v438
        %v522 = vunpack.c.h.b16 %v438
        %v523 = vunpack.c.l.b16 %v439
        %v524 = vunpack.c.h.b16 %v439
        %v525 = vunpack.c.l.b16 %v440
        %v526 = vunpack.c.h.b16 %v440
        %v527 = vunpack.c.l.b16 %v441
        %v528 = vunpack.c.h.b16 %v441
        %v529 = vunpack.c.l.b16 %v442
        %v530 = vunpack.c.h.b16 %v442
        %v531 = vunpack.c.l.b16 %v443
        %v532 = vunpack.c.h.b16 %v443
        %v533 = vunpack.c.l.b16 %v444
        %v534 = vunpack.c.h.b16 %v444
        %v535 = vunpack.c.l.b16 %v445
        %v536 = vunpack.c.h.b16 %v445
        %v537 = vunpack.c.l.b16 %v446
        %v538 = vunpack.c.h.b16 %v446
        %v539 = vunpack.c.l.b16 %v447
        %v540 = vunpack.c.h.b16 %v447
        %v541 = vunpack.c.l.b16 %v448
        %v542 = vunpack.c.h.b16 %v448
        %v543 = vunpack.c.l.b16 %v449
        %v544 = vunpack.c.h.b16 %v449
        %v545 = vunpack.c.l.b16 %v450
        %v546 = vunpack.c.h.b16 %v450
        %v547 = vunpack.c.l.b16 %v451
        %v548 = vunpack.c.h.b16 %v451
        %v549 = vunpack.c.l.b16 %v452
        %v550 = vunpack.c.h.b16 %v452
        %v551 = vunpack.c.l.b16 %v453
        %v552 = vunpack.c.h.b16 %v453
        %v553 = vunpack.c.l.b16 %v454
        %v554 = vunpack.c.h.b16 %v454
        %v555 = vunpack.c.l.b16 %v455
        %v556 = vunpack.c.h.b16 %v455
        %v557 = vunpack.c.l.b16 %v456
        %v558 = vunpack.c.h.b16 %v456
        %v559 = vunpack.c.l.b16 %v457
        %v560 = vunpack.c.h.b16 %v457
        %v561 = vunpack.c.l.b16 %v458
        %v562 = vunpack.c.h.b16 %v458
        %v563 = vunpack.c.l.b16 %v459
        %v564 = vunpack.c.h.b16 %v459
        %v565 = vunpack.c.l.b16 %v460
        %v566 = vunpack.c.h.b16 %v460
        %v567 = vpack.c.b16 %v505, %v503
        %v568 = vpack.c.b16 %v506, %v504
        %v569 = vpack.c.b16 %v509, %v507
        %v570 = vpack.c.b16 %v510, %v508
        %v571 = vpack.c.b16 %v513, %v511
        %v572 = vpack.c.b16 %v514, %v512
        %v573 = vpack.c.b16 %v517, %v515
        %v574 = vpack.c.b16 %v518, %v516
        %v575 = vpack.c.b16 %v521, %v519
        %v576 = vpack.c.b16 %v522, %v520
        %v577 = vpack.c.b16 %v525, %v523
        %v578 = vpack.c.b16 %v526, %v524
        %v579 = vpack.c.b16 %v529, %v527
        %v580 = vpack.c.b16 %v530, %v528
        %v581 = vpack.c.b16 %v533, %v531
        %v582 = vpack.c.b16 %v534, %v532
        %v583 = vpack.c.b16 %v537, %v535
        %v584 = vpack.c.b16 %v538, %v536
        %v585 = vpack.c.b16 %v541, %v539
        %v586 = vpack.c.b16 %v542, %v540
        %v587 = vpack.c.b16 %v545, %v543
        %v588 = vpack.c.b16 %v546, %v544
        %v589 = vpack.c.b16 %v549, %v547
        %v590 = vpack.c.b16 %v550, %v548
        %v591 = vpack.c.b16 %v553, %v551
        %v592 = vpack.c.b16 %v554, %v552
        %v593 = vpack.c.b16 %v557, %v555
        %v594 = vpack.c.b16 %v558, %v556
        %v595 = vpack.c.b16 %v561, %v559
        %v596 = vpack.c.b16 %v562, %v560
        %v597 = vpack.c.b16 %v565, %v563
        %v598 = vpack.c.b16 %v566, %v564
        %631 = vmatpush.bf16.msra.mxu0 %v581
        %632 = vmatpush.bf16.msra.mxu0 %v579
        %633 = vmatpush.bf16.msra.mxu0 %v577
        %634 = vmatpush.bf16.msra.mxu0 %v575
        %635 = vmatpush.bf16.msra.mxu0 %v573
        %636 = vmatpush.bf16.msra.mxu0 %v571
        %637 = vmatpush.bf16.msra.mxu0 %v569
        %638 = vmatpush.bf16.msra.mxu0 %v567
        %639 = vmatmul.bf16.gmra.mxu0 %v467
        %v640 = vpop.f32.mrf.mxu0
        %v641 = vadd.f32 0.0, %v640
        %v642 = vpop.f32.mrf.mxu0
        %v643 = vadd.f32 0.0, %v642
        %644 = vdwg.mxu0
        %645 = vmatpush.bf16.msra.mxu0 %v597
        %646 = vmatpush.bf16.msra.mxu0 %v595
        %647 = vmatpush.bf16.msra.mxu0 %v593
        %648 = vmatpush.bf16.msra.mxu0 %v591
        %649 = vmatpush.bf16.msra.mxu0 %v589
        %650 = vmatpush.bf16.msra.mxu0 %v587
        %651 = vmatpush.bf16.msra.mxu0 %v585
        %652 = vmatpush.bf16.msra.mxu0 %v583
        %653 = vmatmul.bf16.gmra.mxu0 %v468
        %v654 = vpop.f32.mrf.mxu0
        %v655 = vadd.f32 %v641, %v654
        %v656 = vpop.f32.mrf.mxu0
        %v657 = vadd.f32 %v643, %v656
        %658 = vdwg.mxu0
        %659 = vmatpush.bf16.msra.mxu0 %v582
        %660 = vmatpush.bf16.msra.mxu0 %v580
        %661 = vmatpush.bf16.msra.mxu0 %v578
        %662 = vmatpush.bf16.msra.mxu0 %v576
        %663 = vmatpush.bf16.msra.mxu0 %v574
        %664 = vmatpush.bf16.msra.mxu0 %v572
        %665 = vmatpush.bf16.msra.mxu0 %v570
        %666 = vmatpush.bf16.msra.mxu0 %v568
        %667 = vmatmul.bf16.gmra.mxu0 %v467
        %v668 = vpop.f32.mrf.mxu0
        %v669 = vadd.f32 0.0, %v668
        %v670 = vpop.f32.mrf.mxu0
        %v671 = vadd.f32 0.0, %v670
        %672 = vdwg.mxu0
        %673 = vmatpush.bf16.msra.mxu0 %v598
        %674 = vmatpush.bf16.msra.mxu0 %v596
        %675 = vmatpush.bf16.msra.mxu0 %v594
        %676 = vmatpush.bf16.msra.mxu0 %v592
        %677 = vmatpush.bf16.msra.mxu0 %v590
        %678 = vmatpush.bf16.msra.mxu0 %v588
        %679 = vmatpush.bf16.msra.mxu0 %v586
        %680 = vmatpush.bf16.msra.mxu0 %v584
        %681 = vmatmul.bf16.gmra.mxu0 %v468
        %v682 = vpop.f32.mrf.mxu0
        %v683 = vadd.f32 %v669, %v682
        %v684 = vpop.f32.mrf.mxu0
        %v685 = vadd.f32 %v671, %v684
        %686 = vdwg.mxu0
        %v687 = vadd.f32 %v423, %v655
        %v688 = vadd.f32 %v424, %v683
        %v689 = vadd.f32 %v425, %v657
        %v690 = vadd.f32 %v426, %v685
        %691 = vst [vmem:[#allocation2] sm:$0xff] %v687
        %692 = vst [vmem:[#allocation2 + $0x8] sm:$0xff] %v688
        %693 = vst [vmem:[#allocation2 + $0x10] sm:$0xff] %v689
        %694 = vst [vmem:[#allocation2 + $0x18] sm:$0xff] %v690
        // Predicated region
        $region75: #{tracing_transformer_block_wrapper.25} parent=65 // pred_check
          %p695 = pneg %p415
        $region76: #{tracing_transformer_block_wrapper.25} parent=65 // pred_check_branch
          %697 = sbr.rel (%p695) target = $region78
        $region77: #{tracing_transformer_block_wrapper.25} parent=65 // pred_region
          %v698 = vld [vmem:[#allocation2] sm:$0xff]
          %v699 = vld [vmem:[#allocation2 + $0x8] sm:$0xff]
          %v700 = vld [vmem:[#allocation2 + $0x10] sm:$0xff]
          %v701 = vld [vmem:[#allocation2 + $0x18] sm:$0xff]
          %v702 = vld [vmem:[%s411] sm:$0x3]
          %v703 = vunpack.c.l.bf16 %v702
          %v705 = vperm.slane %v703, 0
          %v706 = vperm.slane %v703, 2
          %v709 = vperm.slane %v705, 0
          %v710 = vperm.slane %v706, 0
          %v711 = vadd.f32 %v698, %v709
          %v712 = vadd.f32 %v699, %v710
          %v713 = vadd.f32 %v700, %v709
          %v714 = vadd.f32 %v701, %v710
          %v715 = vpack.c.bf16 %v712, %v711
          %v716 = vpack.c.bf16 %v714, %v713
          %717 = vst [vmem:[%s393] sm:$0xff] %v715
          %718 = vst [vmem:[%s393 + $0x8] sm:$0xff] %v716
        $region78: #{tracing_transformer_block_wrapper.25} parent=65 // pred_fallthru
          _
        %s719 = sand.u32 %s125, 1
        %s720 = sand.u32 %s125, 1
        %s721 = smul.addr %s720, 16
        %s722 = scalar_lea.vmem [#allocation4], %s721
        // Predicated region
        $region79: #{tracing_transformer_block_wrapper.25} parent=65 // pred_check
          %p723 = pneg %p135
        $region80: #{tracing_transformer_block_wrapper.25} parent=65 // pred_check_branch
          %725 = sbr.rel (%p723) target = $region82
        $region81: #{tracing_transformer_block_wrapper.25} parent=65 // pred_region
          %s726 = smul.u32 2, %s19
          %s727 = smul.u32 2, %s20
          %s728 = smul.addr %s726, 6
          %s729 = sadd.s32 %s727, %s728
          %s730 = smul.addr %s729, 4
          %s731 = scalar_lea.vmem %s3, %s730
          // Predicated region
          $region83: #{tracing_transformer_block_wrapper.25} parent=81 // pred_check
            _
          $region84: #{tracing_transformer_block_wrapper.25} parent=81 // pred_check_branch
            %733 = sbr.rel (0) target = $region86
          $region85: #{tracing_transformer_block_wrapper.25} parent=81 // pred_region
            // Predicated region
            $region87: #{tracing_transformer_block_wrapper.25} parent=85 // pred_check
              _
            $region88: #{tracing_transformer_block_wrapper.25} parent=85 // pred_check_branch
              %735 = sbr.rel (0) target = $region90
            $region89: #{tracing_transformer_block_wrapper.25} parent=85 // pred_region
              // Predicated region
              $region102: #{tracing_transformer_block_wrapper.25} parent=89 // pred_check
                _
              $region103: #{tracing_transformer_block_wrapper.25} parent=89 // pred_check_branch
                %753 = sbr.rel (0) target = $region105
              $region104: #{tracing_transformer_block_wrapper.25} parent=89 // pred_region
                loop: start=0, step=1, limit=1
                $region106: #{tracing_transformer_block_wrapper.25} parent=104 // loop_pre_header
                  _
                $region107: #{tracing_transformer_block_wrapper.25} parent=104 // loop_header
                  %s755 = sphi 0, %s759
                  %p756 = scmp.ge.s32.totalorder %s755, 1
                  %s760 = sphi %s722, %s722
                  %s761 = sphi %s731, %s731
                $region108: #{tracing_transformer_block_wrapper.25} parent=104 // loop_header_branch
                  %758 = sbr.rel (%p756) target = $region112
                $region109: #{tracing_transformer_block_wrapper.25} parent=104 // loop_body
                  %v762 = vld [vmem:[%s760] sm:$0xff]
                  %763 = vst [vmem:[%s761] sm:$0xff] %v762
                  %v764 = vld [vmem:[%s760 + $0x8] sm:$0xff]
                  %765 = vst [vmem:[%s761 + $0x18] sm:$0xff] %v764
                $region110: #{tracing_transformer_block_wrapper.25} parent=104 // loop_footer
                  %s759 = sadd.s32 1, %s755
                $region111: #{tracing_transformer_block_wrapper.25} parent=104 // loop_footer_branch
                  %754 = sbr.rel target = $region107
                $region112: #{tracing_transformer_block_wrapper.25} parent=104 // loop_exit
                  _
              $region105: #{tracing_transformer_block_wrapper.25} parent=89 // pred_fallthru
                _
              // Predicated region
              $region113: #{tracing_transformer_block_wrapper.25} parent=89 // pred_check
                _
              $region114: #{tracing_transformer_block_wrapper.25} parent=89 // pred_check_branch
                %767 = sbr.rel target = $region116
              $region115: #{tracing_transformer_block_wrapper.25} parent=89 // pred_region
                _
              $region116: #{tracing_transformer_block_wrapper.25} parent=89 // pred_fallthru
                _
            $region90: #{tracing_transformer_block_wrapper.25} parent=85 // pred_fallthru
              _
            // Predicated region
            $region91: #{tracing_transformer_block_wrapper.25} parent=85 // pred_check
              _
            $region92: #{tracing_transformer_block_wrapper.25} parent=85 // pred_check_branch
              %737 = sbr.rel target = $region94
            $region93: #{tracing_transformer_block_wrapper.25} parent=85 // pred_region
              %s739 = ssub.s32 256, 1
              loop: start=0, step=1, limit=1
              $region95: #{tracing_transformer_block_wrapper.25} parent=93 // loop_pre_header
                _
              $region96: #{tracing_transformer_block_wrapper.25} parent=93 // loop_header
                %s741 = sphi 0, %s745
                %p742 = scmp.ge.s32.totalorder %s741, 1
                %s746 = sphi %s722, %s722
                %s747 = sphi %s731, %s731
              $region97: #{tracing_transformer_block_wrapper.25} parent=93 // loop_header_branch
                %744 = sbr.rel (%p742) target = $region101
              $region98: #{tracing_transformer_block_wrapper.25} parent=93 // loop_body
                %v748 = vld [vmem:[%s746] sm:%s739]
                %749 = vst [vmem:[%s747] sm:%s739] %v748
                %v750 = vld [vmem:[%s746 + $0x8] sm:%s739]
                %751 = vst [vmem:[%s747 + $0x18] sm:%s739] %v750
              $region99: #{tracing_transformer_block_wrapper.25} parent=93 // loop_footer
                %s745 = sadd.s32 1, %s741
              $region100: #{tracing_transformer_block_wrapper.25} parent=93 // loop_footer_branch
                %740 = sbr.rel target = $region96
              $region101: #{tracing_transformer_block_wrapper.25} parent=93 // loop_exit
                _
            $region94: #{tracing_transformer_block_wrapper.25} parent=85 // pred_fallthru
              _
          $region86: #{tracing_transformer_block_wrapper.25} parent=81 // pred_fallthru
            _
          %768 = vnop
        $region82: #{tracing_transformer_block_wrapper.25} parent=65 // pred_fallthru
          _
      $region66: #{tracing_transformer_block_wrapper.25} parent=5 // pred_fallthru
        _
      %p769 = scmp.le.s32.totalorder 2, %s9
      // Predicated region
      $region117: #{tracing_transformer_block_wrapper.25} parent=5 // pred_check
        %p770 = pneg %p769
      $region118: #{tracing_transformer_block_wrapper.25} parent=5 // pred_check_branch
        %772 = sbr.rel (%p770) target = $region120
      $region119: #{tracing_transformer_block_wrapper.25} parent=5 // pred_region
        %s773 = ssub.s32 %s9, 2
        // Predicated region
        $region121: #{tracing_transformer_block_wrapper.25} parent=119 // pred_check
          %p774 = pneg %p141
        $region122: #{tracing_transformer_block_wrapper.25} parent=119 // pred_check_branch
          %776 = sbr.rel (%p774) target = $region124
        $region123: #{tracing_transformer_block_wrapper.25} parent=119 // pred_region
          %s777 = sand.u32 %s126, 1
          %s778 = sand.u32 %s126, 1
          %s779 = smul.addr %s778, 16
          %s780 = scalar_lea.vmem [#allocation4], %s779
        $region124: #{tracing_transformer_block_wrapper.25} parent=119 // pred_fallthru
          _
      $region120: #{tracing_transformer_block_wrapper.25} parent=5 // pred_fallthru
        _
    $region6: #{tracing_transformer_block_wrapper.25} parent=1 // loop_footer
      %s13 = sadd.s32 1, %s9
    $region7: #{tracing_transformer_block_wrapper.25} parent=1 // loop_footer_branch
      %8 = sbr.rel target = $region3
    $region8: #{tracing_transformer_block_wrapper.25} parent=1 // loop_exit
      _

// kernel: tracing_transformer_block_wrapper.28
$region0: #{tracing_transformer_block_wrapper.28}
  #allocation0 [shape = 'u32[]', space=smem, size = 0x4, offset = 0x4, fixed_abs, tag = 'smem constant byte address 0x4 - core index']
  #allocation1 [shape = 'u32[72,128]{1,0:T(1,128)}', space=vmem, size = 0x9000, scoped, tag = 'internal scratch']
  #allocation2 [shape = 'f32[16,256]{1,0:T(8,128)}', space=vmem, size = 0x4000, scoped, tag = 'scratch operand']
  %s0 = inlined_call_operand.vmem [shape: bf16[16,256], index: 0, kind: input, shape index: {}]
  %s1 = inlined_call_operand.vmem [shape: bf16[256,256], index: 1, kind: input, shape index: {}]
  %s2 = inlined_call_operand.vmem [shape: bf16[1,256], index: 2, kind: input, shape index: {}]
  %s3 = inlined_call_operand.vmem [shape: bf16[16,256], index: 3, kind: output, shape index: {}]
  %s4 = sld [smem:[#allocation0]]
  $region30: #{tracing_transformer_block_wrapper.28} parent=0
    _
  %s6 = ssub.s32 1, %s4
  %s7 = scalar_select 0, %s6, %s4
  // Predicated region
  $region2: #{tracing_transformer_block_wrapper.28} parent=0 // pred_check
    _
  $region3: #{tracing_transformer_block_wrapper.28} parent=0 // pred_check_branch
    %9 = sbr.rel (0) target = $region5
  $region4: #{tracing_transformer_block_wrapper.28} parent=0 // pred_region
    _
  $region5: #{tracing_transformer_block_wrapper.28} parent=0 // pred_fallthru
    _
  // Predicated region
  $region6: #{tracing_transformer_block_wrapper.28} parent=0 // pred_check
    _
  $region7: #{tracing_transformer_block_wrapper.28} parent=0 // pred_check_branch
    %11 = sbr.rel (0) target = $region9
  $region8: #{tracing_transformer_block_wrapper.28} parent=0 // pred_region
    _
  $region9: #{tracing_transformer_block_wrapper.28} parent=0 // pred_fallthru
    _
  // Predicated region
  $region10: #{tracing_transformer_block_wrapper.28} parent=0 // pred_check
    _
  $region11: #{tracing_transformer_block_wrapper.28} parent=0 // pred_check_branch
    %13 = sbr.rel (0) target = $region13
  $region12: #{tracing_transformer_block_wrapper.28} parent=0 // pred_region
    _
  $region13: #{tracing_transformer_block_wrapper.28} parent=0 // pred_fallthru
    _
  %p14 = scmp.eq.s32.totalorder 0, 0
  // Predicated region
  $region14: #{tracing_transformer_block_wrapper.28} parent=0 // pred_check
    %p15 = pneg %p14
  $region15: #{tracing_transformer_block_wrapper.28} parent=0 // pred_check_branch
    %17 = sbr.rel (%p15) target = $region17
  $region16: #{tracing_transformer_block_wrapper.28} parent=0 // pred_region
    %18 = vst [vmem:[#allocation2] sm:$0xff] 0.0
    %19 = vst [vmem:[#allocation2 + $0x8] sm:$0xff] 0.0
    %20 = vst [vmem:[#allocation2 + $0x10] sm:$0xff] 0.0
    %21 = vst [vmem:[#allocation2 + $0x18] sm:$0xff] 0.0
  $region17: #{tracing_transformer_block_wrapper.28} parent=0 // pred_fallthru
    _
  %v22 = vld [vmem:[#allocation2] sm:$0xff]
  %v23 = vld [vmem:[#allocation2 + $0x8] sm:$0xff]
  %v24 = vld [vmem:[#allocation2 + $0x10] sm:$0xff]
  %v25 = vld [vmem:[#allocation2 + $0x18] sm:$0xff]
  %v26 = vld [vmem:[%s0] sm:$0xff]
  %v27 = vld [vmem:[%s0 + $0x8] sm:$0xff]
  %v28 = vld [vmem:[%s1] sm:$0xff]
  %v29 = vld [vmem:[%s1 + $0x8] sm:$0xff]
  %v30 = vld [vmem:[%s1 + $0x10] sm:$0xff]
  %v31 = vld [vmem:[%s1 + $0x18] sm:$0xff]
  %v32 = vld [vmem:[%s1 + $0x20] sm:$0xff]
  %v33 = vld [vmem:[%s1 + $0x28] sm:$0xff]
  %v34 = vld [vmem:[%s1 + $0x30] sm:$0xff]
  %v35 = vld [vmem:[%s1 + $0x38] sm:$0xff]
  %v36 = vld [vmem:[%s1 + $0x40] sm:$0xff]
  %v37 = vld [vmem:[%s1 + $0x48] sm:$0xff]
  %v38 = vld [vmem:[%s1 + $0x50] sm:$0xff]
  %v39 = vld [vmem:[%s1 + $0x58] sm:$0xff]
  %v40 = vld [vmem:[%s1 + $0x60] sm:$0xff]
  %v41 = vld [vmem:[%s1 + $0x68] sm:$0xff]
  %v42 = vld [vmem:[%s1 + $0x70] sm:$0xff]
  %v43 = vld [vmem:[%s1 + $0x78] sm:$0xff]
  %v44 = vld [vmem:[%s1 + $0x80] sm:$0xff]
  %v45 = vld [vmem:[%s1 + $0x88] sm:$0xff]
  %v46 = vld [vmem:[%s1 + $0x90] sm:$0xff]
  %v47 = vld [vmem:[%s1 + $0x98] sm:$0xff]
  %v48 = vld [vmem:[%s1 + $0xa0] sm:$0xff]
  %v49 = vld [vmem:[%s1 + $0xa8] sm:$0xff]
  %v50 = vld [vmem:[%s1 + $0xb0] sm:$0xff]
  %v51 = vld [vmem:[%s1 + $0xb8] sm:$0xff]
  %v52 = vld [vmem:[%s1 + $0xc0] sm:$0xff]
  %v53 = vld [vmem:[%s1 + $0xc8] sm:$0xff]
  %v54 = vld [vmem:[%s1 + $0xd0] sm:$0xff]
  %v55 = vld [vmem:[%s1 + $0xd8] sm:$0xff]
  %v56 = vld [vmem:[%s1 + $0xe0] sm:$0xff]
  %v57 = vld [vmem:[%s1 + $0xe8] sm:$0xff]
  %v58 = vld [vmem:[%s1 + $0xf0] sm:$0xff]
  %v59 = vld [vmem:[%s1 + $0xf8] sm:$0xff]
  %v62 = vunpack.c.l.b16 %v26
  %v63 = vunpack.c.h.b16 %v26
  %v64 = vunpack.c.l.b16 %v27
  %v65 = vunpack.c.h.b16 %v27
  %v66 = vpack.c.b16 %v64, %v62
  %v67 = vpack.c.b16 %v65, %v63
  %v102 = vunpack.c.l.b16 %v28
  %v103 = vunpack.c.h.b16 %v28
  %v104 = vunpack.c.l.b16 %v29
  %v105 = vunpack.c.h.b16 %v29
  %v106 = vunpack.c.l.b16 %v30
  %v107 = vunpack.c.h.b16 %v30
  %v108 = vunpack.c.l.b16 %v31
  %v109 = vunpack.c.h.b16 %v31
  %v110 = vunpack.c.l.b16 %v32
  %v111 = vunpack.c.h.b16 %v32
  %v112 = vunpack.c.l.b16 %v33
  %v113 = vunpack.c.h.b16 %v33
  %v114 = vunpack.c.l.b16 %v34
  %v115 = vunpack.c.h.b16 %v34
  %v116 = vunpack.c.l.b16 %v35
  %v117 = vunpack.c.h.b16 %v35
  %v118 = vunpack.c.l.b16 %v36
  %v119 = vunpack.c.h.b16 %v36
  %v120 = vunpack.c.l.b16 %v37
  %v121 = vunpack.c.h.b16 %v37
  %v122 = vunpack.c.l.b16 %v38
  %v123 = vunpack.c.h.b16 %v38
  %v124 = vunpack.c.l.b16 %v39
  %v125 = vunpack.c.h.b16 %v39
  %v126 = vunpack.c.l.b16 %v40
  %v127 = vunpack.c.h.b16 %v40
  %v128 = vunpack.c.l.b16 %v41
  %v129 = vunpack.c.h.b16 %v41
  %v130 = vunpack.c.l.b16 %v42
  %v131 = vunpack.c.h.b16 %v42
  %v132 = vunpack.c.l.b16 %v43
  %v133 = vunpack.c.h.b16 %v43
  %v134 = vunpack.c.l.b16 %v44
  %v135 = vunpack.c.h.b16 %v44
  %v136 = vunpack.c.l.b16 %v45
  %v137 = vunpack.c.h.b16 %v45
  %v138 = vunpack.c.l.b16 %v46
  %v139 = vunpack.c.h.b16 %v46
  %v140 = vunpack.c.l.b16 %v47
  %v141 = vunpack.c.h.b16 %v47
  %v142 = vunpack.c.l.b16 %v48
  %v143 = vunpack.c.h.b16 %v48
  %v144 = vunpack.c.l.b16 %v49
  %v145 = vunpack.c.h.b16 %v49
  %v146 = vunpack.c.l.b16 %v50
  %v147 = vunpack.c.h.b16 %v50
  %v148 = vunpack.c.l.b16 %v51
  %v149 = vunpack.c.h.b16 %v51
  %v150 = vunpack.c.l.b16 %v52
  %v151 = vunpack.c.h.b16 %v52
  %v152 = vunpack.c.l.b16 %v53
  %v153 = vunpack.c.h.b16 %v53
  %v154 = vunpack.c.l.b16 %v54
  %v155 = vunpack.c.h.b16 %v54
  %v156 = vunpack.c.l.b16 %v55
  %v157 = vunpack.c.h.b16 %v55
  %v158 = vunpack.c.l.b16 %v56
  %v159 = vunpack.c.h.b16 %v56
  %v160 = vunpack.c.l.b16 %v57
  %v161 = vunpack.c.h.b16 %v57
  %v162 = vunpack.c.l.b16 %v58
  %v163 = vunpack.c.h.b16 %v58
  %v164 = vunpack.c.l.b16 %v59
  %v165 = vunpack.c.h.b16 %v59
  %v166 = vpack.c.b16 %v104, %v102
  %v167 = vpack.c.b16 %v105, %v103
  %v168 = vpack.c.b16 %v108, %v106
  %v169 = vpack.c.b16 %v109, %v107
  %v170 = vpack.c.b16 %v112, %v110
  %v171 = vpack.c.b16 %v113, %v111
  %v172 = vpack.c.b16 %v116, %v114
  %v173 = vpack.c.b16 %v117, %v115
  %v174 = vpack.c.b16 %v120, %v118
  %v175 = vpack.c.b16 %v121, %v119
  %v176 = vpack.c.b16 %v124, %v122
  %v177 = vpack.c.b16 %v125, %v123
  %v178 = vpack.c.b16 %v128, %v126
  %v179 = vpack.c.b16 %v129, %v127
  %v180 = vpack.c.b16 %v132, %v130
  %v181 = vpack.c.b16 %v133, %v131
  %v182 = vpack.c.b16 %v136, %v134
  %v183 = vpack.c.b16 %v137, %v135
  %v184 = vpack.c.b16 %v140, %v138
  %v185 = vpack.c.b16 %v141, %v139
  %v186 = vpack.c.b16 %v144, %v142
  %v187 = vpack.c.b16 %v145, %v143
  %v188 = vpack.c.b16 %v148, %v146
  %v189 = vpack.c.b16 %v149, %v147
  %v190 = vpack.c.b16 %v152, %v150
  %v191 = vpack.c.b16 %v153, %v151
  %v192 = vpack.c.b16 %v156, %v154
  %v193 = vpack.c.b16 %v157, %v155
  %v194 = vpack.c.b16 %v160, %v158
  %v195 = vpack.c.b16 %v161, %v159
  %v196 = vpack.c.b16 %v164, %v162
  %v197 = vpack.c.b16 %v165, %v163
  %230 = vmatpush.bf16.msra.mxu0 %v180
  %231 = vmatpush.bf16.msra.mxu0 %v178
  %232 = vmatpush.bf16.msra.mxu0 %v176
  %233 = vmatpush.bf16.msra.mxu0 %v174
  %234 = vmatpush.bf16.msra.mxu0 %v172
  %235 = vmatpush.bf16.msra.mxu0 %v170
  %236 = vmatpush.bf16.msra.mxu0 %v168
  %237 = vmatpush.bf16.msra.mxu0 %v166
  %238 = vmatmul.bf16.gmra.mxu0 %v66
  %v239 = vpop.f32.mrf.mxu0
  %v240 = vadd.f32 0.0, %v239
  %v241 = vpop.f32.mrf.mxu0
  %v242 = vadd.f32 0.0, %v241
  %243 = vdwg.mxu0
  %244 = vmatpush.bf16.msra.mxu0 %v196
  %245 = vmatpush.bf16.msra.mxu0 %v194
  %246 = vmatpush.bf16.msra.mxu0 %v192
  %247 = vmatpush.bf16.msra.mxu0 %v190
  %248 = vmatpush.bf16.msra.mxu0 %v188
  %249 = vmatpush.bf16.msra.mxu0 %v186
  %250 = vmatpush.bf16.msra.mxu0 %v184
  %251 = vmatpush.bf16.msra.mxu0 %v182
  %252 = vmatmul.bf16.gmra.mxu0 %v67
  %v253 = vpop.f32.mrf.mxu0
  %v254 = vadd.f32 %v240, %v253
  %v255 = vpop.f32.mrf.mxu0
  %v256 = vadd.f32 %v242, %v255
  %257 = vdwg.mxu0
  %258 = vmatpush.bf16.msra.mxu0 %v181
  %259 = vmatpush.bf16.msra.mxu0 %v179
  %260 = vmatpush.bf16.msra.mxu0 %v177
  %261 = vmatpush.bf16.msra.mxu0 %v175
  %262 = vmatpush.bf16.msra.mxu0 %v173
  %263 = vmatpush.bf16.msra.mxu0 %v171
  %264 = vmatpush.bf16.msra.mxu0 %v169
  %265 = vmatpush.bf16.msra.mxu0 %v167
  %266 = vmatmul.bf16.gmra.mxu0 %v66
  %v267 = vpop.f32.mrf.mxu0
  %v268 = vadd.f32 0.0, %v267
  %v269 = vpop.f32.mrf.mxu0
  %v270 = vadd.f32 0.0, %v269
  %271 = vdwg.mxu0
  %272 = vmatpush.bf16.msra.mxu0 %v197
  %273 = vmatpush.bf16.msra.mxu0 %v195
  %274 = vmatpush.bf16.msra.mxu0 %v193
  %275 = vmatpush.bf16.msra.mxu0 %v191
  %276 = vmatpush.bf16.msra.mxu0 %v189
  %277 = vmatpush.bf16.msra.mxu0 %v187
  %278 = vmatpush.bf16.msra.mxu0 %v185
  %279 = vmatpush.bf16.msra.mxu0 %v183
  %280 = vmatmul.bf16.gmra.mxu0 %v67
  %v281 = vpop.f32.mrf.mxu0
  %v282 = vadd.f32 %v268, %v281
  %v283 = vpop.f32.mrf.mxu0
  %v284 = vadd.f32 %v270, %v283
  %285 = vdwg.mxu0
  %v286 = vadd.f32 %v22, %v254
  %v287 = vadd.f32 %v23, %v282
  %v288 = vadd.f32 %v24, %v256
  %v289 = vadd.f32 %v25, %v284
  %290 = vst [vmem:[#allocation2] sm:$0xff] %v286
  %291 = vst [vmem:[#allocation2 + $0x8] sm:$0xff] %v287
  %292 = vst [vmem:[#allocation2 + $0x10] sm:$0xff] %v288
  %293 = vst [vmem:[#allocation2 + $0x18] sm:$0xff] %v289
  // Predicated region
  $region18: #{tracing_transformer_block_wrapper.28} parent=0 // pred_check
    %p294 = pneg %p14
  $region19: #{tracing_transformer_block_wrapper.28} parent=0 // pred_check_branch
    %296 = sbr.rel (%p294) target = $region21
  $region20: #{tracing_transformer_block_wrapper.28} parent=0 // pred_region
    %v297 = vld [vmem:[#allocation2] sm:$0xff]
    %v298 = vld [vmem:[#allocation2 + $0x8] sm:$0xff]
    %v299 = vld [vmem:[#allocation2 + $0x10] sm:$0xff]
    %v300 = vld [vmem:[#allocation2 + $0x18] sm:$0xff]
    %v301 = vld [vmem:[%s2] sm:$0x3]
    %v302 = vunpack.c.l.bf16 %v301
    %v304 = vperm.slane %v302, 0
    %v305 = vperm.slane %v302, 2
    %v308 = vperm.slane %v304, 0
    %v309 = vperm.slane %v305, 0
    %v310 = vadd.f32 %v297, %v308
    %v311 = vadd.f32 %v298, %v309
    %v312 = vadd.f32 %v299, %v308
    %v313 = vadd.f32 %v300, %v309
    %v314 = vpack.c.bf16 %v311, %v310
    %v315 = vpack.c.bf16 %v313, %v312
    %316 = vst [vmem:[%s3] sm:$0xff] %v314
    %317 = vst [vmem:[%s3 + $0x8] sm:$0xff] %v315
  $region21: #{tracing_transformer_block_wrapper.28} parent=0 // pred_fallthru
    _
  // Predicated region
  $region22: #{tracing_transformer_block_wrapper.28} parent=0 // pred_check
    _
  $region23: #{tracing_transformer_block_wrapper.28} parent=0 // pred_check_branch
    %319 = sbr.rel (0) target = $region25
  $region24: #{tracing_transformer_block_wrapper.28} parent=0 // pred_region
    _
  $region25: #{tracing_transformer_block_wrapper.28} parent=0 // pred_fallthru
    _
  // Predicated region
  $region26: #{tracing_transformer_block_wrapper.28} parent=0 // pred_check
    _
  $region27: #{tracing_transformer_block_wrapper.28} parent=0 // pred_check_branch
    %321 = sbr.rel (0) target = $region29
  $region28: #{tracing_transformer_block_wrapper.28} parent=0 // pred_region
    _
  $region29: #{tracing_transformer_block_wrapper.28} parent=0 // pred_fallthru
    _

// kernel: tracing_transformer_block_wrapper.26
$region0: #{tracing_transformer_block_wrapper.26}
  #allocation0 [shape = 'u32[]', space=smem, size = 0x4, offset = 0x4, fixed_abs, tag = 'smem constant byte address 0x4 - core index']
  #allocation1 [shape = 'u32[72,128]{1,0:T(1,128)}', space=vmem, size = 0x9000, scoped, tag = 'internal scratch']
  #allocation2 [shape = 'f32[32,1]{1,0:T(8,128)}', space=vmem, size = 0x4000, scoped, tag = 'scratch operand']
  #allocation3 [shape = 'f32[32,1]{1,0:T(8,128)}', space=vmem, size = 0x4000, scoped, tag = 'scratch operand']
  #allocation4 [shape = 'f32[32,128]{1,0:T(8,128)}', space=vmem, size = 0x4000, scoped, tag = 'scratch operand']
  %s0 = inlined_call_operand.vmem [shape: bf16[2,32,256], index: 0, kind: input, shape index: {}]
  %s1 = inlined_call_operand.vmem [shape: bf16[2,32,256], index: 1, kind: input, shape index: {}]
  %s2 = inlined_call_operand.vmem [shape: bf16[2,32,256], index: 2, kind: input, shape index: {}]
  %s3 = inlined_call_operand.vmem [shape: bf16[2,32,256], index: 3, kind: output, shape index: {}]
  %s4 = sld [smem:[#allocation0]]
  $region213: #{tracing_transformer_block_wrapper.26} parent=0
    _
  %s6 = ssub.s32 1, %s4
  %s7 = scalar_select 0, %s6, %s4
  $region1: #{tracing_transformer_block_wrapper.26} parent=0
    #allocation5 [shape = 'u8[16384]{0}', space=vmem, size = 0x4000, scoped, tag = 'input window, operand 0']
    #allocation6 [shape = 'u8[16384]{0}', space=vmem, size = 0x4000, scoped, tag = 'input window, operand 1']
    #allocation7 [shape = 'u8[16384]{0}', space=vmem, size = 0x4000, scoped, tag = 'input window, operand 2']
    #allocation8 [shape = 'u8[16384]{0}', space=vmem, size = 0x4000, scoped, tag = 'output window, operand 0']
    loop: start=0, step=1, limit=6
    $region2: #{tracing_transformer_block_wrapper.26} parent=1 // loop_pre_header
      _
    $region3: #{tracing_transformer_block_wrapper.26} parent=1 // loop_header
      %s9 = sphi 0, %s13
      %p10 = scmp.ge.s32.totalorder %s9, 6
      %s16 = sphi 0, %s42
      %s17 = sphi 0, %s38
      %s18 = sphi 0, %s34
      %s19 = sphi 0, %s30
      %s20 = sphi 0, %s16
      %s21 = sphi 0, %s17
      %s22 = sphi 0, %s18
      %s23 = sphi 0, %s19
      %s24 = sphi 0, %s20
      %s25 = sphi 0, %s21
      %s26 = sphi 0, %s22
      %s27 = sphi 0, %s23
      %s49 = sphi 0, %s51
      %s52 = sphi 0, %s49
      %s53 = sphi 0, %s52
      %s69 = sphi 0, %s53
      %s79 = sphi 0, %s81
      %s82 = sphi 0, %s79
      %s83 = sphi 0, %s82
      %s99 = sphi 0, %s83
      %s109 = sphi 0, %s111
      %s112 = sphi 0, %s109
      %s113 = sphi 0, %s112
      %s129 = sphi 0, %s113
      %s139 = sphi 0, %s141
      %s142 = sphi 0, %s139
      %s143 = sphi 0, %s142
      %s159 = sphi 0, %s143
    $region4: #{tracing_transformer_block_wrapper.26} parent=1 // loop_header_branch
      %12 = sbr.rel (%p10) target = $region8
    $region5: #{tracing_transformer_block_wrapper.26} parent=1 // loop_body
      %s14 = ssub.s32 %s9, 1
      %s15 = ssub.s32 %s9, 2
      %s28 = sadd.s32 1, %s19
      %p29 = scmp.ge.s32.totalorder %s28, 1
      %s30 = scalar_select %p29, 0, %s28
      %s31 = sadd.s32 1, %s18
      %s32 = scalar_select %p29, %s31, %s18
      %p33 = scmp.ge.s32.totalorder %s32, 1
      %s34 = scalar_select %p33, 0, %s32
      %s35 = sadd.s32 1, %s17
      %s36 = scalar_select %p33, %s35, %s17
      %p37 = scmp.ge.s32.totalorder %s36, 2
      %s38 = scalar_select %p37, 0, %s36
      %s39 = sadd.s32 1, %s16
      %s40 = scalar_select %p37, %s39, %s16
      %p41 = scmp.ge.s32.totalorder %s40, 2
      %s42 = scalar_select %p41, 0, %s40
      %s43 = ssub.s32 %s16, %s42
      %s44 = ssub.s32 %s18, %s34
      %s45 = sor.u32 %s43, %s44
      %s46 = ssub.s32 %s17, %s38
      %s47 = sor.u32 %s45, %s46
      %p48 = scmp.eq.s32.totalorder %s47, 0
      %s50 = sadd.s32 %s49, 1
      %s51 = scalar_select %p48, %s49, %s50
      %p54 = pneg %p48
      %p55 = scmp.eq.s32.totalorder %s9, 3
      %p56 = por %p54, %p55
      %p57 = scmp.ne.s32.totalorder %s49, %s52
      %p58 = scmp.eq.s32.totalorder %s9, 0
      %p59 = por %p57, %p58
      %p60 = scmp.ne.s32.totalorder %s49, %s52
      %p61 = scmp.eq.s32.totalorder %s14, 3
      %p62 = por %p60, %p61
      %p63 = scmp.ne.s32.totalorder %s52, %s53
      %p64 = scmp.eq.s32.totalorder %s14, 0
      %p65 = por %p63, %p64
      %p66 = scmp.ne.s32.totalorder %s52, %s53
      %p67 = scmp.eq.s32.totalorder %s15, 3
      %p68 = por %p66, %p67
      %p70 = scmp.ne.s32.totalorder %s53, %s69
      %p71 = scmp.eq.s32.totalorder %s15, 0
      %p72 = por %p70, %p71
      %s73 = ssub.s32 %s16, %s42
      %s74 = ssub.s32 %s19, %s30
      %s75 = sor.u32 %s73, %s74
      %s76 = ssub.s32 %s17, %s38
      %s77 = sor.u32 %s75, %s76
      %p78 = scmp.eq.s32.totalorder %s77, 0
      %s80 = sadd.s32 %s79, 1
      %s81 = scalar_select %p78, %s79, %s80
      %p84 = pneg %p78
      %p85 = scmp.eq.s32.totalorder %s9, 3
      %p86 = por %p84, %p85
      %p87 = scmp.ne.s32.totalorder %s79, %s82
      %p88 = scmp.eq.s32.totalorder %s9, 0
      %p89 = por %p87, %p88
      %p90 = scmp.ne.s32.totalorder %s79, %s82
      %p91 = scmp.eq.s32.totalorder %s14, 3
      %p92 = por %p90, %p91
      %p93 = scmp.ne.s32.totalorder %s82, %s83
      %p94 = scmp.eq.s32.totalorder %s14, 0
      %p95 = por %p93, %p94
      %p96 = scmp.ne.s32.totalorder %s82, %s83
      %p97 = scmp.eq.s32.totalorder %s15, 3
      %p98 = por %p96, %p97
      %p100 = scmp.ne.s32.totalorder %s83, %s99
      %p101 = scmp.eq.s32.totalorder %s15, 0
      %p102 = por %p100, %p101
      %s103 = ssub.s32 %s16, %s42
      %s104 = ssub.s32 %s19, %s30
      %s105 = sor.u32 %s103, %s104
      %s106 = ssub.s32 %s17, %s38
      %s107 = sor.u32 %s105, %s106
      %p108 = scmp.eq.s32.totalorder %s107, 0
      %s110 = sadd.s32 %s109, 1
      %s111 = scalar_select %p108, %s109, %s110
      %p114 = pneg %p108
      %p115 = scmp.eq.s32.totalorder %s9, 3
      %p116 = por %p114, %p115
      %p117 = scmp.ne.s32.totalorder %s109, %s112
      %p118 = scmp.eq.s32.totalorder %s9, 0
      %p119 = por %p117, %p118
      %p120 = scmp.ne.s32.totalorder %s109, %s112
      %p121 = scmp.eq.s32.totalorder %s14, 3
      %p122 = por %p120, %p121
      %p123 = scmp.ne.s32.totalorder %s112, %s113
      %p124 = scmp.eq.s32.totalorder %s14, 0
      %p125 = por %p123, %p124
      %p126 = scmp.ne.s32.totalorder %s112, %s113
      %p127 = scmp.eq.s32.totalorder %s15, 3
      %p128 = por %p126, %p127
      %p130 = scmp.ne.s32.totalorder %s113, %s129
      %p131 = scmp.eq.s32.totalorder %s15, 0
      %p132 = por %p130, %p131
      %s133 = ssub.s32 %s16, %s42
      %s134 = ssub.s32 %s18, %s34
      %s135 = sor.u32 %s133, %s134
      %s136 = ssub.s32 %s17, %s38
      %s137 = sor.u32 %s135, %s136
      %p138 = scmp.eq.s32.totalorder %s137, 0
      %s140 = sadd.s32 %s139, 1
      %s141 = scalar_select %p138, %s139, %s140
      %p144 = pneg %p138
      %p145 = scmp.eq.s32.totalorder %s9, 3
      %p146 = por %p144, %p145
      %p147 = scmp.ne.s32.totalorder %s139, %s142
      %p148 = scmp.eq.s32.totalorder %s9, 0
      %p149 = por %p147, %p148
      %p150 = scmp.ne.s32.totalorder %s139, %s142
      %p151 = scmp.eq.s32.totalorder %s14, 3
      %p152 = por %p150, %p151
      %p153 = scmp.ne.s32.totalorder %s142, %s143
      %p154 = scmp.eq.s32.totalorder %s14, 0
      %p155 = por %p153, %p154
      %p156 = scmp.ne.s32.totalorder %s142, %s143
      %p157 = scmp.eq.s32.totalorder %s15, 3
      %p158 = por %p156, %p157
      %p160 = scmp.ne.s32.totalorder %s143, %s159
      %p161 = scmp.eq.s32.totalorder %s15, 0
      %p162 = por %p160, %p161
      %p163 = scmp.le.s32.totalorder 1, %s9
      %p164 = scmp.lt.s32.totalorder %s9, 5
      %p165 = pnand %p163, %p164
      %p166 = pneg %p165
      // Predicated region
      $region9: #{tracing_transformer_block_wrapper.26} parent=5 // pred_check
        _
      $region10: #{tracing_transformer_block_wrapper.26} parent=5 // pred_check_branch
        %168 = sbr.rel (%p165) target = $region12
      $region11: #{tracing_transformer_block_wrapper.26} parent=5 // pred_region
        %s169 = ssub.s32 %s9, 1
      $region12: #{tracing_transformer_block_wrapper.26} parent=5 // pred_fallthru
        _
      %p170 = scmp.lt.s32.totalorder %s9, 4
      // Predicated region
      $region13: #{tracing_transformer_block_wrapper.26} parent=5 // pred_check
        %p171 = pneg %p170
      $region14: #{tracing_transformer_block_wrapper.26} parent=5 // pred_check_branch
        %173 = sbr.rel (%p171) target = $region16
      $region15: #{tracing_transformer_block_wrapper.26} parent=5 // pred_region
        // Predicated region
        $region17: #{tracing_transformer_block_wrapper.26} parent=15 // pred_check
          %p174 = pneg %p59
        $region18: #{tracing_transformer_block_wrapper.26} parent=15 // pred_check_branch
          %176 = sbr.rel (%p174) target = $region20
        $region19: #{tracing_transformer_block_wrapper.26} parent=15 // pred_region
          %s177 = sand.u32 %s49, 1
          %s178 = sand.u32 %s49, 1
          %s179 = smul.addr %s178, 16
          %s180 = scalar_lea.vmem [#allocation5], %s179
          %s181 = smul.u32 4, %s18
          %s182 = smul.addr %s181, 2
          %s183 = sadd.s32 %s17, %s182
          %s184 = smul.addr %s16, 8
          %s185 = sadd.s32 %s183, %s184
          %s186 = smul.addr %s185, 4
          %s187 = scalar_lea.vmem %s0, %s186
          // Predicated region
          $region21: #{tracing_transformer_block_wrapper.26} parent=19 // pred_check
            _
          $region22: #{tracing_transformer_block_wrapper.26} parent=19 // pred_check_branch
            %189 = sbr.rel (0) target = $region24
          $region23: #{tracing_transformer_block_wrapper.26} parent=19 // pred_region
            // Predicated region
            $region25: #{tracing_transformer_block_wrapper.26} parent=23 // pred_check
              _
            $region26: #{tracing_transformer_block_wrapper.26} parent=23 // pred_check_branch
              %191 = sbr.rel target = $region28
            $region27: #{tracing_transformer_block_wrapper.26} parent=23 // pred_region
              // Predicated region
              $region40: #{tracing_transformer_block_wrapper.26} parent=27 // pred_check
                _
              $region41: #{tracing_transformer_block_wrapper.26} parent=27 // pred_check_branch
                %213 = sbr.rel (0) target = $region43
              $region42: #{tracing_transformer_block_wrapper.26} parent=27 // pred_region
                loop: start=0, step=1, limit=1
                $region44: #{tracing_transformer_block_wrapper.26} parent=42 // loop_pre_header
                  _
                $region45: #{tracing_transformer_block_wrapper.26} parent=42 // loop_header
                  %s215 = sphi 0, %s219
                  %p216 = scmp.ge.s32.totalorder %s215, 1
                  %s220 = sphi %s187, %s187
                  %s221 = sphi %s180, %s180
                $region46: #{tracing_transformer_block_wrapper.26} parent=42 // loop_header_branch
                  %218 = sbr.rel (%p216) target = $region50
                $region47: #{tracing_transformer_block_wrapper.26} parent=42 // loop_body
                  _
                $region48: #{tracing_transformer_block_wrapper.26} parent=42 // loop_footer
                  %s219 = sadd.s32 1, %s215
                $region49: #{tracing_transformer_block_wrapper.26} parent=42 // loop_footer_branch
                  %214 = sbr.rel target = $region45
                $region50: #{tracing_transformer_block_wrapper.26} parent=42 // loop_exit
                  _
                %s223 = ssub.s32 16, 1
                loop: start=0, step=1, limit=1
                $region51: #{tracing_transformer_block_wrapper.26} parent=42 // loop_pre_header
                  _
                $region52: #{tracing_transformer_block_wrapper.26} parent=42 // loop_header
                  %s225 = sphi 0, %s229
                  %p226 = scmp.ge.s32.totalorder %s225, 1
                  %s230 = sphi %s187, %s187
                  %s231 = sphi %s180, %s180
                $region53: #{tracing_transformer_block_wrapper.26} parent=42 // loop_header_branch
                  %228 = sbr.rel (%p226) target = $region57
                $region54: #{tracing_transformer_block_wrapper.26} parent=42 // loop_body
                  %v232 = vld [vmem:[%s230] sm:%s223]
                  %233 = vst [vmem:[%s231] sm:%s223] %v232
                  %v234 = vld [vmem:[%s230 + $0x8] sm:%s223]
                  %235 = vst [vmem:[%s231 + $0x4] sm:%s223] %v234
                  %v236 = vld [vmem:[%s230 + $0x10] sm:%s223]
                  %237 = vst [vmem:[%s231 + $0x8] sm:%s223] %v236
                  %v238 = vld [vmem:[%s230 + $0x18] sm:%s223]
                  %239 = vst [vmem:[%s231 + $0xc] sm:%s223] %v238
                $region55: #{tracing_transformer_block_wrapper.26} parent=42 // loop_footer
                  %s229 = sadd.s32 1, %s225
                $region56: #{tracing_transformer_block_wrapper.26} parent=42 // loop_footer_branch
                  %224 = sbr.rel target = $region52
                $region57: #{tracing_transformer_block_wrapper.26} parent=42 // loop_exit
                  _
              $region43: #{tracing_transformer_block_wrapper.26} parent=27 // pred_fallthru
                _
            $region28: #{tracing_transformer_block_wrapper.26} parent=23 // pred_fallthru
              _
            // Predicated region
            $region29: #{tracing_transformer_block_wrapper.26} parent=23 // pred_check
              _
            $region30: #{tracing_transformer_block_wrapper.26} parent=23 // pred_check_branch
              %193 = sbr.rel (0) target = $region32
            $region31: #{tracing_transformer_block_wrapper.26} parent=23 // pred_region
              %s195 = ssub.s32 16, 1
              loop: start=0, step=1, limit=1
              $region33: #{tracing_transformer_block_wrapper.26} parent=31 // loop_pre_header
                _
              $region34: #{tracing_transformer_block_wrapper.26} parent=31 // loop_header
                %s197 = sphi 0, %s201
                %p198 = scmp.ge.s32.totalorder %s197, 1
                %s202 = sphi %s187, %s187
                %s203 = sphi %s180, %s180
              $region35: #{tracing_transformer_block_wrapper.26} parent=31 // loop_header_branch
                %200 = sbr.rel (%p198) target = $region39
              $region36: #{tracing_transformer_block_wrapper.26} parent=31 // loop_body
                %v204 = vld [vmem:[%s202] sm:%s195]
                %205 = vst [vmem:[%s203] sm:%s195] %v204
                %v206 = vld [vmem:[%s202 + $0x8] sm:%s195]
                %207 = vst [vmem:[%s203 + $0x4] sm:%s195] %v206
                %v208 = vld [vmem:[%s202 + $0x10] sm:%s195]
                %209 = vst [vmem:[%s203 + $0x8] sm:%s195] %v208
                %v210 = vld [vmem:[%s202 + $0x18] sm:%s195]
                %211 = vst [vmem:[%s203 + $0xc] sm:%s195] %v210
              $region37: #{tracing_transformer_block_wrapper.26} parent=31 // loop_footer
                %s201 = sadd.s32 1, %s197
              $region38: #{tracing_transformer_block_wrapper.26} parent=31 // loop_footer_branch
                %196 = sbr.rel target = $region34
              $region39: #{tracing_transformer_block_wrapper.26} parent=31 // loop_exit
                _
            $region32: #{tracing_transformer_block_wrapper.26} parent=23 // pred_fallthru
              _
          $region24: #{tracing_transformer_block_wrapper.26} parent=19 // pred_fallthru
            _
          %240 = vnop
        $region20: #{tracing_transformer_block_wrapper.26} parent=15 // pred_fallthru
          _
        // Predicated region
        $region58: #{tracing_transformer_block_wrapper.26} parent=15 // pred_check
          %p241 = pneg %p89
        $region59: #{tracing_transformer_block_wrapper.26} parent=15 // pred_check_branch
          %243 = sbr.rel (%p241) target = $region61
        $region60: #{tracing_transformer_block_wrapper.26} parent=15 // pred_region
          %s244 = sand.u32 %s79, 1
          %s245 = sand.u32 %s79, 1
          %s246 = smul.addr %s245, 16
          %s247 = scalar_lea.vmem [#allocation6], %s246
          %s248 = smul.u32 4, %s19
          %s249 = smul.addr %s248, 2
          %s250 = sadd.s32 %s17, %s249
          %s251 = smul.addr %s16, 8
          %s252 = sadd.s32 %s250, %s251
          %s253 = smul.addr %s252, 4
          %s254 = scalar_lea.vmem %s1, %s253
          // Predicated region
          $region62: #{tracing_transformer_block_wrapper.26} parent=60 // pred_check
            _
          $region63: #{tracing_transformer_block_wrapper.26} parent=60 // pred_check_branch
            %256 = sbr.rel (0) target = $region65
          $region64: #{tracing_transformer_block_wrapper.26} parent=60 // pred_region
            // Predicated region
            $region66: #{tracing_transformer_block_wrapper.26} parent=64 // pred_check
              _
            $region67: #{tracing_transformer_block_wrapper.26} parent=64 // pred_check_branch
              %258 = sbr.rel target = $region69
            $region68: #{tracing_transformer_block_wrapper.26} parent=64 // pred_region
              // Predicated region
              $region81: #{tracing_transformer_block_wrapper.26} parent=68 // pred_check
                _
              $region82: #{tracing_transformer_block_wrapper.26} parent=68 // pred_check_branch
                %280 = sbr.rel (0) target = $region84
              $region83: #{tracing_transformer_block_wrapper.26} parent=68 // pred_region
                loop: start=0, step=1, limit=1
                $region85: #{tracing_transformer_block_wrapper.26} parent=83 // loop_pre_header
                  _
                $region86: #{tracing_transformer_block_wrapper.26} parent=83 // loop_header
                  %s282 = sphi 0, %s286
                  %p283 = scmp.ge.s32.totalorder %s282, 1
                  %s287 = sphi %s254, %s254
                  %s288 = sphi %s247, %s247
                $region87: #{tracing_transformer_block_wrapper.26} parent=83 // loop_header_branch
                  %285 = sbr.rel (%p283) target = $region91
                $region88: #{tracing_transformer_block_wrapper.26} parent=83 // loop_body
                  _
                $region89: #{tracing_transformer_block_wrapper.26} parent=83 // loop_footer
                  %s286 = sadd.s32 1, %s282
                $region90: #{tracing_transformer_block_wrapper.26} parent=83 // loop_footer_branch
                  %281 = sbr.rel target = $region86
                $region91: #{tracing_transformer_block_wrapper.26} parent=83 // loop_exit
                  _
                %s290 = ssub.s32 16, 1
                loop: start=0, step=1, limit=1
                $region92: #{tracing_transformer_block_wrapper.26} parent=83 // loop_pre_header
                  _
                $region93: #{tracing_transformer_block_wrapper.26} parent=83 // loop_header
                  %s292 = sphi 0, %s296
                  %p293 = scmp.ge.s32.totalorder %s292, 1
                  %s297 = sphi %s254, %s254
                  %s298 = sphi %s247, %s247
                $region94: #{tracing_transformer_block_wrapper.26} parent=83 // loop_header_branch
                  %295 = sbr.rel (%p293) target = $region98
                $region95: #{tracing_transformer_block_wrapper.26} parent=83 // loop_body
                  %v299 = vld [vmem:[%s297] sm:%s290]
                  %300 = vst [vmem:[%s298] sm:%s290] %v299
                  %v301 = vld [vmem:[%s297 + $0x8] sm:%s290]
                  %302 = vst [vmem:[%s298 + $0x4] sm:%s290] %v301
                  %v303 = vld [vmem:[%s297 + $0x10] sm:%s290]
                  %304 = vst [vmem:[%s298 + $0x8] sm:%s290] %v303
                  %v305 = vld [vmem:[%s297 + $0x18] sm:%s290]
                  %306 = vst [vmem:[%s298 + $0xc] sm:%s290] %v305
                $region96: #{tracing_transformer_block_wrapper.26} parent=83 // loop_footer
                  %s296 = sadd.s32 1, %s292
                $region97: #{tracing_transformer_block_wrapper.26} parent=83 // loop_footer_branch
                  %291 = sbr.rel target = $region93
                $region98: #{tracing_transformer_block_wrapper.26} parent=83 // loop_exit
                  _
              $region84: #{tracing_transformer_block_wrapper.26} parent=68 // pred_fallthru
                _
            $region69: #{tracing_transformer_block_wrapper.26} parent=64 // pred_fallthru
              _
            // Predicated region
            $region70: #{tracing_transformer_block_wrapper.26} parent=64 // pred_check
              _
            $region71: #{tracing_transformer_block_wrapper.26} parent=64 // pred_check_branch
              %260 = sbr.rel (0) target = $region73
            $region72: #{tracing_transformer_block_wrapper.26} parent=64 // pred_region
              %s262 = ssub.s32 16, 1
              loop: start=0, step=1, limit=1
              $region74: #{tracing_transformer_block_wrapper.26} parent=72 // loop_pre_header
                _
              $region75: #{tracing_transformer_block_wrapper.26} parent=72 // loop_header
                %s264 = sphi 0, %s268
                %p265 = scmp.ge.s32.totalorder %s264, 1
                %s269 = sphi %s254, %s254
                %s270 = sphi %s247, %s247
              $region76: #{tracing_transformer_block_wrapper.26} parent=72 // loop_header_branch
                %267 = sbr.rel (%p265) target = $region80
              $region77: #{tracing_transformer_block_wrapper.26} parent=72 // loop_body
                %v271 = vld [vmem:[%s269] sm:%s262]
                %272 = vst [vmem:[%s270] sm:%s262] %v271
                %v273 = vld [vmem:[%s269 + $0x8] sm:%s262]
                %274 = vst [vmem:[%s270 + $0x4] sm:%s262] %v273
                %v275 = vld [vmem:[%s269 + $0x10] sm:%s262]
                %276 = vst [vmem:[%s270 + $0x8] sm:%s262] %v275
                %v277 = vld [vmem:[%s269 + $0x18] sm:%s262]
                %278 = vst [vmem:[%s270 + $0xc] sm:%s262] %v277
              $region78: #{tracing_transformer_block_wrapper.26} parent=72 // loop_footer
                %s268 = sadd.s32 1, %s264
              $region79: #{tracing_transformer_block_wrapper.26} parent=72 // loop_footer_branch
                %263 = sbr.rel target = $region75
              $region80: #{tracing_transformer_block_wrapper.26} parent=72 // loop_exit
                _
            $region73: #{tracing_transformer_block_wrapper.26} parent=64 // pred_fallthru
              _
          $region65: #{tracing_transformer_block_wrapper.26} parent=60 // pred_fallthru
            _
          %307 = vnop
        $region61: #{tracing_transformer_block_wrapper.26} parent=15 // pred_fallthru
          _
        // Predicated region
        $region99: #{tracing_transformer_block_wrapper.26} parent=15 // pred_check
          %p308 = pneg %p119
        $region100: #{tracing_transformer_block_wrapper.26} parent=15 // pred_check_branch
          %310 = sbr.rel (%p308) target = $region102
        $region101: #{tracing_transformer_block_wrapper.26} parent=15 // pred_region
          %s311 = sand.u32 %s109, 1
          %s312 = sand.u32 %s109, 1
          %s313 = smul.addr %s312, 16
          %s314 = scalar_lea.vmem [#allocation7], %s313
          %s315 = smul.u32 4, %s19
          %s316 = smul.addr %s315, 2
          %s317 = sadd.s32 %s17, %s316
          %s318 = smul.addr %s16, 8
          %s319 = sadd.s32 %s317, %s318
          %s320 = smul.addr %s319, 4
          %s321 = scalar_lea.vmem %s2, %s320
          // Predicated region
          $region103: #{tracing_transformer_block_wrapper.26} parent=101 // pred_check
            _
          $region104: #{tracing_transformer_block_wrapper.26} parent=101 // pred_check_branch
            %323 = sbr.rel (0) target = $region106
          $region105: #{tracing_transformer_block_wrapper.26} parent=101 // pred_region
            // Predicated region
            $region107: #{tracing_transformer_block_wrapper.26} parent=105 // pred_check
              _
            $region108: #{tracing_transformer_block_wrapper.26} parent=105 // pred_check_branch
              %325 = sbr.rel target = $region110
            $region109: #{tracing_transformer_block_wrapper.26} parent=105 // pred_region
              // Predicated region
              $region122: #{tracing_transformer_block_wrapper.26} parent=109 // pred_check
                _
              $region123: #{tracing_transformer_block_wrapper.26} parent=109 // pred_check_branch
                %347 = sbr.rel (0) target = $region125
              $region124: #{tracing_transformer_block_wrapper.26} parent=109 // pred_region
                loop: start=0, step=1, limit=1
                $region126: #{tracing_transformer_block_wrapper.26} parent=124 // loop_pre_header
                  _
                $region127: #{tracing_transformer_block_wrapper.26} parent=124 // loop_header
                  %s349 = sphi 0, %s353
                  %p350 = scmp.ge.s32.totalorder %s349, 1
                  %s354 = sphi %s321, %s321
                  %s355 = sphi %s314, %s314
                $region128: #{tracing_transformer_block_wrapper.26} parent=124 // loop_header_branch
                  %352 = sbr.rel (%p350) target = $region132
                $region129: #{tracing_transformer_block_wrapper.26} parent=124 // loop_body
                  _
                $region130: #{tracing_transformer_block_wrapper.26} parent=124 // loop_footer
                  %s353 = sadd.s32 1, %s349
                $region131: #{tracing_transformer_block_wrapper.26} parent=124 // loop_footer_branch
                  %348 = sbr.rel target = $region127
                $region132: #{tracing_transformer_block_wrapper.26} parent=124 // loop_exit
                  _
                %s357 = ssub.s32 16, 1
                loop: start=0, step=1, limit=1
                $region133: #{tracing_transformer_block_wrapper.26} parent=124 // loop_pre_header
                  _
                $region134: #{tracing_transformer_block_wrapper.26} parent=124 // loop_header
                  %s359 = sphi 0, %s363
                  %p360 = scmp.ge.s32.totalorder %s359, 1
                  %s364 = sphi %s321, %s321
                  %s365 = sphi %s314, %s314
                $region135: #{tracing_transformer_block_wrapper.26} parent=124 // loop_header_branch
                  %362 = sbr.rel (%p360) target = $region139
                $region136: #{tracing_transformer_block_wrapper.26} parent=124 // loop_body
                  %v366 = vld [vmem:[%s364] sm:%s357]
                  %367 = vst [vmem:[%s365] sm:%s357] %v366
                  %v368 = vld [vmem:[%s364 + $0x8] sm:%s357]
                  %369 = vst [vmem:[%s365 + $0x4] sm:%s357] %v368
                  %v370 = vld [vmem:[%s364 + $0x10] sm:%s357]
                  %371 = vst [vmem:[%s365 + $0x8] sm:%s357] %v370
                  %v372 = vld [vmem:[%s364 + $0x18] sm:%s357]
                  %373 = vst [vmem:[%s365 + $0xc] sm:%s357] %v372
                $region137: #{tracing_transformer_block_wrapper.26} parent=124 // loop_footer
                  %s363 = sadd.s32 1, %s359
                $region138: #{tracing_transformer_block_wrapper.26} parent=124 // loop_footer_branch
                  %358 = sbr.rel target = $region134
                $region139: #{tracing_transformer_block_wrapper.26} parent=124 // loop_exit
                  _
              $region125: #{tracing_transformer_block_wrapper.26} parent=109 // pred_fallthru
                _
            $region110: #{tracing_transformer_block_wrapper.26} parent=105 // pred_fallthru
              _
            // Predicated region
            $region111: #{tracing_transformer_block_wrapper.26} parent=105 // pred_check
              _
            $region112: #{tracing_transformer_block_wrapper.26} parent=105 // pred_check_branch
              %327 = sbr.rel (0) target = $region114
            $region113: #{tracing_transformer_block_wrapper.26} parent=105 // pred_region
              %s329 = ssub.s32 16, 1
              loop: start=0, step=1, limit=1
              $region115: #{tracing_transformer_block_wrapper.26} parent=113 // loop_pre_header
                _
              $region116: #{tracing_transformer_block_wrapper.26} parent=113 // loop_header
                %s331 = sphi 0, %s335
                %p332 = scmp.ge.s32.totalorder %s331, 1
                %s336 = sphi %s321, %s321
                %s337 = sphi %s314, %s314
              $region117: #{tracing_transformer_block_wrapper.26} parent=113 // loop_header_branch
                %334 = sbr.rel (%p332) target = $region121
              $region118: #{tracing_transformer_block_wrapper.26} parent=113 // loop_body
                %v338 = vld [vmem:[%s336] sm:%s329]
                %339 = vst [vmem:[%s337] sm:%s329] %v338
                %v340 = vld [vmem:[%s336 + $0x8] sm:%s329]
                %341 = vst [vmem:[%s337 + $0x4] sm:%s329] %v340
                %v342 = vld [vmem:[%s336 + $0x10] sm:%s329]
                %343 = vst [vmem:[%s337 + $0x8] sm:%s329] %v342
                %v344 = vld [vmem:[%s336 + $0x18] sm:%s329]
                %345 = vst [vmem:[%s337 + $0xc] sm:%s329] %v344
              $region119: #{tracing_transformer_block_wrapper.26} parent=113 // loop_footer
                %s335 = sadd.s32 1, %s331
              $region120: #{tracing_transformer_block_wrapper.26} parent=113 // loop_footer_branch
                %330 = sbr.rel target = $region116
              $region121: #{tracing_transformer_block_wrapper.26} parent=113 // loop_exit
                _
            $region114: #{tracing_transformer_block_wrapper.26} parent=105 // pred_fallthru
              _
          $region106: #{tracing_transformer_block_wrapper.26} parent=101 // pred_fallthru
            _
          %374 = vnop
        $region102: #{tracing_transformer_block_wrapper.26} parent=15 // pred_fallthru
          _
      $region16: #{tracing_transformer_block_wrapper.26} parent=5 // pred_fallthru
        _
      %p375 = scmp.le.s32.totalorder 1, %s9
      %p376 = scmp.lt.s32.totalorder %s9, 5
      %p377 = pnand %p375, %p376
      %p378 = pneg %p377
      // Predicated region
      $region140: #{tracing_transformer_block_wrapper.26} parent=5 // pred_check
        _
      $region141: #{tracing_transformer_block_wrapper.26} parent=5 // pred_check_branch
        %380 = sbr.rel (%p377) target = $region143
      $region142: #{tracing_transformer_block_wrapper.26} parent=5 // pred_region
        %s381 = ssub.s32 %s9, 1
        %s382 = sand.u32 %s52, 1
        %s383 = sand.u32 %s52, 1
        %s384 = smul.addr %s383, 16
        %s385 = scalar_lea.vmem [#allocation5], %s384
        // Predicated region
        $region144: #{tracing_transformer_block_wrapper.26} parent=142 // pred_check
          %p386 = pneg %p65
        $region145: #{tracing_transformer_block_wrapper.26} parent=142 // pred_check_branch
          %388 = sbr.rel (%p386) target = $region147
        $region146: #{tracing_transformer_block_wrapper.26} parent=142 // pred_region
          _
        $region147: #{tracing_transformer_block_wrapper.26} parent=142 // pred_fallthru
          _
        %s389 = sand.u32 %s82, 1
        %s390 = sand.u32 %s82, 1
        %s391 = smul.addr %s390, 16
        %s392 = scalar_lea.vmem [#allocation6], %s391
        // Predicated region
        $region148: #{tracing_transformer_block_wrapper.26} parent=142 // pred_check
          %p393 = pneg %p95
        $region149: #{tracing_transformer_block_wrapper.26} parent=142 // pred_check_branch
          %395 = sbr.rel (%p393) target = $region151
        $region150: #{tracing_transformer_block_wrapper.26} parent=142 // pred_region
          _
        $region151: #{tracing_transformer_block_wrapper.26} parent=142 // pred_fallthru
          _
        %s396 = sand.u32 %s112, 1
        %s397 = sand.u32 %s112, 1
        %s398 = smul.addr %s397, 16
        %s399 = scalar_lea.vmem [#allocation7], %s398
        // Predicated region
        $region152: #{tracing_transformer_block_wrapper.26} parent=142 // pred_check
          %p400 = pneg %p125
        $region153: #{tracing_transformer_block_wrapper.26} parent=142 // pred_check_branch
          %402 = sbr.rel (%p400) target = $region155
        $region154: #{tracing_transformer_block_wrapper.26} parent=142 // pred_region
          _
        $region155: #{tracing_transformer_block_wrapper.26} parent=142 // pred_fallthru
          _
        %s403 = sand.u32 %s52, 1
        %s404 = sand.u32 %s52, 1
        %s405 = smul.addr %s404, 16
        %s406 = scalar_lea.vmem [#allocation5], %s405
        %p407 = pneg %p65
        %p408 = pneg %p62
        %s409 = sand.u32 %s82, 1
        %s410 = sand.u32 %s82, 1
        %s411 = smul.addr %s410, 16
        %s412 = scalar_lea.vmem [#allocation6], %s411
        %p413 = pneg %p95
        %p414 = pneg %p92
        %s415 = sand.u32 %s112, 1
        %s416 = sand.u32 %s112, 1
        %s417 = smul.addr %s416, 16
        %s418 = scalar_lea.vmem [#allocation7], %s417
        %p419 = pneg %p125
        %p420 = pneg %p122
        %p421 = pneg %p155
        %p422 = pneg %p152
        %s423 = sand.u32 %s142, 1
        %s424 = sand.u32 %s142, 1
        %s425 = smul.addr %s424, 16
        %s426 = scalar_lea.vmem [#allocation8], %s425
        %s427 = smul.u32 4, %s22
        %s428 = smul.u32 4, %s23
        %s429 = smul.u32 4, %s23
        %s430 = smul.u32 4, %s22
        %p432 = scmp.eq.s32.totalorder %s23, 0
        // Predicated region
        $region156: #{tracing_transformer_block_wrapper.26} parent=142 // pred_check
          %p433 = pneg %p432
        $region157: #{tracing_transformer_block_wrapper.26} parent=142 // pred_check_branch
          %435 = sbr.rel (%p433) target = $region159
        $region158: #{tracing_transformer_block_wrapper.26} parent=142 // pred_region
          %vm436 = vcmask 7168
          %437 = vst.msk [vmem:[#allocation2] sm:$0xff] %vm436, -inf
          %438 = vst.msk [vmem:[#allocation2 + $0x8] sm:$0xff] %vm436, -inf
          %439 = vst.msk [vmem:[#allocation2 + $0x10] sm:$0xff] %vm436, -inf
          %440 = vst.msk [vmem:[#allocation2 + $0x18] sm:$0xff] %vm436, -inf
          %441 = vst.msk [vmem:[#allocation3] sm:$0xff] %vm436, 0.0
          %442 = vst.msk [vmem:[#allocation3 + $0x8] sm:$0xff] %vm436, 0.0
          %443 = vst.msk [vmem:[#allocation3 + $0x10] sm:$0xff] %vm436, 0.0
          %444 = vst.msk [vmem:[#allocation3 + $0x18] sm:$0xff] %vm436, 0.0
          %445 = vst [vmem:[#allocation4] sm:$0xff] 0.0
          %446 = vst [vmem:[#allocation4 + $0x8] sm:$0xff] 0.0
          %447 = vst [vmem:[#allocation4 + $0x10] sm:$0xff] 0.0
          %448 = vst [vmem:[#allocation4 + $0x18] sm:$0xff] 0.0
        $region159: #{tracing_transformer_block_wrapper.26} parent=142 // pred_fallthru
          _
        %v449 = vld [vmem:[%s385] sm:$0xf]
        %v450 = vld [vmem:[%s385 + $0x4] sm:$0xf]
        %v451 = vld [vmem:[%s385 + $0x8] sm:$0xf]
        %v452 = vld [vmem:[%s385 + $0xc] sm:$0xf]
        %v453 = vld [vmem:[%s392] sm:$0xf]
        %v454 = vld [vmem:[%s392 + $0x4] sm:$0xf]
        %v455 = vld [vmem:[%s392 + $0x8] sm:$0xf]
        %v456 = vld [vmem:[%s392 + $0xc] sm:$0xf]
        %v461 = vunpack.c.l.b16 %v449
        %v462 = vunpack.c.l.b16 %v450
        %v463 = vunpack.c.l.b16 %v451
        %v464 = vunpack.c.l.b16 %v452
        %v465 = vpack.c.b16 %v462, %v461
        %v466 = vpack.c.b16 %v464, %v463
        %v473 = vunpack.c.l.b16 %v453
        %v474 = vunpack.c.l.b16 %v454
        %v475 = vunpack.c.l.b16 %v455
        %v476 = vunpack.c.l.b16 %v456
        %v477 = vpack.c.b16 %v474, %v473
        %v478 = vpack.c.b16 %v476, %v475
        %481 = vmatpush.bf16.xpose.msra.mxu0 0
        %482 = vmatpush.bf16.xpose.msra.mxu0 0
        %483 = vmatpush.bf16.xpose.msra.mxu0 0
        %484 = vmatpush.bf16.xpose.msra.mxu0 0
        %485 = vmatpush.bf16.xpose.msra.mxu0 0
        %486 = vmatpush.bf16.xpose.msra.mxu0 0
        %487 = vmatpush.bf16.xpose.msra.mxu0 %v478
        %488 = vmatpush.bf16.xpose.msra.mxu0 %v477
        %489 = vmatmul.bf16.gmra.mxu0 %v465
        %v490 = vpop.f32.mrf.mxu0
        %v491 = vadd.f32 0.0, %v490
        %v492 = vpop.f32.mrf.mxu0
        %v493 = vadd.f32 0.0, %v492
        %494 = vmatmul.bf16.gmra.mxu0 %v466
        %v495 = vpop.f32.mrf.mxu0
        %v496 = vadd.f32 0.0, %v495
        %v497 = vpop.f32.mrf.mxu0
        %v498 = vadd.f32 0.0, %v497
        %499 = vdwg.mxu0
        %v500 = vmul.f32 %v491, 0.088388346
        %v501 = vmul.f32 %v493, 0.088388346
        %v502 = vmul.f32 %v496, 0.088388346
        %v503 = vmul.f32 %v498, 0.088388346
        %v504 = vld [vmem:[#allocation2] sm:$0xff]
        %v505 = vld [vmem:[#allocation2 + $0x8] sm:$0xff]
        %v506 = vld [vmem:[#allocation2 + $0x10] sm:$0xff]
        %v507 = vld [vmem:[#allocation2 + $0x18] sm:$0xff]
        %vm508 = vcmask 261120
        %v509 = vsel %vm508, %v500, -inf
        %510 = vmax.xlane.f32.xlu0 %v509
        %v511 = vpop.xlane.xlu0 %510
        %v512 = vsel %vm508, %v501, -inf
        %513 = vmax.xlane.f32.xlu0 %v512
        %v514 = vpop.xlane.xlu0 %513
        %v515 = vsel %vm508, %v502, -inf
        %516 = vmax.xlane.f32.xlu0 %v515
        %v517 = vpop.xlane.xlu0 %516
        %v518 = vsel %vm508, %v503, -inf
        %519 = vmax.xlane.f32.xlu0 %v518
        %v520 = vpop.xlane.xlu0 %519
        %v521 = vmax.f32 %v504, %v511
        %v522 = vmax.f32 %v505, %v514
        %v523 = vmax.f32 %v506, %v517
        %v524 = vmax.f32 %v507, %v520
        %v525 = vsub.f32 %v504, %v521
        %v526 = vsub.f32 %v505, %v522
        %v527 = vsub.f32 %v506, %v523
        %v528 = vsub.f32 %v507, %v524
        %v529 = vmul.f32 %v525, 1.442695
        %v530 = vpow.pop %v529
        %v531 = vmul.f32 %v526, 1.442695
        %v532 = vpow.pop %v531
        %v533 = vmul.f32 %v527, 1.442695
        %v534 = vpow.pop %v533
        %v535 = vmul.f32 %v528, 1.442695
        %v536 = vpow.pop %v535
        %538 = vset.pattern.permute.xlu0 0
        %539 = vperm.xlu0 %538, %v521
        %v540 = vpop.permute.xlu0 %539
        %543 = vset.pattern.permute.xlu0 0
        %544 = vperm.xlu0 %543, %v522
        %v545 = vpop.permute.xlu0 %544
        %548 = vset.pattern.permute.xlu0 0
        %549 = vperm.xlu0 %548, %v523
        %v550 = vpop.permute.xlu0 %549
        %553 = vset.pattern.permute.xlu0 0
        %554 = vperm.xlu0 %553, %v524
        %v555 = vpop.permute.xlu0 %554
        %v557 = vsub.f32 %v500, %v540
        %v558 = vsub.f32 %v501, %v545
        %v559 = vsub.f32 %v502, %v550
        %v560 = vsub.f32 %v503, %v555
        %v561 = vmul.f32 %v557, 1.442695
        %v562 = vpow.pop %v561
        %v563 = vmul.f32 %v558, 1.442695
        %v564 = vpow.pop %v563
        %v565 = vmul.f32 %v559, 1.442695
        %v566 = vpow.pop %v565
        %v567 = vmul.f32 %v560, 1.442695
        %v568 = vpow.pop %v567
        %v569 = vld [vmem:[#allocation3] sm:$0xff]
        %v570 = vld [vmem:[#allocation3 + $0x8] sm:$0xff]
        %v571 = vld [vmem:[#allocation3 + $0x10] sm:$0xff]
        %v572 = vld [vmem:[#allocation3 + $0x18] sm:$0xff]
        %v573 = vmul.f32 %v530, %v569
        %v574 = vmul.f32 %v532, %v570
        %v575 = vmul.f32 %v534, %v571
        %v576 = vmul.f32 %v536, %v572
        %v577 = vsel %vm508, %v562, 0.0
        %578 = vadd.xlane.f32.xlu0 %v577
        %v579 = vpop.xlane.xlu0 %578
        %v580 = vsel %vm508, %v564, 0.0
        %581 = vadd.xlane.f32.xlu0 %v580
        %v582 = vpop.xlane.xlu0 %581
        %v583 = vsel %vm508, %v566, 0.0
        %584 = vadd.xlane.f32.xlu0 %v583
        %v585 = vpop.xlane.xlu0 %584
        %v586 = vsel %vm508, %v568, 0.0
        %587 = vadd.xlane.f32.xlu0 %v586
        %v588 = vpop.xlane.xlu0 %587
        %v589 = vadd.f32 %v573, %v579
        %v590 = vadd.f32 %v574, %v582
        %v591 = vadd.f32 %v575, %v585
        %v592 = vadd.f32 %v576, %v588
        %vm593 = vcmask 7168
        %594 = vst.msk [vmem:[#allocation3] sm:$0xff] %vm593, %v589
        %595 = vst.msk [vmem:[#allocation3 + $0x8] sm:$0xff] %vm593, %v590
        %596 = vst.msk [vmem:[#allocation3 + $0x10] sm:$0xff] %vm593, %v591
        %597 = vst.msk [vmem:[#allocation3 + $0x18] sm:$0xff] %vm593, %v592
        %v598 = vld [vmem:[#allocation4] sm:$0xff]
        %v599 = vld [vmem:[#allocation4 + $0x8] sm:$0xff]
        %v600 = vld [vmem:[#allocation4 + $0x10] sm:$0xff]
        %v601 = vld [vmem:[#allocation4 + $0x18] sm:$0xff]
        %603 = vset.pattern.permute.xlu0 0
        %604 = vperm.xlu0 %603, %v530
        %v605 = vpop.permute.xlu0 %604
        %608 = vset.pattern.permute.xlu0 0
        %609 = vperm.xlu0 %608, %v532
        %v610 = vpop.permute.xlu0 %609
        %613 = vset.pattern.permute.xlu0 0
        %614 = vperm.xlu0 %613, %v534
        %v615 = vpop.permute.xlu0 %614
        %618 = vset.pattern.permute.xlu0 0
        %619 = vperm.xlu0 %618, %v536
        %v620 = vpop.permute.xlu0 %619
        %v622 = vmul.f32 %v605, %v598
        %v623 = vmul.f32 %v610, %v599
        %v624 = vmul.f32 %v615, %v600
        %v625 = vmul.f32 %v620, %v601
        %v626 = vpack.c.bf16 %v564, %v562
        %v627 = vpack.c.bf16 %v568, %v566
        %v628 = vld [vmem:[%s399] sm:$0xf]
        %v629 = vld [vmem:[%s399 + $0x4] sm:$0xf]
        %v630 = vld [vmem:[%s399 + $0x8] sm:$0xf]
        %v631 = vld [vmem:[%s399 + $0xc] sm:$0xf]
        %v636 = vunpack.c.l.b16 %v628
        %v637 = vunpack.c.l.b16 %v629
        %v638 = vunpack.c.l.b16 %v630
        %v639 = vunpack.c.l.b16 %v631
        %v640 = vpack.c.b16 %v637, %v636
        %v641 = vpack.c.b16 %v639, %v638
        %v645 = vsel %vm508, %v626, 0
        %v648 = vsel %vm508, %v627, 0
        %650 = vmatpush.bf16.msra.mxu0 0
        %651 = vmatpush.bf16.msra.mxu0 0
        %652 = vmatpush.bf16.msra.mxu0 0
        %653 = vmatpush.bf16.msra.mxu0 0
        %654 = vmatpush.bf16.msra.mxu0 0
        %655 = vmatpush.bf16.msra.mxu0 0
        %656 = vmatpush.bf16.msra.mxu0 %v641
        %657 = vmatpush.bf16.msra.mxu0 %v640
        %658 = vmatmul.bf16.gmra.mxu0 %v645
        %v659 = vpop.f32.mrf.mxu0
        %v660 = vadd.f32 0.0, %v659
        %v661 = vpop.f32.mrf.mxu0
        %v662 = vadd.f32 0.0, %v661
        %663 = vmatmul.bf16.gmra.mxu0 %v648
        %v664 = vpop.f32.mrf.mxu0
        %v665 = vadd.f32 0.0, %v664
        %v666 = vpop.f32.mrf.mxu0
        %v667 = vadd.f32 0.0, %v666
        %668 = vdwg.mxu0
        %v669 = vadd.f32 %v622, %v660
        %v670 = vadd.f32 %v623, %v662
        %v671 = vadd.f32 %v624, %v665
        %v672 = vadd.f32 %v625, %v667
        %673 = vst [vmem:[#allocation4] sm:$0xff] %v669
        %674 = vst [vmem:[#allocation4 + $0x8] sm:$0xff] %v670
        %675 = vst [vmem:[#allocation4 + $0x10] sm:$0xff] %v671
        %676 = vst [vmem:[#allocation4 + $0x18] sm:$0xff] %v672
        %677 = vst.msk [vmem:[#allocation2] sm:$0xff] %vm593, %v521
        %678 = vst.msk [vmem:[#allocation2 + $0x8] sm:$0xff] %vm593, %v522
        %679 = vst.msk [vmem:[#allocation2 + $0x10] sm:$0xff] %vm593, %v523
        %680 = vst.msk [vmem:[#allocation2 + $0x18] sm:$0xff] %vm593, %v524
        // Predicated region
        $region160: #{tracing_transformer_block_wrapper.26} parent=142 // pred_check
          %p681 = pneg %p432
        $region161: #{tracing_transformer_block_wrapper.26} parent=142 // pred_check_branch
          %683 = sbr.rel (%p681) target = $region163
        $region162: #{tracing_transformer_block_wrapper.26} parent=142 // pred_region
          %v684 = vld [vmem:[#allocation4] sm:$0xff]
          %v685 = vld [vmem:[#allocation4 + $0x8] sm:$0xff]
          %v686 = vld [vmem:[#allocation4 + $0x10] sm:$0xff]
          %v687 = vld [vmem:[#allocation4 + $0x18] sm:$0xff]
          %v688 = vld [vmem:[#allocation3] sm:$0xff]
          %v689 = vld [vmem:[#allocation3 + $0x8] sm:$0xff]
          %v690 = vld [vmem:[#allocation3 + $0x10] sm:$0xff]
          %v691 = vld [vmem:[#allocation3 + $0x18] sm:$0xff]
          %v692 = vrcp.pop %v688
          %v693 = vrcp.pop %v689
          %v694 = vrcp.pop %v690
          %v695 = vrcp.pop %v691
          %697 = vset.pattern.permute.xlu0 0
          %698 = vperm.xlu0 %697, %v692
          %v699 = vpop.permute.xlu0 %698
          %702 = vset.pattern.permute.xlu0 0
          %703 = vperm.xlu0 %702, %v693
          %v704 = vpop.permute.xlu0 %703
          %707 = vset.pattern.permute.xlu0 0
          %708 = vperm.xlu0 %707, %v694
          %v709 = vpop.permute.xlu0 %708
          %712 = vset.pattern.permute.xlu0 0
          %713 = vperm.xlu0 %712, %v695
          %v714 = vpop.permute.xlu0 %713
          %v716 = vmul.f32 %v684, %v699
          %v717 = vmul.f32 %v685, %v704
          %v718 = vmul.f32 %v686, %v709
          %v719 = vmul.f32 %v687, %v714
          %v720 = vpack.c.bf16 %v716, %v716
          %v721 = vpack.c.bf16 %v717, %v717
          %v722 = vpack.c.bf16 %v718, %v718
          %v723 = vpack.c.bf16 %v719, %v719
          %724 = vst [vmem:[%s426] sm:$0xf] %v720
          %725 = vst [vmem:[%s426 + $0x4] sm:$0xf] %v721
          %726 = vst [vmem:[%s426 + $0x8] sm:$0xf] %v722
          %727 = vst [vmem:[%s426 + $0xc] sm:$0xf] %v723
        $region163: #{tracing_transformer_block_wrapper.26} parent=142 // pred_fallthru
          _
        %s728 = sand.u32 %s142, 1
        %s729 = sand.u32 %s142, 1
        %s730 = smul.addr %s729, 16
        %s731 = scalar_lea.vmem [#allocation8], %s730
        // Predicated region
        $region164: #{tracing_transformer_block_wrapper.26} parent=142 // pred_check
          %p732 = pneg %p152
        $region165: #{tracing_transformer_block_wrapper.26} parent=142 // pred_check_branch
          %734 = sbr.rel (%p732) target = $region167
        $region166: #{tracing_transformer_block_wrapper.26} parent=142 // pred_region
          %s735 = smul.u32 4, %s22
          %s736 = smul.addr %s735, 2
          %s737 = sadd.s32 %s21, %s736
          %s738 = smul.addr %s20, 8
          %s739 = sadd.s32 %s737, %s738
          %s740 = smul.addr %s739, 4
          %s741 = scalar_lea.vmem %s3, %s740
          // Predicated region
          $region168: #{tracing_transformer_block_wrapper.26} parent=166 // pred_check
            _
          $region169: #{tracing_transformer_block_wrapper.26} parent=166 // pred_check_branch
            %743 = sbr.rel (0) target = $region171
          $region170: #{tracing_transformer_block_wrapper.26} parent=166 // pred_region
            // Predicated region
            $region172: #{tracing_transformer_block_wrapper.26} parent=170 // pred_check
              _
            $region173: #{tracing_transformer_block_wrapper.26} parent=170 // pred_check_branch
              %745 = sbr.rel target = $region175
            $region174: #{tracing_transformer_block_wrapper.26} parent=170 // pred_region
              // Predicated region
              $region187: #{tracing_transformer_block_wrapper.26} parent=174 // pred_check
                _
              $region188: #{tracing_transformer_block_wrapper.26} parent=174 // pred_check_branch
                %767 = sbr.rel (0) target = $region190
              $region189: #{tracing_transformer_block_wrapper.26} parent=174 // pred_region
                loop: start=0, step=1, limit=1
                $region191: #{tracing_transformer_block_wrapper.26} parent=189 // loop_pre_header
                  _
                $region192: #{tracing_transformer_block_wrapper.26} parent=189 // loop_header
                  %s769 = sphi 0, %s773
                  %p770 = scmp.ge.s32.totalorder %s769, 1
                  %s774 = sphi %s731, %s731
                  %s775 = sphi %s741, %s741
                $region193: #{tracing_transformer_block_wrapper.26} parent=189 // loop_header_branch
                  %772 = sbr.rel (%p770) target = $region197
                $region194: #{tracing_transformer_block_wrapper.26} parent=189 // loop_body
                  _
                $region195: #{tracing_transformer_block_wrapper.26} parent=189 // loop_footer
                  %s773 = sadd.s32 1, %s769
                $region196: #{tracing_transformer_block_wrapper.26} parent=189 // loop_footer_branch
                  %768 = sbr.rel target = $region192
                $region197: #{tracing_transformer_block_wrapper.26} parent=189 // loop_exit
                  _
                %s777 = ssub.s32 16, 1
                loop: start=0, step=1, limit=1
                $region198: #{tracing_transformer_block_wrapper.26} parent=189 // loop_pre_header
                  _
                $region199: #{tracing_transformer_block_wrapper.26} parent=189 // loop_header
                  %s779 = sphi 0, %s783
                  %p780 = scmp.ge.s32.totalorder %s779, 1
                  %s784 = sphi %s731, %s731
                  %s785 = sphi %s741, %s741
                $region200: #{tracing_transformer_block_wrapper.26} parent=189 // loop_header_branch
                  %782 = sbr.rel (%p780) target = $region204
                $region201: #{tracing_transformer_block_wrapper.26} parent=189 // loop_body
                  %v786 = vld [vmem:[%s784] sm:%s777]
                  %787 = vst [vmem:[%s785] sm:%s777] %v786
                  %v788 = vld [vmem:[%s784 + $0x4] sm:%s777]
                  %789 = vst [vmem:[%s785 + $0x8] sm:%s777] %v788
                  %v790 = vld [vmem:[%s784 + $0x8] sm:%s777]
                  %791 = vst [vmem:[%s785 + $0x10] sm:%s777] %v790
                  %v792 = vld [vmem:[%s784 + $0xc] sm:%s777]
                  %793 = vst [vmem:[%s785 + $0x18] sm:%s777] %v792
                $region202: #{tracing_transformer_block_wrapper.26} parent=189 // loop_footer
                  %s783 = sadd.s32 1, %s779
                $region203: #{tracing_transformer_block_wrapper.26} parent=189 // loop_footer_branch
                  %778 = sbr.rel target = $region199
                $region204: #{tracing_transformer_block_wrapper.26} parent=189 // loop_exit
                  _
              $region190: #{tracing_transformer_block_wrapper.26} parent=174 // pred_fallthru
                _
            $region175: #{tracing_transformer_block_wrapper.26} parent=170 // pred_fallthru
              _
            // Predicated region
            $region176: #{tracing_transformer_block_wrapper.26} parent=170 // pred_check
              _
            $region177: #{tracing_transformer_block_wrapper.26} parent=170 // pred_check_branch
              %747 = sbr.rel (0) target = $region179
            $region178: #{tracing_transformer_block_wrapper.26} parent=170 // pred_region
              %s749 = ssub.s32 16, 1
              loop: start=0, step=1, limit=1
              $region180: #{tracing_transformer_block_wrapper.26} parent=178 // loop_pre_header
                _
              $region181: #{tracing_transformer_block_wrapper.26} parent=178 // loop_header
                %s751 = sphi 0, %s755
                %p752 = scmp.ge.s32.totalorder %s751, 1
                %s756 = sphi %s731, %s731
                %s757 = sphi %s741, %s741
              $region182: #{tracing_transformer_block_wrapper.26} parent=178 // loop_header_branch
                %754 = sbr.rel (%p752) target = $region186
              $region183: #{tracing_transformer_block_wrapper.26} parent=178 // loop_body
                %v758 = vld [vmem:[%s756] sm:%s749]
                %759 = vst [vmem:[%s757] sm:%s749] %v758
                %v760 = vld [vmem:[%s756 + $0x4] sm:%s749]
                %761 = vst [vmem:[%s757 + $0x8] sm:%s749] %v760
                %v762 = vld [vmem:[%s756 + $0x8] sm:%s749]
                %763 = vst [vmem:[%s757 + $0x10] sm:%s749] %v762
                %v764 = vld [vmem:[%s756 + $0xc] sm:%s749]
                %765 = vst [vmem:[%s757 + $0x18] sm:%s749] %v764
              $region184: #{tracing_transformer_block_wrapper.26} parent=178 // loop_footer
                %s755 = sadd.s32 1, %s751
              $region185: #{tracing_transformer_block_wrapper.26} parent=178 // loop_footer_branch
                %750 = sbr.rel target = $region181
              $region186: #{tracing_transformer_block_wrapper.26} parent=178 // loop_exit
                _
            $region179: #{tracing_transformer_block_wrapper.26} parent=170 // pred_fallthru
              _
          $region171: #{tracing_transformer_block_wrapper.26} parent=166 // pred_fallthru
            _
          %794 = vnop
        $region167: #{tracing_transformer_block_wrapper.26} parent=142 // pred_fallthru
          _
      $region143: #{tracing_transformer_block_wrapper.26} parent=5 // pred_fallthru
        _
      %p795 = scmp.le.s32.totalorder 2, %s9
      // Predicated region
      $region205: #{tracing_transformer_block_wrapper.26} parent=5 // pred_check
        %p796 = pneg %p795
      $region206: #{tracing_transformer_block_wrapper.26} parent=5 // pred_check_branch
        %798 = sbr.rel (%p796) target = $region208
      $region207: #{tracing_transformer_block_wrapper.26} parent=5 // pred_region
        %s799 = ssub.s32 %s9, 2
        // Predicated region
        $region209: #{tracing_transformer_block_wrapper.26} parent=207 // pred_check
          %p800 = pneg %p158
        $region210: #{tracing_transformer_block_wrapper.26} parent=207 // pred_check_branch
          %802 = sbr.rel (%p800) target = $region212
        $region211: #{tracing_transformer_block_wrapper.26} parent=207 // pred_region
          %s803 = sand.u32 %s143, 1
          %s804 = sand.u32 %s143, 1
          %s805 = smul.addr %s804, 16
          %s806 = scalar_lea.vmem [#allocation8], %s805
        $region212: #{tracing_transformer_block_wrapper.26} parent=207 // pred_fallthru
          _
      $region208: #{tracing_transformer_block_wrapper.26} parent=5 // pred_fallthru
        _
    $region6: #{tracing_transformer_block_wrapper.26} parent=1 // loop_footer
      %s13 = sadd.s32 1, %s9
    $region7: #{tracing_transformer_block_wrapper.26} parent=1 // loop_footer_branch
      %8 = sbr.rel target = $region3
    $region8: #{tracing_transformer_block_wrapper.26} parent=1 // loop_exit
      _

// kernel: tracing_transformer_block_wrapper.27
$region0: #{tracing_transformer_block_wrapper.27}
  #allocation0 [shape = 'u32[]', space=smem, size = 0x4, offset = 0x4, fixed_abs, tag = 'smem constant byte address 0x4 - core index']
  #allocation1 [shape = 'u32[72,128]{1,0:T(1,128)}', space=vmem, size = 0x9000, scoped, tag = 'internal scratch']
  #allocation2 [shape = 'f32[48,256]{1,0:T(8,128)}', space=vmem, size = 0xc000, scoped, tag = 'scratch operand']
  %s0 = inlined_call_operand.vmem [shape: bf16[48,256], index: 0, kind: input, shape index: {}]
  %s1 = inlined_call_operand.vmem [shape: bf16[256,256], index: 1, kind: input, shape index: {}]
  %s2 = inlined_call_operand.vmem [shape: bf16[1,256], index: 2, kind: input, shape index: {}]
  %s3 = inlined_call_operand.vmem [shape: bf16[48,256], index: 3, kind: output, shape index: {}]
  %s4 = sld [smem:[#allocation0]]
  $region30: #{tracing_transformer_block_wrapper.27} parent=0
    _
  %s6 = ssub.s32 1, %s4
  %s7 = scalar_select 0, %s6, %s4
  // Predicated region
  $region2: #{tracing_transformer_block_wrapper.27} parent=0 // pred_check
    _
  $region3: #{tracing_transformer_block_wrapper.27} parent=0 // pred_check_branch
    %9 = sbr.rel (0) target = $region5
  $region4: #{tracing_transformer_block_wrapper.27} parent=0 // pred_region
    _
  $region5: #{tracing_transformer_block_wrapper.27} parent=0 // pred_fallthru
    _
  // Predicated region
  $region6: #{tracing_transformer_block_wrapper.27} parent=0 // pred_check
    _
  $region7: #{tracing_transformer_block_wrapper.27} parent=0 // pred_check_branch
    %11 = sbr.rel (0) target = $region9
  $region8: #{tracing_transformer_block_wrapper.27} parent=0 // pred_region
    _
  $region9: #{tracing_transformer_block_wrapper.27} parent=0 // pred_fallthru
    _
  // Predicated region
  $region10: #{tracing_transformer_block_wrapper.27} parent=0 // pred_check
    _
  $region11: #{tracing_transformer_block_wrapper.27} parent=0 // pred_check_branch
    %13 = sbr.rel (0) target = $region13
  $region12: #{tracing_transformer_block_wrapper.27} parent=0 // pred_region
    _
  $region13: #{tracing_transformer_block_wrapper.27} parent=0 // pred_fallthru
    _
  %p14 = scmp.eq.s32.totalorder 0, 0
  // Predicated region
  $region14: #{tracing_transformer_block_wrapper.27} parent=0 // pred_check
    %p15 = pneg %p14
  $region15: #{tracing_transformer_block_wrapper.27} parent=0 // pred_check_branch
    %17 = sbr.rel (%p15) target = $region17
  $region16: #{tracing_transformer_block_wrapper.27} parent=0 // pred_region
    %18 = vst [vmem:[#allocation2] sm:$0xff] 0.0
    %19 = vst [vmem:[#allocation2 + $0x8] sm:$0xff] 0.0
    %20 = vst [vmem:[#allocation2 + $0x10] sm:$0xff] 0.0
    %21 = vst [vmem:[#allocation2 + $0x18] sm:$0xff] 0.0
    %22 = vst [vmem:[#allocation2 + $0x20] sm:$0xff] 0.0
    %23 = vst [vmem:[#allocation2 + $0x28] sm:$0xff] 0.0
    %24 = vst [vmem:[#allocation2 + $0x30] sm:$0xff] 0.0
    %25 = vst [vmem:[#allocation2 + $0x38] sm:$0xff] 0.0
    %26 = vst [vmem:[#allocation2 + $0x40] sm:$0xff] 0.0
    %27 = vst [vmem:[#allocation2 + $0x48] sm:$0xff] 0.0
    %28 = vst [vmem:[#allocation2 + $0x50] sm:$0xff] 0.0
    %29 = vst [vmem:[#allocation2 + $0x58] sm:$0xff] 0.0
  $region17: #{tracing_transformer_block_wrapper.27} parent=0 // pred_fallthru
    _
  %v30 = vld [vmem:[#allocation2] sm:$0xff]
  %v31 = vld [vmem:[#allocation2 + $0x8] sm:$0xff]
  %v32 = vld [vmem:[#allocation2 + $0x10] sm:$0xff]
  %v33 = vld [vmem:[#allocation2 + $0x18] sm:$0xff]
  %v34 = vld [vmem:[#allocation2 + $0x20] sm:$0xff]
  %v35 = vld [vmem:[#allocation2 + $0x28] sm:$0xff]
  %v36 = vld [vmem:[#allocation2 + $0x30] sm:$0xff]
  %v37 = vld [vmem:[#allocation2 + $0x38] sm:$0xff]
  %v38 = vld [vmem:[#allocation2 + $0x40] sm:$0xff]
  %v39 = vld [vmem:[#allocation2 + $0x48] sm:$0xff]
  %v40 = vld [vmem:[#allocation2 + $0x50] sm:$0xff]
  %v41 = vld [vmem:[#allocation2 + $0x58] sm:$0xff]
  %v42 = vld [vmem:[%s0] sm:$0xff]
  %v43 = vld [vmem:[%s0 + $0x8] sm:$0xff]
  %v44 = vld [vmem:[%s0 + $0x10] sm:$0xff]
  %v45 = vld [vmem:[%s0 + $0x18] sm:$0xff]
  %v46 = vld [vmem:[%s0 + $0x20] sm:$0xff]
  %v47 = vld [vmem:[%s0 + $0x28] sm:$0xff]
  %v48 = vld [vmem:[%s1] sm:$0xff]
  %v49 = vld [vmem:[%s1 + $0x8] sm:$0xff]
  %v50 = vld [vmem:[%s1 + $0x10] sm:$0xff]
  %v51 = vld [vmem:[%s1 + $0x18] sm:$0xff]
  %v52 = vld [vmem:[%s1 + $0x20] sm:$0xff]
  %v53 = vld [vmem:[%s1 + $0x28] sm:$0xff]
  %v54 = vld [vmem:[%s1 + $0x30] sm:$0xff]
  %v55 = vld [vmem:[%s1 + $0x38] sm:$0xff]
  %v56 = vld [vmem:[%s1 + $0x40] sm:$0xff]
  %v57 = vld [vmem:[%s1 + $0x48] sm:$0xff]
  %v58 = vld [vmem:[%s1 + $0x50] sm:$0xff]
  %v59 = vld [vmem:[%s1 + $0x58] sm:$0xff]
  %v60 = vld [vmem:[%s1 + $0x60] sm:$0xff]
  %v61 = vld [vmem:[%s1 + $0x68] sm:$0xff]
  %v62 = vld [vmem:[%s1 + $0x70] sm:$0xff]
  %v63 = vld [vmem:[%s1 + $0x78] sm:$0xff]
  %v64 = vld [vmem:[%s1 + $0x80] sm:$0xff]
  %v65 = vld [vmem:[%s1 + $0x88] sm:$0xff]
  %v66 = vld [vmem:[%s1 + $0x90] sm:$0xff]
  %v67 = vld [vmem:[%s1 + $0x98] sm:$0xff]
  %v68 = vld [vmem:[%s1 + $0xa0] sm:$0xff]
  %v69 = vld [vmem:[%s1 + $0xa8] sm:$0xff]
  %v70 = vld [vmem:[%s1 + $0xb0] sm:$0xff]
  %v71 = vld [vmem:[%s1 + $0xb8] sm:$0xff]
  %v72 = vld [vmem:[%s1 + $0xc0] sm:$0xff]
  %v73 = vld [vmem:[%s1 + $0xc8] sm:$0xff]
  %v74 = vld [vmem:[%s1 + $0xd0] sm:$0xff]
  %v75 = vld [vmem:[%s1 + $0xd8] sm:$0xff]
  %v76 = vld [vmem:[%s1 + $0xe0] sm:$0xff]
  %v77 = vld [vmem:[%s1 + $0xe8] sm:$0xff]
  %v78 = vld [vmem:[%s1 + $0xf0] sm:$0xff]
  %v79 = vld [vmem:[%s1 + $0xf8] sm:$0xff]
  %v86 = vunpack.c.l.b16 %v42
  %v87 = vunpack.c.h.b16 %v42
  %v88 = vunpack.c.l.b16 %v43
  %v89 = vunpack.c.h.b16 %v43
  %v90 = vunpack.c.l.b16 %v44
  %v91 = vunpack.c.h.b16 %v44
  %v92 = vunpack.c.l.b16 %v45
  %v93 = vunpack.c.h.b16 %v45
  %v94 = vunpack.c.l.b16 %v46
  %v95 = vunpack.c.h.b16 %v46
  %v96 = vunpack.c.l.b16 %v47
  %v97 = vunpack.c.h.b16 %v47
  %v98 = vpack.c.b16 %v88, %v86
  %v99 = vpack.c.b16 %v89, %v87
  %v100 = vpack.c.b16 %v92, %v90
  %v101 = vpack.c.b16 %v93, %v91
  %v102 = vpack.c.b16 %v96, %v94
  %v103 = vpack.c.b16 %v97, %v95
  %v142 = vunpack.c.l.b16 %v48
  %v143 = vunpack.c.h.b16 %v48
  %v144 = vunpack.c.l.b16 %v49
  %v145 = vunpack.c.h.b16 %v49
  %v146 = vunpack.c.l.b16 %v50
  %v147 = vunpack.c.h.b16 %v50
  %v148 = vunpack.c.l.b16 %v51
  %v149 = vunpack.c.h.b16 %v51
  %v150 = vunpack.c.l.b16 %v52
  %v151 = vunpack.c.h.b16 %v52
  %v152 = vunpack.c.l.b16 %v53
  %v153 = vunpack.c.h.b16 %v53
  %v154 = vunpack.c.l.b16 %v54
  %v155 = vunpack.c.h.b16 %v54
  %v156 = vunpack.c.l.b16 %v55
  %v157 = vunpack.c.h.b16 %v55
  %v158 = vunpack.c.l.b16 %v56
  %v159 = vunpack.c.h.b16 %v56
  %v160 = vunpack.c.l.b16 %v57
  %v161 = vunpack.c.h.b16 %v57
  %v162 = vunpack.c.l.b16 %v58
  %v163 = vunpack.c.h.b16 %v58
  %v164 = vunpack.c.l.b16 %v59
  %v165 = vunpack.c.h.b16 %v59
  %v166 = vunpack.c.l.b16 %v60
  %v167 = vunpack.c.h.b16 %v60
  %v168 = vunpack.c.l.b16 %v61
  %v169 = vunpack.c.h.b16 %v61
  %v170 = vunpack.c.l.b16 %v62
  %v171 = vunpack.c.h.b16 %v62
  %v172 = vunpack.c.l.b16 %v63
  %v173 = vunpack.c.h.b16 %v63
  %v174 = vunpack.c.l.b16 %v64
  %v175 = vunpack.c.h.b16 %v64
  %v176 = vunpack.c.l.b16 %v65
  %v177 = vunpack.c.h.b16 %v65
  %v178 = vunpack.c.l.b16 %v66
  %v179 = vunpack.c.h.b16 %v66
  %v180 = vunpack.c.l.b16 %v67
  %v181 = vunpack.c.h.b16 %v67
  %v182 = vunpack.c.l.b16 %v68
  %v183 = vunpack.c.h.b16 %v68
  %v184 = vunpack.c.l.b16 %v69
  %v185 = vunpack.c.h.b16 %v69
  %v186 = vunpack.c.l.b16 %v70
  %v187 = vunpack.c.h.b16 %v70
  %v188 = vunpack.c.l.b16 %v71
  %v189 = vunpack.c.h.b16 %v71
  %v190 = vunpack.c.l.b16 %v72
  %v191 = vunpack.c.h.b16 %v72
  %v192 = vunpack.c.l.b16 %v73
  %v193 = vunpack.c.h.b16 %v73
  %v194 = vunpack.c.l.b16 %v74
  %v195 = vunpack.c.h.b16 %v74
  %v196 = vunpack.c.l.b16 %v75
  %v197 = vunpack.c.h.b16 %v75
  %v198 = vunpack.c.l.b16 %v76
  %v199 = vunpack.c.h.b16 %v76
  %v200 = vunpack.c.l.b16 %v77
  %v201 = vunpack.c.h.b16 %v77
  %v202 = vunpack.c.l.b16 %v78
  %v203 = vunpack.c.h.b16 %v78
  %v204 = vunpack.c.l.b16 %v79
  %v205 = vunpack.c.h.b16 %v79
  %v206 = vpack.c.b16 %v144, %v142
  %v207 = vpack.c.b16 %v145, %v143
  %v208 = vpack.c.b16 %v148, %v146
  %v209 = vpack.c.b16 %v149, %v147
  %v210 = vpack.c.b16 %v152, %v150
  %v211 = vpack.c.b16 %v153, %v151
  %v212 = vpack.c.b16 %v156, %v154
  %v213 = vpack.c.b16 %v157, %v155
  %v214 = vpack.c.b16 %v160, %v158
  %v215 = vpack.c.b16 %v161, %v159
  %v216 = vpack.c.b16 %v164, %v162
  %v217 = vpack.c.b16 %v165, %v163
  %v218 = vpack.c.b16 %v168, %v166
  %v219 = vpack.c.b16 %v169, %v167
  %v220 = vpack.c.b16 %v172, %v170
  %v221 = vpack.c.b16 %v173, %v171
  %v222 = vpack.c.b16 %v176, %v174
  %v223 = vpack.c.b16 %v177, %v175
  %v224 = vpack.c.b16 %v180, %v178
  %v225 = vpack.c.b16 %v181, %v179
  %v226 = vpack.c.b16 %v184, %v182
  %v227 = vpack.c.b16 %v185, %v183
  %v228 = vpack.c.b16 %v188, %v186
  %v229 = vpack.c.b16 %v189, %v187
  %v230 = vpack.c.b16 %v192, %v190
  %v231 = vpack.c.b16 %v193, %v191
  %v232 = vpack.c.b16 %v196, %v194
  %v233 = vpack.c.b16 %v197, %v195
  %v234 = vpack.c.b16 %v200, %v198
  %v235 = vpack.c.b16 %v201, %v199
  %v236 = vpack.c.b16 %v204, %v202
  %v237 = vpack.c.b16 %v205, %v203
  %270 = vmatpush.bf16.msra.mxu0 %v220
  %271 = vmatpush.bf16.msra.mxu0 %v218
  %272 = vmatpush.bf16.msra.mxu0 %v216
  %273 = vmatpush.bf16.msra.mxu0 %v214
  %274 = vmatpush.bf16.msra.mxu0 %v212
  %275 = vmatpush.bf16.msra.mxu0 %v210
  %276 = vmatpush.bf16.msra.mxu0 %v208
  %277 = vmatpush.bf16.msra.mxu0 %v206
  %278 = vmatmul.bf16.gmra.mxu0 %v98
  %v279 = vpop.f32.mrf.mxu0
  %v280 = vadd.f32 0.0, %v279
  %v281 = vpop.f32.mrf.mxu0
  %v282 = vadd.f32 0.0, %v281
  %283 = vmatmul.bf16.gmra.mxu0 %v100
  %v284 = vpop.f32.mrf.mxu0
  %v285 = vadd.f32 0.0, %v284
  %v286 = vpop.f32.mrf.mxu0
  %v287 = vadd.f32 0.0, %v286
  %288 = vmatmul.bf16.gmra.mxu0 %v102
  %v289 = vpop.f32.mrf.mxu0
  %v290 = vadd.f32 0.0, %v289
  %v291 = vpop.f32.mrf.mxu0
  %v292 = vadd.f32 0.0, %v291
  %293 = vdwg.mxu0
  %294 = vmatpush.bf16.msra.mxu0 %v236
  %295 = vmatpush.bf16.msra.mxu0 %v234
  %296 = vmatpush.bf16.msra.mxu0 %v232
  %297 = vmatpush.bf16.msra.mxu0 %v230
  %298 = vmatpush.bf16.msra.mxu0 %v228
  %299 = vmatpush.bf16.msra.mxu0 %v226
  %300 = vmatpush.bf16.msra.mxu0 %v224
  %301 = vmatpush.bf16.msra.mxu0 %v222
  %302 = vmatmul.bf16.gmra.mxu0 %v99
  %v303 = vpop.f32.mrf.mxu0
  %v304 = vadd.f32 %v280, %v303
  %v305 = vpop.f32.mrf.mxu0
  %v306 = vadd.f32 %v282, %v305
  %307 = vmatmul.bf16.gmra.mxu0 %v101
  %v308 = vpop.f32.mrf.mxu0
  %v309 = vadd.f32 %v285, %v308
  %v310 = vpop.f32.mrf.mxu0
  %v311 = vadd.f32 %v287, %v310
  %312 = vmatmul.bf16.gmra.mxu0 %v103
  %v313 = vpop.f32.mrf.mxu0
  %v314 = vadd.f32 %v290, %v313
  %v315 = vpop.f32.mrf.mxu0
  %v316 = vadd.f32 %v292, %v315
  %317 = vdwg.mxu0
  %318 = vmatpush.bf16.msra.mxu0 %v221
  %319 = vmatpush.bf16.msra.mxu0 %v219
  %320 = vmatpush.bf16.msra.mxu0 %v217
  %321 = vmatpush.bf16.msra.mxu0 %v215
  %322 = vmatpush.bf16.msra.mxu0 %v213
  %323 = vmatpush.bf16.msra.mxu0 %v211
  %324 = vmatpush.bf16.msra.mxu0 %v209
  %325 = vmatpush.bf16.msra.mxu0 %v207
  %326 = vmatmul.bf16.gmra.mxu0 %v98
  %v327 = vpop.f32.mrf.mxu0
  %v328 = vadd.f32 0.0, %v327
  %v329 = vpop.f32.mrf.mxu0
  %v330 = vadd.f32 0.0, %v329
  %331 = vmatmul.bf16.gmra.mxu0 %v100
  %v332 = vpop.f32.mrf.mxu0
  %v333 = vadd.f32 0.0, %v332
  %v334 = vpop.f32.mrf.mxu0
  %v335 = vadd.f32 0.0, %v334
  %336 = vmatmul.bf16.gmra.mxu0 %v102
  %v337 = vpop.f32.mrf.mxu0
  %v338 = vadd.f32 0.0, %v337
  %v339 = vpop.f32.mrf.mxu0
  %v340 = vadd.f32 0.0, %v339
  %341 = vdwg.mxu0
  %342 = vmatpush.bf16.msra.mxu0 %v237
  %343 = vmatpush.bf16.msra.mxu0 %v235
  %344 = vmatpush.bf16.msra.mxu0 %v233
  %345 = vmatpush.bf16.msra.mxu0 %v231
  %346 = vmatpush.bf16.msra.mxu0 %v229
  %347 = vmatpush.bf16.msra.mxu0 %v227
  %348 = vmatpush.bf16.msra.mxu0 %v225
  %349 = vmatpush.bf16.msra.mxu0 %v223
  %350 = vmatmul.bf16.gmra.mxu0 %v99
  %v351 = vpop.f32.mrf.mxu0
  %v352 = vadd.f32 %v328, %v351
  %v353 = vpop.f32.mrf.mxu0
  %v354 = vadd.f32 %v330, %v353
  %355 = vmatmul.bf16.gmra.mxu0 %v101
  %v356 = vpop.f32.mrf.mxu0
  %v357 = vadd.f32 %v333, %v356
  %v358 = vpop.f32.mrf.mxu0
  %v359 = vadd.f32 %v335, %v358
  %360 = vmatmul.bf16.gmra.mxu0 %v103
  %v361 = vpop.f32.mrf.mxu0
  %v362 = vadd.f32 %v338, %v361
  %v363 = vpop.f32.mrf.mxu0
  %v364 = vadd.f32 %v340, %v363
  %365 = vdwg.mxu0
  %v366 = vadd.f32 %v30, %v304
  %v367 = vadd.f32 %v31, %v352
  %v368 = vadd.f32 %v32, %v306
  %v369 = vadd.f32 %v33, %v354
  %v370 = vadd.f32 %v34, %v309
  %v371 = vadd.f32 %v35, %v357
  %v372 = vadd.f32 %v36, %v311
  %v373 = vadd.f32 %v37, %v359
  %v374 = vadd.f32 %v38, %v314
  %v375 = vadd.f32 %v39, %v362
  %v376 = vadd.f32 %v40, %v316
  %v377 = vadd.f32 %v41, %v364
  %378 = vst [vmem:[#allocation2] sm:$0xff] %v366
  %379 = vst [vmem:[#allocation2 + $0x8] sm:$0xff] %v367
  %380 = vst [vmem:[#allocation2 + $0x10] sm:$0xff] %v368
  %381 = vst [vmem:[#allocation2 + $0x18] sm:$0xff] %v369
  %382 = vst [vmem:[#allocation2 + $0x20] sm:$0xff] %v370
  %383 = vst [vmem:[#allocation2 + $0x28] sm:$0xff] %v371
  %384 = vst [vmem:[#allocation2 + $0x30] sm:$0xff] %v372
  %385 = vst [vmem:[#allocation2 + $0x38] sm:$0xff] %v373
  %386 = vst [vmem:[#allocation2 + $0x40] sm:$0xff] %v374
  %387 = vst [vmem:[#allocation2 + $0x48] sm:$0xff] %v375
  %388 = vst [vmem:[#allocation2 + $0x50] sm:$0xff] %v376
  %389 = vst [vmem:[#allocation2 + $0x58] sm:$0xff] %v377
  // Predicated region
  $region18: #{tracing_transformer_block_wrapper.27} parent=0 // pred_check
    %p390 = pneg %p14
  $region19: #{tracing_transformer_block_wrapper.27} parent=0 // pred_check_branch
    %392 = sbr.rel (%p390) target = $region21
  $region20: #{tracing_transformer_block_wrapper.27} parent=0 // pred_region
    %v393 = vld [vmem:[#allocation2] sm:$0xff]
    %v394 = vld [vmem:[#allocation2 + $0x8] sm:$0xff]
    %v395 = vld [vmem:[#allocation2 + $0x10] sm:$0xff]
    %v396 = vld [vmem:[#allocation2 + $0x18] sm:$0xff]
    %v397 = vld [vmem:[#allocation2 + $0x20] sm:$0xff]
    %v398 = vld [vmem:[#allocation2 + $0x28] sm:$0xff]
    %v399 = vld [vmem:[#allocation2 + $0x30] sm:$0xff]
    %v400 = vld [vmem:[#allocation2 + $0x38] sm:$0xff]
    %v401 = vld [vmem:[#allocation2 + $0x40] sm:$0xff]
    %v402 = vld [vmem:[#allocation2 + $0x48] sm:$0xff]
    %v403 = vld [vmem:[#allocation2 + $0x50] sm:$0xff]
    %v404 = vld [vmem:[#allocation2 + $0x58] sm:$0xff]
    %v405 = vld [vmem:[%s2] sm:$0x3]
    %v406 = vunpack.c.l.bf16 %v405
    %v408 = vperm.slane %v406, 0
    %v409 = vperm.slane %v406, 2
    %v412 = vperm.slane %v408, 0
    %v413 = vperm.slane %v409, 0
    %v414 = vadd.f32 %v393, %v412
    %v415 = vadd.f32 %v394, %v413
    %v416 = vadd.f32 %v395, %v412
    %v417 = vadd.f32 %v396, %v413
    %v418 = vadd.f32 %v397, %v412
    %v419 = vadd.f32 %v398, %v413
    %v420 = vadd.f32 %v399, %v412
    %v421 = vadd.f32 %v400, %v413
    %v422 = vadd.f32 %v401, %v412
    %v423 = vadd.f32 %v402, %v413
    %v424 = vadd.f32 %v403, %v412
    %v425 = vadd.f32 %v404, %v413
    %v426 = vpack.c.bf16 %v415, %v414
    %v427 = vpack.c.bf16 %v417, %v416
    %v428 = vpack.c.bf16 %v419, %v418
    %v429 = vpack.c.bf16 %v421, %v420
    %v430 = vpack.c.bf16 %v423, %v422
    %v431 = vpack.c.bf16 %v425, %v424
    %432 = vst [vmem:[%s3] sm:$0xff] %v426
    %433 = vst [vmem:[%s3 + $0x8] sm:$0xff] %v427
    %434 = vst [vmem:[%s3 + $0x10] sm:$0xff] %v428
    %435 = vst [vmem:[%s3 + $0x18] sm:$0xff] %v429
    %436 = vst [vmem:[%s3 + $0x20] sm:$0xff] %v430
    %437 = vst [vmem:[%s3 + $0x28] sm:$0xff] %v431
  $region21: #{tracing_transformer_block_wrapper.27} parent=0 // pred_fallthru
    _
  // Predicated region
  $region22: #{tracing_transformer_block_wrapper.27} parent=0 // pred_check
    _
  $region23: #{tracing_transformer_block_wrapper.27} parent=0 // pred_check_branch
    %439 = sbr.rel (0) target = $region25
  $region24: #{tracing_transformer_block_wrapper.27} parent=0 // pred_region
    _
  $region25: #{tracing_transformer_block_wrapper.27} parent=0 // pred_fallthru
    _
  // Predicated region
  $region26: #{tracing_transformer_block_wrapper.27} parent=0 // pred_check
    _
  $region27: #{tracing_transformer_block_wrapper.27} parent=0 // pred_check_branch
    %441 = sbr.rel (0) target = $region29
  $region28: #{tracing_transformer_block_wrapper.27} parent=0 // pred_region
    _
  $region29: #{tracing_transformer_block_wrapper.27} parent=0 // pred_fallthru
    _

// kernel: tracing_transformer_block_wrapper.32
$region0: #{tracing_transformer_block_wrapper.32}
  #allocation0 [shape = 'u32[]', space=smem, size = 0x4, offset = 0x4, fixed_abs, tag = 'smem constant byte address 0x4 - core index']
  #allocation1 [shape = 'u32[72,128]{1,0:T(1,128)}', space=vmem, size = 0x9000, scoped, tag = 'internal scratch']
  #allocation2 [shape = 'f32[16,256]{1,0:T(8,128)}', space=vmem, size = 0x4000, scoped, tag = 'scratch operand']
  %s0 = inlined_call_operand.vmem [shape: bf16[16,256], index: 0, kind: input, shape index: {}]
  %s1 = inlined_call_operand.vmem [shape: bf16[256,1024], index: 1, kind: input, shape index: {}]
  %s2 = inlined_call_operand.vmem [shape: bf16[1,1024], index: 2, kind: input, shape index: {}]
  %s3 = inlined_call_operand.vmem [shape: bf16[1024,256], index: 3, kind: input, shape index: {}]
  %s4 = inlined_call_operand.vmem [shape: bf16[1,256], index: 4, kind: input, shape index: {}]
  %s5 = inlined_call_operand.vmem [shape: bf16[16,256], index: 5, kind: output, shape index: {}]
  %s6 = sld [smem:[#allocation0]]
  $region84: #{tracing_transformer_block_wrapper.32} parent=0
    _
  %s8 = ssub.s32 1, %s6
  %s9 = scalar_select 0, %s8, %s6
  $region1: #{tracing_transformer_block_wrapper.32} parent=0
    #allocation3 [shape = 'u8[524288]{0}', space=vmem, size = 0x80000, scoped, tag = 'input window, operand 1']
    loop: start=0, step=1, limit=4
    $region2: #{tracing_transformer_block_wrapper.32} parent=1 // loop_pre_header
      _
    $region3: #{tracing_transformer_block_wrapper.32} parent=1 // loop_header
      %s11 = sphi 0, %s15
      %p12 = scmp.ge.s32.totalorder %s11, 4
      %s18 = sphi 0, %s30
      %s19 = sphi 0, %s26
      %s20 = sphi 0, %s18
      %s21 = sphi 0, %s19
      %s22 = sphi 0, %s20
      %s23 = sphi 0, %s21
      %s33 = sphi 0, %s35
      %s36 = sphi 0, %s33
      %s37 = sphi 0, %s36
      %s53 = sphi 0, %s37
      %s59 = sphi 0, %s61
      %s62 = sphi 0, %s59
      %s63 = sphi 0, %s62
      %s79 = sphi 0, %s63
      %s85 = sphi 0, %s87
      %s88 = sphi 0, %s85
      %s89 = sphi 0, %s88
      %s105 = sphi 0, %s89
      %s111 = sphi 0, %s113
      %s114 = sphi 0, %s111
      %s115 = sphi 0, %s114
      %s131 = sphi 0, %s115
      %s135 = sphi 0, %s135
      %s137 = sphi 0, %s135
      %s138 = sphi 0, %s137
      %s152 = sphi 0, %s138
      %s158 = sphi 0, %s160
      %s161 = sphi 0, %s158
      %s162 = sphi 0, %s161
      %s178 = sphi 0, %s162
    $region4: #{tracing_transformer_block_wrapper.32} parent=1 // loop_header_branch
      %14 = sbr.rel (%p12) target = $region8
    $region5: #{tracing_transformer_block_wrapper.32} parent=1 // loop_body
      %s16 = ssub.s32 %s11, 1
      %s17 = ssub.s32 %s11, 2
      %s24 = sadd.s32 1, %s19
      %p25 = scmp.ge.s32.totalorder %s24, 2
      %s26 = scalar_select %p25, 0, %s24
      %s27 = sadd.s32 1, %s18
      %s28 = scalar_select %p25, %s27, %s18
      %p29 = scmp.ge.s32.totalorder %s28, 1
      %s30 = scalar_select %p29, 0, %s28
      %s31 = ssub.s32 %s18, %s30
      %p32 = scmp.eq.s32.totalorder %s31, 0
      %s34 = sadd.s32 %s33, 1
      %s35 = scalar_select %p32, %s33, %s34
      %p38 = pneg %p32
      %p39 = scmp.eq.s32.totalorder %s11, 1
      %p40 = por %p38, %p39
      %p41 = scmp.ne.s32.totalorder %s33, %s36
      %p42 = scmp.eq.s32.totalorder %s11, 0
      %p43 = por %p41, %p42
      %p44 = scmp.ne.s32.totalorder %s33, %s36
      %p45 = scmp.eq.s32.totalorder %s16, 1
      %p46 = por %p44, %p45
      %p47 = scmp.ne.s32.totalorder %s36, %s37
      %p48 = scmp.eq.s32.totalorder %s16, 0
      %p49 = por %p47, %p48
      %p50 = scmp.ne.s32.totalorder %s36, %s37
      %p51 = scmp.eq.s32.totalorder %s17, 1
      %p52 = por %p50, %p51
      %p54 = scmp.ne.s32.totalorder %s37, %s53
      %p55 = scmp.eq.s32.totalorder %s17, 0
      %p56 = por %p54, %p55
      %s57 = ssub.s32 %s19, %s26
      %p58 = scmp.eq.s32.totalorder %s57, 0
      %s60 = sadd.s32 %s59, 1
      %s61 = scalar_select %p58, %s59, %s60
      %p64 = pneg %p58
      %p65 = scmp.eq.s32.totalorder %s11, 1
      %p66 = por %p64, %p65
      %p67 = scmp.ne.s32.totalorder %s59, %s62
      %p68 = scmp.eq.s32.totalorder %s11, 0
      %p69 = por %p67, %p68
      %p70 = scmp.ne.s32.totalorder %s59, %s62
      %p71 = scmp.eq.s32.totalorder %s16, 1
      %p72 = por %p70, %p71
      %p73 = scmp.ne.s32.totalorder %s62, %s63
      %p74 = scmp.eq.s32.totalorder %s16, 0
      %p75 = por %p73, %p74
      %p76 = scmp.ne.s32.totalorder %s62, %s63
      %p77 = scmp.eq.s32.totalorder %s17, 1
      %p78 = por %p76, %p77
      %p80 = scmp.ne.s32.totalorder %s63, %s79
      %p81 = scmp.eq.s32.totalorder %s17, 0
      %p82 = por %p80, %p81
      %s83 = ssub.s32 %s19, %s26
      %p84 = scmp.eq.s32.totalorder %s83, 0
      %s86 = sadd.s32 %s85, 1
      %s87 = scalar_select %p84, %s85, %s86
      %p90 = pneg %p84
      %p91 = scmp.eq.s32.totalorder %s11, 1
      %p92 = por %p90, %p91
      %p93 = scmp.ne.s32.totalorder %s85, %s88
      %p94 = scmp.eq.s32.totalorder %s11, 0
      %p95 = por %p93, %p94
      %p96 = scmp.ne.s32.totalorder %s85, %s88
      %p97 = scmp.eq.s32.totalorder %s16, 1
      %p98 = por %p96, %p97
      %p99 = scmp.ne.s32.totalorder %s88, %s89
      %p100 = scmp.eq.s32.totalorder %s16, 0
      %p101 = por %p99, %p100
      %p102 = scmp.ne.s32.totalorder %s88, %s89
      %p103 = scmp.eq.s32.totalorder %s17, 1
      %p104 = por %p102, %p103
      %p106 = scmp.ne.s32.totalorder %s89, %s105
      %p107 = scmp.eq.s32.totalorder %s17, 0
      %p108 = por %p106, %p107
      %s109 = ssub.s32 %s19, %s26
      %p110 = scmp.eq.s32.totalorder %s109, 0
      %s112 = sadd.s32 %s111, 1
      %s113 = scalar_select %p110, %s111, %s112
      %p116 = pneg %p110
      %p117 = scmp.eq.s32.totalorder %s11, 1
      %p118 = por %p116, %p117
      %p119 = scmp.ne.s32.totalorder %s111, %s114
      %p120 = scmp.eq.s32.totalorder %s11, 0
      %p121 = por %p119, %p120
      %p122 = scmp.ne.s32.totalorder %s111, %s114
      %p123 = scmp.eq.s32.totalorder %s16, 1
      %p124 = por %p122, %p123
      %p125 = scmp.ne.s32.totalorder %s114, %s115
      %p126 = scmp.eq.s32.totalorder %s16, 0
      %p127 = por %p125, %p126
      %p128 = scmp.ne.s32.totalorder %s114, %s115
      %p129 = scmp.eq.s32.totalorder %s17, 1
      %p130 = por %p128, %p129
      %p132 = scmp.ne.s32.totalorder %s115, %s131
      %p133 = scmp.eq.s32.totalorder %s17, 0
      %p134 = por %p132, %p133
      %s136 = sadd.s32 %s135, 1
      %p139 = scmp.eq.s32.totalorder %s11, 1
      %p140 = scmp.ne.s32.totalorder %s135, %s137
      %p141 = scmp.eq.s32.totalorder %s11, 0
      %p142 = por %p140, %p141
      %p143 = scmp.ne.s32.totalorder %s135, %s137
      %p144 = scmp.eq.s32.totalorder %s16, 1
      %p145 = por %p143, %p144
      %p146 = scmp.ne.s32.totalorder %s137, %s138
      %p147 = scmp.eq.s32.totalorder %s16, 0
      %p148 = por %p146, %p147
      %p149 = scmp.ne.s32.totalorder %s137, %s138
      %p150 = scmp.eq.s32.totalorder %s17, 1
      %p151 = por %p149, %p150
      %p153 = scmp.ne.s32.totalorder %s138, %s152
      %p154 = scmp.eq.s32.totalorder %s17, 0
      %p155 = por %p153, %p154
      %s156 = ssub.s32 %s18, %s30
      %p157 = scmp.eq.s32.totalorder %s156, 0
      %s159 = sadd.s32 %s158, 1
      %s160 = scalar_select %p157, %s158, %s159
      %p163 = pneg %p157
      %p164 = scmp.eq.s32.totalorder %s11, 1
      %p165 = por %p163, %p164
      %p166 = scmp.ne.s32.totalorder %s158, %s161
      %p167 = scmp.eq.s32.totalorder %s11, 0
      %p168 = por %p166, %p167
      %p169 = scmp.ne.s32.totalorder %s158, %s161
      %p170 = scmp.eq.s32.totalorder %s16, 1
      %p171 = por %p169, %p170
      %p172 = scmp.ne.s32.totalorder %s161, %s162
      %p173 = scmp.eq.s32.totalorder %s16, 0
      %p174 = por %p172, %p173
      %p175 = scmp.ne.s32.totalorder %s161, %s162
      %p176 = scmp.eq.s32.totalorder %s17, 1
      %p177 = por %p175, %p176
      %p179 = scmp.ne.s32.totalorder %s162, %s178
      %p180 = scmp.eq.s32.totalorder %s17, 0
      %p181 = por %p179, %p180
      %p182 = scmp.le.s32.totalorder 1, %s11
      %p183 = scmp.lt.s32.totalorder %s11, 3
      %p184 = pnand %p182, %p183
      %p185 = pneg %p184
      // Predicated region
      $region9: #{tracing_transformer_block_wrapper.32} parent=5 // pred_check
        _
      $region10: #{tracing_transformer_block_wrapper.32} parent=5 // pred_check_branch
        %187 = sbr.rel (%p184) target = $region12
      $region11: #{tracing_transformer_block_wrapper.32} parent=5 // pred_region
        %s188 = ssub.s32 %s11, 1
        // Predicated region
        $region13: #{tracing_transformer_block_wrapper.32} parent=11 // pred_check
          %p189 = pneg %p49
        $region14: #{tracing_transformer_block_wrapper.32} parent=11 // pred_check_branch
          %191 = sbr.rel (%p189) target = $region16
        $region15: #{tracing_transformer_block_wrapper.32} parent=11 // pred_region
          %s192 = smul.u32 2, %s20
          %p193 = scmp.lt.s32.totalorder %s192, 1
          %s194 = scalar_select %p193, %s192, 1
          %s195 = smul.addr %s194, 2
          %s196 = smul.addr %s195, 4
          %s197 = scalar_lea.vmem %s0, %s196
          %s198 = smul.u32 2, %s20
        $region16: #{tracing_transformer_block_wrapper.32} parent=11 // pred_fallthru
          _
        // Predicated region
        $region17: #{tracing_transformer_block_wrapper.32} parent=11 // pred_check
          %p199 = pneg %p148
        $region18: #{tracing_transformer_block_wrapper.32} parent=11 // pred_check_branch
          %201 = sbr.rel (%p199) target = $region20
        $region19: #{tracing_transformer_block_wrapper.32} parent=11 // pred_region
          _
        $region20: #{tracing_transformer_block_wrapper.32} parent=11 // pred_fallthru
          _
      $region12: #{tracing_transformer_block_wrapper.32} parent=5 // pred_fallthru
        _
      %p202 = scmp.lt.s32.totalorder %s11, 2
      // Predicated region
      $region21: #{tracing_transformer_block_wrapper.32} parent=5 // pred_check
        %p203 = pneg %p202
      $region22: #{tracing_transformer_block_wrapper.32} parent=5 // pred_check_branch
        %205 = sbr.rel (%p203) target = $region24
      $region23: #{tracing_transformer_block_wrapper.32} parent=5 // pred_region
        // Predicated region
        $region25: #{tracing_transformer_block_wrapper.32} parent=23 // pred_check
          %p206 = pneg %p69
        $region26: #{tracing_transformer_block_wrapper.32} parent=23 // pred_check_branch
          %208 = sbr.rel (%p206) target = $region28
        $region27: #{tracing_transformer_block_wrapper.32} parent=23 // pred_region
          %s209 = sand.u32 %s59, 1
          %s210 = sand.u32 %s59, 1
          %s211 = smul.addr %s210, 512
          %s212 = scalar_lea.vmem [#allocation3], %s211
          %s213 = smul.u32 4, %s19
          %s214 = smul.addr %s213, 4
          %s215 = scalar_lea.vmem %s1, %s214
          // Predicated region
          $region29: #{tracing_transformer_block_wrapper.32} parent=27 // pred_check
            _
          $region30: #{tracing_transformer_block_wrapper.32} parent=27 // pred_check_branch
            %217 = sbr.rel (0) target = $region32
          $region31: #{tracing_transformer_block_wrapper.32} parent=27 // pred_region
            // Predicated region
            $region33: #{tracing_transformer_block_wrapper.32} parent=31 // pred_check
              _
            $region34: #{tracing_transformer_block_wrapper.32} parent=31 // pred_check_branch
              %219 = sbr.rel (0) target = $region36
            $region35: #{tracing_transformer_block_wrapper.32} parent=31 // pred_region
              loop: start=0, step=1, limit=1
              $region37: #{tracing_transformer_block_wrapper.32} parent=35 // loop_pre_header
                _
              $region38: #{tracing_transformer_block_wrapper.32} parent=35 // loop_header
                %s221 = sphi 0, %s225
                %p222 = scmp.ge.s32.totalorder %s221, 1
                %s226 = sphi %s215, %s215
                %s227 = sphi %s212, %s212
              $region39: #{tracing_transformer_block_wrapper.32} parent=35 // loop_header_branch
                %224 = sbr.rel (%p222) target = $region43
              $region40: #{tracing_transformer_block_wrapper.32} parent=35 // loop_body
                %v228 = vld [vmem:[%s226] sm:$0xff]
                %229 = vst [vmem:[%s227] sm:$0xff] %v228
                %v230 = vld [vmem:[%s226 + $0x8] sm:$0xff]
                %231 = vst [vmem:[%s227 + $0x8] sm:$0xff] %v230
                %v232 = vld [vmem:[%s226 + $0x20] sm:$0xff]
                %233 = vst [vmem:[%s227 + $0x10] sm:$0xff] %v232
                %v234 = vld [vmem:[%s226 + $0x28] sm:$0xff]
                %235 = vst [vmem:[%s227 + $0x18] sm:$0xff] %v234
                %v236 = vld [vmem:[%s226 + $0x40] sm:$0xff]
                %237 = vst [vmem:[%s227 + $0x20] sm:$0xff] %v236
                %v238 = vld [vmem:[%s226 + $0x48] sm:$0xff]
                %239 = vst [vmem:[%s227 + $0x28] sm:$0xff] %v238
                %v240 = vld [vmem:[%s226 + $0x60] sm:$0xff]
                %241 = vst [vmem:[%s227 + $0x30] sm:$0xff] %v240
                %v242 = vld [vmem:[%s226 + $0x68] sm:$0xff]
                %243 = vst [vmem:[%s227 + $0x38] sm:$0xff] %v242
                %v244 = vld [vmem:[%s226 + $0x80] sm:$0xff]
                %245 = vst [vmem:[%s227 + $0x40] sm:$0xff] %v244
                %v246 = vld [vmem:[%s226 + $0x88] sm:$0xff]
                %247 = vst [vmem:[%s227 + $0x48] sm:$0xff] %v246
                %v248 = vld [vmem:[%s226 + $0xa0] sm:$0xff]
                %249 = vst [vmem:[%s227 + $0x50] sm:$0xff] %v248
                %v250 = vld [vmem:[%s226 + $0xa8] sm:$0xff]
                %251 = vst [vmem:[%s227 + $0x58] sm:$0xff] %v250
                %v252 = vld [vmem:[%s226 + $0xc0] sm:$0xff]
                %253 = vst [vmem:[%s227 + $0x60] sm:$0xff] %v252
                %v254 = vld [vmem:[%s226 + $0xc8] sm:$0xff]
                %255 = vst [vmem:[%s227 + $0x68] sm:$0xff] %v254
                %v256 = vld [vmem:[%s226 + $0xe0] sm:$0xff]
                %257 = vst [vmem:[%s227 + $0x70] sm:$0xff] %v256
                %v258 = vld [vmem:[%s226 + $0xe8] sm:$0xff]
                %259 = vst [vmem:[%s227 + $0x78] sm:$0xff] %v258
                %v260 = vld [vmem:[%s226 + $0x100] sm:$0xff]
                %261 = vst [vmem:[%s227 + $0x80] sm:$0xff] %v260
                %v262 = vld [vmem:[%s226 + $0x108] sm:$0xff]
                %263 = vst [vmem:[%s227 + $0x88] sm:$0xff] %v262
                %v264 = vld [vmem:[%s226 + $0x120] sm:$0xff]
                %265 = vst [vmem:[%s227 + $0x90] sm:$0xff] %v264
                %v266 = vld [vmem:[%s226 + $0x128] sm:$0xff]
                %267 = vst [vmem:[%s227 + $0x98] sm:$0xff] %v266
                %v268 = vld [vmem:[%s226 + $0x140] sm:$0xff]
                %269 = vst [vmem:[%s227 + $0xa0] sm:$0xff] %v268
                %v270 = vld [vmem:[%s226 + $0x148] sm:$0xff]
                %271 = vst [vmem:[%s227 + $0xa8] sm:$0xff] %v270
                %v272 = vld [vmem:[%s226 + $0x160] sm:$0xff]
                %273 = vst [vmem:[%s227 + $0xb0] sm:$0xff] %v272
                %v274 = vld [vmem:[%s226 + $0x168] sm:$0xff]
                %275 = vst [vmem:[%s227 + $0xb8] sm:$0xff] %v274
                %v276 = vld [vmem:[%s226 + $0x180] sm:$0xff]
                %277 = vst [vmem:[%s227 + $0xc0] sm:$0xff] %v276
                %v278 = vld [vmem:[%s226 + $0x188] sm:$0xff]
                %279 = vst [vmem:[%s227 + $0xc8] sm:$0xff] %v278
                %v280 = vld [vmem:[%s226 + $0x1a0] sm:$0xff]
                %281 = vst [vmem:[%s227 + $0xd0] sm:$0xff] %v280
                %v282 = vld [vmem:[%s226 + $0x1a8] sm:$0xff]
                %283 = vst [vmem:[%s227 + $0xd8] sm:$0xff] %v282
                %v284 = vld [vmem:[%s226 + $0x1c0] sm:$0xff]
                %285 = vst [vmem:[%s227 + $0xe0] sm:$0xff] %v284
                %v286 = vld [vmem:[%s226 + $0x1c8] sm:$0xff]
                %287 = vst [vmem:[%s227 + $0xe8] sm:$0xff] %v286
                %v288 = vld [vmem:[%s226 + $0x1e0] sm:$0xff]
                %289 = vst [vmem:[%s227 + $0xf0] sm:$0xff] %v288
                %v290 = vld [vmem:[%s226 + $0x1e8] sm:$0xff]
                %291 = vst [vmem:[%s227 + $0xf8] sm:$0xff] %v290
                %v292 = vld [vmem:[%s226 + $0x200] sm:$0xff]
                %293 = vst [vmem:[%s227 + $0x100] sm:$0xff] %v292
                %v294 = vld [vmem:[%s226 + $0x208] sm:$0xff]
                %295 = vst [vmem:[%s227 + $0x108] sm:$0xff] %v294
                %v296 = vld [vmem:[%s226 + $0x220] sm:$0xff]
                %297 = vst [vmem:[%s227 + $0x110] sm:$0xff] %v296
                %v298 = vld [vmem:[%s226 + $0x228] sm:$0xff]
                %299 = vst [vmem:[%s227 + $0x118] sm:$0xff] %v298
                %v300 = vld [vmem:[%s226 + $0x240] sm:$0xff]
                %301 = vst [vmem:[%s227 + $0x120] sm:$0xff] %v300
                %v302 = vld [vmem:[%s226 + $0x248] sm:$0xff]
                %303 = vst [vmem:[%s227 + $0x128] sm:$0xff] %v302
                %v304 = vld [vmem:[%s226 + $0x260] sm:$0xff]
                %305 = vst [vmem:[%s227 + $0x130] sm:$0xff] %v304
                %v306 = vld [vmem:[%s226 + $0x268] sm:$0xff]
                %307 = vst [vmem:[%s227 + $0x138] sm:$0xff] %v306
                %v308 = vld [vmem:[%s226 + $0x280] sm:$0xff]
                %309 = vst [vmem:[%s227 + $0x140] sm:$0xff] %v308
                %v310 = vld [vmem:[%s226 + $0x288] sm:$0xff]
                %311 = vst [vmem:[%s227 + $0x148] sm:$0xff] %v310
                %v312 = vld [vmem:[%s226 + $0x2a0] sm:$0xff]
                %313 = vst [vmem:[%s227 + $0x150] sm:$0xff] %v312
                %v314 = vld [vmem:[%s226 + $0x2a8] sm:$0xff]
                %315 = vst [vmem:[%s227 + $0x158] sm:$0xff] %v314
                %v316 = vld [vmem:[%s226 + $0x2c0] sm:$0xff]
                %317 = vst [vmem:[%s227 + $0x160] sm:$0xff] %v316
                %v318 = vld [vmem:[%s226 + $0x2c8] sm:$0xff]
                %319 = vst [vmem:[%s227 + $0x168] sm:$0xff] %v318
                %v320 = vld [vmem:[%s226 + $0x2e0] sm:$0xff]
                %321 = vst [vmem:[%s227 + $0x170] sm:$0xff] %v320
                %v322 = vld [vmem:[%s226 + $0x2e8] sm:$0xff]
                %323 = vst [vmem:[%s227 + $0x178] sm:$0xff] %v322
                %v324 = vld [vmem:[%s226 + $0x300] sm:$0xff]
                %325 = vst [vmem:[%s227 + $0x180] sm:$0xff] %v324
                %v326 = vld [vmem:[%s226 + $0x308] sm:$0xff]
                %327 = vst [vmem:[%s227 + $0x188] sm:$0xff] %v326
                %v328 = vld [vmem:[%s226 + $0x320] sm:$0xff]
                %329 = vst [vmem:[%s227 + $0x190] sm:$0xff] %v328
                %v330 = vld [vmem:[%s226 + $0x328] sm:$0xff]
                %331 = vst [vmem:[%s227 + $0x198] sm:$0xff] %v330
                %v332 = vld [vmem:[%s226 + $0x340] sm:$0xff]
                %333 = vst [vmem:[%s227 + $0x1a0] sm:$0xff] %v332
                %v334 = vld [vmem:[%s226 + $0x348] sm:$0xff]
                %335 = vst [vmem:[%s227 + $0x1a8] sm:$0xff] %v334
                %v336 = vld [vmem:[%s226 + $0x360] sm:$0xff]
                %337 = vst [vmem:[%s227 + $0x1b0] sm:$0xff] %v336
                %v338 = vld [vmem:[%s226 + $0x368] sm:$0xff]
                %339 = vst [vmem:[%s227 + $0x1b8] sm:$0xff] %v338
                %v340 = vld [vmem:[%s226 + $0x380] sm:$0xff]
                %341 = vst [vmem:[%s227 + $0x1c0] sm:$0xff] %v340
                %v342 = vld [vmem:[%s226 + $0x388] sm:$0xff]
                %343 = vst [vmem:[%s227 + $0x1c8] sm:$0xff] %v342
                %v344 = vld [vmem:[%s226 + $0x3a0] sm:$0xff]
                %345 = vst [vmem:[%s227 + $0x1d0] sm:$0xff] %v344
                %v346 = vld [vmem:[%s226 + $0x3a8] sm:$0xff]
                %347 = vst [vmem:[%s227 + $0x1d8] sm:$0xff] %v346
                %v348 = vld [vmem:[%s226 + $0x3c0] sm:$0xff]
                %349 = vst [vmem:[%s227 + $0x1e0] sm:$0xff] %v348
                %v350 = vld [vmem:[%s226 + $0x3c8] sm:$0xff]
                %351 = vst [vmem:[%s227 + $0x1e8] sm:$0xff] %v350
                %v352 = vld [vmem:[%s226 + $0x3e0] sm:$0xff]
                %353 = vst [vmem:[%s227 + $0x1f0] sm:$0xff] %v352
                %v354 = vld [vmem:[%s226 + $0x3e8] sm:$0xff]
                %355 = vst [vmem:[%s227 + $0x1f8] sm:$0xff] %v354
              $region41: #{tracing_transformer_block_wrapper.32} parent=35 // loop_footer
                %s225 = sadd.s32 1, %s221
              $region42: #{tracing_transformer_block_wrapper.32} parent=35 // loop_footer_branch
                %220 = sbr.rel target = $region38
              $region43: #{tracing_transformer_block_wrapper.32} parent=35 // loop_exit
                _
            $region36: #{tracing_transformer_block_wrapper.32} parent=31 // pred_fallthru
              _
            // Predicated region
            $region44: #{tracing_transformer_block_wrapper.32} parent=31 // pred_check
              _
            $region45: #{tracing_transformer_block_wrapper.32} parent=31 // pred_check_branch
              %357 = sbr.rel target = $region47
            $region46: #{tracing_transformer_block_wrapper.32} parent=31 // pred_region
              _
            $region47: #{tracing_transformer_block_wrapper.32} parent=31 // pred_fallthru
              _
          $region32: #{tracing_transformer_block_wrapper.32} parent=27 // pred_fallthru
            _
          %358 = vnop
        $region28: #{tracing_transformer_block_wrapper.32} parent=23 // pred_fallthru
          _
        // Predicated region
        $region48: #{tracing_transformer_block_wrapper.32} parent=23 // pred_check
          %p359 = pneg %p95
        $region49: #{tracing_transformer_block_wrapper.32} parent=23 // pred_check_branch
          %361 = sbr.rel (%p359) target = $region51
        $region50: #{tracing_transformer_block_wrapper.32} parent=23 // pred_region
          %s362 = smul.u32 4, %s19
          %p363 = scmp.lt.s32.totalorder %s362, 7
          %s364 = scalar_select %p363, %s362, 7
          %s365 = scalar_lea.vmem %s2, %s364
          %s366 = smul.u32 4, %s19
        $region51: #{tracing_transformer_block_wrapper.32} parent=23 // pred_fallthru
          _
        // Predicated region
        $region52: #{tracing_transformer_block_wrapper.32} parent=23 // pred_check
          %p367 = pneg %p121
        $region53: #{tracing_transformer_block_wrapper.32} parent=23 // pred_check_branch
          %369 = sbr.rel (%p367) target = $region55
        $region54: #{tracing_transformer_block_wrapper.32} parent=23 // pred_region
          %s370 = smul.u32 64, %s19
          %p371 = scmp.lt.s32.totalorder %s370, 127
          %s372 = scalar_select %p371, %s370, 127
          %s373 = smul.addr %s372, 2
          %s374 = smul.addr %s373, 4
          %s375 = scalar_lea.vmem %s3, %s374
          %s376 = smul.u32 64, %s19
        $region55: #{tracing_transformer_block_wrapper.32} parent=23 // pred_fallthru
          _
      $region24: #{tracing_transformer_block_wrapper.32} parent=5 // pred_fallthru
        _
      %p377 = scmp.le.s32.totalorder 1, %s11
      %p378 = scmp.lt.s32.totalorder %s11, 3
      %p379 = pnand %p377, %p378
      %p380 = pneg %p379
      // Predicated region
      $region56: #{tracing_transformer_block_wrapper.32} parent=5 // pred_check
        _
      $region57: #{tracing_transformer_block_wrapper.32} parent=5 // pred_check_branch
        %382 = sbr.rel (%p379) target = $region59
      $region58: #{tracing_transformer_block_wrapper.32} parent=5 // pred_region
        %s383 = ssub.s32 %s11, 1
        %s384 = sand.u32 %s62, 1
        %s385 = sand.u32 %s62, 1
        %s386 = smul.addr %s385, 512
        %s387 = scalar_lea.vmem [#allocation3], %s386
        // Predicated region
        $region60: #{tracing_transformer_block_wrapper.32} parent=58 // pred_check
          %p388 = pneg %p75
        $region61: #{tracing_transformer_block_wrapper.32} parent=58 // pred_check_branch
          %390 = sbr.rel (%p388) target = $region63
        $region62: #{tracing_transformer_block_wrapper.32} parent=58 // pred_region
          _
        $region63: #{tracing_transformer_block_wrapper.32} parent=58 // pred_fallthru
          _
        %s391 = smul.u32 2, %s20
        %p392 = scmp.lt.s32.totalorder %s391, 1
        %s393 = scalar_select %p392, %s391, 1
        %s394 = smul.addr %s393, 2
        %s395 = smul.addr %s394, 4
        %s396 = scalar_lea.vmem %s0, %s395
        %p397 = pneg %p49
        %p398 = pneg %p46
        %s399 = sand.u32 %s62, 1
        %s400 = sand.u32 %s62, 1
        %s401 = smul.addr %s400, 512
        %s402 = scalar_lea.vmem [#allocation3], %s401
        %p403 = pneg %p75
        %p404 = pneg %p72
        %s405 = smul.u32 4, %s21
        %p406 = scmp.lt.s32.totalorder %s405, 7
        %s407 = scalar_select %p406, %s405, 7
        %s408 = scalar_lea.vmem %s2, %s407
        %p409 = pneg %p101
        %p410 = pneg %p98
        %s411 = smul.u32 64, %s21
        %p412 = scmp.lt.s32.totalorder %s411, 127
        %s413 = scalar_select %p412, %s411, 127
        %s414 = smul.addr %s413, 2
        %s415 = smul.addr %s414, 4
        %s416 = scalar_lea.vmem %s3, %s415
        %p417 = pneg %p127
        %p418 = pneg %p124
        %p419 = pneg %p148
        %p420 = pneg %p145
        %p421 = pneg %p174
        %p422 = pneg %p171
        %s423 = smul.u32 2, %s20
        %p424 = scmp.lt.s32.totalorder %s423, 1
        %s425 = scalar_select %p424, %s423, 1
        %s426 = smul.addr %s425, 2
        %s427 = smul.addr %s426, 4
        %s428 = scalar_lea.vmem %s5, %s427
        %s429 = smul.u32 2, %s20
        %p430 = scmp.lt.s32.totalorder %s429, 1
        %s431 = scalar_select %p430, %s429, 1
        %s432 = smul.addr %s431, 2
        %s433 = smul.addr %s432, 4
        %s434 = scalar_lea.vmem %s0, %s433
        %s435 = smul.u32 2, %s20
        %s436 = smul.u32 4, %s21
        %s437 = smul.u32 4, %s21
        %p438 = scmp.lt.s32.totalorder %s437, 7
        %s439 = scalar_select %p438, %s437, 7
        %s440 = scalar_lea.vmem %s2, %s439
        %s441 = smul.u32 4, %s21
        %s442 = smul.u32 64, %s21
        %p443 = scmp.lt.s32.totalorder %s442, 127
        %s444 = scalar_select %p443, %s442, 127
        %s445 = smul.addr %s444, 2
        %s446 = smul.addr %s445, 4
        %s447 = scalar_lea.vmem %s3, %s446
        %s448 = smul.u32 64, %s21
        %s449 = smul.u32 2, %s20
        %p450 = scmp.lt.s32.totalorder %s449, 1
        %s451 = scalar_select %p450, %s449, 1
        %s452 = smul.addr %s451, 2
        %s453 = smul.addr %s452, 4
        %s454 = scalar_lea.vmem %s5, %s453
        %s455 = smul.u32 2, %s20
        %p456 = scmp.eq.s32.totalorder %s21, 0
        // Predicated region
        $region64: #{tracing_transformer_block_wrapper.32} parent=58 // pred_check
          %p457 = pneg %p456
        $region65: #{tracing_transformer_block_wrapper.32} parent=58 // pred_check_branch
          %459 = sbr.rel (%p457) target = $region67
        $region66: #{tracing_transformer_block_wrapper.32} parent=58 // pred_region
          %460 = vst [vmem:[#allocation2] sm:$0xff] 0.0
          %461 = vst [vmem:[#allocation2 + $0x8] sm:$0xff] 0.0
          %462 = vst [vmem:[#allocation2 + $0x10] sm:$0xff] 0.0
          %463 = vst [vmem:[#allocation2 + $0x18] sm:$0xff] 0.0
        $region67: #{tracing_transformer_block_wrapper.32} parent=58 // pred_fallthru
          _
        %v464 = vld [vmem:[%s434] sm:$0xff]
        %v465 = vld [vmem:[%s434 + $0x8] sm:$0xff]
        %v466 = vld [vmem:[%s387] sm:$0xff]
        %v467 = vld [vmem:[%s387 + $0x8] sm:$0xff]
        %v468 = vld [vmem:[%s387 + $0x10] sm:$0xff]
        %v469 = vld [vmem:[%s387 + $0x18] sm:$0xff]
        %v470 = vld [vmem:[%s387 + $0x20] sm:$0xff]
        %v471 = vld [vmem:[%s387 + $0x28] sm:$0xff]
        %v472 = vld [vmem:[%s387 + $0x30] sm:$0xff]
        %v473 = vld [vmem:[%s387 + $0x38] sm:$0xff]
        %v474 = vld [vmem:[%s387 + $0x40] sm:$0xff]
        %v475 = vld [vmem:[%s387 + $0x48] sm:$0xff]
        %v476 = vld [vmem:[%s387 + $0x50] sm:$0xff]
        %v477 = vld [vmem:[%s387 + $0x58] sm:$0xff]
        %v478 = vld [vmem:[%s387 + $0x60] sm:$0xff]
        %v479 = vld [vmem:[%s387 + $0x68] sm:$0xff]
        %v480 = vld [vmem:[%s387 + $0x70] sm:$0xff]
        %v481 = vld [vmem:[%s387 + $0x78] sm:$0xff]
        %v482 = vld [vmem:[%s387 + $0x80] sm:$0xff]
        %v483 = vld [vmem:[%s387 + $0x88] sm:$0xff]
        %v484 = vld [vmem:[%s387 + $0x90] sm:$0xff]
        %v485 = vld [vmem:[%s387 + $0x98] sm:$0xff]
        %v486 = vld [vmem:[%s387 + $0xa0] sm:$0xff]
        %v487 = vld [vmem:[%s387 + $0xa8] sm:$0xff]
        %v488 = vld [vmem:[%s387 + $0xb0] sm:$0xff]
        %v489 = vld [vmem:[%s387 + $0xb8] sm:$0xff]
        %v490 = vld [vmem:[%s387 + $0xc0] sm:$0xff]
        %v491 = vld [vmem:[%s387 + $0xc8] sm:$0xff]
        %v492 = vld [vmem:[%s387 + $0xd0] sm:$0xff]
        %v493 = vld [vmem:[%s387 + $0xd8] sm:$0xff]
        %v494 = vld [vmem:[%s387 + $0xe0] sm:$0xff]
        %v495 = vld [vmem:[%s387 + $0xe8] sm:$0xff]
        %v496 = vld [vmem:[%s387 + $0xf0] sm:$0xff]
        %v497 = vld [vmem:[%s387 + $0xf8] sm:$0xff]
        %v498 = vld [vmem:[%s387 + $0x100] sm:$0xff]
        %v499 = vld [vmem:[%s387 + $0x108] sm:$0xff]
        %v500 = vld [vmem:[%s387 + $0x110] sm:$0xff]
        %v501 = vld [vmem:[%s387 + $0x118] sm:$0xff]
        %v502 = vld [vmem:[%s387 + $0x120] sm:$0xff]
        %v503 = vld [vmem:[%s387 + $0x128] sm:$0xff]
        %v504 = vld [vmem:[%s387 + $0x130] sm:$0xff]
        %v505 = vld [vmem:[%s387 + $0x138] sm:$0xff]
        %v506 = vld [vmem:[%s387 + $0x140] sm:$0xff]
        %v507 = vld [vmem:[%s387 + $0x148] sm:$0xff]
        %v508 = vld [vmem:[%s387 + $0x150] sm:$0xff]
        %v509 = vld [vmem:[%s387 + $0x158] sm:$0xff]
        %v510 = vld [vmem:[%s387 + $0x160] sm:$0xff]
        %v511 = vld [vmem:[%s387 + $0x168] sm:$0xff]
        %v512 = vld [vmem:[%s387 + $0x170] sm:$0xff]
        %v513 = vld [vmem:[%s387 + $0x178] sm:$0xff]
        %v514 = vld [vmem:[%s387 + $0x180] sm:$0xff]
        %v515 = vld [vmem:[%s387 + $0x188] sm:$0xff]
        %v516 = vld [vmem:[%s387 + $0x190] sm:$0xff]
        %v517 = vld [vmem:[%s387 + $0x198] sm:$0xff]
        %v518 = vld [vmem:[%s387 + $0x1a0] sm:$0xff]
        %v519 = vld [vmem:[%s387 + $0x1a8] sm:$0xff]
        %v520 = vld [vmem:[%s387 + $0x1b0] sm:$0xff]
        %v521 = vld [vmem:[%s387 + $0x1b8] sm:$0xff]
        %v522 = vld [vmem:[%s387 + $0x1c0] sm:$0xff]
        %v523 = vld [vmem:[%s387 + $0x1c8] sm:$0xff]
        %v524 = vld [vmem:[%s387 + $0x1d0] sm:$0xff]
        %v525 = vld [vmem:[%s387 + $0x1d8] sm:$0xff]
        %v526 = vld [vmem:[%s387 + $0x1e0] sm:$0xff]
        %v527 = vld [vmem:[%s387 + $0x1e8] sm:$0xff]
        %v528 = vld [vmem:[%s387 + $0x1f0] sm:$0xff]
        %v529 = vld [vmem:[%s387 + $0x1f8] sm:$0xff]
        %v530 = vld [vmem:[%s440] sm:$0xf]
        %v531 = vunpack.c.l.bf16 %v530
        %v533 = vperm.slane %v531, 0
        %v534 = vperm.slane %v531, 2
        %v535 = vperm.slane %v531, 4
        %v536 = vperm.slane %v531, 6
        %v541 = vperm.slane %v533, 0
        %v542 = vperm.slane %v534, 0
        %v543 = vperm.slane %v535, 0
        %v544 = vperm.slane %v536, 0
        %v547 = vunpack.c.l.b16 %v464
        %v548 = vunpack.c.h.b16 %v464
        %v549 = vunpack.c.l.b16 %v465
        %v550 = vunpack.c.h.b16 %v465
        %v551 = vpack.c.b16 %v549, %v547
        %v552 = vpack.c.b16 %v550, %v548
        %v619 = vunpack.c.l.b16 %v466
        %v620 = vunpack.c.h.b16 %v466
        %v621 = vunpack.c.l.b16 %v467
        %v622 = vunpack.c.h.b16 %v467
        %v623 = vunpack.c.l.b16 %v468
        %v624 = vunpack.c.h.b16 %v468
        %v625 = vunpack.c.l.b16 %v469
        %v626 = vunpack.c.h.b16 %v469
        %v627 = vunpack.c.l.b16 %v470
        %v628 = vunpack.c.h.b16 %v470
        %v629 = vunpack.c.l.b16 %v471
        %v630 = vunpack.c.h.b16 %v471
        %v631 = vunpack.c.l.b16 %v472
        %v632 = vunpack.c.h.b16 %v472
        %v633 = vunpack.c.l.b16 %v473
        %v634 = vunpack.c.h.b16 %v473
        %v635 = vunpack.c.l.b16 %v474
        %v636 = vunpack.c.h.b16 %v474
        %v637 = vunpack.c.l.b16 %v475
        %v638 = vunpack.c.h.b16 %v475
        %v639 = vunpack.c.l.b16 %v476
        %v640 = vunpack.c.h.b16 %v476
        %v641 = vunpack.c.l.b16 %v477
        %v642 = vunpack.c.h.b16 %v477
        %v643 = vunpack.c.l.b16 %v478
        %v644 = vunpack.c.h.b16 %v478
        %v645 = vunpack.c.l.b16 %v479
        %v646 = vunpack.c.h.b16 %v479
        %v647 = vunpack.c.l.b16 %v480
        %v648 = vunpack.c.h.b16 %v480
        %v649 = vunpack.c.l.b16 %v481
        %v650 = vunpack.c.h.b16 %v481
        %v651 = vunpack.c.l.b16 %v482
        %v652 = vunpack.c.h.b16 %v482
        %v653 = vunpack.c.l.b16 %v483
        %v654 = vunpack.c.h.b16 %v483
        %v655 = vunpack.c.l.b16 %v484
        %v656 = vunpack.c.h.b16 %v484
        %v657 = vunpack.c.l.b16 %v485
        %v658 = vunpack.c.h.b16 %v485
        %v659 = vunpack.c.l.b16 %v486
        %v660 = vunpack.c.h.b16 %v486
        %v661 = vunpack.c.l.b16 %v487
        %v662 = vunpack.c.h.b16 %v487
        %v663 = vunpack.c.l.b16 %v488
        %v664 = vunpack.c.h.b16 %v488
        %v665 = vunpack.c.l.b16 %v489
        %v666 = vunpack.c.h.b16 %v489
        %v667 = vunpack.c.l.b16 %v490
        %v668 = vunpack.c.h.b16 %v490
        %v669 = vunpack.c.l.b16 %v491
        %v670 = vunpack.c.h.b16 %v491
        %v671 = vunpack.c.l.b16 %v492
        %v672 = vunpack.c.h.b16 %v492
        %v673 = vunpack.c.l.b16 %v493
        %v674 = vunpack.c.h.b16 %v493
        %v675 = vunpack.c.l.b16 %v494
        %v676 = vunpack.c.h.b16 %v494
        %v677 = vunpack.c.l.b16 %v495
        %v678 = vunpack.c.h.b16 %v495
        %v679 = vunpack.c.l.b16 %v496
        %v680 = vunpack.c.h.b16 %v496
        %v681 = vunpack.c.l.b16 %v497
        %v682 = vunpack.c.h.b16 %v497
        %v683 = vunpack.c.l.b16 %v498
        %v684 = vunpack.c.h.b16 %v498
        %v685 = vunpack.c.l.b16 %v499
        %v686 = vunpack.c.h.b16 %v499
        %v687 = vunpack.c.l.b16 %v500
        %v688 = vunpack.c.h.b16 %v500
        %v689 = vunpack.c.l.b16 %v501
        %v690 = vunpack.c.h.b16 %v501
        %v691 = vunpack.c.l.b16 %v502
        %v692 = vunpack.c.h.b16 %v502
        %v693 = vunpack.c.l.b16 %v503
        %v694 = vunpack.c.h.b16 %v503
        %v695 = vunpack.c.l.b16 %v504
        %v696 = vunpack.c.h.b16 %v504
        %v697 = vunpack.c.l.b16 %v505
        %v698 = vunpack.c.h.b16 %v505
        %v699 = vunpack.c.l.b16 %v506
        %v700 = vunpack.c.h.b16 %v506
        %v701 = vunpack.c.l.b16 %v507
        %v702 = vunpack.c.h.b16 %v507
        %v703 = vunpack.c.l.b16 %v508
        %v704 = vunpack.c.h.b16 %v508
        %v705 = vunpack.c.l.b16 %v509
        %v706 = vunpack.c.h.b16 %v509
        %v707 = vunpack.c.l.b16 %v510
        %v708 = vunpack.c.h.b16 %v510
        %v709 = vunpack.c.l.b16 %v511
        %v710 = vunpack.c.h.b16 %v511
        %v711 = vunpack.c.l.b16 %v512
        %v712 = vunpack.c.h.b16 %v512
        %v713 = vunpack.c.l.b16 %v513
        %v714 = vunpack.c.h.b16 %v513
        %v715 = vunpack.c.l.b16 %v514
        %v716 = vunpack.c.h.b16 %v514
        %v717 = vunpack.c.l.b16 %v515
        %v718 = vunpack.c.h.b16 %v515
        %v719 = vunpack.c.l.b16 %v516
        %v720 = vunpack.c.h.b16 %v516
        %v721 = vunpack.c.l.b16 %v517
        %v722 = vunpack.c.h.b16 %v517
        %v723 = vunpack.c.l.b16 %v518
        %v724 = vunpack.c.h.b16 %v518
        %v725 = vunpack.c.l.b16 %v519
        %v726 = vunpack.c.h.b16 %v519
        %v727 = vunpack.c.l.b16 %v520
        %v728 = vunpack.c.h.b16 %v520
        %v729 = vunpack.c.l.b16 %v521
        %v730 = vunpack.c.h.b16 %v521
        %v731 = vunpack.c.l.b16 %v522
        %v732 = vunpack.c.h.b16 %v522
        %v733 = vunpack.c.l.b16 %v523
        %v734 = vunpack.c.h.b16 %v523
        %v735 = vunpack.c.l.b16 %v524
        %v736 = vunpack.c.h.b16 %v524
        %v737 = vunpack.c.l.b16 %v525
        %v738 = vunpack.c.h.b16 %v525
        %v739 = vunpack.c.l.b16 %v526
        %v740 = vunpack.c.h.b16 %v526
        %v741 = vunpack.c.l.b16 %v527
        %v742 = vunpack.c.h.b16 %v527
        %v743 = vunpack.c.l.b16 %v528
        %v744 = vunpack.c.h.b16 %v528
        %v745 = vunpack.c.l.b16 %v529
        %v746 = vunpack.c.h.b16 %v529
        %v747 = vpack.c.b16 %v623, %v619
        %v748 = vpack.c.b16 %v624, %v620
        %v749 = vpack.c.b16 %v625, %v621
        %v750 = vpack.c.b16 %v626, %v622
        %v751 = vpack.c.b16 %v631, %v627
        %v752 = vpack.c.b16 %v632, %v628
        %v753 = vpack.c.b16 %v633, %v629
        %v754 = vpack.c.b16 %v634, %v630
        %v755 = vpack.c.b16 %v639, %v635
        %v756 = vpack.c.b16 %v640, %v636
        %v757 = vpack.c.b16 %v641, %v637
        %v758 = vpack.c.b16 %v642, %v638
        %v759 = vpack.c.b16 %v647, %v643
        %v760 = vpack.c.b16 %v648, %v644
        %v761 = vpack.c.b16 %v649, %v645
        %v762 = vpack.c.b16 %v650, %v646
        %v763 = vpack.c.b16 %v655, %v651
        %v764 = vpack.c.b16 %v656, %v652
        %v765 = vpack.c.b16 %v657, %v653
        %v766 = vpack.c.b16 %v658, %v654
        %v767 = vpack.c.b16 %v663, %v659
        %v768 = vpack.c.b16 %v664, %v660
        %v769 = vpack.c.b16 %v665, %v661
        %v770 = vpack.c.b16 %v666, %v662
        %v771 = vpack.c.b16 %v671, %v667
        %v772 = vpack.c.b16 %v672, %v668
        %v773 = vpack.c.b16 %v673, %v669
        %v774 = vpack.c.b16 %v674, %v670
        %v775 = vpack.c.b16 %v679, %v675
        %v776 = vpack.c.b16 %v680, %v676
        %v777 = vpack.c.b16 %v681, %v677
        %v778 = vpack.c.b16 %v682, %v678
        %v779 = vpack.c.b16 %v687, %v683
        %v780 = vpack.c.b16 %v688, %v684
        %v781 = vpack.c.b16 %v689, %v685
        %v782 = vpack.c.b16 %v690, %v686
        %v783 = vpack.c.b16 %v695, %v691
        %v784 = vpack.c.b16 %v696, %v692
        %v785 = vpack.c.b16 %v697, %v693
        %v786 = vpack.c.b16 %v698, %v694
        %v787 = vpack.c.b16 %v703, %v699
        %v788 = vpack.c.b16 %v704, %v700
        %v789 = vpack.c.b16 %v705, %v701
        %v790 = vpack.c.b16 %v706, %v702
        %v791 = vpack.c.b16 %v711, %v707
        %v792 = vpack.c.b16 %v712, %v708
        %v793 = vpack.c.b16 %v713, %v709
        %v794 = vpack.c.b16 %v714, %v710
        %v795 = vpack.c.b16 %v719, %v715
        %v796 = vpack.c.b16 %v720, %v716
        %v797 = vpack.c.b16 %v721, %v717
        %v798 = vpack.c.b16 %v722, %v718
        %v799 = vpack.c.b16 %v727, %v723
        %v800 = vpack.c.b16 %v728, %v724
        %v801 = vpack.c.b16 %v729, %v725
        %v802 = vpack.c.b16 %v730, %v726
        %v803 = vpack.c.b16 %v735, %v731
        %v804 = vpack.c.b16 %v736, %v732
        %v805 = vpack.c.b16 %v737, %v733
        %v806 = vpack.c.b16 %v738, %v734
        %v807 = vpack.c.b16 %v743, %v739
        %v808 = vpack.c.b16 %v744, %v740
        %v809 = vpack.c.b16 %v745, %v741
        %v810 = vpack.c.b16 %v746, %v742
        %875 = vmatpush.bf16.msra.mxu0 %v775
        %876 = vmatpush.bf16.msra.mxu0 %v771
        %877 = vmatpush.bf16.msra.mxu0 %v767
        %878 = vmatpush.bf16.msra.mxu0 %v763
        %879 = vmatpush.bf16.msra.mxu0 %v759
        %880 = vmatpush.bf16.msra.mxu0 %v755
        %881 = vmatpush.bf16.msra.mxu0 %v751
        %882 = vmatpush.bf16.msra.mxu0 %v747
        %883 = vmatmul.bf16.gmra.mxu0 %v551
        %v884 = vpop.f32.mrf.mxu0
        %v885 = vadd.f32 %v541, %v884
        %v886 = vpop.f32.mrf.mxu0
        %v887 = vadd.f32 %v541, %v886
        %888 = vdwg.mxu0
        %889 = vmatpush.bf16.msra.mxu0 %v807
        %890 = vmatpush.bf16.msra.mxu0 %v803
        %891 = vmatpush.bf16.msra.mxu0 %v799
        %892 = vmatpush.bf16.msra.mxu0 %v795
        %893 = vmatpush.bf16.msra.mxu0 %v791
        %894 = vmatpush.bf16.msra.mxu0 %v787
        %895 = vmatpush.bf16.msra.mxu0 %v783
        %896 = vmatpush.bf16.msra.mxu0 %v779
        %897 = vmatmul.bf16.gmra.mxu0 %v552
        %v898 = vpop.f32.mrf.mxu0
        %v899 = vadd.f32 %v885, %v898
        %v900 = vpop.f32.mrf.mxu0
        %v901 = vadd.f32 %v887, %v900
        %902 = vdwg.mxu0
        %903 = vmatpush.bf16.msra.mxu0 %v776
        %904 = vmatpush.bf16.msra.mxu0 %v772
        %905 = vmatpush.bf16.msra.mxu0 %v768
        %906 = vmatpush.bf16.msra.mxu0 %v764
        %907 = vmatpush.bf16.msra.mxu0 %v760
        %908 = vmatpush.bf16.msra.mxu0 %v756
        %909 = vmatpush.bf16.msra.mxu0 %v752
        %910 = vmatpush.bf16.msra.mxu0 %v748
        %911 = vmatmul.bf16.gmra.mxu0 %v551
        %v912 = vpop.f32.mrf.mxu0
        %v913 = vadd.f32 %v542, %v912
        %v914 = vpop.f32.mrf.mxu0
        %v915 = vadd.f32 %v542, %v914
        %916 = vdwg.mxu0
        %917 = vmatpush.bf16.msra.mxu0 %v808
        %918 = vmatpush.bf16.msra.mxu0 %v804
        %919 = vmatpush.bf16.msra.mxu0 %v800
        %920 = vmatpush.bf16.msra.mxu0 %v796
        %921 = vmatpush.bf16.msra.mxu0 %v792
        %922 = vmatpush.bf16.msra.mxu0 %v788
        %923 = vmatpush.bf16.msra.mxu0 %v784
        %924 = vmatpush.bf16.msra.mxu0 %v780
        %925 = vmatmul.bf16.gmra.mxu0 %v552
        %v926 = vpop.f32.mrf.mxu0
        %v927 = vadd.f32 %v913, %v926
        %v928 = vpop.f32.mrf.mxu0
        %v929 = vadd.f32 %v915, %v928
        %930 = vdwg.mxu0
        %931 = vmatpush.bf16.msra.mxu0 %v777
        %932 = vmatpush.bf16.msra.mxu0 %v773
        %933 = vmatpush.bf16.msra.mxu0 %v769
        %934 = vmatpush.bf16.msra.mxu0 %v765
        %935 = vmatpush.bf16.msra.mxu0 %v761
        %936 = vmatpush.bf16.msra.mxu0 %v757
        %937 = vmatpush.bf16.msra.mxu0 %v753
        %938 = vmatpush.bf16.msra.mxu0 %v749
        %939 = vmatmul.bf16.gmra.mxu0 %v551
        %v940 = vpop.f32.mrf.mxu0
        %v941 = vadd.f32 %v543, %v940
        %v942 = vpop.f32.mrf.mxu0
        %v943 = vadd.f32 %v543, %v942
        %944 = vdwg.mxu0
        %945 = vmatpush.bf16.msra.mxu0 %v809
        %946 = vmatpush.bf16.msra.mxu0 %v805
        %947 = vmatpush.bf16.msra.mxu0 %v801
        %948 = vmatpush.bf16.msra.mxu0 %v797
        %949 = vmatpush.bf16.msra.mxu0 %v793
        %950 = vmatpush.bf16.msra.mxu0 %v789
        %951 = vmatpush.bf16.msra.mxu0 %v785
        %952 = vmatpush.bf16.msra.mxu0 %v781
        %953 = vmatmul.bf16.gmra.mxu0 %v552
        %v954 = vpop.f32.mrf.mxu0
        %v955 = vadd.f32 %v941, %v954
        %v956 = vpop.f32.mrf.mxu0
        %v957 = vadd.f32 %v943, %v956
        %958 = vdwg.mxu0
        %959 = vmatpush.bf16.msra.mxu0 %v778
        %960 = vmatpush.bf16.msra.mxu0 %v774
        %961 = vmatpush.bf16.msra.mxu0 %v770
        %962 = vmatpush.bf16.msra.mxu0 %v766
        %963 = vmatpush.bf16.msra.mxu0 %v762
        %964 = vmatpush.bf16.msra.mxu0 %v758
        %965 = vmatpush.bf16.msra.mxu0 %v754
        %966 = vmatpush.bf16.msra.mxu0 %v750
        %967 = vmatmul.bf16.gmra.mxu0 %v551
        %v968 = vpop.f32.mrf.mxu0
        %v969 = vadd.f32 %v544, %v968
        %v970 = vpop.f32.mrf.mxu0
        %v971 = vadd.f32 %v544, %v970
        %972 = vdwg.mxu0
        %973 = vmatpush.bf16.msra.mxu0 %v810
        %974 = vmatpush.bf16.msra.mxu0 %v806
        %975 = vmatpush.bf16.msra.mxu0 %v802
        %976 = vmatpush.bf16.msra.mxu0 %v798
        %977 = vmatpush.bf16.msra.mxu0 %v794
        %978 = vmatpush.bf16.msra.mxu0 %v790
        %979 = vmatpush.bf16.msra.mxu0 %v786
        %980 = vmatpush.bf16.msra.mxu0 %v782
        %981 = vmatmul.bf16.gmra.mxu0 %v552
        %v982 = vpop.f32.mrf.mxu0
        %v983 = vadd.f32 %v969, %v982
        %v984 = vpop.f32.mrf.mxu0
        %v985 = vadd.f32 %v971, %v984
        %986 = vdwg.mxu0
        %v987 = vmul.f32 %v899, 0.5
        %v988 = vmul.f32 %v927, 0.5
        %v989 = vmul.f32 %v955, 0.5
        %v990 = vmul.f32 %v983, 0.5
        %v991 = vmul.f32 %v901, 0.5
        %v992 = vmul.f32 %v929, 0.5
        %v993 = vmul.f32 %v957, 0.5
        %v994 = vmul.f32 %v985, 0.5
        %v995 = vmul.f32 %v899, 0.044715
        %v996 = vmul.f32 %v927, 0.044715
        %v997 = vmul.f32 %v955, 0.044715
        %v998 = vmul.f32 %v983, 0.044715
        %v999 = vmul.f32 %v901, 0.044715
        %v1000 = vmul.f32 %v929, 0.044715
        %v1001 = vmul.f32 %v957, 0.044715
        %v1002 = vmul.f32 %v985, 0.044715
        %v1003 = vmul.f32 %v995, %v899
        %v1004 = vmul.f32 %v996, %v927
        %v1005 = vmul.f32 %v997, %v955
        %v1006 = vmul.f32 %v998, %v983
        %v1007 = vmul.f32 %v999, %v901
        %v1008 = vmul.f32 %v1000, %v929
        %v1009 = vmul.f32 %v1001, %v957
        %v1010 = vmul.f32 %v1002, %v985
        %v1011 = vmul.f32 %v1003, %v899
        %v1012 = vmul.f32 %v1004, %v927
        %v1013 = vmul.f32 %v1005, %v955
        %v1014 = vmul.f32 %v1006, %v983
        %v1015 = vmul.f32 %v1007, %v901
        %v1016 = vmul.f32 %v1008, %v929
        %v1017 = vmul.f32 %v1009, %v957
        %v1018 = vmul.f32 %v1010, %v985
        %v1019 = vadd.f32 %v899, %v1011
        %v1020 = vadd.f32 %v927, %v1012
        %v1021 = vadd.f32 %v955, %v1013
        %v1022 = vadd.f32 %v983, %v1014
        %v1023 = vadd.f32 %v901, %v1015
        %v1024 = vadd.f32 %v929, %v1016
        %v1025 = vadd.f32 %v957, %v1017
        %v1026 = vadd.f32 %v985, %v1018
        %v1027 = vmul.f32 %v1019, 0.7978846
        %v1028 = vmul.f32 %v1020, 0.7978846
        %v1029 = vmul.f32 %v1021, 0.7978846
        %v1030 = vmul.f32 %v1022, 0.7978846
        %v1031 = vmul.f32 %v1023, 0.7978846
        %v1032 = vmul.f32 %v1024, 0.7978846
        %v1033 = vmul.f32 %v1025, 0.7978846
        %v1034 = vmul.f32 %v1026, 0.7978846
        %v1035 = vtanh.pop %v1027
        %v1036 = vtanh.pop %v1028
        %v1037 = vtanh.pop %v1029
        %v1038 = vtanh.pop %v1030
        %v1039 = vtanh.pop %v1031
        %v1040 = vtanh.pop %v1032
        %v1041 = vtanh.pop %v1033
        %v1042 = vtanh.pop %v1034
        %v1043 = vadd.f32 %v1035, 1.0
        %v1044 = vadd.f32 %v1036, 1.0
        %v1045 = vadd.f32 %v1037, 1.0
        %v1046 = vadd.f32 %v1038, 1.0
        %v1047 = vadd.f32 %v1039, 1.0
        %v1048 = vadd.f32 %v1040, 1.0
        %v1049 = vadd.f32 %v1041, 1.0
        %v1050 = vadd.f32 %v1042, 1.0
        %v1051 = vmul.f32 %v987, %v1043
        %v1052 = vmul.f32 %v988, %v1044
        %v1053 = vmul.f32 %v989, %v1045
        %v1054 = vmul.f32 %v990, %v1046
        %v1055 = vmul.f32 %v991, %v1047
        %v1056 = vmul.f32 %v992, %v1048
        %v1057 = vmul.f32 %v993, %v1049
        %v1058 = vmul.f32 %v994, %v1050
        %v1059 = vld [vmem:[#allocation2] sm:$0xff]
        %v1060 = vld [vmem:[#allocation2 + $0x8] sm:$0xff]
        %v1061 = vld [vmem:[#allocation2 + $0x10] sm:$0xff]
        %v1062 = vld [vmem:[#allocation2 + $0x18] sm:$0xff]
        %v1063 = vpack.c.bf16 %v1055, %v1051
        %v1064 = vpack.c.bf16 %v1056, %v1052
        %v1065 = vpack.c.bf16 %v1057, %v1053
        %v1066 = vpack.c.bf16 %v1058, %v1054
        %v1067 = vld [vmem:[%s447] sm:$0xff]
        %v1068 = vld [vmem:[%s447 + $0x8] sm:$0xff]
        %v1069 = vld [vmem:[%s447 + $0x10] sm:$0xff]
        %v1070 = vld [vmem:[%s447 + $0x18] sm:$0xff]
        %v1071 = vld [vmem:[%s447 + $0x20] sm:$0xff]
        %v1072 = vld [vmem:[%s447 + $0x28] sm:$0xff]
        %v1073 = vld [vmem:[%s447 + $0x30] sm:$0xff]
        %v1074 = vld [vmem:[%s447 + $0x38] sm:$0xff]
        %v1075 = vld [vmem:[%s447 + $0x40] sm:$0xff]
        %v1076 = vld [vmem:[%s447 + $0x48] sm:$0xff]
        %v1077 = vld [vmem:[%s447 + $0x50] sm:$0xff]
        %v1078 = vld [vmem:[%s447 + $0x58] sm:$0xff]
        %v1079 = vld [vmem:[%s447 + $0x60] sm:$0xff]
        %v1080 = vld [vmem:[%s447 + $0x68] sm:$0xff]
        %v1081 = vld [vmem:[%s447 + $0x70] sm:$0xff]
        %v1082 = vld [vmem:[%s447 + $0x78] sm:$0xff]
        %v1083 = vld [vmem:[%s447 + $0x80] sm:$0xff]
        %v1084 = vld [vmem:[%s447 + $0x88] sm:$0xff]
        %v1085 = vld [vmem:[%s447 + $0x90] sm:$0xff]
        %v1086 = vld [vmem:[%s447 + $0x98] sm:$0xff]
        %v1087 = vld [vmem:[%s447 + $0xa0] sm:$0xff]
        %v1088 = vld [vmem:[%s447 + $0xa8] sm:$0xff]
        %v1089 = vld [vmem:[%s447 + $0xb0] sm:$0xff]
        %v1090 = vld [vmem:[%s447 + $0xb8] sm:$0xff]
        %v1091 = vld [vmem:[%s447 + $0xc0] sm:$0xff]
        %v1092 = vld [vmem:[%s447 + $0xc8] sm:$0xff]
        %v1093 = vld [vmem:[%s447 + $0xd0] sm:$0xff]
        %v1094 = vld [vmem:[%s447 + $0xd8] sm:$0xff]
        %v1095 = vld [vmem:[%s447 + $0xe0] sm:$0xff]
        %v1096 = vld [vmem:[%s447 + $0xe8] sm:$0xff]
        %v1097 = vld [vmem:[%s447 + $0xf0] sm:$0xff]
        %v1098 = vld [vmem:[%s447 + $0xf8] sm:$0xff]
        %v1099 = vld [vmem:[%s447 + $0x100] sm:$0xff]
        %v1100 = vld [vmem:[%s447 + $0x108] sm:$0xff]
        %v1101 = vld [vmem:[%s447 + $0x110] sm:$0xff]
        %v1102 = vld [vmem:[%s447 + $0x118] sm:$0xff]
        %v1103 = vld [vmem:[%s447 + $0x120] sm:$0xff]
        %v1104 = vld [vmem:[%s447 + $0x128] sm:$0xff]
        %v1105 = vld [vmem:[%s447 + $0x130] sm:$0xff]
        %v1106 = vld [vmem:[%s447 + $0x138] sm:$0xff]
        %v1107 = vld [vmem:[%s447 + $0x140] sm:$0xff]
        %v1108 = vld [vmem:[%s447 + $0x148] sm:$0xff]
        %v1109 = vld [vmem:[%s447 + $0x150] sm:$0xff]
        %v1110 = vld [vmem:[%s447 + $0x158] sm:$0xff]
        %v1111 = vld [vmem:[%s447 + $0x160] sm:$0xff]
        %v1112 = vld [vmem:[%s447 + $0x168] sm:$0xff]
        %v1113 = vld [vmem:[%s447 + $0x170] sm:$0xff]
        %v1114 = vld [vmem:[%s447 + $0x178] sm:$0xff]
        %v1115 = vld [vmem:[%s447 + $0x180] sm:$0xff]
        %v1116 = vld [vmem:[%s447 + $0x188] sm:$0xff]
        %v1117 = vld [vmem:[%s447 + $0x190] sm:$0xff]
        %v1118 = vld [vmem:[%s447 + $0x198] sm:$0xff]
        %v1119 = vld [vmem:[%s447 + $0x1a0] sm:$0xff]
        %v1120 = vld [vmem:[%s447 + $0x1a8] sm:$0xff]
        %v1121 = vld [vmem:[%s447 + $0x1b0] sm:$0xff]
        %v1122 = vld [vmem:[%s447 + $0x1b8] sm:$0xff]
        %v1123 = vld [vmem:[%s447 + $0x1c0] sm:$0xff]
        %v1124 = vld [vmem:[%s447 + $0x1c8] sm:$0xff]
        %v1125 = vld [vmem:[%s447 + $0x1d0] sm:$0xff]
        %v1126 = vld [vmem:[%s447 + $0x1d8] sm:$0xff]
        %v1127 = vld [vmem:[%s447 + $0x1e0] sm:$0xff]
        %v1128 = vld [vmem:[%s447 + $0x1e8] sm:$0xff]
        %v1129 = vld [vmem:[%s447 + $0x1f0] sm:$0xff]
        %v1130 = vld [vmem:[%s447 + $0x1f8] sm:$0xff]
        %v1195 = vunpack.c.l.b16 %v1067
        %v1196 = vunpack.c.h.b16 %v1067
        %v1197 = vunpack.c.l.b16 %v1068
        %v1198 = vunpack.c.h.b16 %v1068
        %v1199 = vunpack.c.l.b16 %v1069
        %v1200 = vunpack.c.h.b16 %v1069
        %v1201 = vunpack.c.l.b16 %v1070
        %v1202 = vunpack.c.h.b16 %v1070
        %v1203 = vunpack.c.l.b16 %v1071
        %v1204 = vunpack.c.h.b16 %v1071
        %v1205 = vunpack.c.l.b16 %v1072
        %v1206 = vunpack.c.h.b16 %v1072
        %v1207 = vunpack.c.l.b16 %v1073
        %v1208 = vunpack.c.h.b16 %v1073
        %v1209 = vunpack.c.l.b16 %v1074
        %v1210 = vunpack.c.h.b16 %v1074
        %v1211 = vunpack.c.l.b16 %v1075
        %v1212 = vunpack.c.h.b16 %v1075
        %v1213 = vunpack.c.l.b16 %v1076
        %v1214 = vunpack.c.h.b16 %v1076
        %v1215 = vunpack.c.l.b16 %v1077
        %v1216 = vunpack.c.h.b16 %v1077
        %v1217 = vunpack.c.l.b16 %v1078
        %v1218 = vunpack.c.h.b16 %v1078
        %v1219 = vunpack.c.l.b16 %v1079
        %v1220 = vunpack.c.h.b16 %v1079
        %v1221 = vunpack.c.l.b16 %v1080
        %v1222 = vunpack.c.h.b16 %v1080
        %v1223 = vunpack.c.l.b16 %v1081
        %v1224 = vunpack.c.h.b16 %v1081
        %v1225 = vunpack.c.l.b16 %v1082
        %v1226 = vunpack.c.h.b16 %v1082
        %v1227 = vunpack.c.l.b16 %v1083
        %v1228 = vunpack.c.h.b16 %v1083
        %v1229 = vunpack.c.l.b16 %v1084
        %v1230 = vunpack.c.h.b16 %v1084
        %v1231 = vunpack.c.l.b16 %v1085
        %v1232 = vunpack.c.h.b16 %v1085
        %v1233 = vunpack.c.l.b16 %v1086
        %v1234 = vunpack.c.h.b16 %v1086
        %v1235 = vunpack.c.l.b16 %v1087
        %v1236 = vunpack.c.h.b16 %v1087
        %v1237 = vunpack.c.l.b16 %v1088
        %v1238 = vunpack.c.h.b16 %v1088
        %v1239 = vunpack.c.l.b16 %v1089
        %v1240 = vunpack.c.h.b16 %v1089
        %v1241 = vunpack.c.l.b16 %v1090
        %v1242 = vunpack.c.h.b16 %v1090
        %v1243 = vunpack.c.l.b16 %v1091
        %v1244 = vunpack.c.h.b16 %v1091
        %v1245 = vunpack.c.l.b16 %v1092
        %v1246 = vunpack.c.h.b16 %v1092
        %v1247 = vunpack.c.l.b16 %v1093
        %v1248 = vunpack.c.h.b16 %v1093
        %v1249 = vunpack.c.l.b16 %v1094
        %v1250 = vunpack.c.h.b16 %v1094
        %v1251 = vunpack.c.l.b16 %v1095
        %v1252 = vunpack.c.h.b16 %v1095
        %v1253 = vunpack.c.l.b16 %v1096
        %v1254 = vunpack.c.h.b16 %v1096
        %v1255 = vunpack.c.l.b16 %v1097
        %v1256 = vunpack.c.h.b16 %v1097
        %v1257 = vunpack.c.l.b16 %v1098
        %v1258 = vunpack.c.h.b16 %v1098
        %v1259 = vunpack.c.l.b16 %v1099
        %v1260 = vunpack.c.h.b16 %v1099
        %v1261 = vunpack.c.l.b16 %v1100
        %v1262 = vunpack.c.h.b16 %v1100
        %v1263 = vunpack.c.l.b16 %v1101
        %v1264 = vunpack.c.h.b16 %v1101
        %v1265 = vunpack.c.l.b16 %v1102
        %v1266 = vunpack.c.h.b16 %v1102
        %v1267 = vunpack.c.l.b16 %v1103
        %v1268 = vunpack.c.h.b16 %v1103
        %v1269 = vunpack.c.l.b16 %v1104
        %v1270 = vunpack.c.h.b16 %v1104
        %v1271 = vunpack.c.l.b16 %v1105
        %v1272 = vunpack.c.h.b16 %v1105
        %v1273 = vunpack.c.l.b16 %v1106
        %v1274 = vunpack.c.h.b16 %v1106
        %v1275 = vunpack.c.l.b16 %v1107
        %v1276 = vunpack.c.h.b16 %v1107
        %v1277 = vunpack.c.l.b16 %v1108
        %v1278 = vunpack.c.h.b16 %v1108
        %v1279 = vunpack.c.l.b16 %v1109
        %v1280 = vunpack.c.h.b16 %v1109
        %v1281 = vunpack.c.l.b16 %v1110
        %v1282 = vunpack.c.h.b16 %v1110
        %v1283 = vunpack.c.l.b16 %v1111
        %v1284 = vunpack.c.h.b16 %v1111
        %v1285 = vunpack.c.l.b16 %v1112
        %v1286 = vunpack.c.h.b16 %v1112
        %v1287 = vunpack.c.l.b16 %v1113
        %v1288 = vunpack.c.h.b16 %v1113
        %v1289 = vunpack.c.l.b16 %v1114
        %v1290 = vunpack.c.h.b16 %v1114
        %v1291 = vunpack.c.l.b16 %v1115
        %v1292 = vunpack.c.h.b16 %v1115
        %v1293 = vunpack.c.l.b16 %v1116
        %v1294 = vunpack.c.h.b16 %v1116
        %v1295 = vunpack.c.l.b16 %v1117
        %v1296 = vunpack.c.h.b16 %v1117
        %v1297 = vunpack.c.l.b16 %v1118
        %v1298 = vunpack.c.h.b16 %v1118
        %v1299 = vunpack.c.l.b16 %v1119
        %v1300 = vunpack.c.h.b16 %v1119
        %v1301 = vunpack.c.l.b16 %v1120
        %v1302 = vunpack.c.h.b16 %v1120
        %v1303 = vunpack.c.l.b16 %v1121
        %v1304 = vunpack.c.h.b16 %v1121
        %v1305 = vunpack.c.l.b16 %v1122
        %v1306 = vunpack.c.h.b16 %v1122
        %v1307 = vunpack.c.l.b16 %v1123
        %v1308 = vunpack.c.h.b16 %v1123
        %v1309 = vunpack.c.l.b16 %v1124
        %v1310 = vunpack.c.h.b16 %v1124
        %v1311 = vunpack.c.l.b16 %v1125
        %v1312 = vunpack.c.h.b16 %v1125
        %v1313 = vunpack.c.l.b16 %v1126
        %v1314 = vunpack.c.h.b16 %v1126
        %v1315 = vunpack.c.l.b16 %v1127
        %v1316 = vunpack.c.h.b16 %v1127
        %v1317 = vunpack.c.l.b16 %v1128
        %v1318 = vunpack.c.h.b16 %v1128
        %v1319 = vunpack.c.l.b16 %v1129
        %v1320 = vunpack.c.h.b16 %v1129
        %v1321 = vunpack.c.l.b16 %v1130
        %v1322 = vunpack.c.h.b16 %v1130
        %v1323 = vpack.c.b16 %v1197, %v1195
        %v1324 = vpack.c.b16 %v1198, %v1196
        %v1325 = vpack.c.b16 %v1201, %v1199
        %v1326 = vpack.c.b16 %v1202, %v1200
        %v1327 = vpack.c.b16 %v1205, %v1203
        %v1328 = vpack.c.b16 %v1206, %v1204
        %v1329 = vpack.c.b16 %v1209, %v1207
        %v1330 = vpack.c.b16 %v1210, %v1208
        %v1331 = vpack.c.b16 %v1213, %v1211
        %v1332 = vpack.c.b16 %v1214, %v1212
        %v1333 = vpack.c.b16 %v1217, %v1215
        %v1334 = vpack.c.b16 %v1218, %v1216
        %v1335 = vpack.c.b16 %v1221, %v1219
        %v1336 = vpack.c.b16 %v1222, %v1220
        %v1337 = vpack.c.b16 %v1225, %v1223
        %v1338 = vpack.c.b16 %v1226, %v1224
        %v1339 = vpack.c.b16 %v1229, %v1227
        %v1340 = vpack.c.b16 %v1230, %v1228
        %v1341 = vpack.c.b16 %v1233, %v1231
        %v1342 = vpack.c.b16 %v1234, %v1232
        %v1343 = vpack.c.b16 %v1237, %v1235
        %v1344 = vpack.c.b16 %v1238, %v1236
        %v1345 = vpack.c.b16 %v1241, %v1239
        %v1346 = vpack.c.b16 %v1242, %v1240
        %v1347 = vpack.c.b16 %v1245, %v1243
        %v1348 = vpack.c.b16 %v1246, %v1244
        %v1349 = vpack.c.b16 %v1249, %v1247
        %v1350 = vpack.c.b16 %v1250, %v1248
        %v1351 = vpack.c.b16 %v1253, %v1251
        %v1352 = vpack.c.b16 %v1254, %v1252
        %v1353 = vpack.c.b16 %v1257, %v1255
        %v1354 = vpack.c.b16 %v1258, %v1256
        %v1355 = vpack.c.b16 %v1261, %v1259
        %v1356 = vpack.c.b16 %v1262, %v1260
        %v1357 = vpack.c.b16 %v1265, %v1263
        %v1358 = vpack.c.b16 %v1266, %v1264
        %v1359 = vpack.c.b16 %v1269, %v1267
        %v1360 = vpack.c.b16 %v1270, %v1268
        %v1361 = vpack.c.b16 %v1273, %v1271
        %v1362 = vpack.c.b16 %v1274, %v1272
        %v1363 = vpack.c.b16 %v1277, %v1275
        %v1364 = vpack.c.b16 %v1278, %v1276
        %v1365 = vpack.c.b16 %v1281, %v1279
        %v1366 = vpack.c.b16 %v1282, %v1280
        %v1367 = vpack.c.b16 %v1285, %v1283
        %v1368 = vpack.c.b16 %v1286, %v1284
        %v1369 = vpack.c.b16 %v1289, %v1287
        %v1370 = vpack.c.b16 %v1290, %v1288
        %v1371 = vpack.c.b16 %v1293, %v1291
        %v1372 = vpack.c.b16 %v1294, %v1292
        %v1373 = vpack.c.b16 %v1297, %v1295
        %v1374 = vpack.c.b16 %v1298, %v1296
        %v1375 = vpack.c.b16 %v1301, %v1299
        %v1376 = vpack.c.b16 %v1302, %v1300
        %v1377 = vpack.c.b16 %v1305, %v1303
        %v1378 = vpack.c.b16 %v1306, %v1304
        %v1379 = vpack.c.b16 %v1309, %v1307
        %v1380 = vpack.c.b16 %v1310, %v1308
        %v1381 = vpack.c.b16 %v1313, %v1311
        %v1382 = vpack.c.b16 %v1314, %v1312
        %v1383 = vpack.c.b16 %v1317, %v1315
        %v1384 = vpack.c.b16 %v1318, %v1316
        %v1385 = vpack.c.b16 %v1321, %v1319
        %v1386 = vpack.c.b16 %v1322, %v1320
        %1451 = vmatpush.bf16.msra.mxu0 %v1337
        %1452 = vmatpush.bf16.msra.mxu0 %v1335
        %1453 = vmatpush.bf16.msra.mxu0 %v1333
        %1454 = vmatpush.bf16.msra.mxu0 %v1331
        %1455 = vmatpush.bf16.msra.mxu0 %v1329
        %1456 = vmatpush.bf16.msra.mxu0 %v1327
        %1457 = vmatpush.bf16.msra.mxu0 %v1325
        %1458 = vmatpush.bf16.msra.mxu0 %v1323
        %1459 = vmatmul.bf16.gmra.mxu0 %v1063
        %v1460 = vpop.f32.mrf.mxu0
        %v1461 = vadd.f32 0.0, %v1460
        %v1462 = vpop.f32.mrf.mxu0
        %v1463 = vadd.f32 0.0, %v1462
        %1464 = vdwg.mxu0
        %1465 = vmatpush.bf16.msra.mxu0 %v1353
        %1466 = vmatpush.bf16.msra.mxu0 %v1351
        %1467 = vmatpush.bf16.msra.mxu0 %v1349
        %1468 = vmatpush.bf16.msra.mxu0 %v1347
        %1469 = vmatpush.bf16.msra.mxu0 %v1345
        %1470 = vmatpush.bf16.msra.mxu0 %v1343
        %1471 = vmatpush.bf16.msra.mxu0 %v1341
        %1472 = vmatpush.bf16.msra.mxu0 %v1339
        %1473 = vmatmul.bf16.gmra.mxu0 %v1064
        %v1474 = vpop.f32.mrf.mxu0
        %v1475 = vadd.f32 %v1461, %v1474
        %v1476 = vpop.f32.mrf.mxu0
        %v1477 = vadd.f32 %v1463, %v1476
        %1478 = vdwg.mxu0
        %1479 = vmatpush.bf16.msra.mxu0 %v1369
        %1480 = vmatpush.bf16.msra.mxu0 %v1367
        %1481 = vmatpush.bf16.msra.mxu0 %v1365
        %1482 = vmatpush.bf16.msra.mxu0 %v1363
        %1483 = vmatpush.bf16.msra.mxu0 %v1361
        %1484 = vmatpush.bf16.msra.mxu0 %v1359
        %1485 = vmatpush.bf16.msra.mxu0 %v1357
        %1486 = vmatpush.bf16.msra.mxu0 %v1355
        %1487 = vmatmul.bf16.gmra.mxu0 %v1065
        %v1488 = vpop.f32.mrf.mxu0
        %v1489 = vadd.f32 %v1475, %v1488
        %v1490 = vpop.f32.mrf.mxu0
        %v1491 = vadd.f32 %v1477, %v1490
        %1492 = vdwg.mxu0
        %1493 = vmatpush.bf16.msra.mxu0 %v1385
        %1494 = vmatpush.bf16.msra.mxu0 %v1383
        %1495 = vmatpush.bf16.msra.mxu0 %v1381
        %1496 = vmatpush.bf16.msra.mxu0 %v1379
        %1497 = vmatpush.bf16.msra.mxu0 %v1377
        %1498 = vmatpush.bf16.msra.mxu0 %v1375
        %1499 = vmatpush.bf16.msra.mxu0 %v1373
        %1500 = vmatpush.bf16.msra.mxu0 %v1371
        %1501 = vmatmul.bf16.gmra.mxu0 %v1066
        %v1502 = vpop.f32.mrf.mxu0
        %v1503 = vadd.f32 %v1489, %v1502
        %v1504 = vpop.f32.mrf.mxu0
        %v1505 = vadd.f32 %v1491, %v1504
        %1506 = vdwg.mxu0
        %1507 = vmatpush.bf16.msra.mxu0 %v1338
        %1508 = vmatpush.bf16.msra.mxu0 %v1336
        %1509 = vmatpush.bf16.msra.mxu0 %v1334
        %1510 = vmatpush.bf16.msra.mxu0 %v1332
        %1511 = vmatpush.bf16.msra.mxu0 %v1330
        %1512 = vmatpush.bf16.msra.mxu0 %v1328
        %1513 = vmatpush.bf16.msra.mxu0 %v1326
        %1514 = vmatpush.bf16.msra.mxu0 %v1324
        %1515 = vmatmul.bf16.gmra.mxu0 %v1063
        %v1516 = vpop.f32.mrf.mxu0
        %v1517 = vadd.f32 0.0, %v1516
        %v1518 = vpop.f32.mrf.mxu0
        %v1519 = vadd.f32 0.0, %v1518
        %1520 = vdwg.mxu0
        %1521 = vmatpush.bf16.msra.mxu0 %v1354
        %1522 = vmatpush.bf16.msra.mxu0 %v1352
        %1523 = vmatpush.bf16.msra.mxu0 %v1350
        %1524 = vmatpush.bf16.msra.mxu0 %v1348
        %1525 = vmatpush.bf16.msra.mxu0 %v1346
        %1526 = vmatpush.bf16.msra.mxu0 %v1344
        %1527 = vmatpush.bf16.msra.mxu0 %v1342
        %1528 = vmatpush.bf16.msra.mxu0 %v1340
        %1529 = vmatmul.bf16.gmra.mxu0 %v1064
        %v1530 = vpop.f32.mrf.mxu0
        %v1531 = vadd.f32 %v1517, %v1530
        %v1532 = vpop.f32.mrf.mxu0
        %v1533 = vadd.f32 %v1519, %v1532
        %1534 = vdwg.mxu0
        %1535 = vmatpush.bf16.msra.mxu0 %v1370
        %1536 = vmatpush.bf16.msra.mxu0 %v1368
        %1537 = vmatpush.bf16.msra.mxu0 %v1366
        %1538 = vmatpush.bf16.msra.mxu0 %v1364
        %1539 = vmatpush.bf16.msra.mxu0 %v1362
        %1540 = vmatpush.bf16.msra.mxu0 %v1360
        %1541 = vmatpush.bf16.msra.mxu0 %v1358
        %1542 = vmatpush.bf16.msra.mxu0 %v1356
        %1543 = vmatmul.bf16.gmra.mxu0 %v1065
        %v1544 = vpop.f32.mrf.mxu0
        %v1545 = vadd.f32 %v1531, %v1544
        %v1546 = vpop.f32.mrf.mxu0
        %v1547 = vadd.f32 %v1533, %v1546
        %1548 = vdwg.mxu0
        %1549 = vmatpush.bf16.msra.mxu0 %v1386
        %1550 = vmatpush.bf16.msra.mxu0 %v1384
        %1551 = vmatpush.bf16.msra.mxu0 %v1382
        %1552 = vmatpush.bf16.msra.mxu0 %v1380
        %1553 = vmatpush.bf16.msra.mxu0 %v1378
        %1554 = vmatpush.bf16.msra.mxu0 %v1376
        %1555 = vmatpush.bf16.msra.mxu0 %v1374
        %1556 = vmatpush.bf16.msra.mxu0 %v1372
        %1557 = vmatmul.bf16.gmra.mxu0 %v1066
        %v1558 = vpop.f32.mrf.mxu0
        %v1559 = vadd.f32 %v1545, %v1558
        %v1560 = vpop.f32.mrf.mxu0
        %v1561 = vadd.f32 %v1547, %v1560
        %1562 = vdwg.mxu0
        %v1563 = vadd.f32 %v1059, %v1503
        %v1564 = vadd.f32 %v1060, %v1559
        %v1565 = vadd.f32 %v1061, %v1505
        %v1566 = vadd.f32 %v1062, %v1561
        %1567 = vst [vmem:[#allocation2] sm:$0xff] %v1563
        %1568 = vst [vmem:[#allocation2 + $0x8] sm:$0xff] %v1564
        %1569 = vst [vmem:[#allocation2 + $0x10] sm:$0xff] %v1565
        %1570 = vst [vmem:[#allocation2 + $0x18] sm:$0xff] %v1566
        %p1571 = scmp.eq.s32.totalorder %s21, 1
        // Predicated region
        $region68: #{tracing_transformer_block_wrapper.32} parent=58 // pred_check
          %p1572 = pneg %p1571
        $region69: #{tracing_transformer_block_wrapper.32} parent=58 // pred_check_branch
          %1574 = sbr.rel (%p1572) target = $region71
        $region70: #{tracing_transformer_block_wrapper.32} parent=58 // pred_region
          %v1575 = vld [vmem:[#allocation2] sm:$0xff]
          %v1576 = vld [vmem:[#allocation2 + $0x8] sm:$0xff]
          %v1577 = vld [vmem:[#allocation2 + $0x10] sm:$0xff]
          %v1578 = vld [vmem:[#allocation2 + $0x18] sm:$0xff]
          %v1579 = vld [vmem:[%s4] sm:$0x3]
          %v1580 = vunpack.c.l.bf16 %v1579
          %v1582 = vperm.slane %v1580, 0
          %v1583 = vperm.slane %v1580, 2
          %v1586 = vperm.slane %v1582, 0
          %v1587 = vperm.slane %v1583, 0
          %v1588 = vadd.f32 %v1575, %v1586
          %v1589 = vadd.f32 %v1576, %v1587
          %v1590 = vadd.f32 %v1577, %v1586
          %v1591 = vadd.f32 %v1578, %v1587
          %v1592 = vpack.c.bf16 %v1589, %v1588
          %v1593 = vpack.c.bf16 %v1591, %v1590
          %1594 = vst [vmem:[%s454] sm:$0xff] %v1592
          %1595 = vst [vmem:[%s454 + $0x8] sm:$0xff] %v1593
        $region71: #{tracing_transformer_block_wrapper.32} parent=58 // pred_fallthru
          _
        %s1596 = smul.u32 2, %s20
        %p1597 = scmp.lt.s32.totalorder %s1596, 1
        %s1598 = scalar_select %p1597, %s1596, 1
        %s1599 = smul.addr %s1598, 2
        %s1600 = smul.addr %s1599, 4
        %s1601 = scalar_lea.vmem %s5, %s1600
        // Predicated region
        $region72: #{tracing_transformer_block_wrapper.32} parent=58 // pred_check
          %p1602 = pneg %p171
        $region73: #{tracing_transformer_block_wrapper.32} parent=58 // pred_check_branch
          %1604 = sbr.rel (%p1602) target = $region75
        $region74: #{tracing_transformer_block_wrapper.32} parent=58 // pred_region
          %s1605 = smul.u32 2, %s20
        $region75: #{tracing_transformer_block_wrapper.32} parent=58 // pred_fallthru
          _
        // Predicated region
        $region76: #{tracing_transformer_block_wrapper.32} parent=58 // pred_check
          %p1606 = pneg %p171
        $region77: #{tracing_transformer_block_wrapper.32} parent=58 // pred_check_branch
          %1608 = sbr.rel (%p1606) target = $region79
        $region78: #{tracing_transformer_block_wrapper.32} parent=58 // pred_region
          %s1609 = smul.u32 2, %s20
          %p1610 = scmp.lt.s32.totalorder %s1609, 1
          %s1611 = scalar_select %p1610, %s1609, 1
          %s1612 = smul.addr %s1611, 2
          %s1613 = smul.addr %s1612, 4
          %s1614 = scalar_lea.vmem %s5, %s1613
        $region79: #{tracing_transformer_block_wrapper.32} parent=58 // pred_fallthru
          _
      $region59: #{tracing_transformer_block_wrapper.32} parent=5 // pred_fallthru
        _
      %p1615 = scmp.le.s32.totalorder 2, %s11
      // Predicated region
      $region80: #{tracing_transformer_block_wrapper.32} parent=5 // pred_check
        %p1616 = pneg %p1615
      $region81: #{tracing_transformer_block_wrapper.32} parent=5 // pred_check_branch
        %1618 = sbr.rel (%p1616) target = $region83
      $region82: #{tracing_transformer_block_wrapper.32} parent=5 // pred_region
        %s1619 = ssub.s32 %s11, 2
      $region83: #{tracing_transformer_block_wrapper.32} parent=5 // pred_fallthru
        _
    $region6: #{tracing_transformer_block_wrapper.32} parent=1 // loop_footer
      %s15 = sadd.s32 1, %s11
    $region7: #{tracing_transformer_block_wrapper.32} parent=1 // loop_footer_branch
      %10 = sbr.rel target = $region3
    $region8: #{tracing_transformer_block_wrapper.32} parent=1 // loop_exit
      _

// kernel: tracing_transformer_block_wrapper.30
$region0: #{tracing_transformer_block_wrapper.30}
  #allocation0 [shape = 'u32[]', space=smem, size = 0x4, offset = 0x4, fixed_abs, tag = 'smem constant byte address 0x4 - core index']
  #allocation1 [shape = 'u32[72,128]{1,0:T(1,128)}', space=vmem, size = 0x9000, scoped, tag = 'internal scratch']
  #allocation2 [shape = 'f32[48,256]{1,0:T(8,128)}', space=vmem, size = 0xc000, scoped, tag = 'scratch operand']
  %s0 = inlined_call_operand.vmem [shape: bf16[48,256], index: 0, kind: input, shape index: {}]
  %s1 = inlined_call_operand.vmem [shape: bf16[256,1024], index: 1, kind: input, shape index: {}]
  %s2 = inlined_call_operand.vmem [shape: bf16[1,1024], index: 2, kind: input, shape index: {}]
  %s3 = inlined_call_operand.vmem [shape: bf16[1024,256], index: 3, kind: input, shape index: {}]
  %s4 = inlined_call_operand.vmem [shape: bf16[1,256], index: 4, kind: input, shape index: {}]
  %s5 = inlined_call_operand.vmem [shape: bf16[48,256], index: 5, kind: output, shape index: {}]
  %s6 = sld [smem:[#allocation0]]
  $region84: #{tracing_transformer_block_wrapper.30} parent=0
    _
  %s8 = ssub.s32 1, %s6
  %s9 = scalar_select 0, %s8, %s6
  $region1: #{tracing_transformer_block_wrapper.30} parent=0
    #allocation3 [shape = 'u8[524288]{0}', space=vmem, size = 0x80000, scoped, tag = 'input window, operand 1']
    loop: start=0, step=1, limit=4
    $region2: #{tracing_transformer_block_wrapper.30} parent=1 // loop_pre_header
      _
    $region3: #{tracing_transformer_block_wrapper.30} parent=1 // loop_header
      %s11 = sphi 0, %s15
      %p12 = scmp.ge.s32.totalorder %s11, 4
      %s18 = sphi 0, %s30
      %s19 = sphi 0, %s26
      %s20 = sphi 0, %s18
      %s21 = sphi 0, %s19
      %s22 = sphi 0, %s20
      %s23 = sphi 0, %s21
      %s33 = sphi 0, %s35
      %s36 = sphi 0, %s33
      %s37 = sphi 0, %s36
      %s53 = sphi 0, %s37
      %s59 = sphi 0, %s61
      %s62 = sphi 0, %s59
      %s63 = sphi 0, %s62
      %s79 = sphi 0, %s63
      %s85 = sphi 0, %s87
      %s88 = sphi 0, %s85
      %s89 = sphi 0, %s88
      %s105 = sphi 0, %s89
      %s111 = sphi 0, %s113
      %s114 = sphi 0, %s111
      %s115 = sphi 0, %s114
      %s131 = sphi 0, %s115
      %s135 = sphi 0, %s135
      %s137 = sphi 0, %s135
      %s138 = sphi 0, %s137
      %s152 = sphi 0, %s138
      %s158 = sphi 0, %s160
      %s161 = sphi 0, %s158
      %s162 = sphi 0, %s161
      %s178 = sphi 0, %s162
    $region4: #{tracing_transformer_block_wrapper.30} parent=1 // loop_header_branch
      %14 = sbr.rel (%p12) target = $region8
    $region5: #{tracing_transformer_block_wrapper.30} parent=1 // loop_body
      %s16 = ssub.s32 %s11, 1
      %s17 = ssub.s32 %s11, 2
      %s24 = sadd.s32 1, %s19
      %p25 = scmp.ge.s32.totalorder %s24, 2
      %s26 = scalar_select %p25, 0, %s24
      %s27 = sadd.s32 1, %s18
      %s28 = scalar_select %p25, %s27, %s18
      %p29 = scmp.ge.s32.totalorder %s28, 1
      %s30 = scalar_select %p29, 0, %s28
      %s31 = ssub.s32 %s18, %s30
      %p32 = scmp.eq.s32.totalorder %s31, 0
      %s34 = sadd.s32 %s33, 1
      %s35 = scalar_select %p32, %s33, %s34
      %p38 = pneg %p32
      %p39 = scmp.eq.s32.totalorder %s11, 1
      %p40 = por %p38, %p39
      %p41 = scmp.ne.s32.totalorder %s33, %s36
      %p42 = scmp.eq.s32.totalorder %s11, 0
      %p43 = por %p41, %p42
      %p44 = scmp.ne.s32.totalorder %s33, %s36
      %p45 = scmp.eq.s32.totalorder %s16, 1
      %p46 = por %p44, %p45
      %p47 = scmp.ne.s32.totalorder %s36, %s37
      %p48 = scmp.eq.s32.totalorder %s16, 0
      %p49 = por %p47, %p48
      %p50 = scmp.ne.s32.totalorder %s36, %s37
      %p51 = scmp.eq.s32.totalorder %s17, 1
      %p52 = por %p50, %p51
      %p54 = scmp.ne.s32.totalorder %s37, %s53
      %p55 = scmp.eq.s32.totalorder %s17, 0
      %p56 = por %p54, %p55
      %s57 = ssub.s32 %s19, %s26
      %p58 = scmp.eq.s32.totalorder %s57, 0
      %s60 = sadd.s32 %s59, 1
      %s61 = scalar_select %p58, %s59, %s60
      %p64 = pneg %p58
      %p65 = scmp.eq.s32.totalorder %s11, 1
      %p66 = por %p64, %p65
      %p67 = scmp.ne.s32.totalorder %s59, %s62
      %p68 = scmp.eq.s32.totalorder %s11, 0
      %p69 = por %p67, %p68
      %p70 = scmp.ne.s32.totalorder %s59, %s62
      %p71 = scmp.eq.s32.totalorder %s16, 1
      %p72 = por %p70, %p71
      %p73 = scmp.ne.s32.totalorder %s62, %s63
      %p74 = scmp.eq.s32.totalorder %s16, 0
      %p75 = por %p73, %p74
      %p76 = scmp.ne.s32.totalorder %s62, %s63
      %p77 = scmp.eq.s32.totalorder %s17, 1
      %p78 = por %p76, %p77
      %p80 = scmp.ne.s32.totalorder %s63, %s79
      %p81 = scmp.eq.s32.totalorder %s17, 0
      %p82 = por %p80, %p81
      %s83 = ssub.s32 %s19, %s26
      %p84 = scmp.eq.s32.totalorder %s83, 0
      %s86 = sadd.s32 %s85, 1
      %s87 = scalar_select %p84, %s85, %s86
      %p90 = pneg %p84
      %p91 = scmp.eq.s32.totalorder %s11, 1
      %p92 = por %p90, %p91
      %p93 = scmp.ne.s32.totalorder %s85, %s88
      %p94 = scmp.eq.s32.totalorder %s11, 0
      %p95 = por %p93, %p94
      %p96 = scmp.ne.s32.totalorder %s85, %s88
      %p97 = scmp.eq.s32.totalorder %s16, 1
      %p98 = por %p96, %p97
      %p99 = scmp.ne.s32.totalorder %s88, %s89
      %p100 = scmp.eq.s32.totalorder %s16, 0
      %p101 = por %p99, %p100
      %p102 = scmp.ne.s32.totalorder %s88, %s89
      %p103 = scmp.eq.s32.totalorder %s17, 1
      %p104 = por %p102, %p103
      %p106 = scmp.ne.s32.totalorder %s89, %s105
      %p107 = scmp.eq.s32.totalorder %s17, 0
      %p108 = por %p106, %p107
      %s109 = ssub.s32 %s19, %s26
      %p110 = scmp.eq.s32.totalorder %s109, 0
      %s112 = sadd.s32 %s111, 1
      %s113 = scalar_select %p110, %s111, %s112
      %p116 = pneg %p110
      %p117 = scmp.eq.s32.totalorder %s11, 1
      %p118 = por %p116, %p117
      %p119 = scmp.ne.s32.totalorder %s111, %s114
      %p120 = scmp.eq.s32.totalorder %s11, 0
      %p121 = por %p119, %p120
      %p122 = scmp.ne.s32.totalorder %s111, %s114
      %p123 = scmp.eq.s32.totalorder %s16, 1
      %p124 = por %p122, %p123
      %p125 = scmp.ne.s32.totalorder %s114, %s115
      %p126 = scmp.eq.s32.totalorder %s16, 0
      %p127 = por %p125, %p126
      %p128 = scmp.ne.s32.totalorder %s114, %s115
      %p129 = scmp.eq.s32.totalorder %s17, 1
      %p130 = por %p128, %p129
      %p132 = scmp.ne.s32.totalorder %s115, %s131
      %p133 = scmp.eq.s32.totalorder %s17, 0
      %p134 = por %p132, %p133
      %s136 = sadd.s32 %s135, 1
      %p139 = scmp.eq.s32.totalorder %s11, 1
      %p140 = scmp.ne.s32.totalorder %s135, %s137
      %p141 = scmp.eq.s32.totalorder %s11, 0
      %p142 = por %p140, %p141
      %p143 = scmp.ne.s32.totalorder %s135, %s137
      %p144 = scmp.eq.s32.totalorder %s16, 1
      %p145 = por %p143, %p144
      %p146 = scmp.ne.s32.totalorder %s137, %s138
      %p147 = scmp.eq.s32.totalorder %s16, 0
      %p148 = por %p146, %p147
      %p149 = scmp.ne.s32.totalorder %s137, %s138
      %p150 = scmp.eq.s32.totalorder %s17, 1
      %p151 = por %p149, %p150
      %p153 = scmp.ne.s32.totalorder %s138, %s152
      %p154 = scmp.eq.s32.totalorder %s17, 0
      %p155 = por %p153, %p154
      %s156 = ssub.s32 %s18, %s30
      %p157 = scmp.eq.s32.totalorder %s156, 0
      %s159 = sadd.s32 %s158, 1
      %s160 = scalar_select %p157, %s158, %s159
      %p163 = pneg %p157
      %p164 = scmp.eq.s32.totalorder %s11, 1
      %p165 = por %p163, %p164
      %p166 = scmp.ne.s32.totalorder %s158, %s161
      %p167 = scmp.eq.s32.totalorder %s11, 0
      %p168 = por %p166, %p167
      %p169 = scmp.ne.s32.totalorder %s158, %s161
      %p170 = scmp.eq.s32.totalorder %s16, 1
      %p171 = por %p169, %p170
      %p172 = scmp.ne.s32.totalorder %s161, %s162
      %p173 = scmp.eq.s32.totalorder %s16, 0
      %p174 = por %p172, %p173
      %p175 = scmp.ne.s32.totalorder %s161, %s162
      %p176 = scmp.eq.s32.totalorder %s17, 1
      %p177 = por %p175, %p176
      %p179 = scmp.ne.s32.totalorder %s162, %s178
      %p180 = scmp.eq.s32.totalorder %s17, 0
      %p181 = por %p179, %p180
      %p182 = scmp.le.s32.totalorder 1, %s11
      %p183 = scmp.lt.s32.totalorder %s11, 3
      %p184 = pnand %p182, %p183
      %p185 = pneg %p184
      // Predicated region
      $region9: #{tracing_transformer_block_wrapper.30} parent=5 // pred_check
        _
      $region10: #{tracing_transformer_block_wrapper.30} parent=5 // pred_check_branch
        %187 = sbr.rel (%p184) target = $region12
      $region11: #{tracing_transformer_block_wrapper.30} parent=5 // pred_region
        %s188 = ssub.s32 %s11, 1
        // Predicated region
        $region13: #{tracing_transformer_block_wrapper.30} parent=11 // pred_check
          %p189 = pneg %p49
        $region14: #{tracing_transformer_block_wrapper.30} parent=11 // pred_check_branch
          %191 = sbr.rel (%p189) target = $region16
        $region15: #{tracing_transformer_block_wrapper.30} parent=11 // pred_region
          %s192 = smul.u32 6, %s20
          %p193 = scmp.lt.s32.totalorder %s192, 5
          %s194 = scalar_select %p193, %s192, 5
          %s195 = smul.addr %s194, 2
          %s196 = smul.addr %s195, 4
          %s197 = scalar_lea.vmem %s0, %s196
          %s198 = smul.u32 6, %s20
        $region16: #{tracing_transformer_block_wrapper.30} parent=11 // pred_fallthru
          _
        // Predicated region
        $region17: #{tracing_transformer_block_wrapper.30} parent=11 // pred_check
          %p199 = pneg %p148
        $region18: #{tracing_transformer_block_wrapper.30} parent=11 // pred_check_branch
          %201 = sbr.rel (%p199) target = $region20
        $region19: #{tracing_transformer_block_wrapper.30} parent=11 // pred_region
          _
        $region20: #{tracing_transformer_block_wrapper.30} parent=11 // pred_fallthru
          _
      $region12: #{tracing_transformer_block_wrapper.30} parent=5 // pred_fallthru
        _
      %p202 = scmp.lt.s32.totalorder %s11, 2
      // Predicated region
      $region21: #{tracing_transformer_block_wrapper.30} parent=5 // pred_check
        %p203 = pneg %p202
      $region22: #{tracing_transformer_block_wrapper.30} parent=5 // pred_check_branch
        %205 = sbr.rel (%p203) target = $region24
      $region23: #{tracing_transformer_block_wrapper.30} parent=5 // pred_region
        // Predicated region
        $region25: #{tracing_transformer_block_wrapper.30} parent=23 // pred_check
          %p206 = pneg %p69
        $region26: #{tracing_transformer_block_wrapper.30} parent=23 // pred_check_branch
          %208 = sbr.rel (%p206) target = $region28
        $region27: #{tracing_transformer_block_wrapper.30} parent=23 // pred_region
          %s209 = sand.u32 %s59, 1
          %s210 = sand.u32 %s59, 1
          %s211 = smul.addr %s210, 512
          %s212 = scalar_lea.vmem [#allocation3], %s211
          %s213 = smul.u32 4, %s19
          %s214 = smul.addr %s213, 4
          %s215 = scalar_lea.vmem %s1, %s214
          // Predicated region
          $region29: #{tracing_transformer_block_wrapper.30} parent=27 // pred_check
            _
          $region30: #{tracing_transformer_block_wrapper.30} parent=27 // pred_check_branch
            %217 = sbr.rel (0) target = $region32
          $region31: #{tracing_transformer_block_wrapper.30} parent=27 // pred_region
            // Predicated region
            $region33: #{tracing_transformer_block_wrapper.30} parent=31 // pred_check
              _
            $region34: #{tracing_transformer_block_wrapper.30} parent=31 // pred_check_branch
              %219 = sbr.rel (0) target = $region36
            $region35: #{tracing_transformer_block_wrapper.30} parent=31 // pred_region
              loop: start=0, step=1, limit=1
              $region37: #{tracing_transformer_block_wrapper.30} parent=35 // loop_pre_header
                _
              $region38: #{tracing_transformer_block_wrapper.30} parent=35 // loop_header
                %s221 = sphi 0, %s225
                %p222 = scmp.ge.s32.totalorder %s221, 1
                %s226 = sphi %s215, %s215
                %s227 = sphi %s212, %s212
              $region39: #{tracing_transformer_block_wrapper.30} parent=35 // loop_header_branch
                %224 = sbr.rel (%p222) target = $region43
              $region40: #{tracing_transformer_block_wrapper.30} parent=35 // loop_body
                %v228 = vld [vmem:[%s226] sm:$0xff]
                %229 = vst [vmem:[%s227] sm:$0xff] %v228
                %v230 = vld [vmem:[%s226 + $0x8] sm:$0xff]
                %231 = vst [vmem:[%s227 + $0x8] sm:$0xff] %v230
                %v232 = vld [vmem:[%s226 + $0x20] sm:$0xff]
                %233 = vst [vmem:[%s227 + $0x10] sm:$0xff] %v232
                %v234 = vld [vmem:[%s226 + $0x28] sm:$0xff]
                %235 = vst [vmem:[%s227 + $0x18] sm:$0xff] %v234
                %v236 = vld [vmem:[%s226 + $0x40] sm:$0xff]
                %237 = vst [vmem:[%s227 + $0x20] sm:$0xff] %v236
                %v238 = vld [vmem:[%s226 + $0x48] sm:$0xff]
                %239 = vst [vmem:[%s227 + $0x28] sm:$0xff] %v238
                %v240 = vld [vmem:[%s226 + $0x60] sm:$0xff]
                %241 = vst [vmem:[%s227 + $0x30] sm:$0xff] %v240
                %v242 = vld [vmem:[%s226 + $0x68] sm:$0xff]
                %243 = vst [vmem:[%s227 + $0x38] sm:$0xff] %v242
                %v244 = vld [vmem:[%s226 + $0x80] sm:$0xff]
                %245 = vst [vmem:[%s227 + $0x40] sm:$0xff] %v244
                %v246 = vld [vmem:[%s226 + $0x88] sm:$0xff]
                %247 = vst [vmem:[%s227 + $0x48] sm:$0xff] %v246
                %v248 = vld [vmem:[%s226 + $0xa0] sm:$0xff]
                %249 = vst [vmem:[%s227 + $0x50] sm:$0xff] %v248
                %v250 = vld [vmem:[%s226 + $0xa8] sm:$0xff]
                %251 = vst [vmem:[%s227 + $0x58] sm:$0xff] %v250
                %v252 = vld [vmem:[%s226 + $0xc0] sm:$0xff]
                %253 = vst [vmem:[%s227 + $0x60] sm:$0xff] %v252
                %v254 = vld [vmem:[%s226 + $0xc8] sm:$0xff]
                %255 = vst [vmem:[%s227 + $0x68] sm:$0xff] %v254
                %v256 = vld [vmem:[%s226 + $0xe0] sm:$0xff]
                %257 = vst [vmem:[%s227 + $0x70] sm:$0xff] %v256
                %v258 = vld [vmem:[%s226 + $0xe8] sm:$0xff]
                %259 = vst [vmem:[%s227 + $0x78] sm:$0xff] %v258
                %v260 = vld [vmem:[%s226 + $0x100] sm:$0xff]
                %261 = vst [vmem:[%s227 + $0x80] sm:$0xff] %v260
                %v262 = vld [vmem:[%s226 + $0x108] sm:$0xff]
                %263 = vst [vmem:[%s227 + $0x88] sm:$0xff] %v262
                %v264 = vld [vmem:[%s226 + $0x120] sm:$0xff]
                %265 = vst [vmem:[%s227 + $0x90] sm:$0xff] %v264
                %v266 = vld [vmem:[%s226 + $0x128] sm:$0xff]
                %267 = vst [vmem:[%s227 + $0x98] sm:$0xff] %v266
                %v268 = vld [vmem:[%s226 + $0x140] sm:$0xff]
                %269 = vst [vmem:[%s227 + $0xa0] sm:$0xff] %v268
                %v270 = vld [vmem:[%s226 + $0x148] sm:$0xff]
                %271 = vst [vmem:[%s227 + $0xa8] sm:$0xff] %v270
                %v272 = vld [vmem:[%s226 + $0x160] sm:$0xff]
                %273 = vst [vmem:[%s227 + $0xb0] sm:$0xff] %v272
                %v274 = vld [vmem:[%s226 + $0x168] sm:$0xff]
                %275 = vst [vmem:[%s227 + $0xb8] sm:$0xff] %v274
                %v276 = vld [vmem:[%s226 + $0x180] sm:$0xff]
                %277 = vst [vmem:[%s227 + $0xc0] sm:$0xff] %v276
                %v278 = vld [vmem:[%s226 + $0x188] sm:$0xff]
                %279 = vst [vmem:[%s227 + $0xc8] sm:$0xff] %v278
                %v280 = vld [vmem:[%s226 + $0x1a0] sm:$0xff]
                %281 = vst [vmem:[%s227 + $0xd0] sm:$0xff] %v280
                %v282 = vld [vmem:[%s226 + $0x1a8] sm:$0xff]
                %283 = vst [vmem:[%s227 + $0xd8] sm:$0xff] %v282
                %v284 = vld [vmem:[%s226 + $0x1c0] sm:$0xff]
                %285 = vst [vmem:[%s227 + $0xe0] sm:$0xff] %v284
                %v286 = vld [vmem:[%s226 + $0x1c8] sm:$0xff]
                %287 = vst [vmem:[%s227 + $0xe8] sm:$0xff] %v286
                %v288 = vld [vmem:[%s226 + $0x1e0] sm:$0xff]
                %289 = vst [vmem:[%s227 + $0xf0] sm:$0xff] %v288
                %v290 = vld [vmem:[%s226 + $0x1e8] sm:$0xff]
                %291 = vst [vmem:[%s227 + $0xf8] sm:$0xff] %v290
                %v292 = vld [vmem:[%s226 + $0x200] sm:$0xff]
                %293 = vst [vmem:[%s227 + $0x100] sm:$0xff] %v292
                %v294 = vld [vmem:[%s226 + $0x208] sm:$0xff]
                %295 = vst [vmem:[%s227 + $0x108] sm:$0xff] %v294
                %v296 = vld [vmem:[%s226 + $0x220] sm:$0xff]
                %297 = vst [vmem:[%s227 + $0x110] sm:$0xff] %v296
                %v298 = vld [vmem:[%s226 + $0x228] sm:$0xff]
                %299 = vst [vmem:[%s227 + $0x118] sm:$0xff] %v298
                %v300 = vld [vmem:[%s226 + $0x240] sm:$0xff]
                %301 = vst [vmem:[%s227 + $0x120] sm:$0xff] %v300
                %v302 = vld [vmem:[%s226 + $0x248] sm:$0xff]
                %303 = vst [vmem:[%s227 + $0x128] sm:$0xff] %v302
                %v304 = vld [vmem:[%s226 + $0x260] sm:$0xff]
                %305 = vst [vmem:[%s227 + $0x130] sm:$0xff] %v304
                %v306 = vld [vmem:[%s226 + $0x268] sm:$0xff]
                %307 = vst [vmem:[%s227 + $0x138] sm:$0xff] %v306
                %v308 = vld [vmem:[%s226 + $0x280] sm:$0xff]
                %309 = vst [vmem:[%s227 + $0x140] sm:$0xff] %v308
                %v310 = vld [vmem:[%s226 + $0x288] sm:$0xff]
                %311 = vst [vmem:[%s227 + $0x148] sm:$0xff] %v310
                %v312 = vld [vmem:[%s226 + $0x2a0] sm:$0xff]
                %313 = vst [vmem:[%s227 + $0x150] sm:$0xff] %v312
                %v314 = vld [vmem:[%s226 + $0x2a8] sm:$0xff]
                %315 = vst [vmem:[%s227 + $0x158] sm:$0xff] %v314
                %v316 = vld [vmem:[%s226 + $0x2c0] sm:$0xff]
                %317 = vst [vmem:[%s227 + $0x160] sm:$0xff] %v316
                %v318 = vld [vmem:[%s226 + $0x2c8] sm:$0xff]
                %319 = vst [vmem:[%s227 + $0x168] sm:$0xff] %v318
                %v320 = vld [vmem:[%s226 + $0x2e0] sm:$0xff]
                %321 = vst [vmem:[%s227 + $0x170] sm:$0xff] %v320
                %v322 = vld [vmem:[%s226 + $0x2e8] sm:$0xff]
                %323 = vst [vmem:[%s227 + $0x178] sm:$0xff] %v322
                %v324 = vld [vmem:[%s226 + $0x300] sm:$0xff]
                %325 = vst [vmem:[%s227 + $0x180] sm:$0xff] %v324
                %v326 = vld [vmem:[%s226 + $0x308] sm:$0xff]
                %327 = vst [vmem:[%s227 + $0x188] sm:$0xff] %v326
                %v328 = vld [vmem:[%s226 + $0x320] sm:$0xff]
                %329 = vst [vmem:[%s227 + $0x190] sm:$0xff] %v328
                %v330 = vld [vmem:[%s226 + $0x328] sm:$0xff]
                %331 = vst [vmem:[%s227 + $0x198] sm:$0xff] %v330
                %v332 = vld [vmem:[%s226 + $0x340] sm:$0xff]
                %333 = vst [vmem:[%s227 + $0x1a0] sm:$0xff] %v332
                %v334 = vld [vmem:[%s226 + $0x348] sm:$0xff]
                %335 = vst [vmem:[%s227 + $0x1a8] sm:$0xff] %v334
                %v336 = vld [vmem:[%s226 + $0x360] sm:$0xff]
                %337 = vst [vmem:[%s227 + $0x1b0] sm:$0xff] %v336
                %v338 = vld [vmem:[%s226 + $0x368] sm:$0xff]
                %339 = vst [vmem:[%s227 + $0x1b8] sm:$0xff] %v338
                %v340 = vld [vmem:[%s226 + $0x380] sm:$0xff]
                %341 = vst [vmem:[%s227 + $0x1c0] sm:$0xff] %v340
                %v342 = vld [vmem:[%s226 + $0x388] sm:$0xff]
                %343 = vst [vmem:[%s227 + $0x1c8] sm:$0xff] %v342
                %v344 = vld [vmem:[%s226 + $0x3a0] sm:$0xff]
                %345 = vst [vmem:[%s227 + $0x1d0] sm:$0xff] %v344
                %v346 = vld [vmem:[%s226 + $0x3a8] sm:$0xff]
                %347 = vst [vmem:[%s227 + $0x1d8] sm:$0xff] %v346
                %v348 = vld [vmem:[%s226 + $0x3c0] sm:$0xff]
                %349 = vst [vmem:[%s227 + $0x1e0] sm:$0xff] %v348
                %v350 = vld [vmem:[%s226 + $0x3c8] sm:$0xff]
                %351 = vst [vmem:[%s227 + $0x1e8] sm:$0xff] %v350
                %v352 = vld [vmem:[%s226 + $0x3e0] sm:$0xff]
                %353 = vst [vmem:[%s227 + $0x1f0] sm:$0xff] %v352
                %v354 = vld [vmem:[%s226 + $0x3e8] sm:$0xff]
                %355 = vst [vmem:[%s227 + $0x1f8] sm:$0xff] %v354
              $region41: #{tracing_transformer_block_wrapper.30} parent=35 // loop_footer
                %s225 = sadd.s32 1, %s221
              $region42: #{tracing_transformer_block_wrapper.30} parent=35 // loop_footer_branch
                %220 = sbr.rel target = $region38
              $region43: #{tracing_transformer_block_wrapper.30} parent=35 // loop_exit
                _
            $region36: #{tracing_transformer_block_wrapper.30} parent=31 // pred_fallthru
              _
            // Predicated region
            $region44: #{tracing_transformer_block_wrapper.30} parent=31 // pred_check
              _
            $region45: #{tracing_transformer_block_wrapper.30} parent=31 // pred_check_branch
              %357 = sbr.rel target = $region47
            $region46: #{tracing_transformer_block_wrapper.30} parent=31 // pred_region
              _
            $region47: #{tracing_transformer_block_wrapper.30} parent=31 // pred_fallthru
              _
          $region32: #{tracing_transformer_block_wrapper.30} parent=27 // pred_fallthru
            _
          %358 = vnop
        $region28: #{tracing_transformer_block_wrapper.30} parent=23 // pred_fallthru
          _
        // Predicated region
        $region48: #{tracing_transformer_block_wrapper.30} parent=23 // pred_check
          %p359 = pneg %p95
        $region49: #{tracing_transformer_block_wrapper.30} parent=23 // pred_check_branch
          %361 = sbr.rel (%p359) target = $region51
        $region50: #{tracing_transformer_block_wrapper.30} parent=23 // pred_region
          %s362 = smul.u32 4, %s19
          %p363 = scmp.lt.s32.totalorder %s362, 7
          %s364 = scalar_select %p363, %s362, 7
          %s365 = scalar_lea.vmem %s2, %s364
          %s366 = smul.u32 4, %s19
        $region51: #{tracing_transformer_block_wrapper.30} parent=23 // pred_fallthru
          _
        // Predicated region
        $region52: #{tracing_transformer_block_wrapper.30} parent=23 // pred_check
          %p367 = pneg %p121
        $region53: #{tracing_transformer_block_wrapper.30} parent=23 // pred_check_branch
          %369 = sbr.rel (%p367) target = $region55
        $region54: #{tracing_transformer_block_wrapper.30} parent=23 // pred_region
          %s370 = smul.u32 64, %s19
          %p371 = scmp.lt.s32.totalorder %s370, 127
          %s372 = scalar_select %p371, %s370, 127
          %s373 = smul.addr %s372, 2
          %s374 = smul.addr %s373, 4
          %s375 = scalar_lea.vmem %s3, %s374
          %s376 = smul.u32 64, %s19
        $region55: #{tracing_transformer_block_wrapper.30} parent=23 // pred_fallthru
          _
      $region24: #{tracing_transformer_block_wrapper.30} parent=5 // pred_fallthru
        _
      %p377 = scmp.le.s32.totalorder 1, %s11
      %p378 = scmp.lt.s32.totalorder %s11, 3
      %p379 = pnand %p377, %p378
      %p380 = pneg %p379
      // Predicated region
      $region56: #{tracing_transformer_block_wrapper.30} parent=5 // pred_check
        _
      $region57: #{tracing_transformer_block_wrapper.30} parent=5 // pred_check_branch
        %382 = sbr.rel (%p379) target = $region59
      $region58: #{tracing_transformer_block_wrapper.30} parent=5 // pred_region
        %s383 = ssub.s32 %s11, 1
        %s384 = sand.u32 %s62, 1
        %s385 = sand.u32 %s62, 1
        %s386 = smul.addr %s385, 512
        %s387 = scalar_lea.vmem [#allocation3], %s386
        // Predicated region
        $region60: #{tracing_transformer_block_wrapper.30} parent=58 // pred_check
          %p388 = pneg %p75
        $region61: #{tracing_transformer_block_wrapper.30} parent=58 // pred_check_branch
          %390 = sbr.rel (%p388) target = $region63
        $region62: #{tracing_transformer_block_wrapper.30} parent=58 // pred_region
          _
        $region63: #{tracing_transformer_block_wrapper.30} parent=58 // pred_fallthru
          _
        %s391 = smul.u32 6, %s20
        %p392 = scmp.lt.s32.totalorder %s391, 5
        %s393 = scalar_select %p392, %s391, 5
        %s394 = smul.addr %s393, 2
        %s395 = smul.addr %s394, 4
        %s396 = scalar_lea.vmem %s0, %s395
        %p397 = pneg %p49
        %p398 = pneg %p46
        %s399 = sand.u32 %s62, 1
        %s400 = sand.u32 %s62, 1
        %s401 = smul.addr %s400, 512
        %s402 = scalar_lea.vmem [#allocation3], %s401
        %p403 = pneg %p75
        %p404 = pneg %p72
        %s405 = smul.u32 4, %s21
        %p406 = scmp.lt.s32.totalorder %s405, 7
        %s407 = scalar_select %p406, %s405, 7
        %s408 = scalar_lea.vmem %s2, %s407
        %p409 = pneg %p101
        %p410 = pneg %p98
        %s411 = smul.u32 64, %s21
        %p412 = scmp.lt.s32.totalorder %s411, 127
        %s413 = scalar_select %p412, %s411, 127
        %s414 = smul.addr %s413, 2
        %s415 = smul.addr %s414, 4
        %s416 = scalar_lea.vmem %s3, %s415
        %p417 = pneg %p127
        %p418 = pneg %p124
        %p419 = pneg %p148
        %p420 = pneg %p145
        %p421 = pneg %p174
        %p422 = pneg %p171
        %s423 = smul.u32 6, %s20
        %p424 = scmp.lt.s32.totalorder %s423, 5
        %s425 = scalar_select %p424, %s423, 5
        %s426 = smul.addr %s425, 2
        %s427 = smul.addr %s426, 4
        %s428 = scalar_lea.vmem %s5, %s427
        %s429 = smul.u32 6, %s20
        %p430 = scmp.lt.s32.totalorder %s429, 5
        %s431 = scalar_select %p430, %s429, 5
        %s432 = smul.addr %s431, 2
        %s433 = smul.addr %s432, 4
        %s434 = scalar_lea.vmem %s0, %s433
        %s435 = smul.u32 6, %s20
        %s436 = smul.u32 4, %s21
        %s437 = smul.u32 4, %s21
        %p438 = scmp.lt.s32.totalorder %s437, 7
        %s439 = scalar_select %p438, %s437, 7
        %s440 = scalar_lea.vmem %s2, %s439
        %s441 = smul.u32 4, %s21
        %s442 = smul.u32 64, %s21
        %p443 = scmp.lt.s32.totalorder %s442, 127
        %s444 = scalar_select %p443, %s442, 127
        %s445 = smul.addr %s444, 2
        %s446 = smul.addr %s445, 4
        %s447 = scalar_lea.vmem %s3, %s446
        %s448 = smul.u32 64, %s21
        %s449 = smul.u32 6, %s20
        %p450 = scmp.lt.s32.totalorder %s449, 5
        %s451 = scalar_select %p450, %s449, 5
        %s452 = smul.addr %s451, 2
        %s453 = smul.addr %s452, 4
        %s454 = scalar_lea.vmem %s5, %s453
        %s455 = smul.u32 6, %s20
        %p456 = scmp.eq.s32.totalorder %s21, 0
        // Predicated region
        $region64: #{tracing_transformer_block_wrapper.30} parent=58 // pred_check
          %p457 = pneg %p456
        $region65: #{tracing_transformer_block_wrapper.30} parent=58 // pred_check_branch
          %459 = sbr.rel (%p457) target = $region67
        $region66: #{tracing_transformer_block_wrapper.30} parent=58 // pred_region
          %460 = vst [vmem:[#allocation2] sm:$0xff] 0.0
          %461 = vst [vmem:[#allocation2 + $0x8] sm:$0xff] 0.0
          %462 = vst [vmem:[#allocation2 + $0x10] sm:$0xff] 0.0
          %463 = vst [vmem:[#allocation2 + $0x18] sm:$0xff] 0.0
          %464 = vst [vmem:[#allocation2 + $0x20] sm:$0xff] 0.0
          %465 = vst [vmem:[#allocation2 + $0x28] sm:$0xff] 0.0
          %466 = vst [vmem:[#allocation2 + $0x30] sm:$0xff] 0.0
          %467 = vst [vmem:[#allocation2 + $0x38] sm:$0xff] 0.0
          %468 = vst [vmem:[#allocation2 + $0x40] sm:$0xff] 0.0
          %469 = vst [vmem:[#allocation2 + $0x48] sm:$0xff] 0.0
          %470 = vst [vmem:[#allocation2 + $0x50] sm:$0xff] 0.0
          %471 = vst [vmem:[#allocation2 + $0x58] sm:$0xff] 0.0
        $region67: #{tracing_transformer_block_wrapper.30} parent=58 // pred_fallthru
          _
        %v472 = vld [vmem:[%s434] sm:$0xff]
        %v473 = vld [vmem:[%s434 + $0x8] sm:$0xff]
        %v474 = vld [vmem:[%s434 + $0x10] sm:$0xff]
        %v475 = vld [vmem:[%s434 + $0x18] sm:$0xff]
        %v476 = vld [vmem:[%s434 + $0x20] sm:$0xff]
        %v477 = vld [vmem:[%s434 + $0x28] sm:$0xff]
        %v478 = vld [vmem:[%s387] sm:$0xff]
        %v479 = vld [vmem:[%s387 + $0x8] sm:$0xff]
        %v480 = vld [vmem:[%s387 + $0x10] sm:$0xff]
        %v481 = vld [vmem:[%s387 + $0x18] sm:$0xff]
        %v482 = vld [vmem:[%s387 + $0x20] sm:$0xff]
        %v483 = vld [vmem:[%s387 + $0x28] sm:$0xff]
        %v484 = vld [vmem:[%s387 + $0x30] sm:$0xff]
        %v485 = vld [vmem:[%s387 + $0x38] sm:$0xff]
        %v486 = vld [vmem:[%s387 + $0x40] sm:$0xff]
        %v487 = vld [vmem:[%s387 + $0x48] sm:$0xff]
        %v488 = vld [vmem:[%s387 + $0x50] sm:$0xff]
        %v489 = vld [vmem:[%s387 + $0x58] sm:$0xff]
        %v490 = vld [vmem:[%s387 + $0x60] sm:$0xff]
        %v491 = vld [vmem:[%s387 + $0x68] sm:$0xff]
        %v492 = vld [vmem:[%s387 + $0x70] sm:$0xff]
        %v493 = vld [vmem:[%s387 + $0x78] sm:$0xff]
        %v494 = vld [vmem:[%s387 + $0x80] sm:$0xff]
        %v495 = vld [vmem:[%s387 + $0x88] sm:$0xff]
        %v496 = vld [vmem:[%s387 + $0x90] sm:$0xff]
        %v497 = vld [vmem:[%s387 + $0x98] sm:$0xff]
        %v498 = vld [vmem:[%s387 + $0xa0] sm:$0xff]
        %v499 = vld [vmem:[%s387 + $0xa8] sm:$0xff]
        %v500 = vld [vmem:[%s387 + $0xb0] sm:$0xff]
        %v501 = vld [vmem:[%s387 + $0xb8] sm:$0xff]
        %v502 = vld [vmem:[%s387 + $0xc0] sm:$0xff]
        %v503 = vld [vmem:[%s387 + $0xc8] sm:$0xff]
        %v504 = vld [vmem:[%s387 + $0xd0] sm:$0xff]
        %v505 = vld [vmem:[%s387 + $0xd8] sm:$0xff]
        %v506 = vld [vmem:[%s387 + $0xe0] sm:$0xff]
        %v507 = vld [vmem:[%s387 + $0xe8] sm:$0xff]
        %v508 = vld [vmem:[%s387 + $0xf0] sm:$0xff]
        %v509 = vld [vmem:[%s387 + $0xf8] sm:$0xff]
        %v510 = vld [vmem:[%s387 + $0x100] sm:$0xff]
        %v511 = vld [vmem:[%s387 + $0x108] sm:$0xff]
        %v512 = vld [vmem:[%s387 + $0x110] sm:$0xff]
        %v513 = vld [vmem:[%s387 + $0x118] sm:$0xff]
        %v514 = vld [vmem:[%s387 + $0x120] sm:$0xff]
        %v515 = vld [vmem:[%s387 + $0x128] sm:$0xff]
        %v516 = vld [vmem:[%s387 + $0x130] sm:$0xff]
        %v517 = vld [vmem:[%s387 + $0x138] sm:$0xff]
        %v518 = vld [vmem:[%s387 + $0x140] sm:$0xff]
        %v519 = vld [vmem:[%s387 + $0x148] sm:$0xff]
        %v520 = vld [vmem:[%s387 + $0x150] sm:$0xff]
        %v521 = vld [vmem:[%s387 + $0x158] sm:$0xff]
        %v522 = vld [vmem:[%s387 + $0x160] sm:$0xff]
        %v523 = vld [vmem:[%s387 + $0x168] sm:$0xff]
        %v524 = vld [vmem:[%s387 + $0x170] sm:$0xff]
        %v525 = vld [vmem:[%s387 + $0x178] sm:$0xff]
        %v526 = vld [vmem:[%s387 + $0x180] sm:$0xff]
        %v527 = vld [vmem:[%s387 + $0x188] sm:$0xff]
        %v528 = vld [vmem:[%s387 + $0x190] sm:$0xff]
        %v529 = vld [vmem:[%s387 + $0x198] sm:$0xff]
        %v530 = vld [vmem:[%s387 + $0x1a0] sm:$0xff]
        %v531 = vld [vmem:[%s387 + $0x1a8] sm:$0xff]
        %v532 = vld [vmem:[%s387 + $0x1b0] sm:$0xff]
        %v533 = vld [vmem:[%s387 + $0x1b8] sm:$0xff]
        %v534 = vld [vmem:[%s387 + $0x1c0] sm:$0xff]
        %v535 = vld [vmem:[%s387 + $0x1c8] sm:$0xff]
        %v536 = vld [vmem:[%s387 + $0x1d0] sm:$0xff]
        %v537 = vld [vmem:[%s387 + $0x1d8] sm:$0xff]
        %v538 = vld [vmem:[%s387 + $0x1e0] sm:$0xff]
        %v539 = vld [vmem:[%s387 + $0x1e8] sm:$0xff]
        %v540 = vld [vmem:[%s387 + $0x1f0] sm:$0xff]
        %v541 = vld [vmem:[%s387 + $0x1f8] sm:$0xff]
        %v542 = vld [vmem:[%s440] sm:$0xf]
        %v543 = vunpack.c.l.bf16 %v542
        %v545 = vperm.slane %v543, 0
        %v546 = vperm.slane %v543, 2
        %v547 = vperm.slane %v543, 4
        %v548 = vperm.slane %v543, 6
        %v553 = vperm.slane %v545, 0
        %v554 = vperm.slane %v546, 0
        %v555 = vperm.slane %v547, 0
        %v556 = vperm.slane %v548, 0
        %v563 = vunpack.c.l.b16 %v472
        %v564 = vunpack.c.h.b16 %v472
        %v565 = vunpack.c.l.b16 %v473
        %v566 = vunpack.c.h.b16 %v473
        %v567 = vunpack.c.l.b16 %v474
        %v568 = vunpack.c.h.b16 %v474
        %v569 = vunpack.c.l.b16 %v475
        %v570 = vunpack.c.h.b16 %v475
        %v571 = vunpack.c.l.b16 %v476
        %v572 = vunpack.c.h.b16 %v476
        %v573 = vunpack.c.l.b16 %v477
        %v574 = vunpack.c.h.b16 %v477
        %v575 = vpack.c.b16 %v565, %v563
        %v576 = vpack.c.b16 %v566, %v564
        %v577 = vpack.c.b16 %v569, %v567
        %v578 = vpack.c.b16 %v570, %v568
        %v579 = vpack.c.b16 %v573, %v571
        %v580 = vpack.c.b16 %v574, %v572
        %v651 = vunpack.c.l.b16 %v478
        %v652 = vunpack.c.h.b16 %v478
        %v653 = vunpack.c.l.b16 %v479
        %v654 = vunpack.c.h.b16 %v479
        %v655 = vunpack.c.l.b16 %v480
        %v656 = vunpack.c.h.b16 %v480
        %v657 = vunpack.c.l.b16 %v481
        %v658 = vunpack.c.h.b16 %v481
        %v659 = vunpack.c.l.b16 %v482
        %v660 = vunpack.c.h.b16 %v482
        %v661 = vunpack.c.l.b16 %v483
        %v662 = vunpack.c.h.b16 %v483
        %v663 = vunpack.c.l.b16 %v484
        %v664 = vunpack.c.h.b16 %v484
        %v665 = vunpack.c.l.b16 %v485
        %v666 = vunpack.c.h.b16 %v485
        %v667 = vunpack.c.l.b16 %v486
        %v668 = vunpack.c.h.b16 %v486
        %v669 = vunpack.c.l.b16 %v487
        %v670 = vunpack.c.h.b16 %v487
        %v671 = vunpack.c.l.b16 %v488
        %v672 = vunpack.c.h.b16 %v488
        %v673 = vunpack.c.l.b16 %v489
        %v674 = vunpack.c.h.b16 %v489
        %v675 = vunpack.c.l.b16 %v490
        %v676 = vunpack.c.h.b16 %v490
        %v677 = vunpack.c.l.b16 %v491
        %v678 = vunpack.c.h.b16 %v491
        %v679 = vunpack.c.l.b16 %v492
        %v680 = vunpack.c.h.b16 %v492
        %v681 = vunpack.c.l.b16 %v493
        %v682 = vunpack.c.h.b16 %v493
        %v683 = vunpack.c.l.b16 %v494
        %v684 = vunpack.c.h.b16 %v494
        %v685 = vunpack.c.l.b16 %v495
        %v686 = vunpack.c.h.b16 %v495
        %v687 = vunpack.c.l.b16 %v496
        %v688 = vunpack.c.h.b16 %v496
        %v689 = vunpack.c.l.b16 %v497
        %v690 = vunpack.c.h.b16 %v497
        %v691 = vunpack.c.l.b16 %v498
        %v692 = vunpack.c.h.b16 %v498
        %v693 = vunpack.c.l.b16 %v499
        %v694 = vunpack.c.h.b16 %v499
        %v695 = vunpack.c.l.b16 %v500
        %v696 = vunpack.c.h.b16 %v500
        %v697 = vunpack.c.l.b16 %v501
        %v698 = vunpack.c.h.b16 %v501
        %v699 = vunpack.c.l.b16 %v502
        %v700 = vunpack.c.h.b16 %v502
        %v701 = vunpack.c.l.b16 %v503
        %v702 = vunpack.c.h.b16 %v503
        %v703 = vunpack.c.l.b16 %v504
        %v704 = vunpack.c.h.b16 %v504
        %v705 = vunpack.c.l.b16 %v505
        %v706 = vunpack.c.h.b16 %v505
        %v707 = vunpack.c.l.b16 %v506
        %v708 = vunpack.c.h.b16 %v506
        %v709 = vunpack.c.l.b16 %v507
        %v710 = vunpack.c.h.b16 %v507
        %v711 = vunpack.c.l.b16 %v508
        %v712 = vunpack.c.h.b16 %v508
        %v713 = vunpack.c.l.b16 %v509
        %v714 = vunpack.c.h.b16 %v509
        %v715 = vunpack.c.l.b16 %v510
        %v716 = vunpack.c.h.b16 %v510
        %v717 = vunpack.c.l.b16 %v511
        %v718 = vunpack.c.h.b16 %v511
        %v719 = vunpack.c.l.b16 %v512
        %v720 = vunpack.c.h.b16 %v512
        %v721 = vunpack.c.l.b16 %v513
        %v722 = vunpack.c.h.b16 %v513
        %v723 = vunpack.c.l.b16 %v514
        %v724 = vunpack.c.h.b16 %v514
        %v725 = vunpack.c.l.b16 %v515
        %v726 = vunpack.c.h.b16 %v515
        %v727 = vunpack.c.l.b16 %v516
        %v728 = vunpack.c.h.b16 %v516
        %v729 = vunpack.c.l.b16 %v517
        %v730 = vunpack.c.h.b16 %v517
        %v731 = vunpack.c.l.b16 %v518
        %v732 = vunpack.c.h.b16 %v518
        %v733 = vunpack.c.l.b16 %v519
        %v734 = vunpack.c.h.b16 %v519
        %v735 = vunpack.c.l.b16 %v520
        %v736 = vunpack.c.h.b16 %v520
        %v737 = vunpack.c.l.b16 %v521
        %v738 = vunpack.c.h.b16 %v521
        %v739 = vunpack.c.l.b16 %v522
        %v740 = vunpack.c.h.b16 %v522
        %v741 = vunpack.c.l.b16 %v523
        %v742 = vunpack.c.h.b16 %v523
        %v743 = vunpack.c.l.b16 %v524
        %v744 = vunpack.c.h.b16 %v524
        %v745 = vunpack.c.l.b16 %v525
        %v746 = vunpack.c.h.b16 %v525
        %v747 = vunpack.c.l.b16 %v526
        %v748 = vunpack.c.h.b16 %v526
        %v749 = vunpack.c.l.b16 %v527
        %v750 = vunpack.c.h.b16 %v527
        %v751 = vunpack.c.l.b16 %v528
        %v752 = vunpack.c.h.b16 %v528
        %v753 = vunpack.c.l.b16 %v529
        %v754 = vunpack.c.h.b16 %v529
        %v755 = vunpack.c.l.b16 %v530
        %v756 = vunpack.c.h.b16 %v530
        %v757 = vunpack.c.l.b16 %v531
        %v758 = vunpack.c.h.b16 %v531
        %v759 = vunpack.c.l.b16 %v532
        %v760 = vunpack.c.h.b16 %v532
        %v761 = vunpack.c.l.b16 %v533
        %v762 = vunpack.c.h.b16 %v533
        %v763 = vunpack.c.l.b16 %v534
        %v764 = vunpack.c.h.b16 %v534
        %v765 = vunpack.c.l.b16 %v535
        %v766 = vunpack.c.h.b16 %v535
        %v767 = vunpack.c.l.b16 %v536
        %v768 = vunpack.c.h.b16 %v536
        %v769 = vunpack.c.l.b16 %v537
        %v770 = vunpack.c.h.b16 %v537
        %v771 = vunpack.c.l.b16 %v538
        %v772 = vunpack.c.h.b16 %v538
        %v773 = vunpack.c.l.b16 %v539
        %v774 = vunpack.c.h.b16 %v539
        %v775 = vunpack.c.l.b16 %v540
        %v776 = vunpack.c.h.b16 %v540
        %v777 = vunpack.c.l.b16 %v541
        %v778 = vunpack.c.h.b16 %v541
        %v779 = vpack.c.b16 %v655, %v651
        %v780 = vpack.c.b16 %v656, %v652
        %v781 = vpack.c.b16 %v657, %v653
        %v782 = vpack.c.b16 %v658, %v654
        %v783 = vpack.c.b16 %v663, %v659
        %v784 = vpack.c.b16 %v664, %v660
        %v785 = vpack.c.b16 %v665, %v661
        %v786 = vpack.c.b16 %v666, %v662
        %v787 = vpack.c.b16 %v671, %v667
        %v788 = vpack.c.b16 %v672, %v668
        %v789 = vpack.c.b16 %v673, %v669
        %v790 = vpack.c.b16 %v674, %v670
        %v791 = vpack.c.b16 %v679, %v675
        %v792 = vpack.c.b16 %v680, %v676
        %v793 = vpack.c.b16 %v681, %v677
        %v794 = vpack.c.b16 %v682, %v678
        %v795 = vpack.c.b16 %v687, %v683
        %v796 = vpack.c.b16 %v688, %v684
        %v797 = vpack.c.b16 %v689, %v685
        %v798 = vpack.c.b16 %v690, %v686
        %v799 = vpack.c.b16 %v695, %v691
        %v800 = vpack.c.b16 %v696, %v692
        %v801 = vpack.c.b16 %v697, %v693
        %v802 = vpack.c.b16 %v698, %v694
        %v803 = vpack.c.b16 %v703, %v699
        %v804 = vpack.c.b16 %v704, %v700
        %v805 = vpack.c.b16 %v705, %v701
        %v806 = vpack.c.b16 %v706, %v702
        %v807 = vpack.c.b16 %v711, %v707
        %v808 = vpack.c.b16 %v712, %v708
        %v809 = vpack.c.b16 %v713, %v709
        %v810 = vpack.c.b16 %v714, %v710
        %v811 = vpack.c.b16 %v719, %v715
        %v812 = vpack.c.b16 %v720, %v716
        %v813 = vpack.c.b16 %v721, %v717
        %v814 = vpack.c.b16 %v722, %v718
        %v815 = vpack.c.b16 %v727, %v723
        %v816 = vpack.c.b16 %v728, %v724
        %v817 = vpack.c.b16 %v729, %v725
        %v818 = vpack.c.b16 %v730, %v726
        %v819 = vpack.c.b16 %v735, %v731
        %v820 = vpack.c.b16 %v736, %v732
        %v821 = vpack.c.b16 %v737, %v733
        %v822 = vpack.c.b16 %v738, %v734
        %v823 = vpack.c.b16 %v743, %v739
        %v824 = vpack.c.b16 %v744, %v740
        %v825 = vpack.c.b16 %v745, %v741
        %v826 = vpack.c.b16 %v746, %v742
        %v827 = vpack.c.b16 %v751, %v747
        %v828 = vpack.c.b16 %v752, %v748
        %v829 = vpack.c.b16 %v753, %v749
        %v830 = vpack.c.b16 %v754, %v750
        %v831 = vpack.c.b16 %v759, %v755
        %v832 = vpack.c.b16 %v760, %v756
        %v833 = vpack.c.b16 %v761, %v757
        %v834 = vpack.c.b16 %v762, %v758
        %v835 = vpack.c.b16 %v767, %v763
        %v836 = vpack.c.b16 %v768, %v764
        %v837 = vpack.c.b16 %v769, %v765
        %v838 = vpack.c.b16 %v770, %v766
        %v839 = vpack.c.b16 %v775, %v771
        %v840 = vpack.c.b16 %v776, %v772
        %v841 = vpack.c.b16 %v777, %v773
        %v842 = vpack.c.b16 %v778, %v774
        %907 = vmatpush.bf16.msra.mxu0 %v807
        %908 = vmatpush.bf16.msra.mxu0 %v803
        %909 = vmatpush.bf16.msra.mxu0 %v799
        %910 = vmatpush.bf16.msra.mxu0 %v795
        %911 = vmatpush.bf16.msra.mxu0 %v791
        %912 = vmatpush.bf16.msra.mxu0 %v787
        %913 = vmatpush.bf16.msra.mxu0 %v783
        %914 = vmatpush.bf16.msra.mxu0 %v779
        %915 = vmatmul.bf16.gmra.mxu0 %v575
        %v916 = vpop.f32.mrf.mxu0
        %v917 = vadd.f32 %v553, %v916
        %v918 = vpop.f32.mrf.mxu0
        %v919 = vadd.f32 %v553, %v918
        %920 = vmatmul.bf16.gmra.mxu0 %v577
        %v921 = vpop.f32.mrf.mxu0
        %v922 = vadd.f32 %v553, %v921
        %v923 = vpop.f32.mrf.mxu0
        %v924 = vadd.f32 %v553, %v923
        %925 = vmatmul.bf16.gmra.mxu0 %v579
        %v926 = vpop.f32.mrf.mxu0
        %v927 = vadd.f32 %v553, %v926
        %v928 = vpop.f32.mrf.mxu0
        %v929 = vadd.f32 %v553, %v928
        %930 = vdwg.mxu0
        %931 = vmatpush.bf16.msra.mxu0 %v839
        %932 = vmatpush.bf16.msra.mxu0 %v835
        %933 = vmatpush.bf16.msra.mxu0 %v831
        %934 = vmatpush.bf16.msra.mxu0 %v827
        %935 = vmatpush.bf16.msra.mxu0 %v823
        %936 = vmatpush.bf16.msra.mxu0 %v819
        %937 = vmatpush.bf16.msra.mxu0 %v815
        %938 = vmatpush.bf16.msra.mxu0 %v811
        %939 = vmatmul.bf16.gmra.mxu0 %v576
        %v940 = vpop.f32.mrf.mxu0
        %v941 = vadd.f32 %v917, %v940
        %v942 = vpop.f32.mrf.mxu0
        %v943 = vadd.f32 %v919, %v942
        %944 = vmatmul.bf16.gmra.mxu0 %v578
        %v945 = vpop.f32.mrf.mxu0
        %v946 = vadd.f32 %v922, %v945
        %v947 = vpop.f32.mrf.mxu0
        %v948 = vadd.f32 %v924, %v947
        %949 = vmatmul.bf16.gmra.mxu0 %v580
        %v950 = vpop.f32.mrf.mxu0
        %v951 = vadd.f32 %v927, %v950
        %v952 = vpop.f32.mrf.mxu0
        %v953 = vadd.f32 %v929, %v952
        %954 = vdwg.mxu0
        %955 = vmatpush.bf16.msra.mxu0 %v808
        %956 = vmatpush.bf16.msra.mxu0 %v804
        %957 = vmatpush.bf16.msra.mxu0 %v800
        %958 = vmatpush.bf16.msra.mxu0 %v796
        %959 = vmatpush.bf16.msra.mxu0 %v792
        %960 = vmatpush.bf16.msra.mxu0 %v788
        %961 = vmatpush.bf16.msra.mxu0 %v784
        %962 = vmatpush.bf16.msra.mxu0 %v780
        %963 = vmatmul.bf16.gmra.mxu0 %v575
        %v964 = vpop.f32.mrf.mxu0
        %v965 = vadd.f32 %v554, %v964
        %v966 = vpop.f32.mrf.mxu0
        %v967 = vadd.f32 %v554, %v966
        %968 = vmatmul.bf16.gmra.mxu0 %v577
        %v969 = vpop.f32.mrf.mxu0
        %v970 = vadd.f32 %v554, %v969
        %v971 = vpop.f32.mrf.mxu0
        %v972 = vadd.f32 %v554, %v971
        %973 = vmatmul.bf16.gmra.mxu0 %v579
        %v974 = vpop.f32.mrf.mxu0
        %v975 = vadd.f32 %v554, %v974
        %v976 = vpop.f32.mrf.mxu0
        %v977 = vadd.f32 %v554, %v976
        %978 = vdwg.mxu0
        %979 = vmatpush.bf16.msra.mxu0 %v840
        %980 = vmatpush.bf16.msra.mxu0 %v836
        %981 = vmatpush.bf16.msra.mxu0 %v832
        %982 = vmatpush.bf16.msra.mxu0 %v828
        %983 = vmatpush.bf16.msra.mxu0 %v824
        %984 = vmatpush.bf16.msra.mxu0 %v820
        %985 = vmatpush.bf16.msra.mxu0 %v816
        %986 = vmatpush.bf16.msra.mxu0 %v812
        %987 = vmatmul.bf16.gmra.mxu0 %v576
        %v988 = vpop.f32.mrf.mxu0
        %v989 = vadd.f32 %v965, %v988
        %v990 = vpop.f32.mrf.mxu0
        %v991 = vadd.f32 %v967, %v990
        %992 = vmatmul.bf16.gmra.mxu0 %v578
        %v993 = vpop.f32.mrf.mxu0
        %v994 = vadd.f32 %v970, %v993
        %v995 = vpop.f32.mrf.mxu0
        %v996 = vadd.f32 %v972, %v995
        %997 = vmatmul.bf16.gmra.mxu0 %v580
        %v998 = vpop.f32.mrf.mxu0
        %v999 = vadd.f32 %v975, %v998
        %v1000 = vpop.f32.mrf.mxu0
        %v1001 = vadd.f32 %v977, %v1000
        %1002 = vdwg.mxu0
        %1003 = vmatpush.bf16.msra.mxu0 %v809
        %1004 = vmatpush.bf16.msra.mxu0 %v805
        %1005 = vmatpush.bf16.msra.mxu0 %v801
        %1006 = vmatpush.bf16.msra.mxu0 %v797
        %1007 = vmatpush.bf16.msra.mxu0 %v793
        %1008 = vmatpush.bf16.msra.mxu0 %v789
        %1009 = vmatpush.bf16.msra.mxu0 %v785
        %1010 = vmatpush.bf16.msra.mxu0 %v781
        %1011 = vmatmul.bf16.gmra.mxu0 %v575
        %v1012 = vpop.f32.mrf.mxu0
        %v1013 = vadd.f32 %v555, %v1012
        %v1014 = vpop.f32.mrf.mxu0
        %v1015 = vadd.f32 %v555, %v1014
        %1016 = vmatmul.bf16.gmra.mxu0 %v577
        %v1017 = vpop.f32.mrf.mxu0
        %v1018 = vadd.f32 %v555, %v1017
        %v1019 = vpop.f32.mrf.mxu0
        %v1020 = vadd.f32 %v555, %v1019
        %1021 = vmatmul.bf16.gmra.mxu0 %v579
        %v1022 = vpop.f32.mrf.mxu0
        %v1023 = vadd.f32 %v555, %v1022
        %v1024 = vpop.f32.mrf.mxu0
        %v1025 = vadd.f32 %v555, %v1024
        %1026 = vdwg.mxu0
        %1027 = vmatpush.bf16.msra.mxu0 %v841
        %1028 = vmatpush.bf16.msra.mxu0 %v837
        %1029 = vmatpush.bf16.msra.mxu0 %v833
        %1030 = vmatpush.bf16.msra.mxu0 %v829
        %1031 = vmatpush.bf16.msra.mxu0 %v825
        %1032 = vmatpush.bf16.msra.mxu0 %v821
        %1033 = vmatpush.bf16.msra.mxu0 %v817
        %1034 = vmatpush.bf16.msra.mxu0 %v813
        %1035 = vmatmul.bf16.gmra.mxu0 %v576
        %v1036 = vpop.f32.mrf.mxu0
        %v1037 = vadd.f32 %v1013, %v1036
        %v1038 = vpop.f32.mrf.mxu0
        %v1039 = vadd.f32 %v1015, %v1038
        %1040 = vmatmul.bf16.gmra.mxu0 %v578
        %v1041 = vpop.f32.mrf.mxu0
        %v1042 = vadd.f32 %v1018, %v1041
        %v1043 = vpop.f32.mrf.mxu0
        %v1044 = vadd.f32 %v1020, %v1043
        %1045 = vmatmul.bf16.gmra.mxu0 %v580
        %v1046 = vpop.f32.mrf.mxu0
        %v1047 = vadd.f32 %v1023, %v1046
        %v1048 = vpop.f32.mrf.mxu0
        %v1049 = vadd.f32 %v1025, %v1048
        %1050 = vdwg.mxu0
        %1051 = vmatpush.bf16.msra.mxu0 %v810
        %1052 = vmatpush.bf16.msra.mxu0 %v806
        %1053 = vmatpush.bf16.msra.mxu0 %v802
        %1054 = vmatpush.bf16.msra.mxu0 %v798
        %1055 = vmatpush.bf16.msra.mxu0 %v794
        %1056 = vmatpush.bf16.msra.mxu0 %v790
        %1057 = vmatpush.bf16.msra.mxu0 %v786
        %1058 = vmatpush.bf16.msra.mxu0 %v782
        %1059 = vmatmul.bf16.gmra.mxu0 %v575
        %v1060 = vpop.f32.mrf.mxu0
        %v1061 = vadd.f32 %v556, %v1060
        %v1062 = vpop.f32.mrf.mxu0
        %v1063 = vadd.f32 %v556, %v1062
        %1064 = vmatmul.bf16.gmra.mxu0 %v577
        %v1065 = vpop.f32.mrf.mxu0
        %v1066 = vadd.f32 %v556, %v1065
        %v1067 = vpop.f32.mrf.mxu0
        %v1068 = vadd.f32 %v556, %v1067
        %1069 = vmatmul.bf16.gmra.mxu0 %v579
        %v1070 = vpop.f32.mrf.mxu0
        %v1071 = vadd.f32 %v556, %v1070
        %v1072 = vpop.f32.mrf.mxu0
        %v1073 = vadd.f32 %v556, %v1072
        %1074 = vdwg.mxu0
        %1075 = vmatpush.bf16.msra.mxu0 %v842
        %1076 = vmatpush.bf16.msra.mxu0 %v838
        %1077 = vmatpush.bf16.msra.mxu0 %v834
        %1078 = vmatpush.bf16.msra.mxu0 %v830
        %1079 = vmatpush.bf16.msra.mxu0 %v826
        %1080 = vmatpush.bf16.msra.mxu0 %v822
        %1081 = vmatpush.bf16.msra.mxu0 %v818
        %1082 = vmatpush.bf16.msra.mxu0 %v814
        %1083 = vmatmul.bf16.gmra.mxu0 %v576
        %v1084 = vpop.f32.mrf.mxu0
        %v1085 = vadd.f32 %v1061, %v1084
        %v1086 = vpop.f32.mrf.mxu0
        %v1087 = vadd.f32 %v1063, %v1086
        %1088 = vmatmul.bf16.gmra.mxu0 %v578
        %v1089 = vpop.f32.mrf.mxu0
        %v1090 = vadd.f32 %v1066, %v1089
        %v1091 = vpop.f32.mrf.mxu0
        %v1092 = vadd.f32 %v1068, %v1091
        %1093 = vmatmul.bf16.gmra.mxu0 %v580
        %v1094 = vpop.f32.mrf.mxu0
        %v1095 = vadd.f32 %v1071, %v1094
        %v1096 = vpop.f32.mrf.mxu0
        %v1097 = vadd.f32 %v1073, %v1096
        %1098 = vdwg.mxu0
        %v1099 = vmul.f32 %v941, 0.5
        %v1100 = vmul.f32 %v989, 0.5
        %v1101 = vmul.f32 %v1037, 0.5
        %v1102 = vmul.f32 %v1085, 0.5
        %v1103 = vmul.f32 %v943, 0.5
        %v1104 = vmul.f32 %v991, 0.5
        %v1105 = vmul.f32 %v1039, 0.5
        %v1106 = vmul.f32 %v1087, 0.5
        %v1107 = vmul.f32 %v946, 0.5
        %v1108 = vmul.f32 %v994, 0.5
        %v1109 = vmul.f32 %v1042, 0.5
        %v1110 = vmul.f32 %v1090, 0.5
        %v1111 = vmul.f32 %v948, 0.5
        %v1112 = vmul.f32 %v996, 0.5
        %v1113 = vmul.f32 %v1044, 0.5
        %v1114 = vmul.f32 %v1092, 0.5
        %v1115 = vmul.f32 %v951, 0.5
        %v1116 = vmul.f32 %v999, 0.5
        %v1117 = vmul.f32 %v1047, 0.5
        %v1118 = vmul.f32 %v1095, 0.5
        %v1119 = vmul.f32 %v953, 0.5
        %v1120 = vmul.f32 %v1001, 0.5
        %v1121 = vmul.f32 %v1049, 0.5
        %v1122 = vmul.f32 %v1097, 0.5
        %v1123 = vmul.f32 %v941, 0.044715
        %v1124 = vmul.f32 %v989, 0.044715
        %v1125 = vmul.f32 %v1037, 0.044715
        %v1126 = vmul.f32 %v1085, 0.044715
        %v1127 = vmul.f32 %v943, 0.044715
        %v1128 = vmul.f32 %v991, 0.044715
        %v1129 = vmul.f32 %v1039, 0.044715
        %v1130 = vmul.f32 %v1087, 0.044715
        %v1131 = vmul.f32 %v946, 0.044715
        %v1132 = vmul.f32 %v994, 0.044715
        %v1133 = vmul.f32 %v1042, 0.044715
        %v1134 = vmul.f32 %v1090, 0.044715
        %v1135 = vmul.f32 %v948, 0.044715
        %v1136 = vmul.f32 %v996, 0.044715
        %v1137 = vmul.f32 %v1044, 0.044715
        %v1138 = vmul.f32 %v1092, 0.044715
        %v1139 = vmul.f32 %v951, 0.044715
        %v1140 = vmul.f32 %v999, 0.044715
        %v1141 = vmul.f32 %v1047, 0.044715
        %v1142 = vmul.f32 %v1095, 0.044715
        %v1143 = vmul.f32 %v953, 0.044715
        %v1144 = vmul.f32 %v1001, 0.044715
        %v1145 = vmul.f32 %v1049, 0.044715
        %v1146 = vmul.f32 %v1097, 0.044715
        %v1147 = vmul.f32 %v1123, %v941
        %v1148 = vmul.f32 %v1124, %v989
        %v1149 = vmul.f32 %v1125, %v1037
        %v1150 = vmul.f32 %v1126, %v1085
        %v1151 = vmul.f32 %v1127, %v943
        %v1152 = vmul.f32 %v1128, %v991
        %v1153 = vmul.f32 %v1129, %v1039
        %v1154 = vmul.f32 %v1130, %v1087
        %v1155 = vmul.f32 %v1131, %v946
        %v1156 = vmul.f32 %v1132, %v994
        %v1157 = vmul.f32 %v1133, %v1042
        %v1158 = vmul.f32 %v1134, %v1090
        %v1159 = vmul.f32 %v1135, %v948
        %v1160 = vmul.f32 %v1136, %v996
        %v1161 = vmul.f32 %v1137, %v1044
        %v1162 = vmul.f32 %v1138, %v1092
        %v1163 = vmul.f32 %v1139, %v951
        %v1164 = vmul.f32 %v1140, %v999
        %v1165 = vmul.f32 %v1141, %v1047
        %v1166 = vmul.f32 %v1142, %v1095
        %v1167 = vmul.f32 %v1143, %v953
        %v1168 = vmul.f32 %v1144, %v1001
        %v1169 = vmul.f32 %v1145, %v1049
        %v1170 = vmul.f32 %v1146, %v1097
        %v1171 = vmul.f32 %v1147, %v941
        %v1172 = vmul.f32 %v1148, %v989
        %v1173 = vmul.f32 %v1149, %v1037
        %v1174 = vmul.f32 %v1150, %v1085
        %v1175 = vmul.f32 %v1151, %v943
        %v1176 = vmul.f32 %v1152, %v991
        %v1177 = vmul.f32 %v1153, %v1039
        %v1178 = vmul.f32 %v1154, %v1087
        %v1179 = vmul.f32 %v1155, %v946
        %v1180 = vmul.f32 %v1156, %v994
        %v1181 = vmul.f32 %v1157, %v1042
        %v1182 = vmul.f32 %v1158, %v1090
        %v1183 = vmul.f32 %v1159, %v948
        %v1184 = vmul.f32 %v1160, %v996
        %v1185 = vmul.f32 %v1161, %v1044
        %v1186 = vmul.f32 %v1162, %v1092
        %v1187 = vmul.f32 %v1163, %v951
        %v1188 = vmul.f32 %v1164, %v999
        %v1189 = vmul.f32 %v1165, %v1047
        %v1190 = vmul.f32 %v1166, %v1095
        %v1191 = vmul.f32 %v1167, %v953
        %v1192 = vmul.f32 %v1168, %v1001
        %v1193 = vmul.f32 %v1169, %v1049
        %v1194 = vmul.f32 %v1170, %v1097
        %v1195 = vadd.f32 %v941, %v1171
        %v1196 = vadd.f32 %v989, %v1172
        %v1197 = vadd.f32 %v1037, %v1173
        %v1198 = vadd.f32 %v1085, %v1174
        %v1199 = vadd.f32 %v943, %v1175
        %v1200 = vadd.f32 %v991, %v1176
        %v1201 = vadd.f32 %v1039, %v1177
        %v1202 = vadd.f32 %v1087, %v1178
        %v1203 = vadd.f32 %v946, %v1179
        %v1204 = vadd.f32 %v994, %v1180
        %v1205 = vadd.f32 %v1042, %v1181
        %v1206 = vadd.f32 %v1090, %v1182
        %v1207 = vadd.f32 %v948, %v1183
        %v1208 = vadd.f32 %v996, %v1184
        %v1209 = vadd.f32 %v1044, %v1185
        %v1210 = vadd.f32 %v1092, %v1186
        %v1211 = vadd.f32 %v951, %v1187
        %v1212 = vadd.f32 %v999, %v1188
        %v1213 = vadd.f32 %v1047, %v1189
        %v1214 = vadd.f32 %v1095, %v1190
        %v1215 = vadd.f32 %v953, %v1191
        %v1216 = vadd.f32 %v1001, %v1192
        %v1217 = vadd.f32 %v1049, %v1193
        %v1218 = vadd.f32 %v1097, %v1194
        %v1219 = vmul.f32 %v1195, 0.7978846
        %v1220 = vmul.f32 %v1196, 0.7978846
        %v1221 = vmul.f32 %v1197, 0.7978846
        %v1222 = vmul.f32 %v1198, 0.7978846
        %v1223 = vmul.f32 %v1199, 0.7978846
        %v1224 = vmul.f32 %v1200, 0.7978846
        %v1225 = vmul.f32 %v1201, 0.7978846
        %v1226 = vmul.f32 %v1202, 0.7978846
        %v1227 = vmul.f32 %v1203, 0.7978846
        %v1228 = vmul.f32 %v1204, 0.7978846
        %v1229 = vmul.f32 %v1205, 0.7978846
        %v1230 = vmul.f32 %v1206, 0.7978846
        %v1231 = vmul.f32 %v1207, 0.7978846
        %v1232 = vmul.f32 %v1208, 0.7978846
        %v1233 = vmul.f32 %v1209, 0.7978846
        %v1234 = vmul.f32 %v1210, 0.7978846
        %v1235 = vmul.f32 %v1211, 0.7978846
        %v1236 = vmul.f32 %v1212, 0.7978846
        %v1237 = vmul.f32 %v1213, 0.7978846
        %v1238 = vmul.f32 %v1214, 0.7978846
        %v1239 = vmul.f32 %v1215, 0.7978846
        %v1240 = vmul.f32 %v1216, 0.7978846
        %v1241 = vmul.f32 %v1217, 0.7978846
        %v1242 = vmul.f32 %v1218, 0.7978846
        %v1243 = vtanh.pop %v1219
        %v1244 = vtanh.pop %v1220
        %v1245 = vtanh.pop %v1221
        %v1246 = vtanh.pop %v1222
        %v1247 = vtanh.pop %v1223
        %v1248 = vtanh.pop %v1224
        %v1249 = vtanh.pop %v1225
        %v1250 = vtanh.pop %v1226
        %v1251 = vtanh.pop %v1227
        %v1252 = vtanh.pop %v1228
        %v1253 = vtanh.pop %v1229
        %v1254 = vtanh.pop %v1230
        %v1255 = vtanh.pop %v1231
        %v1256 = vtanh.pop %v1232
        %v1257 = vtanh.pop %v1233
        %v1258 = vtanh.pop %v1234
        %v1259 = vtanh.pop %v1235
        %v1260 = vtanh.pop %v1236
        %v1261 = vtanh.pop %v1237
        %v1262 = vtanh.pop %v1238
        %v1263 = vtanh.pop %v1239
        %v1264 = vtanh.pop %v1240
        %v1265 = vtanh.pop %v1241
        %v1266 = vtanh.pop %v1242
        %v1267 = vadd.f32 %v1243, 1.0
        %v1268 = vadd.f32 %v1244, 1.0
        %v1269 = vadd.f32 %v1245, 1.0
        %v1270 = vadd.f32 %v1246, 1.0
        %v1271 = vadd.f32 %v1247, 1.0
        %v1272 = vadd.f32 %v1248, 1.0
        %v1273 = vadd.f32 %v1249, 1.0
        %v1274 = vadd.f32 %v1250, 1.0
        %v1275 = vadd.f32 %v1251, 1.0
        %v1276 = vadd.f32 %v1252, 1.0
        %v1277 = vadd.f32 %v1253, 1.0
        %v1278 = vadd.f32 %v1254, 1.0
        %v1279 = vadd.f32 %v1255, 1.0
        %v1280 = vadd.f32 %v1256, 1.0
        %v1281 = vadd.f32 %v1257, 1.0
        %v1282 = vadd.f32 %v1258, 1.0
        %v1283 = vadd.f32 %v1259, 1.0
        %v1284 = vadd.f32 %v1260, 1.0
        %v1285 = vadd.f32 %v1261, 1.0
        %v1286 = vadd.f32 %v1262, 1.0
        %v1287 = vadd.f32 %v1263, 1.0
        %v1288 = vadd.f32 %v1264, 1.0
        %v1289 = vadd.f32 %v1265, 1.0
        %v1290 = vadd.f32 %v1266, 1.0
        %v1291 = vmul.f32 %v1099, %v1267
        %v1292 = vmul.f32 %v1100, %v1268
        %v1293 = vmul.f32 %v1101, %v1269
        %v1294 = vmul.f32 %v1102, %v1270
        %v1295 = vmul.f32 %v1103, %v1271
        %v1296 = vmul.f32 %v1104, %v1272
        %v1297 = vmul.f32 %v1105, %v1273
        %v1298 = vmul.f32 %v1106, %v1274
        %v1299 = vmul.f32 %v1107, %v1275
        %v1300 = vmul.f32 %v1108, %v1276
        %v1301 = vmul.f32 %v1109, %v1277
        %v1302 = vmul.f32 %v1110, %v1278
        %v1303 = vmul.f32 %v1111, %v1279
        %v1304 = vmul.f32 %v1112, %v1280
        %v1305 = vmul.f32 %v1113, %v1281
        %v1306 = vmul.f32 %v1114, %v1282
        %v1307 = vmul.f32 %v1115, %v1283
        %v1308 = vmul.f32 %v1116, %v1284
        %v1309 = vmul.f32 %v1117, %v1285
        %v1310 = vmul.f32 %v1118, %v1286
        %v1311 = vmul.f32 %v1119, %v1287
        %v1312 = vmul.f32 %v1120, %v1288
        %v1313 = vmul.f32 %v1121, %v1289
        %v1314 = vmul.f32 %v1122, %v1290
        %v1315 = vld [vmem:[#allocation2] sm:$0xff]
        %v1316 = vld [vmem:[#allocation2 + $0x8] sm:$0xff]
        %v1317 = vld [vmem:[#allocation2 + $0x10] sm:$0xff]
        %v1318 = vld [vmem:[#allocation2 + $0x18] sm:$0xff]
        %v1319 = vld [vmem:[#allocation2 + $0x20] sm:$0xff]
        %v1320 = vld [vmem:[#allocation2 + $0x28] sm:$0xff]
        %v1321 = vld [vmem:[#allocation2 + $0x30] sm:$0xff]
        %v1322 = vld [vmem:[#allocation2 + $0x38] sm:$0xff]
        %v1323 = vld [vmem:[#allocation2 + $0x40] sm:$0xff]
        %v1324 = vld [vmem:[#allocation2 + $0x48] sm:$0xff]
        %v1325 = vld [vmem:[#allocation2 + $0x50] sm:$0xff]
        %v1326 = vld [vmem:[#allocation2 + $0x58] sm:$0xff]
        %v1327 = vpack.c.bf16 %v1295, %v1291
        %v1328 = vpack.c.bf16 %v1296, %v1292
        %v1329 = vpack.c.bf16 %v1297, %v1293
        %v1330 = vpack.c.bf16 %v1298, %v1294
        %v1331 = vpack.c.bf16 %v1303, %v1299
        %v1332 = vpack.c.bf16 %v1304, %v1300
        %v1333 = vpack.c.bf16 %v1305, %v1301
        %v1334 = vpack.c.bf16 %v1306, %v1302
        %v1335 = vpack.c.bf16 %v1311, %v1307
        %v1336 = vpack.c.bf16 %v1312, %v1308
        %v1337 = vpack.c.bf16 %v1313, %v1309
        %v1338 = vpack.c.bf16 %v1314, %v1310
        %v1339 = vld [vmem:[%s447] sm:$0xff]
        %v1340 = vld [vmem:[%s447 + $0x8] sm:$0xff]
        %v1341 = vld [vmem:[%s447 + $0x10] sm:$0xff]
        %v1342 = vld [vmem:[%s447 + $0x18] sm:$0xff]
        %v1343 = vld [vmem:[%s447 + $0x20] sm:$0xff]
        %v1344 = vld [vmem:[%s447 + $0x28] sm:$0xff]
        %v1345 = vld [vmem:[%s447 + $0x30] sm:$0xff]
        %v1346 = vld [vmem:[%s447 + $0x38] sm:$0xff]
        %v1347 = vld [vmem:[%s447 + $0x40] sm:$0xff]
        %v1348 = vld [vmem:[%s447 + $0x48] sm:$0xff]
        %v1349 = vld [vmem:[%s447 + $0x50] sm:$0xff]
        %v1350 = vld [vmem:[%s447 + $0x58] sm:$0xff]
        %v1351 = vld [vmem:[%s447 + $0x60] sm:$0xff]
        %v1352 = vld [vmem:[%s447 + $0x68] sm:$0xff]
        %v1353 = vld [vmem:[%s447 + $0x70] sm:$0xff]
        %v1354 = vld [vmem:[%s447 + $0x78] sm:$0xff]
        %v1355 = vld [vmem:[%s447 + $0x80] sm:$0xff]
        %v1356 = vld [vmem:[%s447 + $0x88] sm:$0xff]
        %v1357 = vld [vmem:[%s447 + $0x90] sm:$0xff]
        %v1358 = vld [vmem:[%s447 + $0x98] sm:$0xff]
        %v1359 = vld [vmem:[%s447 + $0xa0] sm:$0xff]
        %v1360 = vld [vmem:[%s447 + $0xa8] sm:$0xff]
        %v1361 = vld [vmem:[%s447 + $0xb0] sm:$0xff]
        %v1362 = vld [vmem:[%s447 + $0xb8] sm:$0xff]
        %v1363 = vld [vmem:[%s447 + $0xc0] sm:$0xff]
        %v1364 = vld [vmem:[%s447 + $0xc8] sm:$0xff]
        %v1365 = vld [vmem:[%s447 + $0xd0] sm:$0xff]
        %v1366 = vld [vmem:[%s447 + $0xd8] sm:$0xff]
        %v1367 = vld [vmem:[%s447 + $0xe0] sm:$0xff]
        %v1368 = vld [vmem:[%s447 + $0xe8] sm:$0xff]
        %v1369 = vld [vmem:[%s447 + $0xf0] sm:$0xff]
        %v1370 = vld [vmem:[%s447 + $0xf8] sm:$0xff]
        %v1371 = vld [vmem:[%s447 + $0x100] sm:$0xff]
        %v1372 = vld [vmem:[%s447 + $0x108] sm:$0xff]
        %v1373 = vld [vmem:[%s447 + $0x110] sm:$0xff]
        %v1374 = vld [vmem:[%s447 + $0x118] sm:$0xff]
        %v1375 = vld [vmem:[%s447 + $0x120] sm:$0xff]
        %v1376 = vld [vmem:[%s447 + $0x128] sm:$0xff]
        %v1377 = vld [vmem:[%s447 + $0x130] sm:$0xff]
        %v1378 = vld [vmem:[%s447 + $0x138] sm:$0xff]
        %v1379 = vld [vmem:[%s447 + $0x140] sm:$0xff]
        %v1380 = vld [vmem:[%s447 + $0x148] sm:$0xff]
        %v1381 = vld [vmem:[%s447 + $0x150] sm:$0xff]
        %v1382 = vld [vmem:[%s447 + $0x158] sm:$0xff]
        %v1383 = vld [vmem:[%s447 + $0x160] sm:$0xff]
        %v1384 = vld [vmem:[%s447 + $0x168] sm:$0xff]
        %v1385 = vld [vmem:[%s447 + $0x170] sm:$0xff]
        %v1386 = vld [vmem:[%s447 + $0x178] sm:$0xff]
        %v1387 = vld [vmem:[%s447 + $0x180] sm:$0xff]
        %v1388 = vld [vmem:[%s447 + $0x188] sm:$0xff]
        %v1389 = vld [vmem:[%s447 + $0x190] sm:$0xff]
        %v1390 = vld [vmem:[%s447 + $0x198] sm:$0xff]
        %v1391 = vld [vmem:[%s447 + $0x1a0] sm:$0xff]
        %v1392 = vld [vmem:[%s447 + $0x1a8] sm:$0xff]
        %v1393 = vld [vmem:[%s447 + $0x1b0] sm:$0xff]
        %v1394 = vld [vmem:[%s447 + $0x1b8] sm:$0xff]
        %v1395 = vld [vmem:[%s447 + $0x1c0] sm:$0xff]
        %v1396 = vld [vmem:[%s447 + $0x1c8] sm:$0xff]
        %v1397 = vld [vmem:[%s447 + $0x1d0] sm:$0xff]
        %v1398 = vld [vmem:[%s447 + $0x1d8] sm:$0xff]
        %v1399 = vld [vmem:[%s447 + $0x1e0] sm:$0xff]
        %v1400 = vld [vmem:[%s447 + $0x1e8] sm:$0xff]
        %v1401 = vld [vmem:[%s447 + $0x1f0] sm:$0xff]
        %v1402 = vld [vmem:[%s447 + $0x1f8] sm:$0xff]
        %v1467 = vunpack.c.l.b16 %v1339
        %v1468 = vunpack.c.h.b16 %v1339
        %v1469 = vunpack.c.l.b16 %v1340
        %v1470 = vunpack.c.h.b16 %v1340
        %v1471 = vunpack.c.l.b16 %v1341
        %v1472 = vunpack.c.h.b16 %v1341
        %v1473 = vunpack.c.l.b16 %v1342
        %v1474 = vunpack.c.h.b16 %v1342
        %v1475 = vunpack.c.l.b16 %v1343
        %v1476 = vunpack.c.h.b16 %v1343
        %v1477 = vunpack.c.l.b16 %v1344
        %v1478 = vunpack.c.h.b16 %v1344
        %v1479 = vunpack.c.l.b16 %v1345
        %v1480 = vunpack.c.h.b16 %v1345
        %v1481 = vunpack.c.l.b16 %v1346
        %v1482 = vunpack.c.h.b16 %v1346
        %v1483 = vunpack.c.l.b16 %v1347
        %v1484 = vunpack.c.h.b16 %v1347
        %v1485 = vunpack.c.l.b16 %v1348
        %v1486 = vunpack.c.h.b16 %v1348
        %v1487 = vunpack.c.l.b16 %v1349
        %v1488 = vunpack.c.h.b16 %v1349
        %v1489 = vunpack.c.l.b16 %v1350
        %v1490 = vunpack.c.h.b16 %v1350
        %v1491 = vunpack.c.l.b16 %v1351
        %v1492 = vunpack.c.h.b16 %v1351
        %v1493 = vunpack.c.l.b16 %v1352
        %v1494 = vunpack.c.h.b16 %v1352
        %v1495 = vunpack.c.l.b16 %v1353
        %v1496 = vunpack.c.h.b16 %v1353
        %v1497 = vunpack.c.l.b16 %v1354
        %v1498 = vunpack.c.h.b16 %v1354
        %v1499 = vunpack.c.l.b16 %v1355
        %v1500 = vunpack.c.h.b16 %v1355
        %v1501 = vunpack.c.l.b16 %v1356
        %v1502 = vunpack.c.h.b16 %v1356
        %v1503 = vunpack.c.l.b16 %v1357
        %v1504 = vunpack.c.h.b16 %v1357
        %v1505 = vunpack.c.l.b16 %v1358
        %v1506 = vunpack.c.h.b16 %v1358
        %v1507 = vunpack.c.l.b16 %v1359
        %v1508 = vunpack.c.h.b16 %v1359
        %v1509 = vunpack.c.l.b16 %v1360
        %v1510 = vunpack.c.h.b16 %v1360
        %v1511 = vunpack.c.l.b16 %v1361
        %v1512 = vunpack.c.h.b16 %v1361
        %v1513 = vunpack.c.l.b16 %v1362
        %v1514 = vunpack.c.h.b16 %v1362
        %v1515 = vunpack.c.l.b16 %v1363
        %v1516 = vunpack.c.h.b16 %v1363
        %v1517 = vunpack.c.l.b16 %v1364
        %v1518 = vunpack.c.h.b16 %v1364
        %v1519 = vunpack.c.l.b16 %v1365
        %v1520 = vunpack.c.h.b16 %v1365
        %v1521 = vunpack.c.l.b16 %v1366
        %v1522 = vunpack.c.h.b16 %v1366
        %v1523 = vunpack.c.l.b16 %v1367
        %v1524 = vunpack.c.h.b16 %v1367
        %v1525 = vunpack.c.l.b16 %v1368
        %v1526 = vunpack.c.h.b16 %v1368
        %v1527 = vunpack.c.l.b16 %v1369
        %v1528 = vunpack.c.h.b16 %v1369
        %v1529 = vunpack.c.l.b16 %v1370
        %v1530 = vunpack.c.h.b16 %v1370
        %v1531 = vunpack.c.l.b16 %v1371
        %v1532 = vunpack.c.h.b16 %v1371
        %v1533 = vunpack.c.l.b16 %v1372
        %v1534 = vunpack.c.h.b16 %v1372
        %v1535 = vunpack.c.l.b16 %v1373
        %v1536 = vunpack.c.h.b16 %v1373
        %v1537 = vunpack.c.l.b16 %v1374
        %v1538 = vunpack.c.h.b16 %v1374
        %v1539 = vunpack.c.l.b16 %v1375
        %v1540 = vunpack.c.h.b16 %v1375
        %v1541 = vunpack.c.l.b16 %v1376
        %v1542 = vunpack.c.h.b16 %v1376
        %v1543 = vunpack.c.l.b16 %v1377
        %v1544 = vunpack.c.h.b16 %v1377
        %v1545 = vunpack.c.l.b16 %v1378
        %v1546 = vunpack.c.h.b16 %v1378
        %v1547 = vunpack.c.l.b16 %v1379
        %v1548 = vunpack.c.h.b16 %v1379
        %v1549 = vunpack.c.l.b16 %v1380
        %v1550 = vunpack.c.h.b16 %v1380
        %v1551 = vunpack.c.l.b16 %v1381
        %v1552 = vunpack.c.h.b16 %v1381
        %v1553 = vunpack.c.l.b16 %v1382
        %v1554 = vunpack.c.h.b16 %v1382
        %v1555 = vunpack.c.l.b16 %v1383
        %v1556 = vunpack.c.h.b16 %v1383
        %v1557 = vunpack.c.l.b16 %v1384
        %v1558 = vunpack.c.h.b16 %v1384
        %v1559 = vunpack.c.l.b16 %v1385
        %v1560 = vunpack.c.h.b16 %v1385
        %v1561 = vunpack.c.l.b16 %v1386
        %v1562 = vunpack.c.h.b16 %v1386
        %v1563 = vunpack.c.l.b16 %v1387
        %v1564 = vunpack.c.h.b16 %v1387
        %v1565 = vunpack.c.l.b16 %v1388
        %v1566 = vunpack.c.h.b16 %v1388
        %v1567 = vunpack.c.l.b16 %v1389
        %v1568 = vunpack.c.h.b16 %v1389
        %v1569 = vunpack.c.l.b16 %v1390
        %v1570 = vunpack.c.h.b16 %v1390
        %v1571 = vunpack.c.l.b16 %v1391
        %v1572 = vunpack.c.h.b16 %v1391
        %v1573 = vunpack.c.l.b16 %v1392
        %v1574 = vunpack.c.h.b16 %v1392
        %v1575 = vunpack.c.l.b16 %v1393
        %v1576 = vunpack.c.h.b16 %v1393
        %v1577 = vunpack.c.l.b16 %v1394
        %v1578 = vunpack.c.h.b16 %v1394
        %v1579 = vunpack.c.l.b16 %v1395
        %v1580 = vunpack.c.h.b16 %v1395
        %v1581 = vunpack.c.l.b16 %v1396
        %v1582 = vunpack.c.h.b16 %v1396
        %v1583 = vunpack.c.l.b16 %v1397
        %v1584 = vunpack.c.h.b16 %v1397
        %v1585 = vunpack.c.l.b16 %v1398
        %v1586 = vunpack.c.h.b16 %v1398
        %v1587 = vunpack.c.l.b16 %v1399
        %v1588 = vunpack.c.h.b16 %v1399
        %v1589 = vunpack.c.l.b16 %v1400
        %v1590 = vunpack.c.h.b16 %v1400
        %v1591 = vunpack.c.l.b16 %v1401
        %v1592 = vunpack.c.h.b16 %v1401
        %v1593 = vunpack.c.l.b16 %v1402
        %v1594 = vunpack.c.h.b16 %v1402
        %v1595 = vpack.c.b16 %v1469, %v1467
        %v1596 = vpack.c.b16 %v1470, %v1468
        %v1597 = vpack.c.b16 %v1473, %v1471
        %v1598 = vpack.c.b16 %v1474, %v1472
        %v1599 = vpack.c.b16 %v1477, %v1475
        %v1600 = vpack.c.b16 %v1478, %v1476
        %v1601 = vpack.c.b16 %v1481, %v1479
        %v1602 = vpack.c.b16 %v1482, %v1480
        %v1603 = vpack.c.b16 %v1485, %v1483
        %v1604 = vpack.c.b16 %v1486, %v1484
        %v1605 = vpack.c.b16 %v1489, %v1487
        %v1606 = vpack.c.b16 %v1490, %v1488
        %v1607 = vpack.c.b16 %v1493, %v1491
        %v1608 = vpack.c.b16 %v1494, %v1492
        %v1609 = vpack.c.b16 %v1497, %v1495
        %v1610 = vpack.c.b16 %v1498, %v1496
        %v1611 = vpack.c.b16 %v1501, %v1499
        %v1612 = vpack.c.b16 %v1502, %v1500
        %v1613 = vpack.c.b16 %v1505, %v1503
        %v1614 = vpack.c.b16 %v1506, %v1504
        %v1615 = vpack.c.b16 %v1509, %v1507
        %v1616 = vpack.c.b16 %v1510, %v1508
        %v1617 = vpack.c.b16 %v1513, %v1511
        %v1618 = vpack.c.b16 %v1514, %v1512
        %v1619 = vpack.c.b16 %v1517, %v1515
        %v1620 = vpack.c.b16 %v1518, %v1516
        %v1621 = vpack.c.b16 %v1521, %v1519
        %v1622 = vpack.c.b16 %v1522, %v1520
        %v1623 = vpack.c.b16 %v1525, %v1523
        %v1624 = vpack.c.b16 %v1526, %v1524
        %v1625 = vpack.c.b16 %v1529, %v1527
        %v1626 = vpack.c.b16 %v1530, %v1528
        %v1627 = vpack.c.b16 %v1533, %v1531
        %v1628 = vpack.c.b16 %v1534, %v1532
        %v1629 = vpack.c.b16 %v1537, %v1535
        %v1630 = vpack.c.b16 %v1538, %v1536
        %v1631 = vpack.c.b16 %v1541, %v1539
        %v1632 = vpack.c.b16 %v1542, %v1540
        %v1633 = vpack.c.b16 %v1545, %v1543
        %v1634 = vpack.c.b16 %v1546, %v1544
        %v1635 = vpack.c.b16 %v1549, %v1547
        %v1636 = vpack.c.b16 %v1550, %v1548
        %v1637 = vpack.c.b16 %v1553, %v1551
        %v1638 = vpack.c.b16 %v1554, %v1552
        %v1639 = vpack.c.b16 %v1557, %v1555
        %v1640 = vpack.c.b16 %v1558, %v1556
        %v1641 = vpack.c.b16 %v1561, %v1559
        %v1642 = vpack.c.b16 %v1562, %v1560
        %v1643 = vpack.c.b16 %v1565, %v1563
        %v1644 = vpack.c.b16 %v1566, %v1564
        %v1645 = vpack.c.b16 %v1569, %v1567
        %v1646 = vpack.c.b16 %v1570, %v1568
        %v1647 = vpack.c.b16 %v1573, %v1571
        %v1648 = vpack.c.b16 %v1574, %v1572
        %v1649 = vpack.c.b16 %v1577, %v1575
        %v1650 = vpack.c.b16 %v1578, %v1576
        %v1651 = vpack.c.b16 %v1581, %v1579
        %v1652 = vpack.c.b16 %v1582, %v1580
        %v1653 = vpack.c.b16 %v1585, %v1583
        %v1654 = vpack.c.b16 %v1586, %v1584
        %v1655 = vpack.c.b16 %v1589, %v1587
        %v1656 = vpack.c.b16 %v1590, %v1588
        %v1657 = vpack.c.b16 %v1593, %v1591
        %v1658 = vpack.c.b16 %v1594, %v1592
        %1723 = vmatpush.bf16.msra.mxu0 %v1609
        %1724 = vmatpush.bf16.msra.mxu0 %v1607
        %1725 = vmatpush.bf16.msra.mxu0 %v1605
        %1726 = vmatpush.bf16.msra.mxu0 %v1603
        %1727 = vmatpush.bf16.msra.mxu0 %v1601
        %1728 = vmatpush.bf16.msra.mxu0 %v1599
        %1729 = vmatpush.bf16.msra.mxu0 %v1597
        %1730 = vmatpush.bf16.msra.mxu0 %v1595
        %1731 = vmatmul.bf16.gmra.mxu0 %v1327
        %v1732 = vpop.f32.mrf.mxu0
        %v1733 = vadd.f32 0.0, %v1732
        %v1734 = vpop.f32.mrf.mxu0
        %v1735 = vadd.f32 0.0, %v1734
        %1736 = vmatmul.bf16.gmra.mxu0 %v1331
        %v1737 = vpop.f32.mrf.mxu0
        %v1738 = vadd.f32 0.0, %v1737
        %v1739 = vpop.f32.mrf.mxu0
        %v1740 = vadd.f32 0.0, %v1739
        %1741 = vmatmul.bf16.gmra.mxu0 %v1335
        %v1742 = vpop.f32.mrf.mxu0
        %v1743 = vadd.f32 0.0, %v1742
        %v1744 = vpop.f32.mrf.mxu0
        %v1745 = vadd.f32 0.0, %v1744
        %1746 = vdwg.mxu0
        %1747 = vmatpush.bf16.msra.mxu0 %v1625
        %1748 = vmatpush.bf16.msra.mxu0 %v1623
        %1749 = vmatpush.bf16.msra.mxu0 %v1621
        %1750 = vmatpush.bf16.msra.mxu0 %v1619
        %1751 = vmatpush.bf16.msra.mxu0 %v1617
        %1752 = vmatpush.bf16.msra.mxu0 %v1615
        %1753 = vmatpush.bf16.msra.mxu0 %v1613
        %1754 = vmatpush.bf16.msra.mxu0 %v1611
        %1755 = vmatmul.bf16.gmra.mxu0 %v1328
        %v1756 = vpop.f32.mrf.mxu0
        %v1757 = vadd.f32 %v1733, %v1756
        %v1758 = vpop.f32.mrf.mxu0
        %v1759 = vadd.f32 %v1735, %v1758
        %1760 = vmatmul.bf16.gmra.mxu0 %v1332
        %v1761 = vpop.f32.mrf.mxu0
        %v1762 = vadd.f32 %v1738, %v1761
        %v1763 = vpop.f32.mrf.mxu0
        %v1764 = vadd.f32 %v1740, %v1763
        %1765 = vmatmul.bf16.gmra.mxu0 %v1336
        %v1766 = vpop.f32.mrf.mxu0
        %v1767 = vadd.f32 %v1743, %v1766
        %v1768 = vpop.f32.mrf.mxu0
        %v1769 = vadd.f32 %v1745, %v1768
        %1770 = vdwg.mxu0
        %1771 = vmatpush.bf16.msra.mxu0 %v1641
        %1772 = vmatpush.bf16.msra.mxu0 %v1639
        %1773 = vmatpush.bf16.msra.mxu0 %v1637
        %1774 = vmatpush.bf16.msra.mxu0 %v1635
        %1775 = vmatpush.bf16.msra.mxu0 %v1633
        %1776 = vmatpush.bf16.msra.mxu0 %v1631
        %1777 = vmatpush.bf16.msra.mxu0 %v1629
        %1778 = vmatpush.bf16.msra.mxu0 %v1627
        %1779 = vmatmul.bf16.gmra.mxu0 %v1329
        %v1780 = vpop.f32.mrf.mxu0
        %v1781 = vadd.f32 %v1757, %v1780
        %v1782 = vpop.f32.mrf.mxu0
        %v1783 = vadd.f32 %v1759, %v1782
        %1784 = vmatmul.bf16.gmra.mxu0 %v1333
        %v1785 = vpop.f32.mrf.mxu0
        %v1786 = vadd.f32 %v1762, %v1785
        %v1787 = vpop.f32.mrf.mxu0
        %v1788 = vadd.f32 %v1764, %v1787
        %1789 = vmatmul.bf16.gmra.mxu0 %v1337
        %v1790 = vpop.f32.mrf.mxu0
        %v1791 = vadd.f32 %v1767, %v1790
        %v1792 = vpop.f32.mrf.mxu0
        %v1793 = vadd.f32 %v1769, %v1792
        %1794 = vdwg.mxu0
        %1795 = vmatpush.bf16.msra.mxu0 %v1657
        %1796 = vmatpush.bf16.msra.mxu0 %v1655
        %1797 = vmatpush.bf16.msra.mxu0 %v1653
        %1798 = vmatpush.bf16.msra.mxu0 %v1651
        %1799 = vmatpush.bf16.msra.mxu0 %v1649
        %1800 = vmatpush.bf16.msra.mxu0 %v1647
        %1801 = vmatpush.bf16.msra.mxu0 %v1645
        %1802 = vmatpush.bf16.msra.mxu0 %v1643
        %1803 = vmatmul.bf16.gmra.mxu0 %v1330
        %v1804 = vpop.f32.mrf.mxu0
        %v1805 = vadd.f32 %v1781, %v1804
        %v1806 = vpop.f32.mrf.mxu0
        %v1807 = vadd.f32 %v1783, %v1806
        %1808 = vmatmul.bf16.gmra.mxu0 %v1334
        %v1809 = vpop.f32.mrf.mxu0
        %v1810 = vadd.f32 %v1786, %v1809
        %v1811 = vpop.f32.mrf.mxu0
        %v1812 = vadd.f32 %v1788, %v1811
        %1813 = vmatmul.bf16.gmra.mxu0 %v1338
        %v1814 = vpop.f32.mrf.mxu0
        %v1815 = vadd.f32 %v1791, %v1814
        %v1816 = vpop.f32.mrf.mxu0
        %v1817 = vadd.f32 %v1793, %v1816
        %1818 = vdwg.mxu0
        %1819 = vmatpush.bf16.msra.mxu0 %v1610
        %1820 = vmatpush.bf16.msra.mxu0 %v1608
        %1821 = vmatpush.bf16.msra.mxu0 %v1606
        %1822 = vmatpush.bf16.msra.mxu0 %v1604
        %1823 = vmatpush.bf16.msra.mxu0 %v1602
        %1824 = vmatpush.bf16.msra.mxu0 %v1600
        %1825 = vmatpush.bf16.msra.mxu0 %v1598
        %1826 = vmatpush.bf16.msra.mxu0 %v1596
        %1827 = vmatmul.bf16.gmra.mxu0 %v1327
        %v1828 = vpop.f32.mrf.mxu0
        %v1829 = vadd.f32 0.0, %v1828
        %v1830 = vpop.f32.mrf.mxu0
        %v1831 = vadd.f32 0.0, %v1830
        %1832 = vmatmul.bf16.gmra.mxu0 %v1331
        %v1833 = vpop.f32.mrf.mxu0
        %v1834 = vadd.f32 0.0, %v1833
        %v1835 = vpop.f32.mrf.mxu0
        %v1836 = vadd.f32 0.0, %v1835
        %1837 = vmatmul.bf16.gmra.mxu0 %v1335
        %v1838 = vpop.f32.mrf.mxu0
        %v1839 = vadd.f32 0.0, %v1838
        %v1840 = vpop.f32.mrf.mxu0
        %v1841 = vadd.f32 0.0, %v1840
        %1842 = vdwg.mxu0
        %1843 = vmatpush.bf16.msra.mxu0 %v1626
        %1844 = vmatpush.bf16.msra.mxu0 %v1624
        %1845 = vmatpush.bf16.msra.mxu0 %v1622
        %1846 = vmatpush.bf16.msra.mxu0 %v1620
        %1847 = vmatpush.bf16.msra.mxu0 %v1618
        %1848 = vmatpush.bf16.msra.mxu0 %v1616
        %1849 = vmatpush.bf16.msra.mxu0 %v1614
        %1850 = vmatpush.bf16.msra.mxu0 %v1612
        %1851 = vmatmul.bf16.gmra.mxu0 %v1328
        %v1852 = vpop.f32.mrf.mxu0
        %v1853 = vadd.f32 %v1829, %v1852
        %v1854 = vpop.f32.mrf.mxu0
        %v1855 = vadd.f32 %v1831, %v1854
        %1856 = vmatmul.bf16.gmra.mxu0 %v1332
        %v1857 = vpop.f32.mrf.mxu0
        %v1858 = vadd.f32 %v1834, %v1857
        %v1859 = vpop.f32.mrf.mxu0
        %v1860 = vadd.f32 %v1836, %v1859
        %1861 = vmatmul.bf16.gmra.mxu0 %v1336
        %v1862 = vpop.f32.mrf.mxu0
        %v1863 = vadd.f32 %v1839, %v1862
        %v1864 = vpop.f32.mrf.mxu0
        %v1865 = vadd.f32 %v1841, %v1864
        %1866 = vdwg.mxu0
        %1867 = vmatpush.bf16.msra.mxu0 %v1642
        %1868 = vmatpush.bf16.msra.mxu0 %v1640
        %1869 = vmatpush.bf16.msra.mxu0 %v1638
        %1870 = vmatpush.bf16.msra.mxu0 %v1636
        %1871 = vmatpush.bf16.msra.mxu0 %v1634
        %1872 = vmatpush.bf16.msra.mxu0 %v1632
        %1873 = vmatpush.bf16.msra.mxu0 %v1630
        %1874 = vmatpush.bf16.msra.mxu0 %v1628
        %1875 = vmatmul.bf16.gmra.mxu0 %v1329
        %v1876 = vpop.f32.mrf.mxu0
        %v1877 = vadd.f32 %v1853, %v1876
        %v1878 = vpop.f32.mrf.mxu0
        %v1879 = vadd.f32 %v1855, %v1878
        %1880 = vmatmul.bf16.gmra.mxu0 %v1333
        %v1881 = vpop.f32.mrf.mxu0
        %v1882 = vadd.f32 %v1858, %v1881
        %v1883 = vpop.f32.mrf.mxu0
        %v1884 = vadd.f32 %v1860, %v1883
        %1885 = vmatmul.bf16.gmra.mxu0 %v1337
        %v1886 = vpop.f32.mrf.mxu0
        %v1887 = vadd.f32 %v1863, %v1886
        %v1888 = vpop.f32.mrf.mxu0
        %v1889 = vadd.f32 %v1865, %v1888
        %1890 = vdwg.mxu0
        %1891 = vmatpush.bf16.msra.mxu0 %v1658
        %1892 = vmatpush.bf16.msra.mxu0 %v1656
        %1893 = vmatpush.bf16.msra.mxu0 %v1654
        %1894 = vmatpush.bf16.msra.mxu0 %v1652
        %1895 = vmatpush.bf16.msra.mxu0 %v1650
        %1896 = vmatpush.bf16.msra.mxu0 %v1648
        %1897 = vmatpush.bf16.msra.mxu0 %v1646
        %1898 = vmatpush.bf16.msra.mxu0 %v1644
        %1899 = vmatmul.bf16.gmra.mxu0 %v1330
        %v1900 = vpop.f32.mrf.mxu0
        %v1901 = vadd.f32 %v1877, %v1900
        %v1902 = vpop.f32.mrf.mxu0
        %v1903 = vadd.f32 %v1879, %v1902
        %1904 = vmatmul.bf16.gmra.mxu0 %v1334
        %v1905 = vpop.f32.mrf.mxu0
        %v1906 = vadd.f32 %v1882, %v1905
        %v1907 = vpop.f32.mrf.mxu0
        %v1908 = vadd.f32 %v1884, %v1907
        %1909 = vmatmul.bf16.gmra.mxu0 %v1338
        %v1910 = vpop.f32.mrf.mxu0
        %v1911 = vadd.f32 %v1887, %v1910
        %v1912 = vpop.f32.mrf.mxu0
        %v1913 = vadd.f32 %v1889, %v1912
        %1914 = vdwg.mxu0
        %v1915 = vadd.f32 %v1315, %v1805
        %v1916 = vadd.f32 %v1316, %v1901
        %v1917 = vadd.f32 %v1317, %v1807
        %v1918 = vadd.f32 %v1318, %v1903
        %v1919 = vadd.f32 %v1319, %v1810
        %v1920 = vadd.f32 %v1320, %v1906
        %v1921 = vadd.f32 %v1321, %v1812
        %v1922 = vadd.f32 %v1322, %v1908
        %v1923 = vadd.f32 %v1323, %v1815
        %v1924 = vadd.f32 %v1324, %v1911
        %v1925 = vadd.f32 %v1325, %v1817
        %v1926 = vadd.f32 %v1326, %v1913
        %1927 = vst [vmem:[#allocation2] sm:$0xff] %v1915
        %1928 = vst [vmem:[#allocation2 + $0x8] sm:$0xff] %v1916
        %1929 = vst [vmem:[#allocation2 + $0x10] sm:$0xff] %v1917
        %1930 = vst [vmem:[#allocation2 + $0x18] sm:$0xff] %v1918
        %1931 = vst [vmem:[#allocation2 + $0x20] sm:$0xff] %v1919
        %1932 = vst [vmem:[#allocation2 + $0x28] sm:$0xff] %v1920
        %1933 = vst [vmem:[#allocation2 + $0x30] sm:$0xff] %v1921
        %1934 = vst [vmem:[#allocation2 + $0x38] sm:$0xff] %v1922
        %1935 = vst [vmem:[#allocation2 + $0x40] sm:$0xff] %v1923
        %1936 = vst [vmem:[#allocation2 + $0x48] sm:$0xff] %v1924
        %1937 = vst [vmem:[#allocation2 + $0x50] sm:$0xff] %v1925
        %1938 = vst [vmem:[#allocation2 + $0x58] sm:$0xff] %v1926
        %p1939 = scmp.eq.s32.totalorder %s21, 1
        // Predicated region
        $region68: #{tracing_transformer_block_wrapper.30} parent=58 // pred_check
          %p1940 = pneg %p1939
        $region69: #{tracing_transformer_block_wrapper.30} parent=58 // pred_check_branch
          %1942 = sbr.rel (%p1940) target = $region71
        $region70: #{tracing_transformer_block_wrapper.30} parent=58 // pred_region
          %v1943 = vld [vmem:[#allocation2] sm:$0xff]
          %v1944 = vld [vmem:[#allocation2 + $0x8] sm:$0xff]
          %v1945 = vld [vmem:[#allocation2 + $0x10] sm:$0xff]
          %v1946 = vld [vmem:[#allocation2 + $0x18] sm:$0xff]
          %v1947 = vld [vmem:[#allocation2 + $0x20] sm:$0xff]
          %v1948 = vld [vmem:[#allocation2 + $0x28] sm:$0xff]
          %v1949 = vld [vmem:[#allocation2 + $0x30] sm:$0xff]
          %v1950 = vld [vmem:[#allocation2 + $0x38] sm:$0xff]
          %v1951 = vld [vmem:[#allocation2 + $0x40] sm:$0xff]
          %v1952 = vld [vmem:[#allocation2 + $0x48] sm:$0xff]
          %v1953 = vld [vmem:[#allocation2 + $0x50] sm:$0xff]
          %v1954 = vld [vmem:[#allocation2 + $0x58] sm:$0xff]
          %v1955 = vld [vmem:[%s4] sm:$0x3]
          %v1956 = vunpack.c.l.bf16 %v1955
          %v1958 = vperm.slane %v1956, 0
          %v1959 = vperm.slane %v1956, 2
          %v1962 = vperm.slane %v1958, 0
          %v1963 = vperm.slane %v1959, 0
          %v1964 = vadd.f32 %v1943, %v1962
          %v1965 = vadd.f32 %v1944, %v1963
          %v1966 = vadd.f32 %v1945, %v1962
          %v1967 = vadd.f32 %v1946, %v1963
          %v1968 = vadd.f32 %v1947, %v1962
          %v1969 = vadd.f32 %v1948, %v1963
          %v1970 = vadd.f32 %v1949, %v1962
          %v1971 = vadd.f32 %v1950, %v1963
          %v1972 = vadd.f32 %v1951, %v1962
          %v1973 = vadd.f32 %v1952, %v1963
          %v1974 = vadd.f32 %v1953, %v1962
          %v1975 = vadd.f32 %v1954, %v1963
          %v1976 = vpack.c.bf16 %v1965, %v1964
          %v1977 = vpack.c.bf16 %v1967, %v1966
          %v1978 = vpack.c.bf16 %v1969, %v1968
          %v1979 = vpack.c.bf16 %v1971, %v1970
          %v1980 = vpack.c.bf16 %v1973, %v1972
          %v1981 = vpack.c.bf16 %v1975, %v1974
          %1982 = vst [vmem:[%s454] sm:$0xff] %v1976
          %1983 = vst [vmem:[%s454 + $0x8] sm:$0xff] %v1977
          %1984 = vst [vmem:[%s454 + $0x10] sm:$0xff] %v1978
          %1985 = vst [vmem:[%s454 + $0x18] sm:$0xff] %v1979
          %1986 = vst [vmem:[%s454 + $0x20] sm:$0xff] %v1980
          %1987 = vst [vmem:[%s454 + $0x28] sm:$0xff] %v1981
        $region71: #{tracing_transformer_block_wrapper.30} parent=58 // pred_fallthru
          _
        %s1988 = smul.u32 6, %s20
        %p1989 = scmp.lt.s32.totalorder %s1988, 5
        %s1990 = scalar_select %p1989, %s1988, 5
        %s1991 = smul.addr %s1990, 2
        %s1992 = smul.addr %s1991, 4
        %s1993 = scalar_lea.vmem %s5, %s1992
        // Predicated region
        $region72: #{tracing_transformer_block_wrapper.30} parent=58 // pred_check
          %p1994 = pneg %p171
        $region73: #{tracing_transformer_block_wrapper.30} parent=58 // pred_check_branch
          %1996 = sbr.rel (%p1994) target = $region75
        $region74: #{tracing_transformer_block_wrapper.30} parent=58 // pred_region
          %s1997 = smul.u32 6, %s20
        $region75: #{tracing_transformer_block_wrapper.30} parent=58 // pred_fallthru
          _
        // Predicated region
        $region76: #{tracing_transformer_block_wrapper.30} parent=58 // pred_check
          %p1998 = pneg %p171
        $region77: #{tracing_transformer_block_wrapper.30} parent=58 // pred_check_branch
          %2000 = sbr.rel (%p1998) target = $region79
        $region78: #{tracing_transformer_block_wrapper.30} parent=58 // pred_region
          %s2001 = smul.u32 6, %s20
          %p2002 = scmp.lt.s32.totalorder %s2001, 5
          %s2003 = scalar_select %p2002, %s2001, 5
          %s2004 = smul.addr %s2003, 2
          %s2005 = smul.addr %s2004, 4
          %s2006 = scalar_lea.vmem %s5, %s2005
        $region79: #{tracing_transformer_block_wrapper.30} parent=58 // pred_fallthru
          _
      $region59: #{tracing_transformer_block_wrapper.30} parent=5 // pred_fallthru
        _
      %p2007 = scmp.le.s32.totalorder 2, %s11
      // Predicated region
      $region80: #{tracing_transformer_block_wrapper.30} parent=5 // pred_check
        %p2008 = pneg %p2007
      $region81: #{tracing_transformer_block_wrapper.30} parent=5 // pred_check_branch
        %2010 = sbr.rel (%p2008) target = $region83
      $region82: #{tracing_transformer_block_wrapper.30} parent=5 // pred_region
        %s2011 = ssub.s32 %s11, 2
      $region83: #{tracing_transformer_block_wrapper.30} parent=5 // pred_fallthru
        _
    $region6: #{tracing_transformer_block_wrapper.30} parent=1 // loop_footer
      %s15 = sadd.s32 1, %s11
    $region7: #{tracing_transformer_block_wrapper.30} parent=1 // loop_footer_branch
      %10 = sbr.rel target = $region3
    $region8: #{tracing_transformer_block_wrapper.30} parent=1 // loop_exit
      _

</llo_original>
